<compile_context>
chip_gen: v7x
topology: tpu7x:2x2x1
jax: 0.10.0
libtpu: 0.0.40
codegen_flags: <defaults>
</compile_context>

<pallas_src>
import functools

import jax
import jax.numpy as jnp
from jax.experimental import pallas as pl
from jax.experimental.pallas import tpu as pltpu


def _round_up(v, m):
    return ((v + m - 1) // m) * m


def _basic_block_kernel(x_ref, w1_ref, w2_ref, b1_ref, b2_ref, out_ref,
                        pad1_ref, col_ref, *, H, W, Wpp, Cp):
    """One batch element per grid step, packed padded-row layout.

    x_ref    : ((H+3)*Wpp, Cp) bf16  input (zero border / zero pad columns)
    w1/w2    : (9*Cp, Cp)      bf16  conv weights, tap-major, BN scale folded
    b1/b2    : (1, Cp)         f32   folded BN bias
    out_ref  : ((H+3)*Wpp, Cp) bf16  output, same packed layout as the input
    pad1_ref : ((H+3)*Wpp, Cp) bf16  scratch: zero-bordered relu(conv1(x))
    col_ref  : (H*Wpp, 9*Cp)   bf16  scratch: im2col patches
    """
    M = H * Wpp                                    # matmul rows per conv

    # Rows r = oy*Wpp + ox with ox >= W are "wrap junk": they are computed
    # (running the matmul over all H*Wpp rows keeps every slice contiguous and
    # sublane-aligned) and masked to zero wherever they could be re-read.
    ox = jax.lax.broadcasted_iota(jnp.int32, (M, 1), 0) % Wpp
    valid = ox < W

    def im2col(src_ref):
        # tap (dy, dx) of the 3x3 window == flattened rows
        # [dy*Wpp + dx, dy*Wpp + dx + M) of the padded image.
        for t in range(9):
            dy, dx = divmod(t, 3)
            off = dy * Wpp + dx
            col_ref[:, t * Cp:(t + 1) * Cp] = src_ref[off:off + M, :]

    # ---- conv1 -> bn1 (folded) -> relu ; dropout(p=0) == identity ----------
    im2col(x_ref)
    out1 = jnp.dot(col_ref[...], w1_ref[...],
                   preferred_element_type=jnp.float32)
    out1 = jnp.maximum(out1 + b1_ref[...], 0.0)
    out1 = jnp.where(valid, out1, 0.0)

    # ---- re-pad for conv2: zero borders first, then one shifted interior
    #      store (aligned full-stripe zero stores; single contiguous copy) ----
    zeros2 = jnp.zeros((2 * Wpp, Cp), pad1_ref.dtype)
    pad1_ref[0:2 * Wpp, :] = zeros2                            # top border
    pad1_ref[(H + 1) * Wpp:(H + 3) * Wpp, :] = zeros2          # bottom + slack
    pad1_ref[Wpp + 1:Wpp + 1 + M, :] = out1.astype(pad1_ref.dtype)

    # ---- conv2 -> bn2 (folded) ----------------------------------------------
    im2col(pad1_ref)
    out2 = jnp.dot(col_ref[...], w2_ref[...],
                   preferred_element_type=jnp.float32)
    out2 = out2 + b2_ref[...]

    # ---- residual add + relu, emitted in the same packed bf16 layout --------
    residual = x_ref[Wpp + 1:Wpp + 1 + M, :].astype(jnp.float32)
    res = jnp.where(valid, jnp.maximum(out2 + residual, 0.0), 0.0)
    out_ref[0:2 * Wpp, :] = zeros2
    out_ref[(H + 1) * Wpp:(H + 3) * Wpp, :] = zeros2
    out_ref[Wpp + 1:Wpp + 1 + M, :] = res.astype(out_ref.dtype)


def _fold_bn(w_hwio, gamma, beta, mean, var, *, C, Cp, eps):
    """Fold BN scale into conv weights; pad to Cp; tap-major (9*Cp, Cp) bf16."""
    scale = gamma / jnp.sqrt(var + eps)
    bias = beta - mean * scale
    w = w_hwio * scale[None, None, None, :]
    w = jnp.pad(w, ((0, 0), (0, 0), (0, Cp - C), (0, Cp - C)))
    w = w.reshape(9 * Cp, Cp).astype(jnp.bfloat16)
    b = jnp.pad(bias, (0, Cp - C)).reshape(1, Cp).astype(jnp.float32)
    return w, b


def pack_nchw(x_nchw, Cp, Wpp):
    """NCHW f32 -> packed padded-row bf16 (B, (H+3)*Wpp, Cp). Boundary only."""
    B, C, H, W = x_nchw.shape
    x = jnp.transpose(x_nchw, (0, 2, 3, 1))                    # NHWC
    x = jnp.pad(x, ((0, 0), (1, 2), (1, Wpp - W - 1), (0, Cp - C)))
    return x.astype(jnp.bfloat16).reshape(B, (H + 3) * Wpp, Cp)


def unpack_nchw(y_packed, C, H, W, Wpp):
    """packed padded-row bf16 -> NCHW f32. Boundary only."""
    B = y_packed.shape[0]
    y = y_packed.reshape(B, H + 3, Wpp, -1)[:, 1:H + 1, 1:W + 1, :C]
    return jnp.transpose(y, (0, 3, 1, 2)).astype(jnp.float32)


def basic_block_packed(x_packed, w1f, b1f, w2f, b2f, *, H, W, Cp):
    """Fused BasicBlock on the packed layout (output layout == input layout,
    so consecutive blocks chain with no inter-block HBM plumbing)."""
    B, Mx, Cp_in = x_packed.shape
    Wpp = Mx // (H + 3)
    assert Cp_in == Cp and Mx == (H + 3) * Wpp and Wpp % 8 == 0
    M = H * Wpp

    kernel = functools.partial(_basic_block_kernel, H=H, W=W, Wpp=Wpp, Cp=Cp)

    # VMEM budget from actual buffer sizes: double-buffered in/out blocks,
    # (conservatively 2x) constants, scratch, plus headroom.  Only raised above
    # the 32 MiB scoped default when shapes need it; capped for v7x (64 MiB).
    blk = Mx * Cp * 2                       # bf16 in / out block
    w_b = 9 * Cp * Cp * 2 + Cp * 4          # one weight + one bias
    scratch_b = Mx * Cp * 2 + M * 9 * Cp * 2
    vmem_bytes = 2 * (2 * blk + 2 * w_b) + scratch_b + (4 << 20)
    vmem_limit = int(min(max(vmem_bytes, 32 << 20), 64 << 20))

    return pl.pallas_call(
        kernel,
        out_shape=jax.ShapeDtypeStruct((B, Mx, Cp), jnp.bfloat16),
        grid_spec=pltpu.PrefetchScalarGridSpec(
            num_scalar_prefetch=0,
            grid=(B,),
            in_specs=[
                pl.BlockSpec((pl.Squeezed(), Mx, Cp), lambda b: (b, 0, 0)),
                # constant operands (index map constant across the grid ->
                # fetched once by the pipeline).
                pl.BlockSpec((9 * Cp, Cp), lambda b: (0, 0)),
                pl.BlockSpec((9 * Cp, Cp), lambda b: (0, 0)),
                pl.BlockSpec((1, Cp), lambda b: (0, 0)),
                pl.BlockSpec((1, Cp), lambda b: (0, 0)),
            ],
            out_specs=pl.BlockSpec((pl.Squeezed(), Mx, Cp),
                                   lambda b: (b, 0, 0)),
            scratch_shapes=[
                pltpu.VMEM((Mx, Cp), jnp.bfloat16),      # zero-bordered relu(conv1)
                pltpu.VMEM((M, 9 * Cp), jnp.bfloat16),   # im2col patches
            ],
        ),
        compiler_params=pltpu.CompilerParams(
            dimension_semantics=("parallel",),           # megacore: shard batch
            vmem_limit_bytes=vmem_limit,
        ),
    )(x_packed, w1f, w2f, b1f, b2f)


def basic_block(x_nchw, w1_hwio, w2_hwio, bn1, bn2, eps=1e-5):
    """NCHW f32 convenience wrapper (layout conversion at network boundaries)."""
    B, C, H, W = x_nchw.shape
    Cp = _round_up(C, 128)
    Wpp = _round_up(W + 2, 8)
    w1f, b1f = _fold_bn(w1_hwio, *bn1, C=C, Cp=Cp, eps=eps)
    w2f, b2f = _fold_bn(w2_hwio, *bn2, C=C, Cp=Cp, eps=eps)
    xp = pack_nchw(x_nchw, Cp, Wpp)
    yp = basic_block_packed(xp, w1f, b1f, w2f, b2f, H=H, W=W, Cp=Cp)
    return unpack_nchw(yp, C, H, W, Wpp)


def reference(x_nchw, w1_hwio, w2_hwio, bn1, bn2, eps=1e-5):
    """Same math as the kernel (bf16 activations/weights with BN scale folded,
    f32 accumulation, bf16 intermediate and bf16 output) via lax.conv."""
    x = jnp.transpose(x_nchw, (0, 2, 3, 1))
    g1, be1, m1, v1 = bn1
    g2, be2, m2, v2 = bn2
    s1 = g1 / jnp.sqrt(v1 + eps)
    b1 = be1 - m1 * s1
    s2 = g2 / jnp.sqrt(v2 + eps)
    b2 = be2 - m2 * s2

    q = lambda a: a.astype(jnp.bfloat16).astype(jnp.float32)
    xq = q(x)
    w1q = q(w1_hwio * s1[None, None, None, :])
    w2q = q(w2_hwio * s2[None, None, None, :])

    def conv(inp, w):
        return jax.lax.conv_general_dilated(
            inp, w, (1, 1), 'SAME',
            dimension_numbers=('NHWC', 'HWIO', 'NHWC'),
            precision=jax.lax.Precision.HIGHEST)

    o = jnp.maximum(conv(xq, w1q) + b1, 0.0)
    o = q(o)                                   # kernel keeps relu(conv1) in bf16
    o = conv(o, w2q) + b2
    o = jnp.maximum(o + xq, 0.0)
    o = q(o)                                   # kernel emits bf16 output
    return jnp.transpose(o, (0, 3, 1, 2))


if __name__ == "__main__":
    # inplanes == planes, stride=1, no downsample; B=8 so each TensorCore gets
    # >= 4 pipeline steps under "parallel" batch sharding.
    B, C, H, W = 8, 64, 16, 16
    keys = jax.random.split(jax.random.PRNGKey(0), 11)

    x = jax.random.normal(keys[0], (B, C, H, W), jnp.float32)
    w1 = jax.random.normal(keys[1], (3, 3, C, C), jnp.float32) * 0.05
    w2 = jax.random.normal(keys[2], (3, 3, C, C), jnp.float32) * 0.05
    bn1 = (jax.random.uniform(keys[3], (C,), minval=0.5, maxval=1.5),
           jax.random.normal(keys[4], (C,)) * 0.1,
           jax.random.normal(keys[5], (C,)) * 0.1,
           jax.random.uniform(keys[6], (C,), minval=0.5, maxval=1.5))
    bn2 = (jax.random.uniform(keys[7], (C,), minval=0.5, maxval=1.5),
           jax.random.normal(keys[8], (C,)) * 0.1,
           jax.random.normal(keys[9], (C,)) * 0.1,
           jax.random.uniform(keys[10], (C,), minval=0.5, maxval=1.5))

    out = jax.block_until_ready(basic_block(x, w1, w2, bn1, bn2))
    ref = reference(x, w1, w2, bn1, bn2)
    err = float(jnp.max(jnp.abs(out - ref)))
    assert jnp.allclose(out, ref, atol=5e-2, rtol=2e-2), f"max abs err = {err}"
    print("KERNEL_OK")
</pallas_src>

<mosaic_0001>
module attributes {stable_mosaic.version = 11 : i64} {
  func.func @_basic_block_kernel(%arg0: i32, %arg1: memref<1x456x128xbf16, #tpu.memory_space<vmem>>, %arg2: memref<1152x128xbf16, #tpu.memory_space<vmem>>, %arg3: memref<1152x128xbf16, #tpu.memory_space<vmem>>, %arg4: memref<1x128xf32, #tpu.memory_space<vmem>>, %arg5: memref<1x128xf32, #tpu.memory_space<vmem>>, %arg6: memref<1x456x128xbf16, #tpu.memory_space<vmem>>, %arg7: memref<456x128xbf16, #tpu.memory_space<vmem>>, %arg8: memref<384x1152xbf16, #tpu.memory_space<vmem>>) attributes {dimension_semantics = [#tpu.dimension_semantics<parallel>], iteration_bounds = array<i64: 8>, scalar_prefetch = 0 : i64, scratch_operands = 2 : i64, tpu.core_type = #tpu.core_type<tc>, window_params = [{transform_indices = @transform_0, window_bounds = array<i64: 1, 456, 128>}, {pipeline_mode = #tpu.pipeline_mode<synchronous>, transform_indices = @transform_1, window_bounds = array<i64: 1152, 128>}, {pipeline_mode = #tpu.pipeline_mode<synchronous>, transform_indices = @transform_2, window_bounds = array<i64: 1152, 128>}, {pipeline_mode = #tpu.pipeline_mode<synchronous>, transform_indices = @transform_3, window_bounds = array<i64: 1, 128>}, {pipeline_mode = #tpu.pipeline_mode<synchronous>, transform_indices = @transform_4, window_bounds = array<i64: 1, 128>}, {transform_indices = @transform_5, window_bounds = array<i64: 1, 456, 128>}]} {
    %0 = tpu.iota {dimensions = array<i32: 0>} : vector<384x1xi32>
    %c24_i32 = arith.constant 24 : i32
    %c0_i32 = arith.constant 0 : i32
    %1 = arith.cmpi eq, %c24_i32, %c0_i32 : i32
    %c1_i32 = arith.constant 1 : i32
    %2 = arith.select %1, %c1_i32, %c24_i32 : i32
    %3 = vector.broadcast %2 : i32 to vector<384x1xi32>
    %4 = arith.remsi %0, %3 : vector<384x1xi32>
    %c0_i32_0 = arith.constant 0 : i32
    %5 = vector.broadcast %c0_i32_0 : i32 to vector<384x1xi32>
    %6 = arith.cmpi ne, %4, %5 : vector<384x1xi32>
    %c0_i32_1 = arith.constant 0 : i32
    %7 = vector.broadcast %c0_i32_1 : i32 to vector<384x1xi32>
    %8 = arith.cmpi slt, %4, %7 : vector<384x1xi32>
    %c0_i32_2 = arith.constant 0 : i32
    %9 = arith.cmpi slt, %2, %c0_i32_2 : i32
    %10 = vector.broadcast %9 : i1 to vector<384x1xi1>
    %11 = vector.broadcast %10 : vector<384x1xi1> to vector<384x1xi1>
    %12 = arith.xori %8, %11 : vector<384x1xi1>
    %13 = arith.andi %12, %6 : vector<384x1xi1>
    %14 = vector.broadcast %2 : i32 to vector<384x1xi32>
    %15 = arith.addi %4, %14 : vector<384x1xi32>
    %16 = arith.select %13, %15, %4 : vector<384x1xi1>, vector<384x1xi32>
    %c16_i32 = arith.constant 16 : i32
    %17 = vector.broadcast %c16_i32 : i32 to vector<384x1xi32>
    %18 = arith.cmpi slt, %16, %17 : vector<384x1xi32>
    %c0 = arith.constant 0 : index
    %c0_3 = arith.constant 0 : index
    %c0_4 = arith.constant 0 : index
    %19 = vector.load %arg1[%c0, %c0_3, %c0_4] : memref<1x456x128xbf16, #tpu.memory_space<vmem>>, vector<1x384x128xbf16>
    %20 = vector.shape_cast %19 : vector<1x384x128xbf16> to vector<384x128xbf16>
    %c0_5 = arith.constant 0 : index
    %c0_6 = arith.constant 0 : index
    %21 = vector.load %arg8[%c0_5, %c0_6] : memref<384x1152xbf16, #tpu.memory_space<vmem>>, vector<384x128xbf16>
    tpu.vector_store %arg8[%c0_5, %c0_6], %20 {strides = array<i32>} : memref<384x1152xbf16, #tpu.memory_space<vmem>>, vector<384x128xbf16>,
    %c0_7 = arith.constant 0 : index
    %c1 = arith.constant 1 : index
    %c0_8 = arith.constant 0 : index
    %22 = vector.load %arg1[%c0_7, %c1, %c0_8] : memref<1x456x128xbf16, #tpu.memory_space<vmem>>, vector<1x384x128xbf16>
    %23 = vector.shape_cast %22 : vector<1x384x128xbf16> to vector<384x128xbf16>
    %c0_9 = arith.constant 0 : index
    %c128 = arith.constant 128 : index
    %24 = vector.load %arg8[%c0_9, %c128] : memref<384x1152xbf16, #tpu.memory_space<vmem>>, vector<384x128xbf16>
    tpu.vector_store %arg8[%c0_9, %c128], %23 {strides = array<i32>} : memref<384x1152xbf16, #tpu.memory_space<vmem>>, vector<384x128xbf16>,
    %c0_10 = arith.constant 0 : index
    %c2 = arith.constant 2 : index
    %c0_11 = arith.constant 0 : index
    %25 = vector.load %arg1[%c0_10, %c2, %c0_11] : memref<1x456x128xbf16, #tpu.memory_space<vmem>>, vector<1x384x128xbf16>
    %26 = vector.shape_cast %25 : vector<1x384x128xbf16> to vector<384x128xbf16>
    %c0_12 = arith.constant 0 : index
    %c256 = arith.constant 256 : index
    %27 = vector.load %arg8[%c0_12, %c256] : memref<384x1152xbf16, #tpu.memory_space<vmem>>, vector<384x128xbf16>
    tpu.vector_store %arg8[%c0_12, %c256], %26 {strides = array<i32>} : memref<384x1152xbf16, #tpu.memory_space<vmem>>, vector<384x128xbf16>,
    %c0_13 = arith.constant 0 : index
    %c24 = arith.constant 24 : index
    %c0_14 = arith.constant 0 : index
    %28 = vector.load %arg1[%c0_13, %c24, %c0_14] : memref<1x456x128xbf16, #tpu.memory_space<vmem>>, vector<1x384x128xbf16>
    %29 = vector.shape_cast %28 : vector<1x384x128xbf16> to vector<384x128xbf16>
    %c0_15 = arith.constant 0 : index
    %c384 = arith.constant 384 : index
    %30 = vector.load %arg8[%c0_15, %c384] : memref<384x1152xbf16, #tpu.memory_space<vmem>>, vector<384x128xbf16>
    tpu.vector_store %arg8[%c0_15, %c384], %29 {strides = array<i32>} : memref<384x1152xbf16, #tpu.memory_space<vmem>>, vector<384x128xbf16>,
    %c0_16 = arith.constant 0 : index
    %c25 = arith.constant 25 : index
    %c0_17 = arith.constant 0 : index
    %31 = vector.load %arg1[%c0_16, %c25, %c0_17] : memref<1x456x128xbf16, #tpu.memory_space<vmem>>, vector<1x384x128xbf16>
    %32 = vector.shape_cast %31 : vector<1x384x128xbf16> to vector<384x128xbf16>
    %c0_18 = arith.constant 0 : index
    %c512 = arith.constant 512 : index
    %33 = vector.load %arg8[%c0_18, %c512] : memref<384x1152xbf16, #tpu.memory_space<vmem>>, vector<384x128xbf16>
    tpu.vector_store %arg8[%c0_18, %c512], %32 {strides = array<i32>} : memref<384x1152xbf16, #tpu.memory_space<vmem>>, vector<384x128xbf16>,
    %c0_19 = arith.constant 0 : index
    %c26 = arith.constant 26 : index
    %c0_20 = arith.constant 0 : index
    %34 = vector.load %arg1[%c0_19, %c26, %c0_20] : memref<1x456x128xbf16, #tpu.memory_space<vmem>>, vector<1x384x128xbf16>
    %35 = vector.shape_cast %34 : vector<1x384x128xbf16> to vector<384x128xbf16>
    %c0_21 = arith.constant 0 : index
    %c640 = arith.constant 640 : index
    %36 = vector.load %arg8[%c0_21, %c640] : memref<384x1152xbf16, #tpu.memory_space<vmem>>, vector<384x128xbf16>
    tpu.vector_store %arg8[%c0_21, %c640], %35 {strides = array<i32>} : memref<384x1152xbf16, #tpu.memory_space<vmem>>, vector<384x128xbf16>,
    %c0_22 = arith.constant 0 : index
    %c48 = arith.constant 48 : index
    %c0_23 = arith.constant 0 : index
    %37 = vector.load %arg1[%c0_22, %c48, %c0_23] : memref<1x456x128xbf16, #tpu.memory_space<vmem>>, vector<1x384x128xbf16>
    %38 = vector.shape_cast %37 : vector<1x384x128xbf16> to vector<384x128xbf16>
    %c0_24 = arith.constant 0 : index
    %c768 = arith.constant 768 : index
    %39 = vector.load %arg8[%c0_24, %c768] : memref<384x1152xbf16, #tpu.memory_space<vmem>>, vector<384x128xbf16>
    tpu.vector_store %arg8[%c0_24, %c768], %38 {strides = array<i32>} : memref<384x1152xbf16, #tpu.memory_space<vmem>>, vector<384x128xbf16>,
    %c0_25 = arith.constant 0 : index
    %c49 = arith.constant 49 : index
    %c0_26 = arith.constant 0 : index
    %40 = vector.load %arg1[%c0_25, %c49, %c0_26] : memref<1x456x128xbf16, #tpu.memory_space<vmem>>, vector<1x384x128xbf16>
    %41 = vector.shape_cast %40 : vector<1x384x128xbf16> to vector<384x128xbf16>
    %c0_27 = arith.constant 0 : index
    %c896 = arith.constant 896 : index
    %42 = vector.load %arg8[%c0_27, %c896] : memref<384x1152xbf16, #tpu.memory_space<vmem>>, vector<384x128xbf16>
    tpu.vector_store %arg8[%c0_27, %c896], %41 {strides = array<i32>} : memref<384x1152xbf16, #tpu.memory_space<vmem>>, vector<384x128xbf16>,
    %c0_28 = arith.constant 0 : index
    %c50 = arith.constant 50 : index
    %c0_29 = arith.constant 0 : index
    %43 = vector.load %arg1[%c0_28, %c50, %c0_29] : memref<1x456x128xbf16, #tpu.memory_space<vmem>>, vector<1x384x128xbf16>
    %44 = vector.shape_cast %43 : vector<1x384x128xbf16> to vector<384x128xbf16>
    %c0_30 = arith.constant 0 : index
    %c1024 = arith.constant 1024 : index
    %45 = vector.load %arg8[%c0_30, %c1024] : memref<384x1152xbf16, #tpu.memory_space<vmem>>, vector<384x128xbf16>
    tpu.vector_store %arg8[%c0_30, %c1024], %44 {strides = array<i32>} : memref<384x1152xbf16, #tpu.memory_space<vmem>>, vector<384x128xbf16>,
    %c0_31 = arith.constant 0 : index
    %c0_32 = arith.constant 0 : index
    %46 = vector.load %arg8[%c0_31, %c0_32] : memref<384x1152xbf16, #tpu.memory_space<vmem>>, vector<384x1152xbf16>
    %c0_33 = arith.constant 0 : index
    %c0_34 = arith.constant 0 : index
    %47 = vector.load %arg2[%c0_33, %c0_34] : memref<1152x128xbf16, #tpu.memory_space<vmem>>, vector<1152x128xbf16>
    %cst = arith.constant dense<0.000000e+00> : vector<384x128xf32>
    %48 = tpu.matmul %46, %47, %cst {dimension_numbers = #tpu.dot_dimension_numbers<[1], [0], [0], [1], [0, 0, 1, 1], [], []>} : vector<384x1152xbf16>, vector<1152x128xbf16>, vector<384x128xf32> -> vector<384x128xf32>
    %c0_35 = arith.constant 0 : index
    %c0_36 = arith.constant 0 : index
    %49 = vector.load %arg4[%c0_35, %c0_36] : memref<1x128xf32, #tpu.memory_space<vmem>>, vector<1x128xf32>
    %50 = vector.broadcast %49 : vector<1x128xf32> to vector<384x128xf32>
    %51 = arith.addf %48, %50 : vector<384x128xf32>
    %cst_37 = arith.constant 0.000000e+00 : f32
    %52 = vector.broadcast %cst_37 : f32 to vector<384x128xf32>
    %53 = arith.maximumf %51, %52 : vector<384x128xf32>
    %cst_38 = arith.constant 0.000000e+00 : f32
    %54 = vector.shape_cast %18 : vector<384x1xi1> to vector<384x1xi1>
    %55 = vector.broadcast %54 : vector<384x1xi1> to vector<384x128xi1>
    %56 = vector.broadcast %cst_38 : f32 to vector<384x128xf32>
    %57 = arith.select %55, %53, %56 : vector<384x128xi1>, vector<384x128xf32>
    %cst_39 = arith.constant 0.000000e+00 : bf16
    %58 = vector.broadcast %cst_39 : bf16 to vector<48x128xbf16>
    %c0_40 = arith.constant 0 : index
    %c0_41 = arith.constant 0 : index
    %59 = vector.load %arg7[%c0_40, %c0_41] : memref<456x128xbf16, #tpu.memory_space<vmem>>, vector<48x128xbf16>
    tpu.vector_store %arg7[%c0_40, %c0_41], %58 {strides = array<i32>} : memref<456x128xbf16, #tpu.memory_space<vmem>>, vector<48x128xbf16>,
    %c408 = arith.constant 408 : index
    %c0_42 = arith.constant 0 : index
    %60 = vector.load %arg7[%c408, %c0_42] : memref<456x128xbf16, #tpu.memory_space<vmem>>, vector<48x128xbf16>
    tpu.vector_store %arg7[%c408, %c0_42], %58 {strides = array<i32>} : memref<456x128xbf16, #tpu.memory_space<vmem>>, vector<48x128xbf16>,
    %61 = arith.truncf %57 : vector<384x128xf32> to vector<384x128xbf16>
    %c25_43 = arith.constant 25 : index
    %c0_44 = arith.constant 0 : index
    %62 = vector.load %arg7[%c25_43, %c0_44] : memref<456x128xbf16, #tpu.memory_space<vmem>>, vector<384x128xbf16>
    tpu.vector_store %arg7[%c25_43, %c0_44], %61 {strides = array<i32>} : memref<456x128xbf16, #tpu.memory_space<vmem>>, vector<384x128xbf16>,
    %c0_45 = arith.constant 0 : index
    %c0_46 = arith.constant 0 : index
    %63 = vector.load %arg7[%c0_45, %c0_46] : memref<456x128xbf16, #tpu.memory_space<vmem>>, vector<384x128xbf16>
    %c0_47 = arith.constant 0 : index
    %c0_48 = arith.constant 0 : index
    %64 = vector.load %arg8[%c0_47, %c0_48] : memref<384x1152xbf16, #tpu.memory_space<vmem>>, vector<384x128xbf16>
    tpu.vector_store %arg8[%c0_47, %c0_48], %63 {strides = array<i32>} : memref<384x1152xbf16, #tpu.memory_space<vmem>>, vector<384x128xbf16>,
    %c1_49 = arith.constant 1 : index
    %c0_50 = arith.constant 0 : index
    %65 = vector.load %arg7[%c1_49, %c0_50] : memref<456x128xbf16, #tpu.memory_space<vmem>>, vector<384x128xbf16>
    %c0_51 = arith.constant 0 : index
    %c128_52 = arith.constant 128 : index
    %66 = vector.load %arg8[%c0_51, %c128_52] : memref<384x1152xbf16, #tpu.memory_space<vmem>>, vector<384x128xbf16>
    tpu.vector_store %arg8[%c0_51, %c128_52], %65 {strides = array<i32>} : memref<384x1152xbf16, #tpu.memory_space<vmem>>, vector<384x128xbf16>,
    %c2_53 = arith.constant 2 : index
    %c0_54 = arith.constant 0 : index
    %67 = vector.load %arg7[%c2_53, %c0_54] : memref<456x128xbf16, #tpu.memory_space<vmem>>, vector<384x128xbf16>
    %c0_55 = arith.constant 0 : index
    %c256_56 = arith.constant 256 : index
    %68 = vector.load %arg8[%c0_55, %c256_56] : memref<384x1152xbf16, #tpu.memory_space<vmem>>, vector<384x128xbf16>
    tpu.vector_store %arg8[%c0_55, %c256_56], %67 {strides = array<i32>} : memref<384x1152xbf16, #tpu.memory_space<vmem>>, vector<384x128xbf16>,
    %c24_57 = arith.constant 24 : index
    %c0_58 = arith.constant 0 : index
    %69 = vector.load %arg7[%c24_57, %c0_58] : memref<456x128xbf16, #tpu.memory_space<vmem>>, vector<384x128xbf16>
    %c0_59 = arith.constant 0 : index
    %c384_60 = arith.constant 384 : index
    %70 = vector.load %arg8[%c0_59, %c384_60] : memref<384x1152xbf16, #tpu.memory_space<vmem>>, vector<384x128xbf16>
    tpu.vector_store %arg8[%c0_59, %c384_60], %69 {strides = array<i32>} : memref<384x1152xbf16, #tpu.memory_space<vmem>>, vector<384x128xbf16>,
    %c25_61 = arith.constant 25 : index
    %c0_62 = arith.constant 0 : index
    %71 = vector.load %arg7[%c25_61, %c0_62] : memref<456x128xbf16, #tpu.memory_space<vmem>>, vector<384x128xbf16>
    %c0_63 = arith.constant 0 : index
    %c512_64 = arith.constant 512 : index
    %72 = vector.load %arg8[%c0_63, %c512_64] : memref<384x1152xbf16, #tpu.memory_space<vmem>>, vector<384x128xbf16>
    tpu.vector_store %arg8[%c0_63, %c512_64], %71 {strides = array<i32>} : memref<384x1152xbf16, #tpu.memory_space<vmem>>, vector<384x128xbf16>,
    %c26_65 = arith.constant 26 : index
    %c0_66 = arith.constant 0 : index
    %73 = vector.load %arg7[%c26_65, %c0_66] : memref<456x128xbf16, #tpu.memory_space<vmem>>, vector<384x128xbf16>
    %c0_67 = arith.constant 0 : index
    %c640_68 = arith.constant 640 : index
    %74 = vector.load %arg8[%c0_67, %c640_68] : memref<384x1152xbf16, #tpu.memory_space<vmem>>, vector<384x128xbf16>
    tpu.vector_store %arg8[%c0_67, %c640_68], %73 {strides = array<i32>} : memref<384x1152xbf16, #tpu.memory_space<vmem>>, vector<384x128xbf16>,
    %c48_69 = arith.constant 48 : index
    %c0_70 = arith.constant 0 : index
    %75 = vector.load %arg7[%c48_69, %c0_70] : memref<456x128xbf16, #tpu.memory_space<vmem>>, vector<384x128xbf16>
    %c0_71 = arith.constant 0 : index
    %c768_72 = arith.constant 768 : index
    %76 = vector.load %arg8[%c0_71, %c768_72] : memref<384x1152xbf16, #tpu.memory_space<vmem>>, vector<384x128xbf16>
    tpu.vector_store %arg8[%c0_71, %c768_72], %75 {strides = array<i32>} : memref<384x1152xbf16, #tpu.memory_space<vmem>>, vector<384x128xbf16>,
    %c49_73 = arith.constant 49 : index
    %c0_74 = arith.constant 0 : index
    %77 = vector.load %arg7[%c49_73, %c0_74] : memref<456x128xbf16, #tpu.memory_space<vmem>>, vector<384x128xbf16>
    %c0_75 = arith.constant 0 : index
    %c896_76 = arith.constant 896 : index
    %78 = vector.load %arg8[%c0_75, %c896_76] : memref<384x1152xbf16, #tpu.memory_space<vmem>>, vector<384x128xbf16>
    tpu.vector_store %arg8[%c0_75, %c896_76], %77 {strides = array<i32>} : memref<384x1152xbf16, #tpu.memory_space<vmem>>, vector<384x128xbf16>,
    %c50_77 = arith.constant 50 : index
    %c0_78 = arith.constant 0 : index
    %79 = vector.load %arg7[%c50_77, %c0_78] : memref<456x128xbf16, #tpu.memory_space<vmem>>, vector<384x128xbf16>
    %c0_79 = arith.constant 0 : index
    %c1024_80 = arith.constant 1024 : index
    %80 = vector.load %arg8[%c0_79, %c1024_80] : memref<384x1152xbf16, #tpu.memory_space<vmem>>, vector<384x128xbf16>
    tpu.vector_store %arg8[%c0_79, %c1024_80], %79 {strides = array<i32>} : memref<384x1152xbf16, #tpu.memory_space<vmem>>, vector<384x128xbf16>,
    %c0_81 = arith.constant 0 : index
    %c0_82 = arith.constant 0 : index
    %81 = vector.load %arg8[%c0_81, %c0_82] : memref<384x1152xbf16, #tpu.memory_space<vmem>>, vector<384x1152xbf16>
    %c0_83 = arith.constant 0 : index
    %c0_84 = arith.constant 0 : index
    %82 = vector.load %arg3[%c0_83, %c0_84] : memref<1152x128xbf16, #tpu.memory_space<vmem>>, vector<1152x128xbf16>
    %cst_85 = arith.constant dense<0.000000e+00> : vector<384x128xf32>
    %83 = tpu.matmul %81, %82, %cst_85 {dimension_numbers = #tpu.dot_dimension_numbers<[1], [0], [0], [1], [0, 0, 1, 1], [], []>} : vector<384x1152xbf16>, vector<1152x128xbf16>, vector<384x128xf32> -> vector<384x128xf32>
    %c0_86 = arith.constant 0 : index
    %c0_87 = arith.constant 0 : index
    %84 = vector.load %arg5[%c0_86, %c0_87] : memref<1x128xf32, #tpu.memory_space<vmem>>, vector<1x128xf32>
    %85 = vector.broadcast %84 : vector<1x128xf32> to vector<384x128xf32>
    %86 = arith.addf %83, %85 : vector<384x128xf32>
    %c0_88 = arith.constant 0 : index
    %c25_89 = arith.constant 25 : index
    %c0_90 = arith.constant 0 : index
    %87 = vector.load %arg1[%c0_88, %c25_89, %c0_90] : memref<1x456x128xbf16, #tpu.memory_space<vmem>>, vector<1x384x128xbf16>
    %88 = vector.shape_cast %87 : vector<1x384x128xbf16> to vector<384x128xbf16>
    %89 = arith.extf %88 : vector<384x128xbf16> to vector<384x128xf32>
    %90 = arith.addf %86, %89 : vector<384x128xf32>
    %cst_91 = arith.constant 0.000000e+00 : f32
    %91 = vector.broadcast %cst_91 : f32 to vector<384x128xf32>
    %92 = arith.maximumf %90, %91 : vector<384x128xf32>
    %cst_92 = arith.constant 0.000000e+00 : f32
    %93 = vector.shape_cast %18 : vector<384x1xi1> to vector<384x1xi1>
    %94 = vector.broadcast %93 : vector<384x1xi1> to vector<384x128xi1>
    %95 = vector.broadcast %cst_92 : f32 to vector<384x128xf32>
    %96 = arith.select %94, %92, %95 : vector<384x128xi1>, vector<384x128xf32>
    %c0_93 = arith.constant 0 : index
    %c0_94 = arith.constant 0 : index
    %c0_95 = arith.constant 0 : index
    %97 = vector.load %arg6[%c0_93, %c0_94, %c0_95] : memref<1x456x128xbf16, #tpu.memory_space<vmem>>, vector<1x48x128xbf16>
    %98 = vector.shape_cast %97 : vector<1x48x128xbf16> to vector<48x128xbf16>
    %99 = vector.shape_cast %58 : vector<48x128xbf16> to vector<1x48x128xbf16>
    tpu.vector_store %arg6[%c0_93, %c0_94, %c0_95], %99 {strides = array<i32>} : memref<1x456x128xbf16, #tpu.memory_space<vmem>>, vector<1x48x128xbf16>,
    %c0_96 = arith.constant 0 : index
    %c408_97 = arith.constant 408 : index
    %c0_98 = arith.constant 0 : index
    %100 = vector.load %arg6[%c0_96, %c408_97, %c0_98] : memref<1x456x128xbf16, #tpu.memory_space<vmem>>, vector<1x48x128xbf16>
    %101 = vector.shape_cast %100 : vector<1x48x128xbf16> to vector<48x128xbf16>
    %102 = vector.shape_cast %58 : vector<48x128xbf16> to vector<1x48x128xbf16>
    tpu.vector_store %arg6[%c0_96, %c408_97, %c0_98], %102 {strides = array<i32>} : memref<1x456x128xbf16, #tpu.memory_space<vmem>>, vector<1x48x128xbf16>,
    %103 = arith.truncf %96 : vector<384x128xf32> to vector<384x128xbf16>
    %c0_99 = arith.constant 0 : index
    %c25_100 = arith.constant 25 : index
    %c0_101 = arith.constant 0 : index
    %104 = vector.load %arg6[%c0_99, %c25_100, %c0_101] : memref<1x456x128xbf16, #tpu.memory_space<vmem>>, vector<1x384x128xbf16>
    %105 = vector.shape_cast %104 : vector<1x384x128xbf16> to vector<384x128xbf16>
    %106 = vector.shape_cast %103 : vector<384x128xbf16> to vector<1x384x128xbf16>
    tpu.vector_store %arg6[%c0_99, %c25_100, %c0_101], %106 {strides = array<i32>} : memref<1x456x128xbf16, #tpu.memory_space<vmem>>, vector<1x384x128xbf16>,
    return
  }
  func.func @transform_0(%arg0: i32) -> (i32, i32, i32) {
    %c0_i32 = arith.constant 0 : i32
    %c0_i32_0 = arith.constant 0 : i32
    %c0_i32_1 = arith.constant 0 : i32
    return %arg0, %c0_i32, %c0_i32_0 : i32, i32, i32
  }
  func.func @transform_1(%arg0: i32) -> (i32, i32) {
    %c0_i32 = arith.constant 0 : i32
    %c0_i32_0 = arith.constant 0 : i32
    %c0_i32_1 = arith.constant 0 : i32
    return %c0_i32, %c0_i32_0 : i32, i32
  }
  func.func @transform_2(%arg0: i32) -> (i32, i32) {
    %c0_i32 = arith.constant 0 : i32
    %c0_i32_0 = arith.constant 0 : i32
    %c0_i32_1 = arith.constant 0 : i32
    return %c0_i32, %c0_i32_0 : i32, i32
  }
  func.func @transform_3(%arg0: i32) -> (i32, i32) {
    %c0_i32 = arith.constant 0 : i32
    %c0_i32_0 = arith.constant 0 : i32
    %c0_i32_1 = arith.constant 0 : i32
    return %c0_i32, %c0_i32_0 : i32, i32
  }
  func.func @transform_4(%arg0: i32) -> (i32, i32) {
    %c0_i32 = arith.constant 0 : i32
    %c0_i32_0 = arith.constant 0 : i32
    %c0_i32_1 = arith.constant 0 : i32
    return %c0_i32, %c0_i32_0 : i32, i32
  }
  func.func @transform_5(%arg0: i32) -> (i32, i32, i32) {
    %c0_i32 = arith.constant 0 : i32
    %c0_i32_0 = arith.constant 0 : i32
    %c0_i32_1 = arith.constant 0 : i32
    return %arg0, %c0_i32, %c0_i32_0 : i32, i32, i32
  }
}

</mosaic_0001>

<llo_original>
// kernel: tpu_custom_call.1
$region0: #{tpu_custom_call.1}
  #allocation0 [shape = 'u32[]', space=smem, size = 0x4, offset = 0x4, fixed_abs, tag = 'smem constant byte address 0x4 - core index']
  #allocation1 [shape = 'u32[144,128]{1,0:T(1,128)}', space=vmem, size = 0x12000, scoped, tag = 'internal scratch']
  #allocation2 [shape = 'bf16[456,128]{1,0:T(8,128)(2,1)}', space=vmem, size = 0x1c800, scoped, tag = 'scratch operand']
  #allocation3 [shape = 'bf16[384,1152]{1,0:T(16,128)(2,1)}', space=vmem, size = 0xd8000, scoped, tag = 'scratch operand']
  %s0 = inlined_call_operand.hbm [shape: bf16[8,456,128], index: 0, kind: input, shape index: {}]
  %s1 = inlined_call_operand.hbm [shape: bf16[1152,128], index: 1, kind: input, shape index: {}]
  %s2 = inlined_call_operand.hbm [shape: bf16[1152,128], index: 2, kind: input, shape index: {}]
  %s3 = inlined_call_operand.vmem [shape: f32[1,128], index: 3, kind: input, shape index: {}]
  %s4 = inlined_call_operand.vmem [shape: f32[1,128], index: 4, kind: input, shape index: {}]
  %s5 = inlined_call_operand.hbm [shape: bf16[8,456,128], index: 5, kind: output, shape index: {}]
  %s6 = sld [smem:[#allocation0]]
  $region65: #{tpu_custom_call.1} parent=0
    _
  %s8 = ssub.s32 1, %s6
  %s9 = scalar_select 0, %s8, %s6
  $region1: #{tpu_custom_call.1} parent=0
    #allocation4 [shape = 'u8[233472]{0}', space=vmem, size = 0x39000, scoped, tag = 'input window, operand 0']
    #allocation5 [shape = 's32[2]{0}', space=sflag, size = 0x8, scoped, tag = 'scoped memory for tpu_custom_call.1']
    #allocation6 [shape = 's32[2]{0}', space=sflag, size = 0x8, scoped, tag = 'scoped memory for tpu_custom_call.1']
    #allocation7 [shape = 'u8[294912]{0}', space=vmem, size = 0x48000, scoped, tag = 'input window, operand 1, single buffered']
    #allocation8 [shape = 's32[1]{0}', space=sflag, size = 0x4, scoped, tag = 'scoped memory for tpu_custom_call.1']
    #allocation9 [shape = 'u8[294912]{0}', space=vmem, size = 0x48000, scoped, tag = 'input window, operand 2, single buffered']
    #allocation10 [shape = 'u8[233472]{0}', space=vmem, size = 0x39000, scoped, tag = 'output window, operand 0']
    %10 = vsyncpa [#allocation5], 0
    %s11 = scalar_lea.sflag [#allocation5], 1
    %12 = vsyncpa %s11, 0
    %13 = vsyncpa [#allocation8], 0
    %14 = vsyncpa [#allocation6], 0
    %s15 = scalar_lea.sflag [#allocation6], 1
    %16 = vsyncpa %s15, 0
    loop: start=0, step=1, limit=10
    $region2: #{tpu_custom_call.1} parent=1 // loop_pre_header
      _
    $region3: #{tpu_custom_call.1} parent=1 // loop_header
      %s18 = sphi 0, %s22
      %p19 = scmp.ge.s32.totalorder %s18, 10
      %s28 = sphi 0, %s30
      %s31 = sphi 0, %s28
      %s32 = sphi 0, %s31
      %s48 = sphi 0, %s32
      %s52 = sphi 0, %s52
      %s54 = sphi 0, %s52
      %s55 = sphi 0, %s54
      %s69 = sphi 0, %s55
      %s73 = sphi 0, %s73
      %s75 = sphi 0, %s73
      %s76 = sphi 0, %s75
      %s90 = sphi 0, %s76
      %s94 = sphi 0, %s94
      %s96 = sphi 0, %s94
      %s97 = sphi 0, %s96
      %s111 = sphi 0, %s97
      %s115 = sphi 0, %s115
      %s117 = sphi 0, %s115
      %s118 = sphi 0, %s117
      %s132 = sphi 0, %s118
      %s138 = sphi 0, %s140
      %s141 = sphi 0, %s138
      %s142 = sphi 0, %s141
      %s158 = sphi 0, %s142
    $region4: #{tpu_custom_call.1} parent=1 // loop_header_branch
      %21 = sbr.rel (%p19) target = $region8
    $region5: #{tpu_custom_call.1} parent=1 // loop_body
      %s23 = ssub.s32 %s18, 1
      %s24 = ssub.s32 %s18, 2
      %s25 = sadd.s32 %s18, 1
      %s26 = ssub.s32 %s18, %s25
      %p27 = scmp.eq.s32.totalorder %s26, 0
      %s29 = sadd.s32 %s28, 1
      %s30 = scalar_select %p27, %s28, %s29
      %p33 = pneg %p27
      %p34 = scmp.eq.s32.totalorder %s18, 7
      %p35 = por %p33, %p34
      %p36 = scmp.ne.s32.totalorder %s28, %s31
      %p37 = scmp.eq.s32.totalorder %s18, 0
      %p38 = por %p36, %p37
      %p39 = scmp.ne.s32.totalorder %s28, %s31
      %p40 = scmp.eq.s32.totalorder %s23, 7
      %p41 = por %p39, %p40
      %p42 = scmp.ne.s32.totalorder %s31, %s32
      %p43 = scmp.eq.s32.totalorder %s23, 0
      %p44 = por %p42, %p43
      %p45 = scmp.ne.s32.totalorder %s31, %s32
      %p46 = scmp.eq.s32.totalorder %s24, 7
      %p47 = por %p45, %p46
      %p49 = scmp.ne.s32.totalorder %s32, %s48
      %p50 = scmp.eq.s32.totalorder %s24, 0
      %p51 = por %p49, %p50
      %s53 = sadd.s32 %s52, 1
      %p56 = scmp.eq.s32.totalorder %s18, 7
      %p57 = scmp.ne.s32.totalorder %s52, %s54
      %p58 = scmp.eq.s32.totalorder %s18, 0
      %p59 = por %p57, %p58
      %p60 = scmp.ne.s32.totalorder %s52, %s54
      %p61 = scmp.eq.s32.totalorder %s23, 7
      %p62 = por %p60, %p61
      %p63 = scmp.ne.s32.totalorder %s54, %s55
      %p64 = scmp.eq.s32.totalorder %s23, 0
      %p65 = por %p63, %p64
      %p66 = scmp.ne.s32.totalorder %s54, %s55
      %p67 = scmp.eq.s32.totalorder %s24, 7
      %p68 = por %p66, %p67
      %p70 = scmp.ne.s32.totalorder %s55, %s69
      %p71 = scmp.eq.s32.totalorder %s24, 0
      %p72 = por %p70, %p71
      %s74 = sadd.s32 %s73, 1
      %p77 = scmp.eq.s32.totalorder %s18, 7
      %p78 = scmp.ne.s32.totalorder %s73, %s75
      %p79 = scmp.eq.s32.totalorder %s18, 0
      %p80 = por %p78, %p79
      %p81 = scmp.ne.s32.totalorder %s73, %s75
      %p82 = scmp.eq.s32.totalorder %s23, 7
      %p83 = por %p81, %p82
      %p84 = scmp.ne.s32.totalorder %s75, %s76
      %p85 = scmp.eq.s32.totalorder %s23, 0
      %p86 = por %p84, %p85
      %p87 = scmp.ne.s32.totalorder %s75, %s76
      %p88 = scmp.eq.s32.totalorder %s24, 7
      %p89 = por %p87, %p88
      %p91 = scmp.ne.s32.totalorder %s76, %s90
      %p92 = scmp.eq.s32.totalorder %s24, 0
      %p93 = por %p91, %p92
      %s95 = sadd.s32 %s94, 1
      %p98 = scmp.eq.s32.totalorder %s18, 7
      %p99 = scmp.ne.s32.totalorder %s94, %s96
      %p100 = scmp.eq.s32.totalorder %s18, 0
      %p101 = por %p99, %p100
      %p102 = scmp.ne.s32.totalorder %s94, %s96
      %p103 = scmp.eq.s32.totalorder %s23, 7
      %p104 = por %p102, %p103
      %p105 = scmp.ne.s32.totalorder %s96, %s97
      %p106 = scmp.eq.s32.totalorder %s23, 0
      %p107 = por %p105, %p106
      %p108 = scmp.ne.s32.totalorder %s96, %s97
      %p109 = scmp.eq.s32.totalorder %s24, 7
      %p110 = por %p108, %p109
      %p112 = scmp.ne.s32.totalorder %s97, %s111
      %p113 = scmp.eq.s32.totalorder %s24, 0
      %p114 = por %p112, %p113
      %s116 = sadd.s32 %s115, 1
      %p119 = scmp.eq.s32.totalorder %s18, 7
      %p120 = scmp.ne.s32.totalorder %s115, %s117
      %p121 = scmp.eq.s32.totalorder %s18, 0
      %p122 = por %p120, %p121
      %p123 = scmp.ne.s32.totalorder %s115, %s117
      %p124 = scmp.eq.s32.totalorder %s23, 7
      %p125 = por %p123, %p124
      %p126 = scmp.ne.s32.totalorder %s117, %s118
      %p127 = scmp.eq.s32.totalorder %s23, 0
      %p128 = por %p126, %p127
      %p129 = scmp.ne.s32.totalorder %s117, %s118
      %p130 = scmp.eq.s32.totalorder %s24, 7
      %p131 = por %p129, %p130
      %p133 = scmp.ne.s32.totalorder %s118, %s132
      %p134 = scmp.eq.s32.totalorder %s24, 0
      %p135 = por %p133, %p134
      %s136 = ssub.s32 %s18, %s25
      %p137 = scmp.eq.s32.totalorder %s136, 0
      %s139 = sadd.s32 %s138, 1
      %s140 = scalar_select %p137, %s138, %s139
      %p143 = pneg %p137
      %p144 = scmp.eq.s32.totalorder %s18, 7
      %p145 = por %p143, %p144
      %p146 = scmp.ne.s32.totalorder %s138, %s141
      %p147 = scmp.eq.s32.totalorder %s18, 0
      %p148 = por %p146, %p147
      %p149 = scmp.ne.s32.totalorder %s138, %s141
      %p150 = scmp.eq.s32.totalorder %s23, 7
      %p151 = por %p149, %p150
      %p152 = scmp.ne.s32.totalorder %s141, %s142
      %p153 = scmp.eq.s32.totalorder %s23, 0
      %p154 = por %p152, %p153
      %p155 = scmp.ne.s32.totalorder %s141, %s142
      %p156 = scmp.eq.s32.totalorder %s24, 7
      %p157 = por %p155, %p156
      %p159 = scmp.ne.s32.totalorder %s142, %s158
      %p160 = scmp.eq.s32.totalorder %s24, 0
      %p161 = por %p159, %p160
      %p162 = scmp.le.s32.totalorder 1, %s18
      %p163 = scmp.lt.s32.totalorder %s18, 9
      %p164 = pnand %p162, %p163
      %p165 = pneg %p164
      // Predicated region
      $region9: #{tpu_custom_call.1} parent=5 // pred_check
        _
      $region10: #{tpu_custom_call.1} parent=5 // pred_check_branch
        %167 = sbr.rel (%p164) target = $region12
      $region11: #{tpu_custom_call.1} parent=5 // pred_region
        %s168 = ssub.s32 %s18, 1
        // Predicated region
        $region13: #{tpu_custom_call.1} parent=11 // pred_check
          %p169 = pneg %p65
        $region14: #{tpu_custom_call.1} parent=11 // pred_check_branch
          %171 = sbr.rel (%p169) target = $region16
        $region15: #{tpu_custom_call.1} parent=11 // pred_region
          %s173 = ssub.s32 9216, 9216
          %174 = vsyncadd [#allocation8], %s173
          %s175 = sshll.u32 [#allocation7], 4
          %s176 = int_to_ptr.vmem [resolvable:$true] %s175
          %181 = dma.hbm_to_vmem [thread:$0]  %s1, 9216, %s176, [#allocation8], 64, 64, 4
        $region16: #{tpu_custom_call.1} parent=11 // pred_fallthru
          _
        // Predicated region
        $region17: #{tpu_custom_call.1} parent=11 // pred_check
          %p182 = pneg %p86
        $region18: #{tpu_custom_call.1} parent=11 // pred_check_branch
          %184 = sbr.rel (%p182) target = $region20
        $region19: #{tpu_custom_call.1} parent=11 // pred_region
          %s186 = ssub.s32 9216, 9216
          %187 = vsyncadd [#allocation8], %s186
          %s188 = sshll.u32 [#allocation9], 4
          %s189 = int_to_ptr.vmem [resolvable:$true] %s188
          %194 = dma.hbm_to_vmem [thread:$0]  %s2, 9216, %s189, [#allocation8], 64, 64, 4
        $region20: #{tpu_custom_call.1} parent=11 // pred_fallthru
          _
        // Predicated region
        $region21: #{tpu_custom_call.1} parent=11 // pred_check
          %p195 = pneg %p107
        $region22: #{tpu_custom_call.1} parent=11 // pred_check_branch
          %197 = sbr.rel (%p195) target = $region24
        $region23: #{tpu_custom_call.1} parent=11 // pred_region
          _
        $region24: #{tpu_custom_call.1} parent=11 // pred_fallthru
          _
        // Predicated region
        $region25: #{tpu_custom_call.1} parent=11 // pred_check
          %p198 = pneg %p128
        $region26: #{tpu_custom_call.1} parent=11 // pred_check_branch
          %200 = sbr.rel (%p198) target = $region28
        $region27: #{tpu_custom_call.1} parent=11 // pred_region
          _
        $region28: #{tpu_custom_call.1} parent=11 // pred_fallthru
          _
      $region12: #{tpu_custom_call.1} parent=5 // pred_fallthru
        _
      %p201 = scmp.lt.s32.totalorder %s18, 8
      // Predicated region
      $region29: #{tpu_custom_call.1} parent=5 // pred_check
        %p202 = pneg %p201
      $region30: #{tpu_custom_call.1} parent=5 // pred_check_branch
        %204 = sbr.rel (%p202) target = $region32
      $region31: #{tpu_custom_call.1} parent=5 // pred_region
        // Predicated region
        $region33: #{tpu_custom_call.1} parent=31 // pred_check
          %p205 = pneg %p38
        $region34: #{tpu_custom_call.1} parent=31 // pred_check_branch
          %207 = sbr.rel (%p205) target = $region36
        $region35: #{tpu_custom_call.1} parent=31 // pred_region
          %s208 = sand.u32 %s28, 1
          %s209 = scalar_lea.sflag [#allocation5], %s208
          %s210 = sand.u32 %s28, 1
          %s211 = smul.addr %s210, 228
          %s212 = scalar_lea.vmem [#allocation4], %s211
          %s214 = ssub.s32 3648, 3648
          %215 = vsyncadd %s209, %s214
          %s216 = smul.addr %s18, 57
          %s217 = smul.addr %s216, 64
          %s218 = scalar_lea.hbm %s0, %s217
          %s219 = sshll.u32 %s212, 4
          %s220 = int_to_ptr.vmem [resolvable:$true] %s219
          %225 = dma.hbm_to_vmem [thread:$0]  %s218, 3648, %s220, %s209, 64, 64, 4
        $region36: #{tpu_custom_call.1} parent=31 // pred_fallthru
          _
      $region32: #{tpu_custom_call.1} parent=5 // pred_fallthru
        _
      %p226 = scmp.le.s32.totalorder 1, %s18
      %p227 = scmp.lt.s32.totalorder %s18, 9
      %p228 = pnand %p226, %p227
      %p229 = pneg %p228
      // Predicated region
      $region37: #{tpu_custom_call.1} parent=5 // pred_check
        _
      $region38: #{tpu_custom_call.1} parent=5 // pred_check_branch
        %231 = sbr.rel (%p228) target = $region40
      $region39: #{tpu_custom_call.1} parent=5 // pred_region
        %s232 = ssub.s32 %s18, 1
        %s233 = sand.u32 %s31, 1
        %s234 = scalar_lea.sflag [#allocation5], %s233
        %s235 = sand.u32 %s31, 1
        %s236 = smul.addr %s235, 228
        %s237 = scalar_lea.vmem [#allocation4], %s236
        // Predicated region
        $region41: #{tpu_custom_call.1} parent=39 // pred_check
          %p238 = pneg %p44
        $region42: #{tpu_custom_call.1} parent=39 // pred_check_branch
          %240 = sbr.rel (%p238) target = $region44
        $region43: #{tpu_custom_call.1} parent=39 // pred_region
          %241 = dma.done %s234, 3648
        $region44: #{tpu_custom_call.1} parent=39 // pred_fallthru
          _
        // Predicated region
        $region45: #{tpu_custom_call.1} parent=39 // pred_check
          %p242 = pneg %p65
        $region46: #{tpu_custom_call.1} parent=39 // pred_check_branch
          %244 = sbr.rel (%p242) target = $region48
        $region47: #{tpu_custom_call.1} parent=39 // pred_region
          %245 = dma.done [#allocation8], 9216
        $region48: #{tpu_custom_call.1} parent=39 // pred_fallthru
          _
        // Predicated region
        $region49: #{tpu_custom_call.1} parent=39 // pred_check
          %p246 = pneg %p86
        $region50: #{tpu_custom_call.1} parent=39 // pred_check_branch
          %248 = sbr.rel (%p246) target = $region52
        $region51: #{tpu_custom_call.1} parent=39 // pred_region
          %249 = dma.done [#allocation8], 9216
        $region52: #{tpu_custom_call.1} parent=39 // pred_fallthru
          _
        %s250 = sand.u32 %s31, 1
        %s251 = scalar_lea.sflag [#allocation5], %s250
        %s252 = sand.u32 %s31, 1
        %s253 = smul.addr %s252, 228
        %s254 = scalar_lea.vmem [#allocation4], %s253
        %p255 = pneg %p44
        %p256 = pneg %p41
        %p257 = pneg %p65
        %p258 = pneg %p62
        %p259 = pneg %p86
        %p260 = pneg %p83
        %p261 = pneg %p107
        %p262 = pneg %p104
        %p263 = pneg %p128
        %p264 = pneg %p125
        %p265 = pneg %p154
        %p266 = pneg %p151
        %s267 = sand.u32 %s141, 1
        %s268 = scalar_lea.sflag [#allocation6], %s267
        %s269 = sand.u32 %s141, 1
        %s270 = smul.addr %s269, 228
        %s271 = scalar_lea.vmem [#allocation10], %s270
        %v273 = vlaneseq
        %v274 = vshrl.u32 %v273, 7
        %v275 = vadd.s32 %v274, 8
        %v276 = vadd.s32 %v274, 16
        %v277 = vadd.s32 %v274, 24
        %v278 = vadd.s32 %v274, 32
        %v279 = vadd.s32 %v274, 40
        %v280 = vadd.s32 %v274, 48
        %v281 = vadd.s32 %v274, 56
        %v282 = vadd.s32 %v274, 64
        %v283 = vadd.s32 %v274, 72
        %v284 = vadd.s32 %v274, 80
        %v285 = vadd.s32 %v274, 88
        %v286 = vadd.s32 %v274, 96
        %v287 = vadd.s32 %v274, 104
        %v288 = vadd.s32 %v274, 112
        %v289 = vadd.s32 %v274, 120
        %v290 = vadd.s32 %v274, 128
        %v291 = vadd.s32 %v274, 136
        %v292 = vadd.s32 %v274, 144
        %v293 = vadd.s32 %v274, 152
        %v294 = vadd.s32 %v274, 160
        %v295 = vadd.s32 %v274, 168
        %v296 = vadd.s32 %v274, 176
        %v297 = vadd.s32 %v274, 184
        %v298 = vadd.s32 %v274, 192
        %v299 = vadd.s32 %v274, 200
        %v300 = vadd.s32 %v274, 208
        %v301 = vadd.s32 %v274, 216
        %v302 = vadd.s32 %v274, 224
        %v303 = vadd.s32 %v274, 232
        %v304 = vadd.s32 %v274, 240
        %v305 = vadd.s32 %v274, 248
        %v306 = vadd.s32 %v274, 256
        %v307 = vadd.s32 %v274, 264
        %v308 = vadd.s32 %v274, 272
        %v309 = vadd.s32 %v274, 280
        %v310 = vadd.s32 %v274, 288
        %v311 = vadd.s32 %v274, 296
        %v312 = vadd.s32 %v274, 304
        %v313 = vadd.s32 %v274, 312
        %v314 = vadd.s32 %v274, 320
        %v315 = vadd.s32 %v274, 328
        %v316 = vadd.s32 %v274, 336
        %v317 = vadd.s32 %v274, 344
        %v318 = vadd.s32 %v274, 352
        %v319 = vadd.s32 %v274, 360
        %v320 = vadd.s32 %v274, 368
        %v321 = vadd.s32 %v274, 376
        %vm322 = vcmp.lt.s32.totalorder %v274, 0
        %v323 = vsub.s32 0, %v274
        %v324 = vsel %vm322, %v323, %v274
        %v325 = vmul.u32.u64.compose %v324, 2863311531
        %v326 = vextract.low.u32 %v325
        %v327 = vextract.high.u32 %v325
        %v328 = vshrl.u32 %v327, 4
        %v329 = vmul.u32 %v328, 24
        %v330 = vsub.s32 %v324, %v329
        %v331 = vsub.s32 0, %v330
        %v332 = vsel %vm322, %v331, %v330
        %vm333 = vcmp.lt.s32.totalorder %v275, 0
        %v334 = vsub.s32 0, %v275
        %v335 = vsel %vm333, %v334, %v275
        %v336 = vmul.u32.u64.compose %v335, 2863311531
        %v337 = vextract.low.u32 %v336
        %v338 = vextract.high.u32 %v336
        %v339 = vshrl.u32 %v338, 4
        %v340 = vmul.u32 %v339, 24
        %v341 = vsub.s32 %v335, %v340
        %v342 = vsub.s32 0, %v341
        %v343 = vsel %vm333, %v342, %v341
        %vm344 = vcmp.lt.s32.totalorder %v276, 0
        %v345 = vsub.s32 0, %v276
        %v346 = vsel %vm344, %v345, %v276
        %v347 = vmul.u32.u64.compose %v346, 2863311531
        %v348 = vextract.low.u32 %v347
        %v349 = vextract.high.u32 %v347
        %v350 = vshrl.u32 %v349, 4
        %v351 = vmul.u32 %v350, 24
        %v352 = vsub.s32 %v346, %v351
        %v353 = vsub.s32 0, %v352
        %v354 = vsel %vm344, %v353, %v352
        %vm355 = vcmp.lt.s32.totalorder %v277, 0
        %v356 = vsub.s32 0, %v277
        %v357 = vsel %vm355, %v356, %v277
        %v358 = vmul.u32.u64.compose %v357, 2863311531
        %v359 = vextract.low.u32 %v358
        %v360 = vextract.high.u32 %v358
        %v361 = vshrl.u32 %v360, 4
        %v362 = vmul.u32 %v361, 24
        %v363 = vsub.s32 %v357, %v362
        %v364 = vsub.s32 0, %v363
        %v365 = vsel %vm355, %v364, %v363
        %vm366 = vcmp.lt.s32.totalorder %v278, 0
        %v367 = vsub.s32 0, %v278
        %v368 = vsel %vm366, %v367, %v278
        %v369 = vmul.u32.u64.compose %v368, 2863311531
        %v370 = vextract.low.u32 %v369
        %v371 = vextract.high.u32 %v369
        %v372 = vshrl.u32 %v371, 4
        %v373 = vmul.u32 %v372, 24
        %v374 = vsub.s32 %v368, %v373
        %v375 = vsub.s32 0, %v374
        %v376 = vsel %vm366, %v375, %v374
        %vm377 = vcmp.lt.s32.totalorder %v279, 0
        %v378 = vsub.s32 0, %v279
        %v379 = vsel %vm377, %v378, %v279
        %v380 = vmul.u32.u64.compose %v379, 2863311531
        %v381 = vextract.low.u32 %v380
        %v382 = vextract.high.u32 %v380
        %v383 = vshrl.u32 %v382, 4
        %v384 = vmul.u32 %v383, 24
        %v385 = vsub.s32 %v379, %v384
        %v386 = vsub.s32 0, %v385
        %v387 = vsel %vm377, %v386, %v385
        %vm388 = vcmp.lt.s32.totalorder %v280, 0
        %v389 = vsub.s32 0, %v280
        %v390 = vsel %vm388, %v389, %v280
        %v391 = vmul.u32.u64.compose %v390, 2863311531
        %v392 = vextract.low.u32 %v391
        %v393 = vextract.high.u32 %v391
        %v394 = vshrl.u32 %v393, 4
        %v395 = vmul.u32 %v394, 24
        %v396 = vsub.s32 %v390, %v395
        %v397 = vsub.s32 0, %v396
        %v398 = vsel %vm388, %v397, %v396
        %vm399 = vcmp.lt.s32.totalorder %v281, 0
        %v400 = vsub.s32 0, %v281
        %v401 = vsel %vm399, %v400, %v281
        %v402 = vmul.u32.u64.compose %v401, 2863311531
        %v403 = vextract.low.u32 %v402
        %v404 = vextract.high.u32 %v402
        %v405 = vshrl.u32 %v404, 4
        %v406 = vmul.u32 %v405, 24
        %v407 = vsub.s32 %v401, %v406
        %v408 = vsub.s32 0, %v407
        %v409 = vsel %vm399, %v408, %v407
        %vm410 = vcmp.lt.s32.totalorder %v282, 0
        %v411 = vsub.s32 0, %v282
        %v412 = vsel %vm410, %v411, %v282
        %v413 = vmul.u32.u64.compose %v412, 2863311531
        %v414 = vextract.low.u32 %v413
        %v415 = vextract.high.u32 %v413
        %v416 = vshrl.u32 %v415, 4
        %v417 = vmul.u32 %v416, 24
        %v418 = vsub.s32 %v412, %v417
        %v419 = vsub.s32 0, %v418
        %v420 = vsel %vm410, %v419, %v418
        %vm421 = vcmp.lt.s32.totalorder %v283, 0
        %v422 = vsub.s32 0, %v283
        %v423 = vsel %vm421, %v422, %v283
        %v424 = vmul.u32.u64.compose %v423, 2863311531
        %v425 = vextract.low.u32 %v424
        %v426 = vextract.high.u32 %v424
        %v427 = vshrl.u32 %v426, 4
        %v428 = vmul.u32 %v427, 24
        %v429 = vsub.s32 %v423, %v428
        %v430 = vsub.s32 0, %v429
        %v431 = vsel %vm421, %v430, %v429
        %vm432 = vcmp.lt.s32.totalorder %v284, 0
        %v433 = vsub.s32 0, %v284
        %v434 = vsel %vm432, %v433, %v284
        %v435 = vmul.u32.u64.compose %v434, 2863311531
        %v436 = vextract.low.u32 %v435
        %v437 = vextract.high.u32 %v435
        %v438 = vshrl.u32 %v437, 4
        %v439 = vmul.u32 %v438, 24
        %v440 = vsub.s32 %v434, %v439
        %v441 = vsub.s32 0, %v440
        %v442 = vsel %vm432, %v441, %v440
        %vm443 = vcmp.lt.s32.totalorder %v285, 0
        %v444 = vsub.s32 0, %v285
        %v445 = vsel %vm443, %v444, %v285
        %v446 = vmul.u32.u64.compose %v445, 2863311531
        %v447 = vextract.low.u32 %v446
        %v448 = vextract.high.u32 %v446
        %v449 = vshrl.u32 %v448, 4
        %v450 = vmul.u32 %v449, 24
        %v451 = vsub.s32 %v445, %v450
        %v452 = vsub.s32 0, %v451
        %v453 = vsel %vm443, %v452, %v451
        %vm454 = vcmp.lt.s32.totalorder %v286, 0
        %v455 = vsub.s32 0, %v286
        %v456 = vsel %vm454, %v455, %v286
        %v457 = vmul.u32.u64.compose %v456, 2863311531
        %v458 = vextract.low.u32 %v457
        %v459 = vextract.high.u32 %v457
        %v460 = vshrl.u32 %v459, 4
        %v461 = vmul.u32 %v460, 24
        %v462 = vsub.s32 %v456, %v461
        %v463 = vsub.s32 0, %v462
        %v464 = vsel %vm454, %v463, %v462
        %vm465 = vcmp.lt.s32.totalorder %v287, 0
        %v466 = vsub.s32 0, %v287
        %v467 = vsel %vm465, %v466, %v287
        %v468 = vmul.u32.u64.compose %v467, 2863311531
        %v469 = vextract.low.u32 %v468
        %v470 = vextract.high.u32 %v468
        %v471 = vshrl.u32 %v470, 4
        %v472 = vmul.u32 %v471, 24
        %v473 = vsub.s32 %v467, %v472
        %v474 = vsub.s32 0, %v473
        %v475 = vsel %vm465, %v474, %v473
        %vm476 = vcmp.lt.s32.totalorder %v288, 0
        %v477 = vsub.s32 0, %v288
        %v478 = vsel %vm476, %v477, %v288
        %v479 = vmul.u32.u64.compose %v478, 2863311531
        %v480 = vextract.low.u32 %v479
        %v481 = vextract.high.u32 %v479
        %v482 = vshrl.u32 %v481, 4
        %v483 = vmul.u32 %v482, 24
        %v484 = vsub.s32 %v478, %v483
        %v485 = vsub.s32 0, %v484
        %v486 = vsel %vm476, %v485, %v484
        %vm487 = vcmp.lt.s32.totalorder %v289, 0
        %v488 = vsub.s32 0, %v289
        %v489 = vsel %vm487, %v488, %v289
        %v490 = vmul.u32.u64.compose %v489, 2863311531
        %v491 = vextract.low.u32 %v490
        %v492 = vextract.high.u32 %v490
        %v493 = vshrl.u32 %v492, 4
        %v494 = vmul.u32 %v493, 24
        %v495 = vsub.s32 %v489, %v494
        %v496 = vsub.s32 0, %v495
        %v497 = vsel %vm487, %v496, %v495
        %vm498 = vcmp.lt.s32.totalorder %v290, 0
        %v499 = vsub.s32 0, %v290
        %v500 = vsel %vm498, %v499, %v290
        %v501 = vmul.u32.u64.compose %v500, 2863311531
        %v502 = vextract.low.u32 %v501
        %v503 = vextract.high.u32 %v501
        %v504 = vshrl.u32 %v503, 4
        %v505 = vmul.u32 %v504, 24
        %v506 = vsub.s32 %v500, %v505
        %v507 = vsub.s32 0, %v506
        %v508 = vsel %vm498, %v507, %v506
        %vm509 = vcmp.lt.s32.totalorder %v291, 0
        %v510 = vsub.s32 0, %v291
        %v511 = vsel %vm509, %v510, %v291
        %v512 = vmul.u32.u64.compose %v511, 2863311531
        %v513 = vextract.low.u32 %v512
        %v514 = vextract.high.u32 %v512
        %v515 = vshrl.u32 %v514, 4
        %v516 = vmul.u32 %v515, 24
        %v517 = vsub.s32 %v511, %v516
        %v518 = vsub.s32 0, %v517
        %v519 = vsel %vm509, %v518, %v517
        %vm520 = vcmp.lt.s32.totalorder %v292, 0
        %v521 = vsub.s32 0, %v292
        %v522 = vsel %vm520, %v521, %v292
        %v523 = vmul.u32.u64.compose %v522, 2863311531
        %v524 = vextract.low.u32 %v523
        %v525 = vextract.high.u32 %v523
        %v526 = vshrl.u32 %v525, 4
        %v527 = vmul.u32 %v526, 24
        %v528 = vsub.s32 %v522, %v527
        %v529 = vsub.s32 0, %v528
        %v530 = vsel %vm520, %v529, %v528
        %vm531 = vcmp.lt.s32.totalorder %v293, 0
        %v532 = vsub.s32 0, %v293
        %v533 = vsel %vm531, %v532, %v293
        %v534 = vmul.u32.u64.compose %v533, 2863311531
        %v535 = vextract.low.u32 %v534
        %v536 = vextract.high.u32 %v534
        %v537 = vshrl.u32 %v536, 4
        %v538 = vmul.u32 %v537, 24
        %v539 = vsub.s32 %v533, %v538
        %v540 = vsub.s32 0, %v539
        %v541 = vsel %vm531, %v540, %v539
        %vm542 = vcmp.lt.s32.totalorder %v294, 0
        %v543 = vsub.s32 0, %v294
        %v544 = vsel %vm542, %v543, %v294
        %v545 = vmul.u32.u64.compose %v544, 2863311531
        %v546 = vextract.low.u32 %v545
        %v547 = vextract.high.u32 %v545
        %v548 = vshrl.u32 %v547, 4
        %v549 = vmul.u32 %v548, 24
        %v550 = vsub.s32 %v544, %v549
        %v551 = vsub.s32 0, %v550
        %v552 = vsel %vm542, %v551, %v550
        %vm553 = vcmp.lt.s32.totalorder %v295, 0
        %v554 = vsub.s32 0, %v295
        %v555 = vsel %vm553, %v554, %v295
        %v556 = vmul.u32.u64.compose %v555, 2863311531
        %v557 = vextract.low.u32 %v556
        %v558 = vextract.high.u32 %v556
        %v559 = vshrl.u32 %v558, 4
        %v560 = vmul.u32 %v559, 24
        %v561 = vsub.s32 %v555, %v560
        %v562 = vsub.s32 0, %v561
        %v563 = vsel %vm553, %v562, %v561
        %vm564 = vcmp.lt.s32.totalorder %v296, 0
        %v565 = vsub.s32 0, %v296
        %v566 = vsel %vm564, %v565, %v296
        %v567 = vmul.u32.u64.compose %v566, 2863311531
        %v568 = vextract.low.u32 %v567
        %v569 = vextract.high.u32 %v567
        %v570 = vshrl.u32 %v569, 4
        %v571 = vmul.u32 %v570, 24
        %v572 = vsub.s32 %v566, %v571
        %v573 = vsub.s32 0, %v572
        %v574 = vsel %vm564, %v573, %v572
        %vm575 = vcmp.lt.s32.totalorder %v297, 0
        %v576 = vsub.s32 0, %v297
        %v577 = vsel %vm575, %v576, %v297
        %v578 = vmul.u32.u64.compose %v577, 2863311531
        %v579 = vextract.low.u32 %v578
        %v580 = vextract.high.u32 %v578
        %v581 = vshrl.u32 %v580, 4
        %v582 = vmul.u32 %v581, 24
        %v583 = vsub.s32 %v577, %v582
        %v584 = vsub.s32 0, %v583
        %v585 = vsel %vm575, %v584, %v583
        %vm586 = vcmp.lt.s32.totalorder %v298, 0
        %v587 = vsub.s32 0, %v298
        %v588 = vsel %vm586, %v587, %v298
        %v589 = vmul.u32.u64.compose %v588, 2863311531
        %v590 = vextract.low.u32 %v589
        %v591 = vextract.high.u32 %v589
        %v592 = vshrl.u32 %v591, 4
        %v593 = vmul.u32 %v592, 24
        %v594 = vsub.s32 %v588, %v593
        %v595 = vsub.s32 0, %v594
        %v596 = vsel %vm586, %v595, %v594
        %vm597 = vcmp.lt.s32.totalorder %v299, 0
        %v598 = vsub.s32 0, %v299
        %v599 = vsel %vm597, %v598, %v299
        %v600 = vmul.u32.u64.compose %v599, 2863311531
        %v601 = vextract.low.u32 %v600
        %v602 = vextract.high.u32 %v600
        %v603 = vshrl.u32 %v602, 4
        %v604 = vmul.u32 %v603, 24
        %v605 = vsub.s32 %v599, %v604
        %v606 = vsub.s32 0, %v605
        %v607 = vsel %vm597, %v606, %v605
        %vm608 = vcmp.lt.s32.totalorder %v300, 0
        %v609 = vsub.s32 0, %v300
        %v610 = vsel %vm608, %v609, %v300
        %v611 = vmul.u32.u64.compose %v610, 2863311531
        %v612 = vextract.low.u32 %v611
        %v613 = vextract.high.u32 %v611
        %v614 = vshrl.u32 %v613, 4
        %v615 = vmul.u32 %v614, 24
        %v616 = vsub.s32 %v610, %v615
        %v617 = vsub.s32 0, %v616
        %v618 = vsel %vm608, %v617, %v616
        %vm619 = vcmp.lt.s32.totalorder %v301, 0
        %v620 = vsub.s32 0, %v301
        %v621 = vsel %vm619, %v620, %v301
        %v622 = vmul.u32.u64.compose %v621, 2863311531
        %v623 = vextract.low.u32 %v622
        %v624 = vextract.high.u32 %v622
        %v625 = vshrl.u32 %v624, 4
        %v626 = vmul.u32 %v625, 24
        %v627 = vsub.s32 %v621, %v626
        %v628 = vsub.s32 0, %v627
        %v629 = vsel %vm619, %v628, %v627
        %vm630 = vcmp.lt.s32.totalorder %v302, 0
        %v631 = vsub.s32 0, %v302
        %v632 = vsel %vm630, %v631, %v302
        %v633 = vmul.u32.u64.compose %v632, 2863311531
        %v634 = vextract.low.u32 %v633
        %v635 = vextract.high.u32 %v633
        %v636 = vshrl.u32 %v635, 4
        %v637 = vmul.u32 %v636, 24
        %v638 = vsub.s32 %v632, %v637
        %v639 = vsub.s32 0, %v638
        %v640 = vsel %vm630, %v639, %v638
        %vm641 = vcmp.lt.s32.totalorder %v303, 0
        %v642 = vsub.s32 0, %v303
        %v643 = vsel %vm641, %v642, %v303
        %v644 = vmul.u32.u64.compose %v643, 2863311531
        %v645 = vextract.low.u32 %v644
        %v646 = vextract.high.u32 %v644
        %v647 = vshrl.u32 %v646, 4
        %v648 = vmul.u32 %v647, 24
        %v649 = vsub.s32 %v643, %v648
        %v650 = vsub.s32 0, %v649
        %v651 = vsel %vm641, %v650, %v649
        %vm652 = vcmp.lt.s32.totalorder %v304, 0
        %v653 = vsub.s32 0, %v304
        %v654 = vsel %vm652, %v653, %v304
        %v655 = vmul.u32.u64.compose %v654, 2863311531
        %v656 = vextract.low.u32 %v655
        %v657 = vextract.high.u32 %v655
        %v658 = vshrl.u32 %v657, 4
        %v659 = vmul.u32 %v658, 24
        %v660 = vsub.s32 %v654, %v659
        %v661 = vsub.s32 0, %v660
        %v662 = vsel %vm652, %v661, %v660
        %vm663 = vcmp.lt.s32.totalorder %v305, 0
        %v664 = vsub.s32 0, %v305
        %v665 = vsel %vm663, %v664, %v305
        %v666 = vmul.u32.u64.compose %v665, 2863311531
        %v667 = vextract.low.u32 %v666
        %v668 = vextract.high.u32 %v666
        %v669 = vshrl.u32 %v668, 4
        %v670 = vmul.u32 %v669, 24
        %v671 = vsub.s32 %v665, %v670
        %v672 = vsub.s32 0, %v671
        %v673 = vsel %vm663, %v672, %v671
        %vm674 = vcmp.lt.s32.totalorder %v306, 0
        %v675 = vsub.s32 0, %v306
        %v676 = vsel %vm674, %v675, %v306
        %v677 = vmul.u32.u64.compose %v676, 2863311531
        %v678 = vextract.low.u32 %v677
        %v679 = vextract.high.u32 %v677
        %v680 = vshrl.u32 %v679, 4
        %v681 = vmul.u32 %v680, 24
        %v682 = vsub.s32 %v676, %v681
        %v683 = vsub.s32 0, %v682
        %v684 = vsel %vm674, %v683, %v682
        %vm685 = vcmp.lt.s32.totalorder %v307, 0
        %v686 = vsub.s32 0, %v307
        %v687 = vsel %vm685, %v686, %v307
        %v688 = vmul.u32.u64.compose %v687, 2863311531
        %v689 = vextract.low.u32 %v688
        %v690 = vextract.high.u32 %v688
        %v691 = vshrl.u32 %v690, 4
        %v692 = vmul.u32 %v691, 24
        %v693 = vsub.s32 %v687, %v692
        %v694 = vsub.s32 0, %v693
        %v695 = vsel %vm685, %v694, %v693
        %vm696 = vcmp.lt.s32.totalorder %v308, 0
        %v697 = vsub.s32 0, %v308
        %v698 = vsel %vm696, %v697, %v308
        %v699 = vmul.u32.u64.compose %v698, 2863311531
        %v700 = vextract.low.u32 %v699
        %v701 = vextract.high.u32 %v699
        %v702 = vshrl.u32 %v701, 4
        %v703 = vmul.u32 %v702, 24
        %v704 = vsub.s32 %v698, %v703
        %v705 = vsub.s32 0, %v704
        %v706 = vsel %vm696, %v705, %v704
        %vm707 = vcmp.lt.s32.totalorder %v309, 0
        %v708 = vsub.s32 0, %v309
        %v709 = vsel %vm707, %v708, %v309
        %v710 = vmul.u32.u64.compose %v709, 2863311531
        %v711 = vextract.low.u32 %v710
        %v712 = vextract.high.u32 %v710
        %v713 = vshrl.u32 %v712, 4
        %v714 = vmul.u32 %v713, 24
        %v715 = vsub.s32 %v709, %v714
        %v716 = vsub.s32 0, %v715
        %v717 = vsel %vm707, %v716, %v715
        %vm718 = vcmp.lt.s32.totalorder %v310, 0
        %v719 = vsub.s32 0, %v310
        %v720 = vsel %vm718, %v719, %v310
        %v721 = vmul.u32.u64.compose %v720, 2863311531
        %v722 = vextract.low.u32 %v721
        %v723 = vextract.high.u32 %v721
        %v724 = vshrl.u32 %v723, 4
        %v725 = vmul.u32 %v724, 24
        %v726 = vsub.s32 %v720, %v725
        %v727 = vsub.s32 0, %v726
        %v728 = vsel %vm718, %v727, %v726
        %vm729 = vcmp.lt.s32.totalorder %v311, 0
        %v730 = vsub.s32 0, %v311
        %v731 = vsel %vm729, %v730, %v311
        %v732 = vmul.u32.u64.compose %v731, 2863311531
        %v733 = vextract.low.u32 %v732
        %v734 = vextract.high.u32 %v732
        %v735 = vshrl.u32 %v734, 4
        %v736 = vmul.u32 %v735, 24
        %v737 = vsub.s32 %v731, %v736
        %v738 = vsub.s32 0, %v737
        %v739 = vsel %vm729, %v738, %v737
        %vm740 = vcmp.lt.s32.totalorder %v312, 0
        %v741 = vsub.s32 0, %v312
        %v742 = vsel %vm740, %v741, %v312
        %v743 = vmul.u32.u64.compose %v742, 2863311531
        %v744 = vextract.low.u32 %v743
        %v745 = vextract.high.u32 %v743
        %v746 = vshrl.u32 %v745, 4
        %v747 = vmul.u32 %v746, 24
        %v748 = vsub.s32 %v742, %v747
        %v749 = vsub.s32 0, %v748
        %v750 = vsel %vm740, %v749, %v748
        %vm751 = vcmp.lt.s32.totalorder %v313, 0
        %v752 = vsub.s32 0, %v313
        %v753 = vsel %vm751, %v752, %v313
        %v754 = vmul.u32.u64.compose %v753, 2863311531
        %v755 = vextract.low.u32 %v754
        %v756 = vextract.high.u32 %v754
        %v757 = vshrl.u32 %v756, 4
        %v758 = vmul.u32 %v757, 24
        %v759 = vsub.s32 %v753, %v758
        %v760 = vsub.s32 0, %v759
        %v761 = vsel %vm751, %v760, %v759
        %vm762 = vcmp.lt.s32.totalorder %v314, 0
        %v763 = vsub.s32 0, %v314
        %v764 = vsel %vm762, %v763, %v314
        %v765 = vmul.u32.u64.compose %v764, 2863311531
        %v766 = vextract.low.u32 %v765
        %v767 = vextract.high.u32 %v765
        %v768 = vshrl.u32 %v767, 4
        %v769 = vmul.u32 %v768, 24
        %v770 = vsub.s32 %v764, %v769
        %v771 = vsub.s32 0, %v770
        %v772 = vsel %vm762, %v771, %v770
        %vm773 = vcmp.lt.s32.totalorder %v315, 0
        %v774 = vsub.s32 0, %v315
        %v775 = vsel %vm773, %v774, %v315
        %v776 = vmul.u32.u64.compose %v775, 2863311531
        %v777 = vextract.low.u32 %v776
        %v778 = vextract.high.u32 %v776
        %v779 = vshrl.u32 %v778, 4
        %v780 = vmul.u32 %v779, 24
        %v781 = vsub.s32 %v775, %v780
        %v782 = vsub.s32 0, %v781
        %v783 = vsel %vm773, %v782, %v781
        %vm784 = vcmp.lt.s32.totalorder %v316, 0
        %v785 = vsub.s32 0, %v316
        %v786 = vsel %vm784, %v785, %v316
        %v787 = vmul.u32.u64.compose %v786, 2863311531
        %v788 = vextract.low.u32 %v787
        %v789 = vextract.high.u32 %v787
        %v790 = vshrl.u32 %v789, 4
        %v791 = vmul.u32 %v790, 24
        %v792 = vsub.s32 %v786, %v791
        %v793 = vsub.s32 0, %v792
        %v794 = vsel %vm784, %v793, %v792
        %vm795 = vcmp.lt.s32.totalorder %v317, 0
        %v796 = vsub.s32 0, %v317
        %v797 = vsel %vm795, %v796, %v317
        %v798 = vmul.u32.u64.compose %v797, 2863311531
        %v799 = vextract.low.u32 %v798
        %v800 = vextract.high.u32 %v798
        %v801 = vshrl.u32 %v800, 4
        %v802 = vmul.u32 %v801, 24
        %v803 = vsub.s32 %v797, %v802
        %v804 = vsub.s32 0, %v803
        %v805 = vsel %vm795, %v804, %v803
        %vm806 = vcmp.lt.s32.totalorder %v318, 0
        %v807 = vsub.s32 0, %v318
        %v808 = vsel %vm806, %v807, %v318
        %v809 = vmul.u32.u64.compose %v808, 2863311531
        %v810 = vextract.low.u32 %v809
        %v811 = vextract.high.u32 %v809
        %v812 = vshrl.u32 %v811, 4
        %v813 = vmul.u32 %v812, 24
        %v814 = vsub.s32 %v808, %v813
        %v815 = vsub.s32 0, %v814
        %v816 = vsel %vm806, %v815, %v814
        %vm817 = vcmp.lt.s32.totalorder %v319, 0
        %v818 = vsub.s32 0, %v319
        %v819 = vsel %vm817, %v818, %v319
        %v820 = vmul.u32.u64.compose %v819, 2863311531
        %v821 = vextract.low.u32 %v820
        %v822 = vextract.high.u32 %v820
        %v823 = vshrl.u32 %v822, 4
        %v824 = vmul.u32 %v823, 24
        %v825 = vsub.s32 %v819, %v824
        %v826 = vsub.s32 0, %v825
        %v827 = vsel %vm817, %v826, %v825
        %vm828 = vcmp.lt.s32.totalorder %v320, 0
        %v829 = vsub.s32 0, %v320
        %v830 = vsel %vm828, %v829, %v320
        %v831 = vmul.u32.u64.compose %v830, 2863311531
        %v832 = vextract.low.u32 %v831
        %v833 = vextract.high.u32 %v831
        %v834 = vshrl.u32 %v833, 4
        %v835 = vmul.u32 %v834, 24
        %v836 = vsub.s32 %v830, %v835
        %v837 = vsub.s32 0, %v836
        %v838 = vsel %vm828, %v837, %v836
        %vm839 = vcmp.lt.s32.totalorder %v321, 0
        %v840 = vsub.s32 0, %v321
        %v841 = vsel %vm839, %v840, %v321
        %v842 = vmul.u32.u64.compose %v841, 2863311531
        %v843 = vextract.low.u32 %v842
        %v844 = vextract.high.u32 %v842
        %v845 = vshrl.u32 %v844, 4
        %v846 = vmul.u32 %v845, 24
        %v847 = vsub.s32 %v841, %v846
        %v848 = vsub.s32 0, %v847
        %v849 = vsel %vm839, %v848, %v847
        %vm850 = vcmp.ne.s32.totalorder %v332, 0
        %vm851 = vcmp.ne.s32.totalorder %v343, 0
        %vm852 = vcmp.ne.s32.totalorder %v354, 0
        %vm853 = vcmp.ne.s32.totalorder %v365, 0
        %vm854 = vcmp.ne.s32.totalorder %v376, 0
        %vm855 = vcmp.ne.s32.totalorder %v387, 0
        %vm856 = vcmp.ne.s32.totalorder %v398, 0
        %vm857 = vcmp.ne.s32.totalorder %v409, 0
        %vm858 = vcmp.ne.s32.totalorder %v420, 0
        %vm859 = vcmp.ne.s32.totalorder %v431, 0
        %vm860 = vcmp.ne.s32.totalorder %v442, 0
        %vm861 = vcmp.ne.s32.totalorder %v453, 0
        %vm862 = vcmp.ne.s32.totalorder %v464, 0
        %vm863 = vcmp.ne.s32.totalorder %v475, 0
        %vm864 = vcmp.ne.s32.totalorder %v486, 0
        %vm865 = vcmp.ne.s32.totalorder %v497, 0
        %vm866 = vcmp.ne.s32.totalorder %v508, 0
        %vm867 = vcmp.ne.s32.totalorder %v519, 0
        %vm868 = vcmp.ne.s32.totalorder %v530, 0
        %vm869 = vcmp.ne.s32.totalorder %v541, 0
        %vm870 = vcmp.ne.s32.totalorder %v552, 0
        %vm871 = vcmp.ne.s32.totalorder %v563, 0
        %vm872 = vcmp.ne.s32.totalorder %v574, 0
        %vm873 = vcmp.ne.s32.totalorder %v585, 0
        %vm874 = vcmp.ne.s32.totalorder %v596, 0
        %vm875 = vcmp.ne.s32.totalorder %v607, 0
        %vm876 = vcmp.ne.s32.totalorder %v618, 0
        %vm877 = vcmp.ne.s32.totalorder %v629, 0
        %vm878 = vcmp.ne.s32.totalorder %v640, 0
        %vm879 = vcmp.ne.s32.totalorder %v651, 0
        %vm880 = vcmp.ne.s32.totalorder %v662, 0
        %vm881 = vcmp.ne.s32.totalorder %v673, 0
        %vm882 = vcmp.ne.s32.totalorder %v684, 0
        %vm883 = vcmp.ne.s32.totalorder %v695, 0
        %vm884 = vcmp.ne.s32.totalorder %v706, 0
        %vm885 = vcmp.ne.s32.totalorder %v717, 0
        %vm886 = vcmp.ne.s32.totalorder %v728, 0
        %vm887 = vcmp.ne.s32.totalorder %v739, 0
        %vm888 = vcmp.ne.s32.totalorder %v750, 0
        %vm889 = vcmp.ne.s32.totalorder %v761, 0
        %vm890 = vcmp.ne.s32.totalorder %v772, 0
        %vm891 = vcmp.ne.s32.totalorder %v783, 0
        %vm892 = vcmp.ne.s32.totalorder %v794, 0
        %vm893 = vcmp.ne.s32.totalorder %v805, 0
        %vm894 = vcmp.ne.s32.totalorder %v816, 0
        %vm895 = vcmp.ne.s32.totalorder %v827, 0
        %vm896 = vcmp.ne.s32.totalorder %v838, 0
        %vm897 = vcmp.ne.s32.totalorder %v849, 0
        %vm898 = vcmp.lt.s32.totalorder %v332, 0
        %vm899 = vcmp.lt.s32.totalorder %v343, 0
        %vm900 = vcmp.lt.s32.totalorder %v354, 0
        %vm901 = vcmp.lt.s32.totalorder %v365, 0
        %vm902 = vcmp.lt.s32.totalorder %v376, 0
        %vm903 = vcmp.lt.s32.totalorder %v387, 0
        %vm904 = vcmp.lt.s32.totalorder %v398, 0
        %vm905 = vcmp.lt.s32.totalorder %v409, 0
        %vm906 = vcmp.lt.s32.totalorder %v420, 0
        %vm907 = vcmp.lt.s32.totalorder %v431, 0
        %vm908 = vcmp.lt.s32.totalorder %v442, 0
        %vm909 = vcmp.lt.s32.totalorder %v453, 0
        %vm910 = vcmp.lt.s32.totalorder %v464, 0
        %vm911 = vcmp.lt.s32.totalorder %v475, 0
        %vm912 = vcmp.lt.s32.totalorder %v486, 0
        %vm913 = vcmp.lt.s32.totalorder %v497, 0
        %vm914 = vcmp.lt.s32.totalorder %v508, 0
        %vm915 = vcmp.lt.s32.totalorder %v519, 0
        %vm916 = vcmp.lt.s32.totalorder %v530, 0
        %vm917 = vcmp.lt.s32.totalorder %v541, 0
        %vm918 = vcmp.lt.s32.totalorder %v552, 0
        %vm919 = vcmp.lt.s32.totalorder %v563, 0
        %vm920 = vcmp.lt.s32.totalorder %v574, 0
        %vm921 = vcmp.lt.s32.totalorder %v585, 0
        %vm922 = vcmp.lt.s32.totalorder %v596, 0
        %vm923 = vcmp.lt.s32.totalorder %v607, 0
        %vm924 = vcmp.lt.s32.totalorder %v618, 0
        %vm925 = vcmp.lt.s32.totalorder %v629, 0
        %vm926 = vcmp.lt.s32.totalorder %v640, 0
        %vm927 = vcmp.lt.s32.totalorder %v651, 0
        %vm928 = vcmp.lt.s32.totalorder %v662, 0
        %vm929 = vcmp.lt.s32.totalorder %v673, 0
        %vm930 = vcmp.lt.s32.totalorder %v684, 0
        %vm931 = vcmp.lt.s32.totalorder %v695, 0
        %vm932 = vcmp.lt.s32.totalorder %v706, 0
        %vm933 = vcmp.lt.s32.totalorder %v717, 0
        %vm934 = vcmp.lt.s32.totalorder %v728, 0
        %vm935 = vcmp.lt.s32.totalorder %v739, 0
        %vm936 = vcmp.lt.s32.totalorder %v750, 0
        %vm937 = vcmp.lt.s32.totalorder %v761, 0
        %vm938 = vcmp.lt.s32.totalorder %v772, 0
        %vm939 = vcmp.lt.s32.totalorder %v783, 0
        %vm940 = vcmp.lt.s32.totalorder %v794, 0
        %vm941 = vcmp.lt.s32.totalorder %v805, 0
        %vm942 = vcmp.lt.s32.totalorder %v816, 0
        %vm943 = vcmp.lt.s32.totalorder %v827, 0
        %vm944 = vcmp.lt.s32.totalorder %v838, 0
        %vm945 = vcmp.lt.s32.totalorder %v849, 0
        %vm946 = vmand %vm898, %vm850
        %vm947 = vmand %vm899, %vm851
        %vm948 = vmand %vm900, %vm852
        %vm949 = vmand %vm901, %vm853
        %vm950 = vmand %vm902, %vm854
        %vm951 = vmand %vm903, %vm855
        %vm952 = vmand %vm904, %vm856
        %vm953 = vmand %vm905, %vm857
        %vm954 = vmand %vm906, %vm858
        %vm955 = vmand %vm907, %vm859
        %vm956 = vmand %vm908, %vm860
        %vm957 = vmand %vm909, %vm861
        %vm958 = vmand %vm910, %vm862
        %vm959 = vmand %vm911, %vm863
        %vm960 = vmand %vm912, %vm864
        %vm961 = vmand %vm913, %vm865
        %vm962 = vmand %vm914, %vm866
        %vm963 = vmand %vm915, %vm867
        %vm964 = vmand %vm916, %vm868
        %vm965 = vmand %vm917, %vm869
        %vm966 = vmand %vm918, %vm870
        %vm967 = vmand %vm919, %vm871
        %vm968 = vmand %vm920, %vm872
        %vm969 = vmand %vm921, %vm873
        %vm970 = vmand %vm922, %vm874
        %vm971 = vmand %vm923, %vm875
        %vm972 = vmand %vm924, %vm876
        %vm973 = vmand %vm925, %vm877
        %vm974 = vmand %vm926, %vm878
        %vm975 = vmand %vm927, %vm879
        %vm976 = vmand %vm928, %vm880
        %vm977 = vmand %vm929, %vm881
        %vm978 = vmand %vm930, %vm882
        %vm979 = vmand %vm931, %vm883
        %vm980 = vmand %vm932, %vm884
        %vm981 = vmand %vm933, %vm885
        %vm982 = vmand %vm934, %vm886
        %vm983 = vmand %vm935, %vm887
        %vm984 = vmand %vm936, %vm888
        %vm985 = vmand %vm937, %vm889
        %vm986 = vmand %vm938, %vm890
        %vm987 = vmand %vm939, %vm891
        %vm988 = vmand %vm940, %vm892
        %vm989 = vmand %vm941, %vm893
        %vm990 = vmand %vm942, %vm894
        %vm991 = vmand %vm943, %vm895
        %vm992 = vmand %vm944, %vm896
        %vm993 = vmand %vm945, %vm897
        %v994 = vadd.s32 %v332, 24
        %v995 = vadd.s32 %v343, 24
        %v996 = vadd.s32 %v354, 24
        %v997 = vadd.s32 %v365, 24
        %v998 = vadd.s32 %v376, 24
        %v999 = vadd.s32 %v387, 24
        %v1000 = vadd.s32 %v398, 24
        %v1001 = vadd.s32 %v409, 24
        %v1002 = vadd.s32 %v420, 24
        %v1003 = vadd.s32 %v431, 24
        %v1004 = vadd.s32 %v442, 24
        %v1005 = vadd.s32 %v453, 24
        %v1006 = vadd.s32 %v464, 24
        %v1007 = vadd.s32 %v475, 24
        %v1008 = vadd.s32 %v486, 24
        %v1009 = vadd.s32 %v497, 24
        %v1010 = vadd.s32 %v508, 24
        %v1011 = vadd.s32 %v519, 24
        %v1012 = vadd.s32 %v530, 24
        %v1013 = vadd.s32 %v541, 24
        %v1014 = vadd.s32 %v552, 24
        %v1015 = vadd.s32 %v563, 24
        %v1016 = vadd.s32 %v574, 24
        %v1017 = vadd.s32 %v585, 24
        %v1018 = vadd.s32 %v596, 24
        %v1019 = vadd.s32 %v607, 24
        %v1020 = vadd.s32 %v618, 24
        %v1021 = vadd.s32 %v629, 24
        %v1022 = vadd.s32 %v640, 24
        %v1023 = vadd.s32 %v651, 24
        %v1024 = vadd.s32 %v662, 24
        %v1025 = vadd.s32 %v673, 24
        %v1026 = vadd.s32 %v684, 24
        %v1027 = vadd.s32 %v695, 24
        %v1028 = vadd.s32 %v706, 24
        %v1029 = vadd.s32 %v717, 24
        %v1030 = vadd.s32 %v728, 24
        %v1031 = vadd.s32 %v739, 24
        %v1032 = vadd.s32 %v750, 24
        %v1033 = vadd.s32 %v761, 24
        %v1034 = vadd.s32 %v772, 24
        %v1035 = vadd.s32 %v783, 24
        %v1036 = vadd.s32 %v794, 24
        %v1037 = vadd.s32 %v805, 24
        %v1038 = vadd.s32 %v816, 24
        %v1039 = vadd.s32 %v827, 24
        %v1040 = vadd.s32 %v838, 24
        %v1041 = vadd.s32 %v849, 24
        %v1042 = vsel %vm946, %v994, %v332
        %v1043 = vsel %vm947, %v995, %v343
        %v1044 = vsel %vm948, %v996, %v354
        %v1045 = vsel %vm949, %v997, %v365
        %v1046 = vsel %vm950, %v998, %v376
        %v1047 = vsel %vm951, %v999, %v387
        %v1048 = vsel %vm952, %v1000, %v398
        %v1049 = vsel %vm953, %v1001, %v409
        %v1050 = vsel %vm954, %v1002, %v420
        %v1051 = vsel %vm955, %v1003, %v431
        %v1052 = vsel %vm956, %v1004, %v442
        %v1053 = vsel %vm957, %v1005, %v453
        %v1054 = vsel %vm958, %v1006, %v464
        %v1055 = vsel %vm959, %v1007, %v475
        %v1056 = vsel %vm960, %v1008, %v486
        %v1057 = vsel %vm961, %v1009, %v497
        %v1058 = vsel %vm962, %v1010, %v508
        %v1059 = vsel %vm963, %v1011, %v519
        %v1060 = vsel %vm964, %v1012, %v530
        %v1061 = vsel %vm965, %v1013, %v541
        %v1062 = vsel %vm966, %v1014, %v552
        %v1063 = vsel %vm967, %v1015, %v563
        %v1064 = vsel %vm968, %v1016, %v574
        %v1065 = vsel %vm969, %v1017, %v585
        %v1066 = vsel %vm970, %v1018, %v596
        %v1067 = vsel %vm971, %v1019, %v607
        %v1068 = vsel %vm972, %v1020, %v618
        %v1069 = vsel %vm973, %v1021, %v629
        %v1070 = vsel %vm974, %v1022, %v640
        %v1071 = vsel %vm975, %v1023, %v651
        %v1072 = vsel %vm976, %v1024, %v662
        %v1073 = vsel %vm977, %v1025, %v673
        %v1074 = vsel %vm978, %v1026, %v684
        %v1075 = vsel %vm979, %v1027, %v695
        %v1076 = vsel %vm980, %v1028, %v706
        %v1077 = vsel %vm981, %v1029, %v717
        %v1078 = vsel %vm982, %v1030, %v728
        %v1079 = vsel %vm983, %v1031, %v739
        %v1080 = vsel %vm984, %v1032, %v750
        %v1081 = vsel %vm985, %v1033, %v761
        %v1082 = vsel %vm986, %v1034, %v772
        %v1083 = vsel %vm987, %v1035, %v783
        %v1084 = vsel %vm988, %v1036, %v794
        %v1085 = vsel %vm989, %v1037, %v805
        %v1086 = vsel %vm990, %v1038, %v816
        %v1087 = vsel %vm991, %v1039, %v827
        %v1088 = vsel %vm992, %v1040, %v838
        %v1089 = vsel %vm993, %v1041, %v849
        %vm1090 = vcmp.lt.s32.totalorder %v1042, 16
        %vm1091 = vcmp.lt.s32.totalorder %v1043, 16
        %vm1092 = vcmp.lt.s32.totalorder %v1044, 16
        %vm1093 = vcmp.lt.s32.totalorder %v1045, 16
        %vm1094 = vcmp.lt.s32.totalorder %v1046, 16
        %vm1095 = vcmp.lt.s32.totalorder %v1047, 16
        %vm1096 = vcmp.lt.s32.totalorder %v1048, 16
        %vm1097 = vcmp.lt.s32.totalorder %v1049, 16
        %vm1098 = vcmp.lt.s32.totalorder %v1050, 16
        %vm1099 = vcmp.lt.s32.totalorder %v1051, 16
        %vm1100 = vcmp.lt.s32.totalorder %v1052, 16
        %vm1101 = vcmp.lt.s32.totalorder %v1053, 16
        %vm1102 = vcmp.lt.s32.totalorder %v1054, 16
        %vm1103 = vcmp.lt.s32.totalorder %v1055, 16
        %vm1104 = vcmp.lt.s32.totalorder %v1056, 16
        %vm1105 = vcmp.lt.s32.totalorder %v1057, 16
        %vm1106 = vcmp.lt.s32.totalorder %v1058, 16
        %vm1107 = vcmp.lt.s32.totalorder %v1059, 16
        %vm1108 = vcmp.lt.s32.totalorder %v1060, 16
        %vm1109 = vcmp.lt.s32.totalorder %v1061, 16
        %vm1110 = vcmp.lt.s32.totalorder %v1062, 16
        %vm1111 = vcmp.lt.s32.totalorder %v1063, 16
        %vm1112 = vcmp.lt.s32.totalorder %v1064, 16
        %vm1113 = vcmp.lt.s32.totalorder %v1065, 16
        %vm1114 = vcmp.lt.s32.totalorder %v1066, 16
        %vm1115 = vcmp.lt.s32.totalorder %v1067, 16
        %vm1116 = vcmp.lt.s32.totalorder %v1068, 16
        %vm1117 = vcmp.lt.s32.totalorder %v1069, 16
        %vm1118 = vcmp.lt.s32.totalorder %v1070, 16
        %vm1119 = vcmp.lt.s32.totalorder %v1071, 16
        %vm1120 = vcmp.lt.s32.totalorder %v1072, 16
        %vm1121 = vcmp.lt.s32.totalorder %v1073, 16
        %vm1122 = vcmp.lt.s32.totalorder %v1074, 16
        %vm1123 = vcmp.lt.s32.totalorder %v1075, 16
        %vm1124 = vcmp.lt.s32.totalorder %v1076, 16
        %vm1125 = vcmp.lt.s32.totalorder %v1077, 16
        %vm1126 = vcmp.lt.s32.totalorder %v1078, 16
        %vm1127 = vcmp.lt.s32.totalorder %v1079, 16
        %vm1128 = vcmp.lt.s32.totalorder %v1080, 16
        %vm1129 = vcmp.lt.s32.totalorder %v1081, 16
        %vm1130 = vcmp.lt.s32.totalorder %v1082, 16
        %vm1131 = vcmp.lt.s32.totalorder %v1083, 16
        %vm1132 = vcmp.lt.s32.totalorder %v1084, 16
        %vm1133 = vcmp.lt.s32.totalorder %v1085, 16
        %vm1134 = vcmp.lt.s32.totalorder %v1086, 16
        %vm1135 = vcmp.lt.s32.totalorder %v1087, 16
        %vm1136 = vcmp.lt.s32.totalorder %v1088, 16
        %vm1137 = vcmp.lt.s32.totalorder %v1089, 16
        %v1138 = vld [vmem:[%s237] sm:$0xf]
        %v1139 = vld [vmem:[%s237 + $0x4] sm:$0xf]
        %v1140 = vld [vmem:[%s237 + $0x8] sm:$0xf]
        %v1141 = vld [vmem:[%s237 + $0xc] sm:$0xf]
        %v1142 = vld [vmem:[%s237 + $0x10] sm:$0xf]
        %v1143 = vld [vmem:[%s237 + $0x14] sm:$0xf]
        %v1144 = vld [vmem:[%s237 + $0x18] sm:$0xf]
        %v1145 = vld [vmem:[%s237 + $0x1c] sm:$0xf]
        %v1146 = vld [vmem:[%s237 + $0x20] sm:$0xf]
        %v1147 = vld [vmem:[%s237 + $0x24] sm:$0xf]
        %v1148 = vld [vmem:[%s237 + $0x28] sm:$0xf]
        %v1149 = vld [vmem:[%s237 + $0x2c] sm:$0xf]
        %v1150 = vld [vmem:[%s237 + $0x30] sm:$0xf]
        %v1151 = vld [vmem:[%s237 + $0x34] sm:$0xf]
        %v1152 = vld [vmem:[%s237 + $0x38] sm:$0xf]
        %v1153 = vld [vmem:[%s237 + $0x3c] sm:$0xf]
        %v1154 = vld [vmem:[%s237 + $0x40] sm:$0xf]
        %v1155 = vld [vmem:[%s237 + $0x44] sm:$0xf]
        %v1156 = vld [vmem:[%s237 + $0x48] sm:$0xf]
        %v1157 = vld [vmem:[%s237 + $0x4c] sm:$0xf]
        %v1158 = vld [vmem:[%s237 + $0x50] sm:$0xf]
        %v1159 = vld [vmem:[%s237 + $0x54] sm:$0xf]
        %v1160 = vld [vmem:[%s237 + $0x58] sm:$0xf]
        %v1161 = vld [vmem:[%s237 + $0x5c] sm:$0xf]
        %v1162 = vld [vmem:[%s237 + $0x60] sm:$0xf]
        %v1163 = vld [vmem:[%s237 + $0x64] sm:$0xf]
        %v1164 = vld [vmem:[%s237 + $0x68] sm:$0xf]
        %v1165 = vld [vmem:[%s237 + $0x6c] sm:$0xf]
        %v1166 = vld [vmem:[%s237 + $0x70] sm:$0xf]
        %v1167 = vld [vmem:[%s237 + $0x74] sm:$0xf]
        %v1168 = vld [vmem:[%s237 + $0x78] sm:$0xf]
        %v1169 = vld [vmem:[%s237 + $0x7c] sm:$0xf]
        %v1170 = vld [vmem:[%s237 + $0x80] sm:$0xf]
        %v1171 = vld [vmem:[%s237 + $0x84] sm:$0xf]
        %v1172 = vld [vmem:[%s237 + $0x88] sm:$0xf]
        %v1173 = vld [vmem:[%s237 + $0x8c] sm:$0xf]
        %v1174 = vld [vmem:[%s237 + $0x90] sm:$0xf]
        %v1175 = vld [vmem:[%s237 + $0x94] sm:$0xf]
        %v1176 = vld [vmem:[%s237 + $0x98] sm:$0xf]
        %v1177 = vld [vmem:[%s237 + $0x9c] sm:$0xf]
        %v1178 = vld [vmem:[%s237 + $0xa0] sm:$0xf]
        %v1179 = vld [vmem:[%s237 + $0xa4] sm:$0xf]
        %v1180 = vld [vmem:[%s237 + $0xa8] sm:$0xf]
        %v1181 = vld [vmem:[%s237 + $0xac] sm:$0xf]
        %v1182 = vld [vmem:[%s237 + $0xb0] sm:$0xf]
        %v1183 = vld [vmem:[%s237 + $0xb4] sm:$0xf]
        %v1184 = vld [vmem:[%s237 + $0xb8] sm:$0xf]
        %v1185 = vld [vmem:[%s237 + $0xbc] sm:$0xf]
        %v1234 = vunpack.c.l.b16 %v1138
        %v1235 = vunpack.c.l.b16 %v1139
        %v1236 = vunpack.c.l.b16 %v1140
        %v1237 = vunpack.c.l.b16 %v1141
        %v1238 = vunpack.c.l.b16 %v1142
        %v1239 = vunpack.c.l.b16 %v1143
        %v1240 = vunpack.c.l.b16 %v1144
        %v1241 = vunpack.c.l.b16 %v1145
        %v1242 = vunpack.c.l.b16 %v1146
        %v1243 = vunpack.c.l.b16 %v1147
        %v1244 = vunpack.c.l.b16 %v1148
        %v1245 = vunpack.c.l.b16 %v1149
        %v1246 = vunpack.c.l.b16 %v1150
        %v1247 = vunpack.c.l.b16 %v1151
        %v1248 = vunpack.c.l.b16 %v1152
        %v1249 = vunpack.c.l.b16 %v1153
        %v1250 = vunpack.c.l.b16 %v1154
        %v1251 = vunpack.c.l.b16 %v1155
        %v1252 = vunpack.c.l.b16 %v1156
        %v1253 = vunpack.c.l.b16 %v1157
        %v1254 = vunpack.c.l.b16 %v1158
        %v1255 = vunpack.c.l.b16 %v1159
        %v1256 = vunpack.c.l.b16 %v1160
        %v1257 = vunpack.c.l.b16 %v1161
        %v1258 = vunpack.c.l.b16 %v1162
        %v1259 = vunpack.c.l.b16 %v1163
        %v1260 = vunpack.c.l.b16 %v1164
        %v1261 = vunpack.c.l.b16 %v1165
        %v1262 = vunpack.c.l.b16 %v1166
        %v1263 = vunpack.c.l.b16 %v1167
        %v1264 = vunpack.c.l.b16 %v1168
        %v1265 = vunpack.c.l.b16 %v1169
        %v1266 = vunpack.c.l.b16 %v1170
        %v1267 = vunpack.c.l.b16 %v1171
        %v1268 = vunpack.c.l.b16 %v1172
        %v1269 = vunpack.c.l.b16 %v1173
        %v1270 = vunpack.c.l.b16 %v1174
        %v1271 = vunpack.c.l.b16 %v1175
        %v1272 = vunpack.c.l.b16 %v1176
        %v1273 = vunpack.c.l.b16 %v1177
        %v1274 = vunpack.c.l.b16 %v1178
        %v1275 = vunpack.c.l.b16 %v1179
        %v1276 = vunpack.c.l.b16 %v1180
        %v1277 = vunpack.c.l.b16 %v1181
        %v1278 = vunpack.c.l.b16 %v1182
        %v1279 = vunpack.c.l.b16 %v1183
        %v1280 = vunpack.c.l.b16 %v1184
        %v1281 = vunpack.c.l.b16 %v1185
        %v1282 = vpack.c.b16 %v1235, %v1234
        %v1283 = vpack.c.b16 %v1237, %v1236
        %v1284 = vpack.c.b16 %v1239, %v1238
        %v1285 = vpack.c.b16 %v1241, %v1240
        %v1286 = vpack.c.b16 %v1243, %v1242
        %v1287 = vpack.c.b16 %v1245, %v1244
        %v1288 = vpack.c.b16 %v1247, %v1246
        %v1289 = vpack.c.b16 %v1249, %v1248
        %v1290 = vpack.c.b16 %v1251, %v1250
        %v1291 = vpack.c.b16 %v1253, %v1252
        %v1292 = vpack.c.b16 %v1255, %v1254
        %v1293 = vpack.c.b16 %v1257, %v1256
        %v1294 = vpack.c.b16 %v1259, %v1258
        %v1295 = vpack.c.b16 %v1261, %v1260
        %v1296 = vpack.c.b16 %v1263, %v1262
        %v1297 = vpack.c.b16 %v1265, %v1264
        %v1298 = vpack.c.b16 %v1267, %v1266
        %v1299 = vpack.c.b16 %v1269, %v1268
        %v1300 = vpack.c.b16 %v1271, %v1270
        %v1301 = vpack.c.b16 %v1273, %v1272
        %v1302 = vpack.c.b16 %v1275, %v1274
        %v1303 = vpack.c.b16 %v1277, %v1276
        %v1304 = vpack.c.b16 %v1279, %v1278
        %v1305 = vpack.c.b16 %v1281, %v1280
        %1330 = vst [vmem:[#allocation3] sm:$0xff] %v1282
        %1331 = vst [vmem:[#allocation3 + $0x48] sm:$0xff] %v1283
        %1332 = vst [vmem:[#allocation3 + $0x90] sm:$0xff] %v1284
        %1333 = vst [vmem:[#allocation3 + $0xd8] sm:$0xff] %v1285
        %1334 = vst [vmem:[#allocation3 + $0x120] sm:$0xff] %v1286
        %1335 = vst [vmem:[#allocation3 + $0x168] sm:$0xff] %v1287
        %1336 = vst [vmem:[#allocation3 + $0x1b0] sm:$0xff] %v1288
        %1337 = vst [vmem:[#allocation3 + $0x1f8] sm:$0xff] %v1289
        %1338 = vst [vmem:[#allocation3 + $0x240] sm:$0xff] %v1290
        %1339 = vst [vmem:[#allocation3 + $0x288] sm:$0xff] %v1291
        %1340 = vst [vmem:[#allocation3 + $0x2d0] sm:$0xff] %v1292
        %1341 = vst [vmem:[#allocation3 + $0x318] sm:$0xff] %v1293
        %1342 = vst [vmem:[#allocation3 + $0x360] sm:$0xff] %v1294
        %1343 = vst [vmem:[#allocation3 + $0x3a8] sm:$0xff] %v1295
        %1344 = vst [vmem:[#allocation3 + $0x3f0] sm:$0xff] %v1296
        %1345 = vst [vmem:[#allocation3 + $0x438] sm:$0xff] %v1297
        %1346 = vst [vmem:[#allocation3 + $0x480] sm:$0xff] %v1298
        %1347 = vst [vmem:[#allocation3 + $0x4c8] sm:$0xff] %v1299
        %1348 = vst [vmem:[#allocation3 + $0x510] sm:$0xff] %v1300
        %1349 = vst [vmem:[#allocation3 + $0x558] sm:$0xff] %v1301
        %1350 = vst [vmem:[#allocation3 + $0x5a0] sm:$0xff] %v1302
        %1351 = vst [vmem:[#allocation3 + $0x5e8] sm:$0xff] %v1303
        %1352 = vst [vmem:[#allocation3 + $0x630] sm:$0xff] %v1304
        %1353 = vst [vmem:[#allocation3 + $0x678] sm:$0xff] %v1305
        %v1354 = vld [vmem:[%s237] sm:$0xf]
        %v1355 = vld [vmem:[%s237 + $0x4] sm:$0xf]
        %v1356 = vld [vmem:[%s237 + $0x8] sm:$0xf]
        %v1357 = vld [vmem:[%s237 + $0xc] sm:$0xf]
        %v1358 = vld [vmem:[%s237 + $0x10] sm:$0xf]
        %v1359 = vld [vmem:[%s237 + $0x14] sm:$0xf]
        %v1360 = vld [vmem:[%s237 + $0x18] sm:$0xf]
        %v1361 = vld [vmem:[%s237 + $0x1c] sm:$0xf]
        %v1362 = vld [vmem:[%s237 + $0x20] sm:$0xf]
        %v1363 = vld [vmem:[%s237 + $0x24] sm:$0xf]
        %v1364 = vld [vmem:[%s237 + $0x28] sm:$0xf]
        %v1365 = vld [vmem:[%s237 + $0x2c] sm:$0xf]
        %v1366 = vld [vmem:[%s237 + $0x30] sm:$0xf]
        %v1367 = vld [vmem:[%s237 + $0x34] sm:$0xf]
        %v1368 = vld [vmem:[%s237 + $0x38] sm:$0xf]
        %v1369 = vld [vmem:[%s237 + $0x3c] sm:$0xf]
        %v1370 = vld [vmem:[%s237 + $0x40] sm:$0xf]
        %v1371 = vld [vmem:[%s237 + $0x44] sm:$0xf]
        %v1372 = vld [vmem:[%s237 + $0x48] sm:$0xf]
        %v1373 = vld [vmem:[%s237 + $0x4c] sm:$0xf]
        %v1374 = vld [vmem:[%s237 + $0x50] sm:$0xf]
        %v1375 = vld [vmem:[%s237 + $0x54] sm:$0xf]
        %v1376 = vld [vmem:[%s237 + $0x58] sm:$0xf]
        %v1377 = vld [vmem:[%s237 + $0x5c] sm:$0xf]
        %v1378 = vld [vmem:[%s237 + $0x60] sm:$0xf]
        %v1379 = vld [vmem:[%s237 + $0x64] sm:$0xf]
        %v1380 = vld [vmem:[%s237 + $0x68] sm:$0xf]
        %v1381 = vld [vmem:[%s237 + $0x6c] sm:$0xf]
        %v1382 = vld [vmem:[%s237 + $0x70] sm:$0xf]
        %v1383 = vld [vmem:[%s237 + $0x74] sm:$0xf]
        %v1384 = vld [vmem:[%s237 + $0x78] sm:$0xf]
        %v1385 = vld [vmem:[%s237 + $0x7c] sm:$0xf]
        %v1386 = vld [vmem:[%s237 + $0x80] sm:$0xf]
        %v1387 = vld [vmem:[%s237 + $0x84] sm:$0xf]
        %v1388 = vld [vmem:[%s237 + $0x88] sm:$0xf]
        %v1389 = vld [vmem:[%s237 + $0x8c] sm:$0xf]
        %v1390 = vld [vmem:[%s237 + $0x90] sm:$0xf]
        %v1391 = vld [vmem:[%s237 + $0x94] sm:$0xf]
        %v1392 = vld [vmem:[%s237 + $0x98] sm:$0xf]
        %v1393 = vld [vmem:[%s237 + $0x9c] sm:$0xf]
        %v1394 = vld [vmem:[%s237 + $0xa0] sm:$0xf]
        %v1395 = vld [vmem:[%s237 + $0xa4] sm:$0xf]
        %v1396 = vld [vmem:[%s237 + $0xa8] sm:$0xf]
        %v1397 = vld [vmem:[%s237 + $0xac] sm:$0xf]
        %v1398 = vld [vmem:[%s237 + $0xb0] sm:$0xf]
        %v1399 = vld [vmem:[%s237 + $0xb4] sm:$0xf]
        %v1400 = vld [vmem:[%s237 + $0xb8] sm:$0xf]
        %v1401 = vld [vmem:[%s237 + $0xbc] sm:$0xf]
        %v1402 = vld [vmem:[%s237 + $0xc0] sm:$0x1]
        %v1452 = vunpack.c.l.b16 %v1354
        %v1453 = vunpack.c.l.b16 %v1355
        %v1454 = vunpack.c.l.b16 %v1356
        %v1455 = vunpack.c.l.b16 %v1357
        %v1456 = vunpack.c.l.b16 %v1358
        %v1457 = vunpack.c.l.b16 %v1359
        %v1458 = vunpack.c.l.b16 %v1360
        %v1459 = vunpack.c.l.b16 %v1361
        %v1460 = vunpack.c.l.b16 %v1362
        %v1461 = vunpack.c.l.b16 %v1363
        %v1462 = vunpack.c.l.b16 %v1364
        %v1463 = vunpack.c.l.b16 %v1365
        %v1464 = vunpack.c.l.b16 %v1366
        %v1465 = vunpack.c.l.b16 %v1367
        %v1466 = vunpack.c.l.b16 %v1368
        %v1467 = vunpack.c.l.b16 %v1369
        %v1468 = vunpack.c.l.b16 %v1370
        %v1469 = vunpack.c.l.b16 %v1371
        %v1470 = vunpack.c.l.b16 %v1372
        %v1471 = vunpack.c.l.b16 %v1373
        %v1472 = vunpack.c.l.b16 %v1374
        %v1473 = vunpack.c.l.b16 %v1375
        %v1474 = vunpack.c.l.b16 %v1376
        %v1475 = vunpack.c.l.b16 %v1377
        %v1476 = vunpack.c.l.b16 %v1378
        %v1477 = vunpack.c.l.b16 %v1379
        %v1478 = vunpack.c.l.b16 %v1380
        %v1479 = vunpack.c.l.b16 %v1381
        %v1480 = vunpack.c.l.b16 %v1382
        %v1481 = vunpack.c.l.b16 %v1383
        %v1482 = vunpack.c.l.b16 %v1384
        %v1483 = vunpack.c.l.b16 %v1385
        %v1484 = vunpack.c.l.b16 %v1386
        %v1485 = vunpack.c.l.b16 %v1387
        %v1486 = vunpack.c.l.b16 %v1388
        %v1487 = vunpack.c.l.b16 %v1389
        %v1488 = vunpack.c.l.b16 %v1390
        %v1489 = vunpack.c.l.b16 %v1391
        %v1490 = vunpack.c.l.b16 %v1392
        %v1491 = vunpack.c.l.b16 %v1393
        %v1492 = vunpack.c.l.b16 %v1394
        %v1493 = vunpack.c.l.b16 %v1395
        %v1494 = vunpack.c.l.b16 %v1396
        %v1495 = vunpack.c.l.b16 %v1397
        %v1496 = vunpack.c.l.b16 %v1398
        %v1497 = vunpack.c.l.b16 %v1399
        %v1498 = vunpack.c.l.b16 %v1400
        %v1499 = vunpack.c.l.b16 %v1401
        %v1500 = vunpack.c.l.b16 %v1402
        %v1501 = vpack.c.b16 %v1453, %v1452
        %v1502 = vpack.c.b16 %v1455, %v1454
        %v1503 = vpack.c.b16 %v1457, %v1456
        %v1504 = vpack.c.b16 %v1459, %v1458
        %v1505 = vpack.c.b16 %v1461, %v1460
        %v1506 = vpack.c.b16 %v1463, %v1462
        %v1507 = vpack.c.b16 %v1465, %v1464
        %v1508 = vpack.c.b16 %v1467, %v1466
        %v1509 = vpack.c.b16 %v1469, %v1468
        %v1510 = vpack.c.b16 %v1471, %v1470
        %v1511 = vpack.c.b16 %v1473, %v1472
        %v1512 = vpack.c.b16 %v1475, %v1474
        %v1513 = vpack.c.b16 %v1477, %v1476
        %v1514 = vpack.c.b16 %v1479, %v1478
        %v1515 = vpack.c.b16 %v1481, %v1480
        %v1516 = vpack.c.b16 %v1483, %v1482
        %v1517 = vpack.c.b16 %v1485, %v1484
        %v1518 = vpack.c.b16 %v1487, %v1486
        %v1519 = vpack.c.b16 %v1489, %v1488
        %v1520 = vpack.c.b16 %v1491, %v1490
        %v1521 = vpack.c.b16 %v1493, %v1492
        %v1522 = vpack.c.b16 %v1495, %v1494
        %v1523 = vpack.c.b16 %v1497, %v1496
        %v1524 = vpack.c.b16 %v1499, %v1498
        %v1525 = vpack.c.b16 %v1500, %v1500
        %vm1526 = vsmask.f32 7424
        %v1528 = vshrl.u32 %v1501, 16
        %v1530 = vshll.u32 %v1501, 16
        %v1532 = vrot.slane %v1530, 1
        %v1533 = vor.u32 %v1528, %v1532
        %v1535 = vshll.u32 %v1502, 16
        %v1537 = vrot.slane %v1535, 1
        %v1538 = vsel %vm1526, %v1533, %v1537
        %v1539 = vshrl.u32 %v1502, 16
        %v1541 = vor.u32 %v1539, %v1537
        %v1543 = vshll.u32 %v1503, 16
        %v1545 = vrot.slane %v1543, 1
        %v1546 = vsel %vm1526, %v1541, %v1545
        %v1547 = vshrl.u32 %v1503, 16
        %v1549 = vor.u32 %v1547, %v1545
        %v1551 = vshll.u32 %v1504, 16
        %v1553 = vrot.slane %v1551, 1
        %v1554 = vsel %vm1526, %v1549, %v1553
        %v1555 = vshrl.u32 %v1504, 16
        %v1557 = vor.u32 %v1555, %v1553
        %v1559 = vshll.u32 %v1505, 16
        %v1561 = vrot.slane %v1559, 1
        %v1562 = vsel %vm1526, %v1557, %v1561
        %v1563 = vshrl.u32 %v1505, 16
        %v1565 = vor.u32 %v1563, %v1561
        %v1567 = vshll.u32 %v1506, 16
        %v1569 = vrot.slane %v1567, 1
        %v1570 = vsel %vm1526, %v1565, %v1569
        %v1571 = vshrl.u32 %v1506, 16
        %v1573 = vor.u32 %v1571, %v1569
        %v1575 = vshll.u32 %v1507, 16
        %v1577 = vrot.slane %v1575, 1
        %v1578 = vsel %vm1526, %v1573, %v1577
        %v1579 = vshrl.u32 %v1507, 16
        %v1581 = vor.u32 %v1579, %v1577
        %v1583 = vshll.u32 %v1508, 16
        %v1585 = vrot.slane %v1583, 1
        %v1586 = vsel %vm1526, %v1581, %v1585
        %v1587 = vshrl.u32 %v1508, 16
        %v1589 = vor.u32 %v1587, %v1585
        %v1591 = vshll.u32 %v1509, 16
        %v1593 = vrot.slane %v1591, 1
        %v1594 = vsel %vm1526, %v1589, %v1593
        %v1595 = vshrl.u32 %v1509, 16
        %v1597 = vor.u32 %v1595, %v1593
        %v1599 = vshll.u32 %v1510, 16
        %v1601 = vrot.slane %v1599, 1
        %v1602 = vsel %vm1526, %v1597, %v1601
        %v1603 = vshrl.u32 %v1510, 16
        %v1605 = vor.u32 %v1603, %v1601
        %v1607 = vshll.u32 %v1511, 16
        %v1609 = vrot.slane %v1607, 1
        %v1610 = vsel %vm1526, %v1605, %v1609
        %v1611 = vshrl.u32 %v1511, 16
        %v1613 = vor.u32 %v1611, %v1609
        %v1615 = vshll.u32 %v1512, 16
        %v1617 = vrot.slane %v1615, 1
        %v1618 = vsel %vm1526, %v1613, %v1617
        %v1619 = vshrl.u32 %v1512, 16
        %v1621 = vor.u32 %v1619, %v1617
        %v1623 = vshll.u32 %v1513, 16
        %v1625 = vrot.slane %v1623, 1
        %v1626 = vsel %vm1526, %v1621, %v1625
        %v1627 = vshrl.u32 %v1513, 16
        %v1629 = vor.u32 %v1627, %v1625
        %v1631 = vshll.u32 %v1514, 16
        %v1633 = vrot.slane %v1631, 1
        %v1634 = vsel %vm1526, %v1629, %v1633
        %v1635 = vshrl.u32 %v1514, 16
        %v1637 = vor.u32 %v1635, %v1633
        %v1639 = vshll.u32 %v1515, 16
        %v1641 = vrot.slane %v1639, 1
        %v1642 = vsel %vm1526, %v1637, %v1641
        %v1643 = vshrl.u32 %v1515, 16
        %v1645 = vor.u32 %v1643, %v1641
        %v1647 = vshll.u32 %v1516, 16
        %v1649 = vrot.slane %v1647, 1
        %v1650 = vsel %vm1526, %v1645, %v1649
        %v1651 = vshrl.u32 %v1516, 16
        %v1653 = vor.u32 %v1651, %v1649
        %v1655 = vshll.u32 %v1517, 16
        %v1657 = vrot.slane %v1655, 1
        %v1658 = vsel %vm1526, %v1653, %v1657
        %v1659 = vshrl.u32 %v1517, 16
        %v1661 = vor.u32 %v1659, %v1657
        %v1663 = vshll.u32 %v1518, 16
        %v1665 = vrot.slane %v1663, 1
        %v1666 = vsel %vm1526, %v1661, %v1665
        %v1667 = vshrl.u32 %v1518, 16
        %v1669 = vor.u32 %v1667, %v1665
        %v1671 = vshll.u32 %v1519, 16
        %v1673 = vrot.slane %v1671, 1
        %v1674 = vsel %vm1526, %v1669, %v1673
        %v1675 = vshrl.u32 %v1519, 16
        %v1677 = vor.u32 %v1675, %v1673
        %v1679 = vshll.u32 %v1520, 16
        %v1681 = vrot.slane %v1679, 1
        %v1682 = vsel %vm1526, %v1677, %v1681
        %v1683 = vshrl.u32 %v1520, 16
        %v1685 = vor.u32 %v1683, %v1681
        %v1687 = vshll.u32 %v1521, 16
        %v1689 = vrot.slane %v1687, 1
        %v1690 = vsel %vm1526, %v1685, %v1689
        %v1691 = vshrl.u32 %v1521, 16
        %v1693 = vor.u32 %v1691, %v1689
        %v1695 = vshll.u32 %v1522, 16
        %v1697 = vrot.slane %v1695, 1
        %v1698 = vsel %vm1526, %v1693, %v1697
        %v1699 = vshrl.u32 %v1522, 16
        %v1701 = vor.u32 %v1699, %v1697
        %v1703 = vshll.u32 %v1523, 16
        %v1705 = vrot.slane %v1703, 1
        %v1706 = vsel %vm1526, %v1701, %v1705
        %v1707 = vshrl.u32 %v1523, 16
        %v1709 = vor.u32 %v1707, %v1705
        %v1711 = vshll.u32 %v1524, 16
        %v1713 = vrot.slane %v1711, 1
        %v1714 = vsel %vm1526, %v1709, %v1713
        %v1715 = vshrl.u32 %v1524, 16
        %v1717 = vor.u32 %v1715, %v1713
        %v1719 = vshll.u32 %v1525, 16
        %v1721 = vrot.slane %v1719, 1
        %v1722 = vsel %vm1526, %v1717, %v1721
        %1747 = vst [vmem:[#allocation3 + $0x8] sm:$0xff] %v1538
        %1748 = vst [vmem:[#allocation3 + $0x50] sm:$0xff] %v1546
        %1749 = vst [vmem:[#allocation3 + $0x98] sm:$0xff] %v1554
        %1750 = vst [vmem:[#allocation3 + $0xe0] sm:$0xff] %v1562
        %1751 = vst [vmem:[#allocation3 + $0x128] sm:$0xff] %v1570
        %1752 = vst [vmem:[#allocation3 + $0x170] sm:$0xff] %v1578
        %1753 = vst [vmem:[#allocation3 + $0x1b8] sm:$0xff] %v1586
        %1754 = vst [vmem:[#allocation3 + $0x200] sm:$0xff] %v1594
        %1755 = vst [vmem:[#allocation3 + $0x248] sm:$0xff] %v1602
        %1756 = vst [vmem:[#allocation3 + $0x290] sm:$0xff] %v1610
        %1757 = vst [vmem:[#allocation3 + $0x2d8] sm:$0xff] %v1618
        %1758 = vst [vmem:[#allocation3 + $0x320] sm:$0xff] %v1626
        %1759 = vst [vmem:[#allocation3 + $0x368] sm:$0xff] %v1634
        %1760 = vst [vmem:[#allocation3 + $0x3b0] sm:$0xff] %v1642
        %1761 = vst [vmem:[#allocation3 + $0x3f8] sm:$0xff] %v1650
        %1762 = vst [vmem:[#allocation3 + $0x440] sm:$0xff] %v1658
        %1763 = vst [vmem:[#allocation3 + $0x488] sm:$0xff] %v1666
        %1764 = vst [vmem:[#allocation3 + $0x4d0] sm:$0xff] %v1674
        %1765 = vst [vmem:[#allocation3 + $0x518] sm:$0xff] %v1682
        %1766 = vst [vmem:[#allocation3 + $0x560] sm:$0xff] %v1690
        %1767 = vst [vmem:[#allocation3 + $0x5a8] sm:$0xff] %v1698
        %1768 = vst [vmem:[#allocation3 + $0x5f0] sm:$0xff] %v1706
        %1769 = vst [vmem:[#allocation3 + $0x638] sm:$0xff] %v1714
        %1770 = vst [vmem:[#allocation3 + $0x680] sm:$0xff] %v1722
        %v1771 = vld [vmem:[%s237] sm:$0xe]
        %v1772 = vld [vmem:[%s237 + $0x4] sm:$0xf]
        %v1773 = vld [vmem:[%s237 + $0x8] sm:$0xf]
        %v1774 = vld [vmem:[%s237 + $0xc] sm:$0xf]
        %v1775 = vld [vmem:[%s237 + $0x10] sm:$0xf]
        %v1776 = vld [vmem:[%s237 + $0x14] sm:$0xf]
        %v1777 = vld [vmem:[%s237 + $0x18] sm:$0xf]
        %v1778 = vld [vmem:[%s237 + $0x1c] sm:$0xf]
        %v1779 = vld [vmem:[%s237 + $0x20] sm:$0xf]
        %v1780 = vld [vmem:[%s237 + $0x24] sm:$0xf]
        %v1781 = vld [vmem:[%s237 + $0x28] sm:$0xf]
        %v1782 = vld [vmem:[%s237 + $0x2c] sm:$0xf]
        %v1783 = vld [vmem:[%s237 + $0x30] sm:$0xf]
        %v1784 = vld [vmem:[%s237 + $0x34] sm:$0xf]
        %v1785 = vld [vmem:[%s237 + $0x38] sm:$0xf]
        %v1786 = vld [vmem:[%s237 + $0x3c] sm:$0xf]
        %v1787 = vld [vmem:[%s237 + $0x40] sm:$0xf]
        %v1788 = vld [vmem:[%s237 + $0x44] sm:$0xf]
        %v1789 = vld [vmem:[%s237 + $0x48] sm:$0xf]
        %v1790 = vld [vmem:[%s237 + $0x4c] sm:$0xf]
        %v1791 = vld [vmem:[%s237 + $0x50] sm:$0xf]
        %v1792 = vld [vmem:[%s237 + $0x54] sm:$0xf]
        %v1793 = vld [vmem:[%s237 + $0x58] sm:$0xf]
        %v1794 = vld [vmem:[%s237 + $0x5c] sm:$0xf]
        %v1795 = vld [vmem:[%s237 + $0x60] sm:$0xf]
        %v1796 = vld [vmem:[%s237 + $0x64] sm:$0xf]
        %v1797 = vld [vmem:[%s237 + $0x68] sm:$0xf]
        %v1798 = vld [vmem:[%s237 + $0x6c] sm:$0xf]
        %v1799 = vld [vmem:[%s237 + $0x70] sm:$0xf]
        %v1800 = vld [vmem:[%s237 + $0x74] sm:$0xf]
        %v1801 = vld [vmem:[%s237 + $0x78] sm:$0xf]
        %v1802 = vld [vmem:[%s237 + $0x7c] sm:$0xf]
        %v1803 = vld [vmem:[%s237 + $0x80] sm:$0xf]
        %v1804 = vld [vmem:[%s237 + $0x84] sm:$0xf]
        %v1805 = vld [vmem:[%s237 + $0x88] sm:$0xf]
        %v1806 = vld [vmem:[%s237 + $0x8c] sm:$0xf]
        %v1807 = vld [vmem:[%s237 + $0x90] sm:$0xf]
        %v1808 = vld [vmem:[%s237 + $0x94] sm:$0xf]
        %v1809 = vld [vmem:[%s237 + $0x98] sm:$0xf]
        %v1810 = vld [vmem:[%s237 + $0x9c] sm:$0xf]
        %v1811 = vld [vmem:[%s237 + $0xa0] sm:$0xf]
        %v1812 = vld [vmem:[%s237 + $0xa4] sm:$0xf]
        %v1813 = vld [vmem:[%s237 + $0xa8] sm:$0xf]
        %v1814 = vld [vmem:[%s237 + $0xac] sm:$0xf]
        %v1815 = vld [vmem:[%s237 + $0xb0] sm:$0xf]
        %v1816 = vld [vmem:[%s237 + $0xb4] sm:$0xf]
        %v1817 = vld [vmem:[%s237 + $0xb8] sm:$0xf]
        %v1818 = vld [vmem:[%s237 + $0xbc] sm:$0xf]
        %v1819 = vld [vmem:[%s237 + $0xc0] sm:$0x1]
        %v1869 = vunpack.c.l.b16 %v1771
        %v1870 = vunpack.c.l.b16 %v1772
        %v1871 = vunpack.c.l.b16 %v1773
        %v1872 = vunpack.c.l.b16 %v1774
        %v1873 = vunpack.c.l.b16 %v1775
        %v1874 = vunpack.c.l.b16 %v1776
        %v1875 = vunpack.c.l.b16 %v1777
        %v1876 = vunpack.c.l.b16 %v1778
        %v1877 = vunpack.c.l.b16 %v1779
        %v1878 = vunpack.c.l.b16 %v1780
        %v1879 = vunpack.c.l.b16 %v1781
        %v1880 = vunpack.c.l.b16 %v1782
        %v1881 = vunpack.c.l.b16 %v1783
        %v1882 = vunpack.c.l.b16 %v1784
        %v1883 = vunpack.c.l.b16 %v1785
        %v1884 = vunpack.c.l.b16 %v1786
        %v1885 = vunpack.c.l.b16 %v1787
        %v1886 = vunpack.c.l.b16 %v1788
        %v1887 = vunpack.c.l.b16 %v1789
        %v1888 = vunpack.c.l.b16 %v1790
        %v1889 = vunpack.c.l.b16 %v1791
        %v1890 = vunpack.c.l.b16 %v1792
        %v1891 = vunpack.c.l.b16 %v1793
        %v1892 = vunpack.c.l.b16 %v1794
        %v1893 = vunpack.c.l.b16 %v1795
        %v1894 = vunpack.c.l.b16 %v1796
        %v1895 = vunpack.c.l.b16 %v1797
        %v1896 = vunpack.c.l.b16 %v1798
        %v1897 = vunpack.c.l.b16 %v1799
        %v1898 = vunpack.c.l.b16 %v1800
        %v1899 = vunpack.c.l.b16 %v1801
        %v1900 = vunpack.c.l.b16 %v1802
        %v1901 = vunpack.c.l.b16 %v1803
        %v1902 = vunpack.c.l.b16 %v1804
        %v1903 = vunpack.c.l.b16 %v1805
        %v1904 = vunpack.c.l.b16 %v1806
        %v1905 = vunpack.c.l.b16 %v1807
        %v1906 = vunpack.c.l.b16 %v1808
        %v1907 = vunpack.c.l.b16 %v1809
        %v1908 = vunpack.c.l.b16 %v1810
        %v1909 = vunpack.c.l.b16 %v1811
        %v1910 = vunpack.c.l.b16 %v1812
        %v1911 = vunpack.c.l.b16 %v1813
        %v1912 = vunpack.c.l.b16 %v1814
        %v1913 = vunpack.c.l.b16 %v1815
        %v1914 = vunpack.c.l.b16 %v1816
        %v1915 = vunpack.c.l.b16 %v1817
        %v1916 = vunpack.c.l.b16 %v1818
        %v1917 = vunpack.c.l.b16 %v1819
        %v1918 = vpack.c.b16 %v1870, %v1869
        %v1919 = vpack.c.b16 %v1872, %v1871
        %v1920 = vpack.c.b16 %v1874, %v1873
        %v1921 = vpack.c.b16 %v1876, %v1875
        %v1922 = vpack.c.b16 %v1878, %v1877
        %v1923 = vpack.c.b16 %v1880, %v1879
        %v1924 = vpack.c.b16 %v1882, %v1881
        %v1925 = vpack.c.b16 %v1884, %v1883
        %v1926 = vpack.c.b16 %v1886, %v1885
        %v1927 = vpack.c.b16 %v1888, %v1887
        %v1928 = vpack.c.b16 %v1890, %v1889
        %v1929 = vpack.c.b16 %v1892, %v1891
        %v1930 = vpack.c.b16 %v1894, %v1893
        %v1931 = vpack.c.b16 %v1896, %v1895
        %v1932 = vpack.c.b16 %v1898, %v1897
        %v1933 = vpack.c.b16 %v1900, %v1899
        %v1934 = vpack.c.b16 %v1902, %v1901
        %v1935 = vpack.c.b16 %v1904, %v1903
        %v1936 = vpack.c.b16 %v1906, %v1905
        %v1937 = vpack.c.b16 %v1908, %v1907
        %v1938 = vpack.c.b16 %v1910, %v1909
        %v1939 = vpack.c.b16 %v1912, %v1911
        %v1940 = vpack.c.b16 %v1914, %v1913
        %v1941 = vpack.c.b16 %v1916, %v1915
        %v1942 = vpack.c.b16 %v1917, %v1917
        %vm1943 = vcmask 1046528
        %v1944 = vrot.slane %v1918, 1
        %v1945 = vrot.slane %v1919, 1
        %v1946 = vsel %vm1943, %v1944, %v1945
        %v1947 = vrot.slane %v1920, 1
        %v1948 = vsel %vm1943, %v1945, %v1947
        %v1949 = vrot.slane %v1921, 1
        %v1950 = vsel %vm1943, %v1947, %v1949
        %v1951 = vrot.slane %v1922, 1
        %v1952 = vsel %vm1943, %v1949, %v1951
        %v1953 = vrot.slane %v1923, 1
        %v1954 = vsel %vm1943, %v1951, %v1953
        %v1955 = vrot.slane %v1924, 1
        %v1956 = vsel %vm1943, %v1953, %v1955
        %v1957 = vrot.slane %v1925, 1
        %v1958 = vsel %vm1943, %v1955, %v1957
        %v1959 = vrot.slane %v1926, 1
        %v1960 = vsel %vm1943, %v1957, %v1959
        %v1961 = vrot.slane %v1927, 1
        %v1962 = vsel %vm1943, %v1959, %v1961
        %v1963 = vrot.slane %v1928, 1
        %v1964 = vsel %vm1943, %v1961, %v1963
        %v1965 = vrot.slane %v1929, 1
        %v1966 = vsel %vm1943, %v1963, %v1965
        %v1967 = vrot.slane %v1930, 1
        %v1968 = vsel %vm1943, %v1965, %v1967
        %v1969 = vrot.slane %v1931, 1
        %v1970 = vsel %vm1943, %v1967, %v1969
        %v1971 = vrot.slane %v1932, 1
        %v1972 = vsel %vm1943, %v1969, %v1971
        %v1973 = vrot.slane %v1933, 1
        %v1974 = vsel %vm1943, %v1971, %v1973
        %v1975 = vrot.slane %v1934, 1
        %v1976 = vsel %vm1943, %v1973, %v1975
        %v1977 = vrot.slane %v1935, 1
        %v1978 = vsel %vm1943, %v1975, %v1977
        %v1979 = vrot.slane %v1936, 1
        %v1980 = vsel %vm1943, %v1977, %v1979
        %v1981 = vrot.slane %v1937, 1
        %v1982 = vsel %vm1943, %v1979, %v1981
        %v1983 = vrot.slane %v1938, 1
        %v1984 = vsel %vm1943, %v1981, %v1983
        %v1985 = vrot.slane %v1939, 1
        %v1986 = vsel %vm1943, %v1983, %v1985
        %v1987 = vrot.slane %v1940, 1
        %v1988 = vsel %vm1943, %v1985, %v1987
        %v1989 = vrot.slane %v1941, 1
        %v1990 = vsel %vm1943, %v1987, %v1989
        %v1991 = vrot.slane %v1942, 1
        %v1992 = vsel %vm1943, %v1989, %v1991
        %2017 = vst [vmem:[#allocation3 + $0x10] sm:$0xff] %v1946
        %2018 = vst [vmem:[#allocation3 + $0x58] sm:$0xff] %v1948
        %2019 = vst [vmem:[#allocation3 + $0xa0] sm:$0xff] %v1950
        %2020 = vst [vmem:[#allocation3 + $0xe8] sm:$0xff] %v1952
        %2021 = vst [vmem:[#allocation3 + $0x130] sm:$0xff] %v1954
        %2022 = vst [vmem:[#allocation3 + $0x178] sm:$0xff] %v1956
        %2023 = vst [vmem:[#allocation3 + $0x1c0] sm:$0xff] %v1958
        %2024 = vst [vmem:[#allocation3 + $0x208] sm:$0xff] %v1960
        %2025 = vst [vmem:[#allocation3 + $0x250] sm:$0xff] %v1962
        %2026 = vst [vmem:[#allocation3 + $0x298] sm:$0xff] %v1964
        %2027 = vst [vmem:[#allocation3 + $0x2e0] sm:$0xff] %v1966
        %2028 = vst [vmem:[#allocation3 + $0x328] sm:$0xff] %v1968
        %2029 = vst [vmem:[#allocation3 + $0x370] sm:$0xff] %v1970
        %2030 = vst [vmem:[#allocation3 + $0x3b8] sm:$0xff] %v1972
        %2031 = vst [vmem:[#allocation3 + $0x400] sm:$0xff] %v1974
        %2032 = vst [vmem:[#allocation3 + $0x448] sm:$0xff] %v1976
        %2033 = vst [vmem:[#allocation3 + $0x490] sm:$0xff] %v1978
        %2034 = vst [vmem:[#allocation3 + $0x4d8] sm:$0xff] %v1980
        %2035 = vst [vmem:[#allocation3 + $0x520] sm:$0xff] %v1982
        %2036 = vst [vmem:[#allocation3 + $0x568] sm:$0xff] %v1984
        %2037 = vst [vmem:[#allocation3 + $0x5b0] sm:$0xff] %v1986
        %2038 = vst [vmem:[#allocation3 + $0x5f8] sm:$0xff] %v1988
        %2039 = vst [vmem:[#allocation3 + $0x640] sm:$0xff] %v1990
        %2040 = vst [vmem:[#allocation3 + $0x688] sm:$0xff] %v1992
        %v2041 = vld [vmem:[%s237 + $0xc] sm:$0xf]
        %v2042 = vld [vmem:[%s237 + $0x10] sm:$0xf]
        %v2043 = vld [vmem:[%s237 + $0x14] sm:$0xf]
        %v2044 = vld [vmem:[%s237 + $0x18] sm:$0xf]
        %v2045 = vld [vmem:[%s237 + $0x1c] sm:$0xf]
        %v2046 = vld [vmem:[%s237 + $0x20] sm:$0xf]
        %v2047 = vld [vmem:[%s237 + $0x24] sm:$0xf]
        %v2048 = vld [vmem:[%s237 + $0x28] sm:$0xf]
        %v2049 = vld [vmem:[%s237 + $0x2c] sm:$0xf]
        %v2050 = vld [vmem:[%s237 + $0x30] sm:$0xf]
        %v2051 = vld [vmem:[%s237 + $0x34] sm:$0xf]
        %v2052 = vld [vmem:[%s237 + $0x38] sm:$0xf]
        %v2053 = vld [vmem:[%s237 + $0x3c] sm:$0xf]
        %v2054 = vld [vmem:[%s237 + $0x40] sm:$0xf]
        %v2055 = vld [vmem:[%s237 + $0x44] sm:$0xf]
        %v2056 = vld [vmem:[%s237 + $0x48] sm:$0xf]
        %v2057 = vld [vmem:[%s237 + $0x4c] sm:$0xf]
        %v2058 = vld [vmem:[%s237 + $0x50] sm:$0xf]
        %v2059 = vld [vmem:[%s237 + $0x54] sm:$0xf]
        %v2060 = vld [vmem:[%s237 + $0x58] sm:$0xf]
        %v2061 = vld [vmem:[%s237 + $0x5c] sm:$0xf]
        %v2062 = vld [vmem:[%s237 + $0x60] sm:$0xf]
        %v2063 = vld [vmem:[%s237 + $0x64] sm:$0xf]
        %v2064 = vld [vmem:[%s237 + $0x68] sm:$0xf]
        %v2065 = vld [vmem:[%s237 + $0x6c] sm:$0xf]
        %v2066 = vld [vmem:[%s237 + $0x70] sm:$0xf]
        %v2067 = vld [vmem:[%s237 + $0x74] sm:$0xf]
        %v2068 = vld [vmem:[%s237 + $0x78] sm:$0xf]
        %v2069 = vld [vmem:[%s237 + $0x7c] sm:$0xf]
        %v2070 = vld [vmem:[%s237 + $0x80] sm:$0xf]
        %v2071 = vld [vmem:[%s237 + $0x84] sm:$0xf]
        %v2072 = vld [vmem:[%s237 + $0x88] sm:$0xf]
        %v2073 = vld [vmem:[%s237 + $0x8c] sm:$0xf]
        %v2074 = vld [vmem:[%s237 + $0x90] sm:$0xf]
        %v2075 = vld [vmem:[%s237 + $0x94] sm:$0xf]
        %v2076 = vld [vmem:[%s237 + $0x98] sm:$0xf]
        %v2077 = vld [vmem:[%s237 + $0x9c] sm:$0xf]
        %v2078 = vld [vmem:[%s237 + $0xa0] sm:$0xf]
        %v2079 = vld [vmem:[%s237 + $0xa4] sm:$0xf]
        %v2080 = vld [vmem:[%s237 + $0xa8] sm:$0xf]
        %v2081 = vld [vmem:[%s237 + $0xac] sm:$0xf]
        %v2082 = vld [vmem:[%s237 + $0xb0] sm:$0xf]
        %v2083 = vld [vmem:[%s237 + $0xb4] sm:$0xf]
        %v2084 = vld [vmem:[%s237 + $0xb8] sm:$0xf]
        %v2085 = vld [vmem:[%s237 + $0xbc] sm:$0xf]
        %v2086 = vld [vmem:[%s237 + $0xc0] sm:$0xf]
        %v2087 = vld [vmem:[%s237 + $0xc4] sm:$0xf]
        %v2088 = vld [vmem:[%s237 + $0xc8] sm:$0xf]
        %v2137 = vunpack.c.l.b16 %v2041
        %v2138 = vunpack.c.l.b16 %v2042
        %v2139 = vunpack.c.l.b16 %v2043
        %v2140 = vunpack.c.l.b16 %v2044
        %v2141 = vunpack.c.l.b16 %v2045
        %v2142 = vunpack.c.l.b16 %v2046
        %v2143 = vunpack.c.l.b16 %v2047
        %v2144 = vunpack.c.l.b16 %v2048
        %v2145 = vunpack.c.l.b16 %v2049
        %v2146 = vunpack.c.l.b16 %v2050
        %v2147 = vunpack.c.l.b16 %v2051
        %v2148 = vunpack.c.l.b16 %v2052
        %v2149 = vunpack.c.l.b16 %v2053
        %v2150 = vunpack.c.l.b16 %v2054
        %v2151 = vunpack.c.l.b16 %v2055
        %v2152 = vunpack.c.l.b16 %v2056
        %v2153 = vunpack.c.l.b16 %v2057
        %v2154 = vunpack.c.l.b16 %v2058
        %v2155 = vunpack.c.l.b16 %v2059
        %v2156 = vunpack.c.l.b16 %v2060
        %v2157 = vunpack.c.l.b16 %v2061
        %v2158 = vunpack.c.l.b16 %v2062
        %v2159 = vunpack.c.l.b16 %v2063
        %v2160 = vunpack.c.l.b16 %v2064
        %v2161 = vunpack.c.l.b16 %v2065
        %v2162 = vunpack.c.l.b16 %v2066
        %v2163 = vunpack.c.l.b16 %v2067
        %v2164 = vunpack.c.l.b16 %v2068
        %v2165 = vunpack.c.l.b16 %v2069
        %v2166 = vunpack.c.l.b16 %v2070
        %v2167 = vunpack.c.l.b16 %v2071
        %v2168 = vunpack.c.l.b16 %v2072
        %v2169 = vunpack.c.l.b16 %v2073
        %v2170 = vunpack.c.l.b16 %v2074
        %v2171 = vunpack.c.l.b16 %v2075
        %v2172 = vunpack.c.l.b16 %v2076
        %v2173 = vunpack.c.l.b16 %v2077
        %v2174 = vunpack.c.l.b16 %v2078
        %v2175 = vunpack.c.l.b16 %v2079
        %v2176 = vunpack.c.l.b16 %v2080
        %v2177 = vunpack.c.l.b16 %v2081
        %v2178 = vunpack.c.l.b16 %v2082
        %v2179 = vunpack.c.l.b16 %v2083
        %v2180 = vunpack.c.l.b16 %v2084
        %v2181 = vunpack.c.l.b16 %v2085
        %v2182 = vunpack.c.l.b16 %v2086
        %v2183 = vunpack.c.l.b16 %v2087
        %v2184 = vunpack.c.l.b16 %v2088
        %v2185 = vpack.c.b16 %v2138, %v2137
        %v2186 = vpack.c.b16 %v2140, %v2139
        %v2187 = vpack.c.b16 %v2142, %v2141
        %v2188 = vpack.c.b16 %v2144, %v2143
        %v2189 = vpack.c.b16 %v2146, %v2145
        %v2190 = vpack.c.b16 %v2148, %v2147
        %v2191 = vpack.c.b16 %v2150, %v2149
        %v2192 = vpack.c.b16 %v2152, %v2151
        %v2193 = vpack.c.b16 %v2154, %v2153
        %v2194 = vpack.c.b16 %v2156, %v2155
        %v2195 = vpack.c.b16 %v2158, %v2157
        %v2196 = vpack.c.b16 %v2160, %v2159
        %v2197 = vpack.c.b16 %v2162, %v2161
        %v2198 = vpack.c.b16 %v2164, %v2163
        %v2199 = vpack.c.b16 %v2166, %v2165
        %v2200 = vpack.c.b16 %v2168, %v2167
        %v2201 = vpack.c.b16 %v2170, %v2169
        %v2202 = vpack.c.b16 %v2172, %v2171
        %v2203 = vpack.c.b16 %v2174, %v2173
        %v2204 = vpack.c.b16 %v2176, %v2175
        %v2205 = vpack.c.b16 %v2178, %v2177
        %v2206 = vpack.c.b16 %v2180, %v2179
        %v2207 = vpack.c.b16 %v2182, %v2181
        %v2208 = vpack.c.b16 %v2184, %v2183
        %2233 = vst [vmem:[#allocation3 + $0x18] sm:$0xff] %v2185
        %2234 = vst [vmem:[#allocation3 + $0x60] sm:$0xff] %v2186
        %2235 = vst [vmem:[#allocation3 + $0xa8] sm:$0xff] %v2187
        %2236 = vst [vmem:[#allocation3 + $0xf0] sm:$0xff] %v2188
        %2237 = vst [vmem:[#allocation3 + $0x138] sm:$0xff] %v2189
        %2238 = vst [vmem:[#allocation3 + $0x180] sm:$0xff] %v2190
        %2239 = vst [vmem:[#allocation3 + $0x1c8] sm:$0xff] %v2191
        %2240 = vst [vmem:[#allocation3 + $0x210] sm:$0xff] %v2192
        %2241 = vst [vmem:[#allocation3 + $0x258] sm:$0xff] %v2193
        %2242 = vst [vmem:[#allocation3 + $0x2a0] sm:$0xff] %v2194
        %2243 = vst [vmem:[#allocation3 + $0x2e8] sm:$0xff] %v2195
        %2244 = vst [vmem:[#allocation3 + $0x330] sm:$0xff] %v2196
        %2245 = vst [vmem:[#allocation3 + $0x378] sm:$0xff] %v2197
        %2246 = vst [vmem:[#allocation3 + $0x3c0] sm:$0xff] %v2198
        %2247 = vst [vmem:[#allocation3 + $0x408] sm:$0xff] %v2199
        %2248 = vst [vmem:[#allocation3 + $0x450] sm:$0xff] %v2200
        %2249 = vst [vmem:[#allocation3 + $0x498] sm:$0xff] %v2201
        %2250 = vst [vmem:[#allocation3 + $0x4e0] sm:$0xff] %v2202
        %2251 = vst [vmem:[#allocation3 + $0x528] sm:$0xff] %v2203
        %2252 = vst [vmem:[#allocation3 + $0x570] sm:$0xff] %v2204
        %2253 = vst [vmem:[#allocation3 + $0x5b8] sm:$0xff] %v2205
        %2254 = vst [vmem:[#allocation3 + $0x600] sm:$0xff] %v2206
        %2255 = vst [vmem:[#allocation3 + $0x648] sm:$0xff] %v2207
        %2256 = vst [vmem:[#allocation3 + $0x690] sm:$0xff] %v2208
        %v2257 = vld [vmem:[%s237 + $0xc] sm:$0xf]
        %v2258 = vld [vmem:[%s237 + $0x10] sm:$0xf]
        %v2259 = vld [vmem:[%s237 + $0x14] sm:$0xf]
        %v2260 = vld [vmem:[%s237 + $0x18] sm:$0xf]
        %v2261 = vld [vmem:[%s237 + $0x1c] sm:$0xf]
        %v2262 = vld [vmem:[%s237 + $0x20] sm:$0xf]
        %v2263 = vld [vmem:[%s237 + $0x24] sm:$0xf]
        %v2264 = vld [vmem:[%s237 + $0x28] sm:$0xf]
        %v2265 = vld [vmem:[%s237 + $0x2c] sm:$0xf]
        %v2266 = vld [vmem:[%s237 + $0x30] sm:$0xf]
        %v2267 = vld [vmem:[%s237 + $0x34] sm:$0xf]
        %v2268 = vld [vmem:[%s237 + $0x38] sm:$0xf]
        %v2269 = vld [vmem:[%s237 + $0x3c] sm:$0xf]
        %v2270 = vld [vmem:[%s237 + $0x40] sm:$0xf]
        %v2271 = vld [vmem:[%s237 + $0x44] sm:$0xf]
        %v2272 = vld [vmem:[%s237 + $0x48] sm:$0xf]
        %v2273 = vld [vmem:[%s237 + $0x4c] sm:$0xf]
        %v2274 = vld [vmem:[%s237 + $0x50] sm:$0xf]
        %v2275 = vld [vmem:[%s237 + $0x54] sm:$0xf]
        %v2276 = vld [vmem:[%s237 + $0x58] sm:$0xf]
        %v2277 = vld [vmem:[%s237 + $0x5c] sm:$0xf]
        %v2278 = vld [vmem:[%s237 + $0x60] sm:$0xf]
        %v2279 = vld [vmem:[%s237 + $0x64] sm:$0xf]
        %v2280 = vld [vmem:[%s237 + $0x68] sm:$0xf]
        %v2281 = vld [vmem:[%s237 + $0x6c] sm:$0xf]
        %v2282 = vld [vmem:[%s237 + $0x70] sm:$0xf]
        %v2283 = vld [vmem:[%s237 + $0x74] sm:$0xf]
        %v2284 = vld [vmem:[%s237 + $0x78] sm:$0xf]
        %v2285 = vld [vmem:[%s237 + $0x7c] sm:$0xf]
        %v2286 = vld [vmem:[%s237 + $0x80] sm:$0xf]
        %v2287 = vld [vmem:[%s237 + $0x84] sm:$0xf]
        %v2288 = vld [vmem:[%s237 + $0x88] sm:$0xf]
        %v2289 = vld [vmem:[%s237 + $0x8c] sm:$0xf]
        %v2290 = vld [vmem:[%s237 + $0x90] sm:$0xf]
        %v2291 = vld [vmem:[%s237 + $0x94] sm:$0xf]
        %v2292 = vld [vmem:[%s237 + $0x98] sm:$0xf]
        %v2293 = vld [vmem:[%s237 + $0x9c] sm:$0xf]
        %v2294 = vld [vmem:[%s237 + $0xa0] sm:$0xf]
        %v2295 = vld [vmem:[%s237 + $0xa4] sm:$0xf]
        %v2296 = vld [vmem:[%s237 + $0xa8] sm:$0xf]
        %v2297 = vld [vmem:[%s237 + $0xac] sm:$0xf]
        %v2298 = vld [vmem:[%s237 + $0xb0] sm:$0xf]
        %v2299 = vld [vmem:[%s237 + $0xb4] sm:$0xf]
        %v2300 = vld [vmem:[%s237 + $0xb8] sm:$0xf]
        %v2301 = vld [vmem:[%s237 + $0xbc] sm:$0xf]
        %v2302 = vld [vmem:[%s237 + $0xc0] sm:$0xf]
        %v2303 = vld [vmem:[%s237 + $0xc4] sm:$0xf]
        %v2304 = vld [vmem:[%s237 + $0xc8] sm:$0xf]
        %v2305 = vld [vmem:[%s237 + $0xcc] sm:$0x1]
        %v2355 = vunpack.c.l.b16 %v2257
        %v2356 = vunpack.c.l.b16 %v2258
        %v2357 = vunpack.c.l.b16 %v2259
        %v2358 = vunpack.c.l.b16 %v2260
        %v2359 = vunpack.c.l.b16 %v2261
        %v2360 = vunpack.c.l.b16 %v2262
        %v2361 = vunpack.c.l.b16 %v2263
        %v2362 = vunpack.c.l.b16 %v2264
        %v2363 = vunpack.c.l.b16 %v2265
        %v2364 = vunpack.c.l.b16 %v2266
        %v2365 = vunpack.c.l.b16 %v2267
        %v2366 = vunpack.c.l.b16 %v2268
        %v2367 = vunpack.c.l.b16 %v2269
        %v2368 = vunpack.c.l.b16 %v2270
        %v2369 = vunpack.c.l.b16 %v2271
        %v2370 = vunpack.c.l.b16 %v2272
        %v2371 = vunpack.c.l.b16 %v2273
        %v2372 = vunpack.c.l.b16 %v2274
        %v2373 = vunpack.c.l.b16 %v2275
        %v2374 = vunpack.c.l.b16 %v2276
        %v2375 = vunpack.c.l.b16 %v2277
        %v2376 = vunpack.c.l.b16 %v2278
        %v2377 = vunpack.c.l.b16 %v2279
        %v2378 = vunpack.c.l.b16 %v2280
        %v2379 = vunpack.c.l.b16 %v2281
        %v2380 = vunpack.c.l.b16 %v2282
        %v2381 = vunpack.c.l.b16 %v2283
        %v2382 = vunpack.c.l.b16 %v2284
        %v2383 = vunpack.c.l.b16 %v2285
        %v2384 = vunpack.c.l.b16 %v2286
        %v2385 = vunpack.c.l.b16 %v2287
        %v2386 = vunpack.c.l.b16 %v2288
        %v2387 = vunpack.c.l.b16 %v2289
        %v2388 = vunpack.c.l.b16 %v2290
        %v2389 = vunpack.c.l.b16 %v2291
        %v2390 = vunpack.c.l.b16 %v2292
        %v2391 = vunpack.c.l.b16 %v2293
        %v2392 = vunpack.c.l.b16 %v2294
        %v2393 = vunpack.c.l.b16 %v2295
        %v2394 = vunpack.c.l.b16 %v2296
        %v2395 = vunpack.c.l.b16 %v2297
        %v2396 = vunpack.c.l.b16 %v2298
        %v2397 = vunpack.c.l.b16 %v2299
        %v2398 = vunpack.c.l.b16 %v2300
        %v2399 = vunpack.c.l.b16 %v2301
        %v2400 = vunpack.c.l.b16 %v2302
        %v2401 = vunpack.c.l.b16 %v2303
        %v2402 = vunpack.c.l.b16 %v2304
        %v2403 = vunpack.c.l.b16 %v2305
        %v2404 = vpack.c.b16 %v2356, %v2355
        %v2405 = vpack.c.b16 %v2358, %v2357
        %v2406 = vpack.c.b16 %v2360, %v2359
        %v2407 = vpack.c.b16 %v2362, %v2361
        %v2408 = vpack.c.b16 %v2364, %v2363
        %v2409 = vpack.c.b16 %v2366, %v2365
        %v2410 = vpack.c.b16 %v2368, %v2367
        %v2411 = vpack.c.b16 %v2370, %v2369
        %v2412 = vpack.c.b16 %v2372, %v2371
        %v2413 = vpack.c.b16 %v2374, %v2373
        %v2414 = vpack.c.b16 %v2376, %v2375
        %v2415 = vpack.c.b16 %v2378, %v2377
        %v2416 = vpack.c.b16 %v2380, %v2379
        %v2417 = vpack.c.b16 %v2382, %v2381
        %v2418 = vpack.c.b16 %v2384, %v2383
        %v2419 = vpack.c.b16 %v2386, %v2385
        %v2420 = vpack.c.b16 %v2388, %v2387
        %v2421 = vpack.c.b16 %v2390, %v2389
        %v2422 = vpack.c.b16 %v2392, %v2391
        %v2423 = vpack.c.b16 %v2394, %v2393
        %v2424 = vpack.c.b16 %v2396, %v2395
        %v2425 = vpack.c.b16 %v2398, %v2397
        %v2426 = vpack.c.b16 %v2400, %v2399
        %v2427 = vpack.c.b16 %v2402, %v2401
        %v2428 = vpack.c.b16 %v2403, %v2403
        %v2430 = vshrl.u32 %v2404, 16
        %v2432 = vshll.u32 %v2404, 16
        %v2434 = vrot.slane %v2432, 1
        %v2435 = vor.u32 %v2430, %v2434
        %v2437 = vshll.u32 %v2405, 16
        %v2439 = vrot.slane %v2437, 1
        %v2440 = vsel %vm1526, %v2435, %v2439
        %v2441 = vshrl.u32 %v2405, 16
        %v2443 = vor.u32 %v2441, %v2439
        %v2445 = vshll.u32 %v2406, 16
        %v2447 = vrot.slane %v2445, 1
        %v2448 = vsel %vm1526, %v2443, %v2447
        %v2449 = vshrl.u32 %v2406, 16
        %v2451 = vor.u32 %v2449, %v2447
        %v2453 = vshll.u32 %v2407, 16
        %v2455 = vrot.slane %v2453, 1
        %v2456 = vsel %vm1526, %v2451, %v2455
        %v2457 = vshrl.u32 %v2407, 16
        %v2459 = vor.u32 %v2457, %v2455
        %v2461 = vshll.u32 %v2408, 16
        %v2463 = vrot.slane %v2461, 1
        %v2464 = vsel %vm1526, %v2459, %v2463
        %v2465 = vshrl.u32 %v2408, 16
        %v2467 = vor.u32 %v2465, %v2463
        %v2469 = vshll.u32 %v2409, 16
        %v2471 = vrot.slane %v2469, 1
        %v2472 = vsel %vm1526, %v2467, %v2471
        %v2473 = vshrl.u32 %v2409, 16
        %v2475 = vor.u32 %v2473, %v2471
        %v2477 = vshll.u32 %v2410, 16
        %v2479 = vrot.slane %v2477, 1
        %v2480 = vsel %vm1526, %v2475, %v2479
        %v2481 = vshrl.u32 %v2410, 16
        %v2483 = vor.u32 %v2481, %v2479
        %v2485 = vshll.u32 %v2411, 16
        %v2487 = vrot.slane %v2485, 1
        %v2488 = vsel %vm1526, %v2483, %v2487
        %v2489 = vshrl.u32 %v2411, 16
        %v2491 = vor.u32 %v2489, %v2487
        %v2493 = vshll.u32 %v2412, 16
        %v2495 = vrot.slane %v2493, 1
        %v2496 = vsel %vm1526, %v2491, %v2495
        %v2497 = vshrl.u32 %v2412, 16
        %v2499 = vor.u32 %v2497, %v2495
        %v2501 = vshll.u32 %v2413, 16
        %v2503 = vrot.slane %v2501, 1
        %v2504 = vsel %vm1526, %v2499, %v2503
        %v2505 = vshrl.u32 %v2413, 16
        %v2507 = vor.u32 %v2505, %v2503
        %v2509 = vshll.u32 %v2414, 16
        %v2511 = vrot.slane %v2509, 1
        %v2512 = vsel %vm1526, %v2507, %v2511
        %v2513 = vshrl.u32 %v2414, 16
        %v2515 = vor.u32 %v2513, %v2511
        %v2517 = vshll.u32 %v2415, 16
        %v2519 = vrot.slane %v2517, 1
        %v2520 = vsel %vm1526, %v2515, %v2519
        %v2521 = vshrl.u32 %v2415, 16
        %v2523 = vor.u32 %v2521, %v2519
        %v2525 = vshll.u32 %v2416, 16
        %v2527 = vrot.slane %v2525, 1
        %v2528 = vsel %vm1526, %v2523, %v2527
        %v2529 = vshrl.u32 %v2416, 16
        %v2531 = vor.u32 %v2529, %v2527
        %v2533 = vshll.u32 %v2417, 16
        %v2535 = vrot.slane %v2533, 1
        %v2536 = vsel %vm1526, %v2531, %v2535
        %v2537 = vshrl.u32 %v2417, 16
        %v2539 = vor.u32 %v2537, %v2535
        %v2541 = vshll.u32 %v2418, 16
        %v2543 = vrot.slane %v2541, 1
        %v2544 = vsel %vm1526, %v2539, %v2543
        %v2545 = vshrl.u32 %v2418, 16
        %v2547 = vor.u32 %v2545, %v2543
        %v2549 = vshll.u32 %v2419, 16
        %v2551 = vrot.slane %v2549, 1
        %v2552 = vsel %vm1526, %v2547, %v2551
        %v2553 = vshrl.u32 %v2419, 16
        %v2555 = vor.u32 %v2553, %v2551
        %v2557 = vshll.u32 %v2420, 16
        %v2559 = vrot.slane %v2557, 1
        %v2560 = vsel %vm1526, %v2555, %v2559
        %v2561 = vshrl.u32 %v2420, 16
        %v2563 = vor.u32 %v2561, %v2559
        %v2565 = vshll.u32 %v2421, 16
        %v2567 = vrot.slane %v2565, 1
        %v2568 = vsel %vm1526, %v2563, %v2567
        %v2569 = vshrl.u32 %v2421, 16
        %v2571 = vor.u32 %v2569, %v2567
        %v2573 = vshll.u32 %v2422, 16
        %v2575 = vrot.slane %v2573, 1
        %v2576 = vsel %vm1526, %v2571, %v2575
        %v2577 = vshrl.u32 %v2422, 16
        %v2579 = vor.u32 %v2577, %v2575
        %v2581 = vshll.u32 %v2423, 16
        %v2583 = vrot.slane %v2581, 1
        %v2584 = vsel %vm1526, %v2579, %v2583
        %v2585 = vshrl.u32 %v2423, 16
        %v2587 = vor.u32 %v2585, %v2583
        %v2589 = vshll.u32 %v2424, 16
        %v2591 = vrot.slane %v2589, 1
        %v2592 = vsel %vm1526, %v2587, %v2591
        %v2593 = vshrl.u32 %v2424, 16
        %v2595 = vor.u32 %v2593, %v2591
        %v2597 = vshll.u32 %v2425, 16
        %v2599 = vrot.slane %v2597, 1
        %v2600 = vsel %vm1526, %v2595, %v2599
        %v2601 = vshrl.u32 %v2425, 16
        %v2603 = vor.u32 %v2601, %v2599
        %v2605 = vshll.u32 %v2426, 16
        %v2607 = vrot.slane %v2605, 1
        %v2608 = vsel %vm1526, %v2603, %v2607
        %v2609 = vshrl.u32 %v2426, 16
        %v2611 = vor.u32 %v2609, %v2607
        %v2613 = vshll.u32 %v2427, 16
        %v2615 = vrot.slane %v2613, 1
        %v2616 = vsel %vm1526, %v2611, %v2615
        %v2617 = vshrl.u32 %v2427, 16
        %v2619 = vor.u32 %v2617, %v2615
        %v2621 = vshll.u32 %v2428, 16
        %v2623 = vrot.slane %v2621, 1
        %v2624 = vsel %vm1526, %v2619, %v2623
        %2649 = vst [vmem:[#allocation3 + $0x20] sm:$0xff] %v2440
        %2650 = vst [vmem:[#allocation3 + $0x68] sm:$0xff] %v2448
        %2651 = vst [vmem:[#allocation3 + $0xb0] sm:$0xff] %v2456
        %2652 = vst [vmem:[#allocation3 + $0xf8] sm:$0xff] %v2464
        %2653 = vst [vmem:[#allocation3 + $0x140] sm:$0xff] %v2472
        %2654 = vst [vmem:[#allocation3 + $0x188] sm:$0xff] %v2480
        %2655 = vst [vmem:[#allocation3 + $0x1d0] sm:$0xff] %v2488
        %2656 = vst [vmem:[#allocation3 + $0x218] sm:$0xff] %v2496
        %2657 = vst [vmem:[#allocation3 + $0x260] sm:$0xff] %v2504
        %2658 = vst [vmem:[#allocation3 + $0x2a8] sm:$0xff] %v2512
        %2659 = vst [vmem:[#allocation3 + $0x2f0] sm:$0xff] %v2520
        %2660 = vst [vmem:[#allocation3 + $0x338] sm:$0xff] %v2528
        %2661 = vst [vmem:[#allocation3 + $0x380] sm:$0xff] %v2536
        %2662 = vst [vmem:[#allocation3 + $0x3c8] sm:$0xff] %v2544
        %2663 = vst [vmem:[#allocation3 + $0x410] sm:$0xff] %v2552
        %2664 = vst [vmem:[#allocation3 + $0x458] sm:$0xff] %v2560
        %2665 = vst [vmem:[#allocation3 + $0x4a0] sm:$0xff] %v2568
        %2666 = vst [vmem:[#allocation3 + $0x4e8] sm:$0xff] %v2576
        %2667 = vst [vmem:[#allocation3 + $0x530] sm:$0xff] %v2584
        %2668 = vst [vmem:[#allocation3 + $0x578] sm:$0xff] %v2592
        %2669 = vst [vmem:[#allocation3 + $0x5c0] sm:$0xff] %v2600
        %2670 = vst [vmem:[#allocation3 + $0x608] sm:$0xff] %v2608
        %2671 = vst [vmem:[#allocation3 + $0x650] sm:$0xff] %v2616
        %2672 = vst [vmem:[#allocation3 + $0x698] sm:$0xff] %v2624
        %v2673 = vld [vmem:[%s237 + $0xc] sm:$0xe]
        %v2674 = vld [vmem:[%s237 + $0x10] sm:$0xf]
        %v2675 = vld [vmem:[%s237 + $0x14] sm:$0xf]
        %v2676 = vld [vmem:[%s237 + $0x18] sm:$0xf]
        %v2677 = vld [vmem:[%s237 + $0x1c] sm:$0xf]
        %v2678 = vld [vmem:[%s237 + $0x20] sm:$0xf]
        %v2679 = vld [vmem:[%s237 + $0x24] sm:$0xf]
        %v2680 = vld [vmem:[%s237 + $0x28] sm:$0xf]
        %v2681 = vld [vmem:[%s237 + $0x2c] sm:$0xf]
        %v2682 = vld [vmem:[%s237 + $0x30] sm:$0xf]
        %v2683 = vld [vmem:[%s237 + $0x34] sm:$0xf]
        %v2684 = vld [vmem:[%s237 + $0x38] sm:$0xf]
        %v2685 = vld [vmem:[%s237 + $0x3c] sm:$0xf]
        %v2686 = vld [vmem:[%s237 + $0x40] sm:$0xf]
        %v2687 = vld [vmem:[%s237 + $0x44] sm:$0xf]
        %v2688 = vld [vmem:[%s237 + $0x48] sm:$0xf]
        %v2689 = vld [vmem:[%s237 + $0x4c] sm:$0xf]
        %v2690 = vld [vmem:[%s237 + $0x50] sm:$0xf]
        %v2691 = vld [vmem:[%s237 + $0x54] sm:$0xf]
        %v2692 = vld [vmem:[%s237 + $0x58] sm:$0xf]
        %v2693 = vld [vmem:[%s237 + $0x5c] sm:$0xf]
        %v2694 = vld [vmem:[%s237 + $0x60] sm:$0xf]
        %v2695 = vld [vmem:[%s237 + $0x64] sm:$0xf]
        %v2696 = vld [vmem:[%s237 + $0x68] sm:$0xf]
        %v2697 = vld [vmem:[%s237 + $0x6c] sm:$0xf]
        %v2698 = vld [vmem:[%s237 + $0x70] sm:$0xf]
        %v2699 = vld [vmem:[%s237 + $0x74] sm:$0xf]
        %v2700 = vld [vmem:[%s237 + $0x78] sm:$0xf]
        %v2701 = vld [vmem:[%s237 + $0x7c] sm:$0xf]
        %v2702 = vld [vmem:[%s237 + $0x80] sm:$0xf]
        %v2703 = vld [vmem:[%s237 + $0x84] sm:$0xf]
        %v2704 = vld [vmem:[%s237 + $0x88] sm:$0xf]
        %v2705 = vld [vmem:[%s237 + $0x8c] sm:$0xf]
        %v2706 = vld [vmem:[%s237 + $0x90] sm:$0xf]
        %v2707 = vld [vmem:[%s237 + $0x94] sm:$0xf]
        %v2708 = vld [vmem:[%s237 + $0x98] sm:$0xf]
        %v2709 = vld [vmem:[%s237 + $0x9c] sm:$0xf]
        %v2710 = vld [vmem:[%s237 + $0xa0] sm:$0xf]
        %v2711 = vld [vmem:[%s237 + $0xa4] sm:$0xf]
        %v2712 = vld [vmem:[%s237 + $0xa8] sm:$0xf]
        %v2713 = vld [vmem:[%s237 + $0xac] sm:$0xf]
        %v2714 = vld [vmem:[%s237 + $0xb0] sm:$0xf]
        %v2715 = vld [vmem:[%s237 + $0xb4] sm:$0xf]
        %v2716 = vld [vmem:[%s237 + $0xb8] sm:$0xf]
        %v2717 = vld [vmem:[%s237 + $0xbc] sm:$0xf]
        %v2718 = vld [vmem:[%s237 + $0xc0] sm:$0xf]
        %v2719 = vld [vmem:[%s237 + $0xc4] sm:$0xf]
        %v2720 = vld [vmem:[%s237 + $0xc8] sm:$0xf]
        %v2721 = vld [vmem:[%s237 + $0xcc] sm:$0x1]
        %v2771 = vunpack.c.l.b16 %v2673
        %v2772 = vunpack.c.l.b16 %v2674
        %v2773 = vunpack.c.l.b16 %v2675
        %v2774 = vunpack.c.l.b16 %v2676
        %v2775 = vunpack.c.l.b16 %v2677
        %v2776 = vunpack.c.l.b16 %v2678
        %v2777 = vunpack.c.l.b16 %v2679
        %v2778 = vunpack.c.l.b16 %v2680
        %v2779 = vunpack.c.l.b16 %v2681
        %v2780 = vunpack.c.l.b16 %v2682
        %v2781 = vunpack.c.l.b16 %v2683
        %v2782 = vunpack.c.l.b16 %v2684
        %v2783 = vunpack.c.l.b16 %v2685
        %v2784 = vunpack.c.l.b16 %v2686
        %v2785 = vunpack.c.l.b16 %v2687
        %v2786 = vunpack.c.l.b16 %v2688
        %v2787 = vunpack.c.l.b16 %v2689
        %v2788 = vunpack.c.l.b16 %v2690
        %v2789 = vunpack.c.l.b16 %v2691
        %v2790 = vunpack.c.l.b16 %v2692
        %v2791 = vunpack.c.l.b16 %v2693
        %v2792 = vunpack.c.l.b16 %v2694
        %v2793 = vunpack.c.l.b16 %v2695
        %v2794 = vunpack.c.l.b16 %v2696
        %v2795 = vunpack.c.l.b16 %v2697
        %v2796 = vunpack.c.l.b16 %v2698
        %v2797 = vunpack.c.l.b16 %v2699
        %v2798 = vunpack.c.l.b16 %v2700
        %v2799 = vunpack.c.l.b16 %v2701
        %v2800 = vunpack.c.l.b16 %v2702
        %v2801 = vunpack.c.l.b16 %v2703
        %v2802 = vunpack.c.l.b16 %v2704
        %v2803 = vunpack.c.l.b16 %v2705
        %v2804 = vunpack.c.l.b16 %v2706
        %v2805 = vunpack.c.l.b16 %v2707
        %v2806 = vunpack.c.l.b16 %v2708
        %v2807 = vunpack.c.l.b16 %v2709
        %v2808 = vunpack.c.l.b16 %v2710
        %v2809 = vunpack.c.l.b16 %v2711
        %v2810 = vunpack.c.l.b16 %v2712
        %v2811 = vunpack.c.l.b16 %v2713
        %v2812 = vunpack.c.l.b16 %v2714
        %v2813 = vunpack.c.l.b16 %v2715
        %v2814 = vunpack.c.l.b16 %v2716
        %v2815 = vunpack.c.l.b16 %v2717
        %v2816 = vunpack.c.l.b16 %v2718
        %v2817 = vunpack.c.l.b16 %v2719
        %v2818 = vunpack.c.l.b16 %v2720
        %v2819 = vunpack.c.l.b16 %v2721
        %v2820 = vpack.c.b16 %v2772, %v2771
        %v2821 = vpack.c.b16 %v2774, %v2773
        %v2822 = vpack.c.b16 %v2776, %v2775
        %v2823 = vpack.c.b16 %v2778, %v2777
        %v2824 = vpack.c.b16 %v2780, %v2779
        %v2825 = vpack.c.b16 %v2782, %v2781
        %v2826 = vpack.c.b16 %v2784, %v2783
        %v2827 = vpack.c.b16 %v2786, %v2785
        %v2828 = vpack.c.b16 %v2788, %v2787
        %v2829 = vpack.c.b16 %v2790, %v2789
        %v2830 = vpack.c.b16 %v2792, %v2791
        %v2831 = vpack.c.b16 %v2794, %v2793
        %v2832 = vpack.c.b16 %v2796, %v2795
        %v2833 = vpack.c.b16 %v2798, %v2797
        %v2834 = vpack.c.b16 %v2800, %v2799
        %v2835 = vpack.c.b16 %v2802, %v2801
        %v2836 = vpack.c.b16 %v2804, %v2803
        %v2837 = vpack.c.b16 %v2806, %v2805
        %v2838 = vpack.c.b16 %v2808, %v2807
        %v2839 = vpack.c.b16 %v2810, %v2809
        %v2840 = vpack.c.b16 %v2812, %v2811
        %v2841 = vpack.c.b16 %v2814, %v2813
        %v2842 = vpack.c.b16 %v2816, %v2815
        %v2843 = vpack.c.b16 %v2818, %v2817
        %v2844 = vpack.c.b16 %v2819, %v2819
        %v2845 = vrot.slane %v2820, 1
        %v2846 = vrot.slane %v2821, 1
        %v2847 = vsel %vm1943, %v2845, %v2846
        %v2848 = vrot.slane %v2822, 1
        %v2849 = vsel %vm1943, %v2846, %v2848
        %v2850 = vrot.slane %v2823, 1
        %v2851 = vsel %vm1943, %v2848, %v2850
        %v2852 = vrot.slane %v2824, 1
        %v2853 = vsel %vm1943, %v2850, %v2852
        %v2854 = vrot.slane %v2825, 1
        %v2855 = vsel %vm1943, %v2852, %v2854
        %v2856 = vrot.slane %v2826, 1
        %v2857 = vsel %vm1943, %v2854, %v2856
        %v2858 = vrot.slane %v2827, 1
        %v2859 = vsel %vm1943, %v2856, %v2858
        %v2860 = vrot.slane %v2828, 1
        %v2861 = vsel %vm1943, %v2858, %v2860
        %v2862 = vrot.slane %v2829, 1
        %v2863 = vsel %vm1943, %v2860, %v2862
        %v2864 = vrot.slane %v2830, 1
        %v2865 = vsel %vm1943, %v2862, %v2864
        %v2866 = vrot.slane %v2831, 1
        %v2867 = vsel %vm1943, %v2864, %v2866
        %v2868 = vrot.slane %v2832, 1
        %v2869 = vsel %vm1943, %v2866, %v2868
        %v2870 = vrot.slane %v2833, 1
        %v2871 = vsel %vm1943, %v2868, %v2870
        %v2872 = vrot.slane %v2834, 1
        %v2873 = vsel %vm1943, %v2870, %v2872
        %v2874 = vrot.slane %v2835, 1
        %v2875 = vsel %vm1943, %v2872, %v2874
        %v2876 = vrot.slane %v2836, 1
        %v2877 = vsel %vm1943, %v2874, %v2876
        %v2878 = vrot.slane %v2837, 1
        %v2879 = vsel %vm1943, %v2876, %v2878
        %v2880 = vrot.slane %v2838, 1
        %v2881 = vsel %vm1943, %v2878, %v2880
        %v2882 = vrot.slane %v2839, 1
        %v2883 = vsel %vm1943, %v2880, %v2882
        %v2884 = vrot.slane %v2840, 1
        %v2885 = vsel %vm1943, %v2882, %v2884
        %v2886 = vrot.slane %v2841, 1
        %v2887 = vsel %vm1943, %v2884, %v2886
        %v2888 = vrot.slane %v2842, 1
        %v2889 = vsel %vm1943, %v2886, %v2888
        %v2890 = vrot.slane %v2843, 1
        %v2891 = vsel %vm1943, %v2888, %v2890
        %v2892 = vrot.slane %v2844, 1
        %v2893 = vsel %vm1943, %v2890, %v2892
        %2918 = vst [vmem:[#allocation3 + $0x28] sm:$0xff] %v2847
        %2919 = vst [vmem:[#allocation3 + $0x70] sm:$0xff] %v2849
        %2920 = vst [vmem:[#allocation3 + $0xb8] sm:$0xff] %v2851
        %2921 = vst [vmem:[#allocation3 + $0x100] sm:$0xff] %v2853
        %2922 = vst [vmem:[#allocation3 + $0x148] sm:$0xff] %v2855
        %2923 = vst [vmem:[#allocation3 + $0x190] sm:$0xff] %v2857
        %2924 = vst [vmem:[#allocation3 + $0x1d8] sm:$0xff] %v2859
        %2925 = vst [vmem:[#allocation3 + $0x220] sm:$0xff] %v2861
        %2926 = vst [vmem:[#allocation3 + $0x268] sm:$0xff] %v2863
        %2927 = vst [vmem:[#allocation3 + $0x2b0] sm:$0xff] %v2865
        %2928 = vst [vmem:[#allocation3 + $0x2f8] sm:$0xff] %v2867
        %2929 = vst [vmem:[#allocation3 + $0x340] sm:$0xff] %v2869
        %2930 = vst [vmem:[#allocation3 + $0x388] sm:$0xff] %v2871
        %2931 = vst [vmem:[#allocation3 + $0x3d0] sm:$0xff] %v2873
        %2932 = vst [vmem:[#allocation3 + $0x418] sm:$0xff] %v2875
        %2933 = vst [vmem:[#allocation3 + $0x460] sm:$0xff] %v2877
        %2934 = vst [vmem:[#allocation3 + $0x4a8] sm:$0xff] %v2879
        %2935 = vst [vmem:[#allocation3 + $0x4f0] sm:$0xff] %v2881
        %2936 = vst [vmem:[#allocation3 + $0x538] sm:$0xff] %v2883
        %2937 = vst [vmem:[#allocation3 + $0x580] sm:$0xff] %v2885
        %2938 = vst [vmem:[#allocation3 + $0x5c8] sm:$0xff] %v2887
        %2939 = vst [vmem:[#allocation3 + $0x610] sm:$0xff] %v2889
        %2940 = vst [vmem:[#allocation3 + $0x658] sm:$0xff] %v2891
        %2941 = vst [vmem:[#allocation3 + $0x6a0] sm:$0xff] %v2893
        %v2942 = vld [vmem:[%s237 + $0x18] sm:$0xf]
        %v2943 = vld [vmem:[%s237 + $0x1c] sm:$0xf]
        %v2944 = vld [vmem:[%s237 + $0x20] sm:$0xf]
        %v2945 = vld [vmem:[%s237 + $0x24] sm:$0xf]
        %v2946 = vld [vmem:[%s237 + $0x28] sm:$0xf]
        %v2947 = vld [vmem:[%s237 + $0x2c] sm:$0xf]
        %v2948 = vld [vmem:[%s237 + $0x30] sm:$0xf]
        %v2949 = vld [vmem:[%s237 + $0x34] sm:$0xf]
        %v2950 = vld [vmem:[%s237 + $0x38] sm:$0xf]
        %v2951 = vld [vmem:[%s237 + $0x3c] sm:$0xf]
        %v2952 = vld [vmem:[%s237 + $0x40] sm:$0xf]
        %v2953 = vld [vmem:[%s237 + $0x44] sm:$0xf]
        %v2954 = vld [vmem:[%s237 + $0x48] sm:$0xf]
        %v2955 = vld [vmem:[%s237 + $0x4c] sm:$0xf]
        %v2956 = vld [vmem:[%s237 + $0x50] sm:$0xf]
        %v2957 = vld [vmem:[%s237 + $0x54] sm:$0xf]
        %v2958 = vld [vmem:[%s237 + $0x58] sm:$0xf]
        %v2959 = vld [vmem:[%s237 + $0x5c] sm:$0xf]
        %v2960 = vld [vmem:[%s237 + $0x60] sm:$0xf]
        %v2961 = vld [vmem:[%s237 + $0x64] sm:$0xf]
        %v2962 = vld [vmem:[%s237 + $0x68] sm:$0xf]
        %v2963 = vld [vmem:[%s237 + $0x6c] sm:$0xf]
        %v2964 = vld [vmem:[%s237 + $0x70] sm:$0xf]
        %v2965 = vld [vmem:[%s237 + $0x74] sm:$0xf]
        %v2966 = vld [vmem:[%s237 + $0x78] sm:$0xf]
        %v2967 = vld [vmem:[%s237 + $0x7c] sm:$0xf]
        %v2968 = vld [vmem:[%s237 + $0x80] sm:$0xf]
        %v2969 = vld [vmem:[%s237 + $0x84] sm:$0xf]
        %v2970 = vld [vmem:[%s237 + $0x88] sm:$0xf]
        %v2971 = vld [vmem:[%s237 + $0x8c] sm:$0xf]
        %v2972 = vld [vmem:[%s237 + $0x90] sm:$0xf]
        %v2973 = vld [vmem:[%s237 + $0x94] sm:$0xf]
        %v2974 = vld [vmem:[%s237 + $0x98] sm:$0xf]
        %v2975 = vld [vmem:[%s237 + $0x9c] sm:$0xf]
        %v2976 = vld [vmem:[%s237 + $0xa0] sm:$0xf]
        %v2977 = vld [vmem:[%s237 + $0xa4] sm:$0xf]
        %v2978 = vld [vmem:[%s237 + $0xa8] sm:$0xf]
        %v2979 = vld [vmem:[%s237 + $0xac] sm:$0xf]
        %v2980 = vld [vmem:[%s237 + $0xb0] sm:$0xf]
        %v2981 = vld [vmem:[%s237 + $0xb4] sm:$0xf]
        %v2982 = vld [vmem:[%s237 + $0xb8] sm:$0xf]
        %v2983 = vld [vmem:[%s237 + $0xbc] sm:$0xf]
        %v2984 = vld [vmem:[%s237 + $0xc0] sm:$0xf]
        %v2985 = vld [vmem:[%s237 + $0xc4] sm:$0xf]
        %v2986 = vld [vmem:[%s237 + $0xc8] sm:$0xf]
        %v2987 = vld [vmem:[%s237 + $0xcc] sm:$0xf]
        %v2988 = vld [vmem:[%s237 + $0xd0] sm:$0xf]
        %v2989 = vld [vmem:[%s237 + $0xd4] sm:$0xf]
        %v3038 = vunpack.c.l.b16 %v2942
        %v3039 = vunpack.c.l.b16 %v2943
        %v3040 = vunpack.c.l.b16 %v2944
        %v3041 = vunpack.c.l.b16 %v2945
        %v3042 = vunpack.c.l.b16 %v2946
        %v3043 = vunpack.c.l.b16 %v2947
        %v3044 = vunpack.c.l.b16 %v2948
        %v3045 = vunpack.c.l.b16 %v2949
        %v3046 = vunpack.c.l.b16 %v2950
        %v3047 = vunpack.c.l.b16 %v2951
        %v3048 = vunpack.c.l.b16 %v2952
        %v3049 = vunpack.c.l.b16 %v2953
        %v3050 = vunpack.c.l.b16 %v2954
        %v3051 = vunpack.c.l.b16 %v2955
        %v3052 = vunpack.c.l.b16 %v2956
        %v3053 = vunpack.c.l.b16 %v2957
        %v3054 = vunpack.c.l.b16 %v2958
        %v3055 = vunpack.c.l.b16 %v2959
        %v3056 = vunpack.c.l.b16 %v2960
        %v3057 = vunpack.c.l.b16 %v2961
        %v3058 = vunpack.c.l.b16 %v2962
        %v3059 = vunpack.c.l.b16 %v2963
        %v3060 = vunpack.c.l.b16 %v2964
        %v3061 = vunpack.c.l.b16 %v2965
        %v3062 = vunpack.c.l.b16 %v2966
        %v3063 = vunpack.c.l.b16 %v2967
        %v3064 = vunpack.c.l.b16 %v2968
        %v3065 = vunpack.c.l.b16 %v2969
        %v3066 = vunpack.c.l.b16 %v2970
        %v3067 = vunpack.c.l.b16 %v2971
        %v3068 = vunpack.c.l.b16 %v2972
        %v3069 = vunpack.c.l.b16 %v2973
        %v3070 = vunpack.c.l.b16 %v2974
        %v3071 = vunpack.c.l.b16 %v2975
        %v3072 = vunpack.c.l.b16 %v2976
        %v3073 = vunpack.c.l.b16 %v2977
        %v3074 = vunpack.c.l.b16 %v2978
        %v3075 = vunpack.c.l.b16 %v2979
        %v3076 = vunpack.c.l.b16 %v2980
        %v3077 = vunpack.c.l.b16 %v2981
        %v3078 = vunpack.c.l.b16 %v2982
        %v3079 = vunpack.c.l.b16 %v2983
        %v3080 = vunpack.c.l.b16 %v2984
        %v3081 = vunpack.c.l.b16 %v2985
        %v3082 = vunpack.c.l.b16 %v2986
        %v3083 = vunpack.c.l.b16 %v2987
        %v3084 = vunpack.c.l.b16 %v2988
        %v3085 = vunpack.c.l.b16 %v2989
        %v3086 = vpack.c.b16 %v3039, %v3038
        %v3087 = vpack.c.b16 %v3041, %v3040
        %v3088 = vpack.c.b16 %v3043, %v3042
        %v3089 = vpack.c.b16 %v3045, %v3044
        %v3090 = vpack.c.b16 %v3047, %v3046
        %v3091 = vpack.c.b16 %v3049, %v3048
        %v3092 = vpack.c.b16 %v3051, %v3050
        %v3093 = vpack.c.b16 %v3053, %v3052
        %v3094 = vpack.c.b16 %v3055, %v3054
        %v3095 = vpack.c.b16 %v3057, %v3056
        %v3096 = vpack.c.b16 %v3059, %v3058
        %v3097 = vpack.c.b16 %v3061, %v3060
        %v3098 = vpack.c.b16 %v3063, %v3062
        %v3099 = vpack.c.b16 %v3065, %v3064
        %v3100 = vpack.c.b16 %v3067, %v3066
        %v3101 = vpack.c.b16 %v3069, %v3068
        %v3102 = vpack.c.b16 %v3071, %v3070
        %v3103 = vpack.c.b16 %v3073, %v3072
        %v3104 = vpack.c.b16 %v3075, %v3074
        %v3105 = vpack.c.b16 %v3077, %v3076
        %v3106 = vpack.c.b16 %v3079, %v3078
        %v3107 = vpack.c.b16 %v3081, %v3080
        %v3108 = vpack.c.b16 %v3083, %v3082
        %v3109 = vpack.c.b16 %v3085, %v3084
        %3134 = vst [vmem:[#allocation3 + $0x30] sm:$0xff] %v3086
        %3135 = vst [vmem:[#allocation3 + $0x78] sm:$0xff] %v3087
        %3136 = vst [vmem:[#allocation3 + $0xc0] sm:$0xff] %v3088
        %3137 = vst [vmem:[#allocation3 + $0x108] sm:$0xff] %v3089
        %3138 = vst [vmem:[#allocation3 + $0x150] sm:$0xff] %v3090
        %3139 = vst [vmem:[#allocation3 + $0x198] sm:$0xff] %v3091
        %3140 = vst [vmem:[#allocation3 + $0x1e0] sm:$0xff] %v3092
        %3141 = vst [vmem:[#allocation3 + $0x228] sm:$0xff] %v3093
        %3142 = vst [vmem:[#allocation3 + $0x270] sm:$0xff] %v3094
        %3143 = vst [vmem:[#allocation3 + $0x2b8] sm:$0xff] %v3095
        %3144 = vst [vmem:[#allocation3 + $0x300] sm:$0xff] %v3096
        %3145 = vst [vmem:[#allocation3 + $0x348] sm:$0xff] %v3097
        %3146 = vst [vmem:[#allocation3 + $0x390] sm:$0xff] %v3098
        %3147 = vst [vmem:[#allocation3 + $0x3d8] sm:$0xff] %v3099
        %3148 = vst [vmem:[#allocation3 + $0x420] sm:$0xff] %v3100
        %3149 = vst [vmem:[#allocation3 + $0x468] sm:$0xff] %v3101
        %3150 = vst [vmem:[#allocation3 + $0x4b0] sm:$0xff] %v3102
        %3151 = vst [vmem:[#allocation3 + $0x4f8] sm:$0xff] %v3103
        %3152 = vst [vmem:[#allocation3 + $0x540] sm:$0xff] %v3104
        %3153 = vst [vmem:[#allocation3 + $0x588] sm:$0xff] %v3105
        %3154 = vst [vmem:[#allocation3 + $0x5d0] sm:$0xff] %v3106
        %3155 = vst [vmem:[#allocation3 + $0x618] sm:$0xff] %v3107
        %3156 = vst [vmem:[#allocation3 + $0x660] sm:$0xff] %v3108
        %3157 = vst [vmem:[#allocation3 + $0x6a8] sm:$0xff] %v3109
        %v3158 = vld [vmem:[%s237 + $0x18] sm:$0xf]
        %v3159 = vld [vmem:[%s237 + $0x1c] sm:$0xf]
        %v3160 = vld [vmem:[%s237 + $0x20] sm:$0xf]
        %v3161 = vld [vmem:[%s237 + $0x24] sm:$0xf]
        %v3162 = vld [vmem:[%s237 + $0x28] sm:$0xf]
        %v3163 = vld [vmem:[%s237 + $0x2c] sm:$0xf]
        %v3164 = vld [vmem:[%s237 + $0x30] sm:$0xf]
        %v3165 = vld [vmem:[%s237 + $0x34] sm:$0xf]
        %v3166 = vld [vmem:[%s237 + $0x38] sm:$0xf]
        %v3167 = vld [vmem:[%s237 + $0x3c] sm:$0xf]
        %v3168 = vld [vmem:[%s237 + $0x40] sm:$0xf]
        %v3169 = vld [vmem:[%s237 + $0x44] sm:$0xf]
        %v3170 = vld [vmem:[%s237 + $0x48] sm:$0xf]
        %v3171 = vld [vmem:[%s237 + $0x4c] sm:$0xf]
        %v3172 = vld [vmem:[%s237 + $0x50] sm:$0xf]
        %v3173 = vld [vmem:[%s237 + $0x54] sm:$0xf]
        %v3174 = vld [vmem:[%s237 + $0x58] sm:$0xf]
        %v3175 = vld [vmem:[%s237 + $0x5c] sm:$0xf]
        %v3176 = vld [vmem:[%s237 + $0x60] sm:$0xf]
        %v3177 = vld [vmem:[%s237 + $0x64] sm:$0xf]
        %v3178 = vld [vmem:[%s237 + $0x68] sm:$0xf]
        %v3179 = vld [vmem:[%s237 + $0x6c] sm:$0xf]
        %v3180 = vld [vmem:[%s237 + $0x70] sm:$0xf]
        %v3181 = vld [vmem:[%s237 + $0x74] sm:$0xf]
        %v3182 = vld [vmem:[%s237 + $0x78] sm:$0xf]
        %v3183 = vld [vmem:[%s237 + $0x7c] sm:$0xf]
        %v3184 = vld [vmem:[%s237 + $0x80] sm:$0xf]
        %v3185 = vld [vmem:[%s237 + $0x84] sm:$0xf]
        %v3186 = vld [vmem:[%s237 + $0x88] sm:$0xf]
        %v3187 = vld [vmem:[%s237 + $0x8c] sm:$0xf]
        %v3188 = vld [vmem:[%s237 + $0x90] sm:$0xf]
        %v3189 = vld [vmem:[%s237 + $0x94] sm:$0xf]
        %v3190 = vld [vmem:[%s237 + $0x98] sm:$0xf]
        %v3191 = vld [vmem:[%s237 + $0x9c] sm:$0xf]
        %v3192 = vld [vmem:[%s237 + $0xa0] sm:$0xf]
        %v3193 = vld [vmem:[%s237 + $0xa4] sm:$0xf]
        %v3194 = vld [vmem:[%s237 + $0xa8] sm:$0xf]
        %v3195 = vld [vmem:[%s237 + $0xac] sm:$0xf]
        %v3196 = vld [vmem:[%s237 + $0xb0] sm:$0xf]
        %v3197 = vld [vmem:[%s237 + $0xb4] sm:$0xf]
        %v3198 = vld [vmem:[%s237 + $0xb8] sm:$0xf]
        %v3199 = vld [vmem:[%s237 + $0xbc] sm:$0xf]
        %v3200 = vld [vmem:[%s237 + $0xc0] sm:$0xf]
        %v3201 = vld [vmem:[%s237 + $0xc4] sm:$0xf]
        %v3202 = vld [vmem:[%s237 + $0xc8] sm:$0xf]
        %v3203 = vld [vmem:[%s237 + $0xcc] sm:$0xf]
        %v3204 = vld [vmem:[%s237 + $0xd0] sm:$0xf]
        %v3205 = vld [vmem:[%s237 + $0xd4] sm:$0xf]
        %v3206 = vld [vmem:[%s237 + $0xd8] sm:$0x1]
        %v3256 = vunpack.c.l.b16 %v3158
        %v3257 = vunpack.c.l.b16 %v3159
        %v3258 = vunpack.c.l.b16 %v3160
        %v3259 = vunpack.c.l.b16 %v3161
        %v3260 = vunpack.c.l.b16 %v3162
        %v3261 = vunpack.c.l.b16 %v3163
        %v3262 = vunpack.c.l.b16 %v3164
        %v3263 = vunpack.c.l.b16 %v3165
        %v3264 = vunpack.c.l.b16 %v3166
        %v3265 = vunpack.c.l.b16 %v3167
        %v3266 = vunpack.c.l.b16 %v3168
        %v3267 = vunpack.c.l.b16 %v3169
        %v3268 = vunpack.c.l.b16 %v3170
        %v3269 = vunpack.c.l.b16 %v3171
        %v3270 = vunpack.c.l.b16 %v3172
        %v3271 = vunpack.c.l.b16 %v3173
        %v3272 = vunpack.c.l.b16 %v3174
        %v3273 = vunpack.c.l.b16 %v3175
        %v3274 = vunpack.c.l.b16 %v3176
        %v3275 = vunpack.c.l.b16 %v3177
        %v3276 = vunpack.c.l.b16 %v3178
        %v3277 = vunpack.c.l.b16 %v3179
        %v3278 = vunpack.c.l.b16 %v3180
        %v3279 = vunpack.c.l.b16 %v3181
        %v3280 = vunpack.c.l.b16 %v3182
        %v3281 = vunpack.c.l.b16 %v3183
        %v3282 = vunpack.c.l.b16 %v3184
        %v3283 = vunpack.c.l.b16 %v3185
        %v3284 = vunpack.c.l.b16 %v3186
        %v3285 = vunpack.c.l.b16 %v3187
        %v3286 = vunpack.c.l.b16 %v3188
        %v3287 = vunpack.c.l.b16 %v3189
        %v3288 = vunpack.c.l.b16 %v3190
        %v3289 = vunpack.c.l.b16 %v3191
        %v3290 = vunpack.c.l.b16 %v3192
        %v3291 = vunpack.c.l.b16 %v3193
        %v3292 = vunpack.c.l.b16 %v3194
        %v3293 = vunpack.c.l.b16 %v3195
        %v3294 = vunpack.c.l.b16 %v3196
        %v3295 = vunpack.c.l.b16 %v3197
        %v3296 = vunpack.c.l.b16 %v3198
        %v3297 = vunpack.c.l.b16 %v3199
        %v3298 = vunpack.c.l.b16 %v3200
        %v3299 = vunpack.c.l.b16 %v3201
        %v3300 = vunpack.c.l.b16 %v3202
        %v3301 = vunpack.c.l.b16 %v3203
        %v3302 = vunpack.c.l.b16 %v3204
        %v3303 = vunpack.c.l.b16 %v3205
        %v3304 = vunpack.c.l.b16 %v3206
        %v3305 = vpack.c.b16 %v3257, %v3256
        %v3306 = vpack.c.b16 %v3259, %v3258
        %v3307 = vpack.c.b16 %v3261, %v3260
        %v3308 = vpack.c.b16 %v3263, %v3262
        %v3309 = vpack.c.b16 %v3265, %v3264
        %v3310 = vpack.c.b16 %v3267, %v3266
        %v3311 = vpack.c.b16 %v3269, %v3268
        %v3312 = vpack.c.b16 %v3271, %v3270
        %v3313 = vpack.c.b16 %v3273, %v3272
        %v3314 = vpack.c.b16 %v3275, %v3274
        %v3315 = vpack.c.b16 %v3277, %v3276
        %v3316 = vpack.c.b16 %v3279, %v3278
        %v3317 = vpack.c.b16 %v3281, %v3280
        %v3318 = vpack.c.b16 %v3283, %v3282
        %v3319 = vpack.c.b16 %v3285, %v3284
        %v3320 = vpack.c.b16 %v3287, %v3286
        %v3321 = vpack.c.b16 %v3289, %v3288
        %v3322 = vpack.c.b16 %v3291, %v3290
        %v3323 = vpack.c.b16 %v3293, %v3292
        %v3324 = vpack.c.b16 %v3295, %v3294
        %v3325 = vpack.c.b16 %v3297, %v3296
        %v3326 = vpack.c.b16 %v3299, %v3298
        %v3327 = vpack.c.b16 %v3301, %v3300
        %v3328 = vpack.c.b16 %v3303, %v3302
        %v3329 = vpack.c.b16 %v3304, %v3304
        %v3331 = vshrl.u32 %v3305, 16
        %v3333 = vshll.u32 %v3305, 16
        %v3335 = vrot.slane %v3333, 1
        %v3336 = vor.u32 %v3331, %v3335
        %v3338 = vshll.u32 %v3306, 16
        %v3340 = vrot.slane %v3338, 1
        %v3341 = vsel %vm1526, %v3336, %v3340
        %v3342 = vshrl.u32 %v3306, 16
        %v3344 = vor.u32 %v3342, %v3340
        %v3346 = vshll.u32 %v3307, 16
        %v3348 = vrot.slane %v3346, 1
        %v3349 = vsel %vm1526, %v3344, %v3348
        %v3350 = vshrl.u32 %v3307, 16
        %v3352 = vor.u32 %v3350, %v3348
        %v3354 = vshll.u32 %v3308, 16
        %v3356 = vrot.slane %v3354, 1
        %v3357 = vsel %vm1526, %v3352, %v3356
        %v3358 = vshrl.u32 %v3308, 16
        %v3360 = vor.u32 %v3358, %v3356
        %v3362 = vshll.u32 %v3309, 16
        %v3364 = vrot.slane %v3362, 1
        %v3365 = vsel %vm1526, %v3360, %v3364
        %v3366 = vshrl.u32 %v3309, 16
        %v3368 = vor.u32 %v3366, %v3364
        %v3370 = vshll.u32 %v3310, 16
        %v3372 = vrot.slane %v3370, 1
        %v3373 = vsel %vm1526, %v3368, %v3372
        %v3374 = vshrl.u32 %v3310, 16
        %v3376 = vor.u32 %v3374, %v3372
        %v3378 = vshll.u32 %v3311, 16
        %v3380 = vrot.slane %v3378, 1
        %v3381 = vsel %vm1526, %v3376, %v3380
        %v3382 = vshrl.u32 %v3311, 16
        %v3384 = vor.u32 %v3382, %v3380
        %v3386 = vshll.u32 %v3312, 16
        %v3388 = vrot.slane %v3386, 1
        %v3389 = vsel %vm1526, %v3384, %v3388
        %v3390 = vshrl.u32 %v3312, 16
        %v3392 = vor.u32 %v3390, %v3388
        %v3394 = vshll.u32 %v3313, 16
        %v3396 = vrot.slane %v3394, 1
        %v3397 = vsel %vm1526, %v3392, %v3396
        %v3398 = vshrl.u32 %v3313, 16
        %v3400 = vor.u32 %v3398, %v3396
        %v3402 = vshll.u32 %v3314, 16
        %v3404 = vrot.slane %v3402, 1
        %v3405 = vsel %vm1526, %v3400, %v3404
        %v3406 = vshrl.u32 %v3314, 16
        %v3408 = vor.u32 %v3406, %v3404
        %v3410 = vshll.u32 %v3315, 16
        %v3412 = vrot.slane %v3410, 1
        %v3413 = vsel %vm1526, %v3408, %v3412
        %v3414 = vshrl.u32 %v3315, 16
        %v3416 = vor.u32 %v3414, %v3412
        %v3418 = vshll.u32 %v3316, 16
        %v3420 = vrot.slane %v3418, 1
        %v3421 = vsel %vm1526, %v3416, %v3420
        %v3422 = vshrl.u32 %v3316, 16
        %v3424 = vor.u32 %v3422, %v3420
        %v3426 = vshll.u32 %v3317, 16
        %v3428 = vrot.slane %v3426, 1
        %v3429 = vsel %vm1526, %v3424, %v3428
        %v3430 = vshrl.u32 %v3317, 16
        %v3432 = vor.u32 %v3430, %v3428
        %v3434 = vshll.u32 %v3318, 16
        %v3436 = vrot.slane %v3434, 1
        %v3437 = vsel %vm1526, %v3432, %v3436
        %v3438 = vshrl.u32 %v3318, 16
        %v3440 = vor.u32 %v3438, %v3436
        %v3442 = vshll.u32 %v3319, 16
        %v3444 = vrot.slane %v3442, 1
        %v3445 = vsel %vm1526, %v3440, %v3444
        %v3446 = vshrl.u32 %v3319, 16
        %v3448 = vor.u32 %v3446, %v3444
        %v3450 = vshll.u32 %v3320, 16
        %v3452 = vrot.slane %v3450, 1
        %v3453 = vsel %vm1526, %v3448, %v3452
        %v3454 = vshrl.u32 %v3320, 16
        %v3456 = vor.u32 %v3454, %v3452
        %v3458 = vshll.u32 %v3321, 16
        %v3460 = vrot.slane %v3458, 1
        %v3461 = vsel %vm1526, %v3456, %v3460
        %v3462 = vshrl.u32 %v3321, 16
        %v3464 = vor.u32 %v3462, %v3460
        %v3466 = vshll.u32 %v3322, 16
        %v3468 = vrot.slane %v3466, 1
        %v3469 = vsel %vm1526, %v3464, %v3468
        %v3470 = vshrl.u32 %v3322, 16
        %v3472 = vor.u32 %v3470, %v3468
        %v3474 = vshll.u32 %v3323, 16
        %v3476 = vrot.slane %v3474, 1
        %v3477 = vsel %vm1526, %v3472, %v3476
        %v3478 = vshrl.u32 %v3323, 16
        %v3480 = vor.u32 %v3478, %v3476
        %v3482 = vshll.u32 %v3324, 16
        %v3484 = vrot.slane %v3482, 1
        %v3485 = vsel %vm1526, %v3480, %v3484
        %v3486 = vshrl.u32 %v3324, 16
        %v3488 = vor.u32 %v3486, %v3484
        %v3490 = vshll.u32 %v3325, 16
        %v3492 = vrot.slane %v3490, 1
        %v3493 = vsel %vm1526, %v3488, %v3492
        %v3494 = vshrl.u32 %v3325, 16
        %v3496 = vor.u32 %v3494, %v3492
        %v3498 = vshll.u32 %v3326, 16
        %v3500 = vrot.slane %v3498, 1
        %v3501 = vsel %vm1526, %v3496, %v3500
        %v3502 = vshrl.u32 %v3326, 16
        %v3504 = vor.u32 %v3502, %v3500
        %v3506 = vshll.u32 %v3327, 16
        %v3508 = vrot.slane %v3506, 1
        %v3509 = vsel %vm1526, %v3504, %v3508
        %v3510 = vshrl.u32 %v3327, 16
        %v3512 = vor.u32 %v3510, %v3508
        %v3514 = vshll.u32 %v3328, 16
        %v3516 = vrot.slane %v3514, 1
        %v3517 = vsel %vm1526, %v3512, %v3516
        %v3518 = vshrl.u32 %v3328, 16
        %v3520 = vor.u32 %v3518, %v3516
        %v3522 = vshll.u32 %v3329, 16
        %v3524 = vrot.slane %v3522, 1
        %v3525 = vsel %vm1526, %v3520, %v3524
        %3550 = vst [vmem:[#allocation3 + $0x38] sm:$0xff] %v3341
        %3551 = vst [vmem:[#allocation3 + $0x80] sm:$0xff] %v3349
        %3552 = vst [vmem:[#allocation3 + $0xc8] sm:$0xff] %v3357
        %3553 = vst [vmem:[#allocation3 + $0x110] sm:$0xff] %v3365
        %3554 = vst [vmem:[#allocation3 + $0x158] sm:$0xff] %v3373
        %3555 = vst [vmem:[#allocation3 + $0x1a0] sm:$0xff] %v3381
        %3556 = vst [vmem:[#allocation3 + $0x1e8] sm:$0xff] %v3389
        %3557 = vst [vmem:[#allocation3 + $0x230] sm:$0xff] %v3397
        %3558 = vst [vmem:[#allocation3 + $0x278] sm:$0xff] %v3405
        %3559 = vst [vmem:[#allocation3 + $0x2c0] sm:$0xff] %v3413
        %3560 = vst [vmem:[#allocation3 + $0x308] sm:$0xff] %v3421
        %3561 = vst [vmem:[#allocation3 + $0x350] sm:$0xff] %v3429
        %3562 = vst [vmem:[#allocation3 + $0x398] sm:$0xff] %v3437
        %3563 = vst [vmem:[#allocation3 + $0x3e0] sm:$0xff] %v3445
        %3564 = vst [vmem:[#allocation3 + $0x428] sm:$0xff] %v3453
        %3565 = vst [vmem:[#allocation3 + $0x470] sm:$0xff] %v3461
        %3566 = vst [vmem:[#allocation3 + $0x4b8] sm:$0xff] %v3469
        %3567 = vst [vmem:[#allocation3 + $0x500] sm:$0xff] %v3477
        %3568 = vst [vmem:[#allocation3 + $0x548] sm:$0xff] %v3485
        %3569 = vst [vmem:[#allocation3 + $0x590] sm:$0xff] %v3493
        %3570 = vst [vmem:[#allocation3 + $0x5d8] sm:$0xff] %v3501
        %3571 = vst [vmem:[#allocation3 + $0x620] sm:$0xff] %v3509
        %3572 = vst [vmem:[#allocation3 + $0x668] sm:$0xff] %v3517
        %3573 = vst [vmem:[#allocation3 + $0x6b0] sm:$0xff] %v3525
        %v3574 = vld [vmem:[%s237 + $0x18] sm:$0xe]
        %v3575 = vld [vmem:[%s237 + $0x1c] sm:$0xf]
        %v3576 = vld [vmem:[%s237 + $0x20] sm:$0xf]
        %v3577 = vld [vmem:[%s237 + $0x24] sm:$0xf]
        %v3578 = vld [vmem:[%s237 + $0x28] sm:$0xf]
        %v3579 = vld [vmem:[%s237 + $0x2c] sm:$0xf]
        %v3580 = vld [vmem:[%s237 + $0x30] sm:$0xf]
        %v3581 = vld [vmem:[%s237 + $0x34] sm:$0xf]
        %v3582 = vld [vmem:[%s237 + $0x38] sm:$0xf]
        %v3583 = vld [vmem:[%s237 + $0x3c] sm:$0xf]
        %v3584 = vld [vmem:[%s237 + $0x40] sm:$0xf]
        %v3585 = vld [vmem:[%s237 + $0x44] sm:$0xf]
        %v3586 = vld [vmem:[%s237 + $0x48] sm:$0xf]
        %v3587 = vld [vmem:[%s237 + $0x4c] sm:$0xf]
        %v3588 = vld [vmem:[%s237 + $0x50] sm:$0xf]
        %v3589 = vld [vmem:[%s237 + $0x54] sm:$0xf]
        %v3590 = vld [vmem:[%s237 + $0x58] sm:$0xf]
        %v3591 = vld [vmem:[%s237 + $0x5c] sm:$0xf]
        %v3592 = vld [vmem:[%s237 + $0x60] sm:$0xf]
        %v3593 = vld [vmem:[%s237 + $0x64] sm:$0xf]
        %v3594 = vld [vmem:[%s237 + $0x68] sm:$0xf]
        %v3595 = vld [vmem:[%s237 + $0x6c] sm:$0xf]
        %v3596 = vld [vmem:[%s237 + $0x70] sm:$0xf]
        %v3597 = vld [vmem:[%s237 + $0x74] sm:$0xf]
        %v3598 = vld [vmem:[%s237 + $0x78] sm:$0xf]
        %v3599 = vld [vmem:[%s237 + $0x7c] sm:$0xf]
        %v3600 = vld [vmem:[%s237 + $0x80] sm:$0xf]
        %v3601 = vld [vmem:[%s237 + $0x84] sm:$0xf]
        %v3602 = vld [vmem:[%s237 + $0x88] sm:$0xf]
        %v3603 = vld [vmem:[%s237 + $0x8c] sm:$0xf]
        %v3604 = vld [vmem:[%s237 + $0x90] sm:$0xf]
        %v3605 = vld [vmem:[%s237 + $0x94] sm:$0xf]
        %v3606 = vld [vmem:[%s237 + $0x98] sm:$0xf]
        %v3607 = vld [vmem:[%s237 + $0x9c] sm:$0xf]
        %v3608 = vld [vmem:[%s237 + $0xa0] sm:$0xf]
        %v3609 = vld [vmem:[%s237 + $0xa4] sm:$0xf]
        %v3610 = vld [vmem:[%s237 + $0xa8] sm:$0xf]
        %v3611 = vld [vmem:[%s237 + $0xac] sm:$0xf]
        %v3612 = vld [vmem:[%s237 + $0xb0] sm:$0xf]
        %v3613 = vld [vmem:[%s237 + $0xb4] sm:$0xf]
        %v3614 = vld [vmem:[%s237 + $0xb8] sm:$0xf]
        %v3615 = vld [vmem:[%s237 + $0xbc] sm:$0xf]
        %v3616 = vld [vmem:[%s237 + $0xc0] sm:$0xf]
        %v3617 = vld [vmem:[%s237 + $0xc4] sm:$0xf]
        %v3618 = vld [vmem:[%s237 + $0xc8] sm:$0xf]
        %v3619 = vld [vmem:[%s237 + $0xcc] sm:$0xf]
        %v3620 = vld [vmem:[%s237 + $0xd0] sm:$0xf]
        %v3621 = vld [vmem:[%s237 + $0xd4] sm:$0xf]
        %v3622 = vld [vmem:[%s237 + $0xd8] sm:$0x1]
        %v3672 = vunpack.c.l.b16 %v3574
        %v3673 = vunpack.c.l.b16 %v3575
        %v3674 = vunpack.c.l.b16 %v3576
        %v3675 = vunpack.c.l.b16 %v3577
        %v3676 = vunpack.c.l.b16 %v3578
        %v3677 = vunpack.c.l.b16 %v3579
        %v3678 = vunpack.c.l.b16 %v3580
        %v3679 = vunpack.c.l.b16 %v3581
        %v3680 = vunpack.c.l.b16 %v3582
        %v3681 = vunpack.c.l.b16 %v3583
        %v3682 = vunpack.c.l.b16 %v3584
        %v3683 = vunpack.c.l.b16 %v3585
        %v3684 = vunpack.c.l.b16 %v3586
        %v3685 = vunpack.c.l.b16 %v3587
        %v3686 = vunpack.c.l.b16 %v3588
        %v3687 = vunpack.c.l.b16 %v3589
        %v3688 = vunpack.c.l.b16 %v3590
        %v3689 = vunpack.c.l.b16 %v3591
        %v3690 = vunpack.c.l.b16 %v3592
        %v3691 = vunpack.c.l.b16 %v3593
        %v3692 = vunpack.c.l.b16 %v3594
        %v3693 = vunpack.c.l.b16 %v3595
        %v3694 = vunpack.c.l.b16 %v3596
        %v3695 = vunpack.c.l.b16 %v3597
        %v3696 = vunpack.c.l.b16 %v3598
        %v3697 = vunpack.c.l.b16 %v3599
        %v3698 = vunpack.c.l.b16 %v3600
        %v3699 = vunpack.c.l.b16 %v3601
        %v3700 = vunpack.c.l.b16 %v3602
        %v3701 = vunpack.c.l.b16 %v3603
        %v3702 = vunpack.c.l.b16 %v3604
        %v3703 = vunpack.c.l.b16 %v3605
        %v3704 = vunpack.c.l.b16 %v3606
        %v3705 = vunpack.c.l.b16 %v3607
        %v3706 = vunpack.c.l.b16 %v3608
        %v3707 = vunpack.c.l.b16 %v3609
        %v3708 = vunpack.c.l.b16 %v3610
        %v3709 = vunpack.c.l.b16 %v3611
        %v3710 = vunpack.c.l.b16 %v3612
        %v3711 = vunpack.c.l.b16 %v3613
        %v3712 = vunpack.c.l.b16 %v3614
        %v3713 = vunpack.c.l.b16 %v3615
        %v3714 = vunpack.c.l.b16 %v3616
        %v3715 = vunpack.c.l.b16 %v3617
        %v3716 = vunpack.c.l.b16 %v3618
        %v3717 = vunpack.c.l.b16 %v3619
        %v3718 = vunpack.c.l.b16 %v3620
        %v3719 = vunpack.c.l.b16 %v3621
        %v3720 = vunpack.c.l.b16 %v3622
        %v3721 = vpack.c.b16 %v3673, %v3672
        %v3722 = vpack.c.b16 %v3675, %v3674
        %v3723 = vpack.c.b16 %v3677, %v3676
        %v3724 = vpack.c.b16 %v3679, %v3678
        %v3725 = vpack.c.b16 %v3681, %v3680
        %v3726 = vpack.c.b16 %v3683, %v3682
        %v3727 = vpack.c.b16 %v3685, %v3684
        %v3728 = vpack.c.b16 %v3687, %v3686
        %v3729 = vpack.c.b16 %v3689, %v3688
        %v3730 = vpack.c.b16 %v3691, %v3690
        %v3731 = vpack.c.b16 %v3693, %v3692
        %v3732 = vpack.c.b16 %v3695, %v3694
        %v3733 = vpack.c.b16 %v3697, %v3696
        %v3734 = vpack.c.b16 %v3699, %v3698
        %v3735 = vpack.c.b16 %v3701, %v3700
        %v3736 = vpack.c.b16 %v3703, %v3702
        %v3737 = vpack.c.b16 %v3705, %v3704
        %v3738 = vpack.c.b16 %v3707, %v3706
        %v3739 = vpack.c.b16 %v3709, %v3708
        %v3740 = vpack.c.b16 %v3711, %v3710
        %v3741 = vpack.c.b16 %v3713, %v3712
        %v3742 = vpack.c.b16 %v3715, %v3714
        %v3743 = vpack.c.b16 %v3717, %v3716
        %v3744 = vpack.c.b16 %v3719, %v3718
        %v3745 = vpack.c.b16 %v3720, %v3720
        %v3746 = vrot.slane %v3721, 1
        %v3747 = vrot.slane %v3722, 1
        %v3748 = vsel %vm1943, %v3746, %v3747
        %v3749 = vrot.slane %v3723, 1
        %v3750 = vsel %vm1943, %v3747, %v3749
        %v3751 = vrot.slane %v3724, 1
        %v3752 = vsel %vm1943, %v3749, %v3751
        %v3753 = vrot.slane %v3725, 1
        %v3754 = vsel %vm1943, %v3751, %v3753
        %v3755 = vrot.slane %v3726, 1
        %v3756 = vsel %vm1943, %v3753, %v3755
        %v3757 = vrot.slane %v3727, 1
        %v3758 = vsel %vm1943, %v3755, %v3757
        %v3759 = vrot.slane %v3728, 1
        %v3760 = vsel %vm1943, %v3757, %v3759
        %v3761 = vrot.slane %v3729, 1
        %v3762 = vsel %vm1943, %v3759, %v3761
        %v3763 = vrot.slane %v3730, 1
        %v3764 = vsel %vm1943, %v3761, %v3763
        %v3765 = vrot.slane %v3731, 1
        %v3766 = vsel %vm1943, %v3763, %v3765
        %v3767 = vrot.slane %v3732, 1
        %v3768 = vsel %vm1943, %v3765, %v3767
        %v3769 = vrot.slane %v3733, 1
        %v3770 = vsel %vm1943, %v3767, %v3769
        %v3771 = vrot.slane %v3734, 1
        %v3772 = vsel %vm1943, %v3769, %v3771
        %v3773 = vrot.slane %v3735, 1
        %v3774 = vsel %vm1943, %v3771, %v3773
        %v3775 = vrot.slane %v3736, 1
        %v3776 = vsel %vm1943, %v3773, %v3775
        %v3777 = vrot.slane %v3737, 1
        %v3778 = vsel %vm1943, %v3775, %v3777
        %v3779 = vrot.slane %v3738, 1
        %v3780 = vsel %vm1943, %v3777, %v3779
        %v3781 = vrot.slane %v3739, 1
        %v3782 = vsel %vm1943, %v3779, %v3781
        %v3783 = vrot.slane %v3740, 1
        %v3784 = vsel %vm1943, %v3781, %v3783
        %v3785 = vrot.slane %v3741, 1
        %v3786 = vsel %vm1943, %v3783, %v3785
        %v3787 = vrot.slane %v3742, 1
        %v3788 = vsel %vm1943, %v3785, %v3787
        %v3789 = vrot.slane %v3743, 1
        %v3790 = vsel %vm1943, %v3787, %v3789
        %v3791 = vrot.slane %v3744, 1
        %v3792 = vsel %vm1943, %v3789, %v3791
        %v3793 = vrot.slane %v3745, 1
        %v3794 = vsel %vm1943, %v3791, %v3793
        %3819 = vst [vmem:[#allocation3 + $0x40] sm:$0xff] %v3748
        %3820 = vst [vmem:[#allocation3 + $0x88] sm:$0xff] %v3750
        %3821 = vst [vmem:[#allocation3 + $0xd0] sm:$0xff] %v3752
        %3822 = vst [vmem:[#allocation3 + $0x118] sm:$0xff] %v3754
        %3823 = vst [vmem:[#allocation3 + $0x160] sm:$0xff] %v3756
        %3824 = vst [vmem:[#allocation3 + $0x1a8] sm:$0xff] %v3758
        %3825 = vst [vmem:[#allocation3 + $0x1f0] sm:$0xff] %v3760
        %3826 = vst [vmem:[#allocation3 + $0x238] sm:$0xff] %v3762
        %3827 = vst [vmem:[#allocation3 + $0x280] sm:$0xff] %v3764
        %3828 = vst [vmem:[#allocation3 + $0x2c8] sm:$0xff] %v3766
        %3829 = vst [vmem:[#allocation3 + $0x310] sm:$0xff] %v3768
        %3830 = vst [vmem:[#allocation3 + $0x358] sm:$0xff] %v3770
        %3831 = vst [vmem:[#allocation3 + $0x3a0] sm:$0xff] %v3772
        %3832 = vst [vmem:[#allocation3 + $0x3e8] sm:$0xff] %v3774
        %3833 = vst [vmem:[#allocation3 + $0x430] sm:$0xff] %v3776
        %3834 = vst [vmem:[#allocation3 + $0x478] sm:$0xff] %v3778
        %3835 = vst [vmem:[#allocation3 + $0x4c0] sm:$0xff] %v3780
        %3836 = vst [vmem:[#allocation3 + $0x508] sm:$0xff] %v3782
        %3837 = vst [vmem:[#allocation3 + $0x550] sm:$0xff] %v3784
        %3838 = vst [vmem:[#allocation3 + $0x598] sm:$0xff] %v3786
        %3839 = vst [vmem:[#allocation3 + $0x5e0] sm:$0xff] %v3788
        %3840 = vst [vmem:[#allocation3 + $0x628] sm:$0xff] %v3790
        %3841 = vst [vmem:[#allocation3 + $0x670] sm:$0xff] %v3792
        %3842 = vst [vmem:[#allocation3 + $0x6b8] sm:$0xff] %v3794
        %v3843 = vld [vmem:[#allocation3] sm:$0xff]
        %v3844 = vld [vmem:[#allocation3 + $0x8] sm:$0xff]
        %v3845 = vld [vmem:[#allocation3 + $0x10] sm:$0xff]
        %v3846 = vld [vmem:[#allocation3 + $0x18] sm:$0xff]
        %v3847 = vld [vmem:[#allocation3 + $0x20] sm:$0xff]
        %v3848 = vld [vmem:[#allocation3 + $0x28] sm:$0xff]
        %v3849 = vld [vmem:[#allocation3 + $0x30] sm:$0xff]
        %v3850 = vld [vmem:[#allocation3 + $0x38] sm:$0xff]
        %v3851 = vld [vmem:[#allocation3 + $0x40] sm:$0xff]
        %v3852 = vld [vmem:[#allocation3 + $0x48] sm:$0xff]
        %v3853 = vld [vmem:[#allocation3 + $0x50] sm:$0xff]
        %v3854 = vld [vmem:[#allocation3 + $0x58] sm:$0xff]
        %v3855 = vld [vmem:[#allocation3 + $0x60] sm:$0xff]
        %v3856 = vld [vmem:[#allocation3 + $0x68] sm:$0xff]
        %v3857 = vld [vmem:[#allocation3 + $0x70] sm:$0xff]
        %v3858 = vld [vmem:[#allocation3 + $0x78] sm:$0xff]
        %v3859 = vld [vmem:[#allocation3 + $0x80] sm:$0xff]
        %v3860 = vld [vmem:[#allocation3 + $0x88] sm:$0xff]
        %v3861 = vld [vmem:[#allocation3 + $0x90] sm:$0xff]
        %v3862 = vld [vmem:[#allocation3 + $0x98] sm:$0xff]
        %v3863 = vld [vmem:[#allocation3 + $0xa0] sm:$0xff]
        %v3864 = vld [vmem:[#allocation3 + $0xa8] sm:$0xff]
        %v3865 = vld [vmem:[#allocation3 + $0xb0] sm:$0xff]
        %v3866 = vld [vmem:[#allocation3 + $0xb8] sm:$0xff]
        %v3867 = vld [vmem:[#allocation3 + $0xc0] sm:$0xff]
        %v3868 = vld [vmem:[#allocation3 + $0xc8] sm:$0xff]
        %v3869 = vld [vmem:[#allocation3 + $0xd0] sm:$0xff]
        %v3870 = vld [vmem:[#allocation3 + $0xd8] sm:$0xff]
        %v3871 = vld [vmem:[#allocation3 + $0xe0] sm:$0xff]
        %v3872 = vld [vmem:[#allocation3 + $0xe8] sm:$0xff]
        %v3873 = vld [vmem:[#allocation3 + $0xf0] sm:$0xff]
        %v3874 = vld [vmem:[#allocation3 + $0xf8] sm:$0xff]
        %v3875 = vld [vmem:[#allocation3 + $0x100] sm:$0xff]
        %v3876 = vld [vmem:[#allocation3 + $0x108] sm:$0xff]
        %v3877 = vld [vmem:[#allocation3 + $0x110] sm:$0xff]
        %v3878 = vld [vmem:[#allocation3 + $0x118] sm:$0xff]
        %v3879 = vld [vmem:[#allocation3 + $0x120] sm:$0xff]
        %v3880 = vld [vmem:[#allocation3 + $0x128] sm:$0xff]
        %v3881 = vld [vmem:[#allocation3 + $0x130] sm:$0xff]
        %v3882 = vld [vmem:[#allocation3 + $0x138] sm:$0xff]
        %v3883 = vld [vmem:[#allocation3 + $0x140] sm:$0xff]
        %v3884 = vld [vmem:[#allocation3 + $0x148] sm:$0xff]
        %v3885 = vld [vmem:[#allocation3 + $0x150] sm:$0xff]
        %v3886 = vld [vmem:[#allocation3 + $0x158] sm:$0xff]
        %v3887 = vld [vmem:[#allocation3 + $0x160] sm:$0xff]
        %v3888 = vld [vmem:[#allocation3 + $0x168] sm:$0xff]
        %v3889 = vld [vmem:[#allocation3 + $0x170] sm:$0xff]
        %v3890 = vld [vmem:[#allocation3 + $0x178] sm:$0xff]
        %v3891 = vld [vmem:[#allocation3 + $0x180] sm:$0xff]
        %v3892 = vld [vmem:[#allocation3 + $0x188] sm:$0xff]
        %v3893 = vld [vmem:[#allocation3 + $0x190] sm:$0xff]
        %v3894 = vld [vmem:[#allocation3 + $0x198] sm:$0xff]
        %v3895 = vld [vmem:[#allocation3 + $0x1a0] sm:$0xff]
        %v3896 = vld [vmem:[#allocation3 + $0x1a8] sm:$0xff]
        %v3897 = vld [vmem:[#allocation3 + $0x1b0] sm:$0xff]
        %v3898 = vld [vmem:[#allocation3 + $0x1b8] sm:$0xff]
        %v3899 = vld [vmem:[#allocation3 + $0x1c0] sm:$0xff]
        %v3900 = vld [vmem:[#allocation3 + $0x1c8] sm:$0xff]
        %v3901 = vld [vmem:[#allocation3 + $0x1d0] sm:$0xff]
        %v3902 = vld [vmem:[#allocation3 + $0x1d8] sm:$0xff]
        %v3903 = vld [vmem:[#allocation3 + $0x1e0] sm:$0xff]
        %v3904 = vld [vmem:[#allocation3 + $0x1e8] sm:$0xff]
        %v3905 = vld [vmem:[#allocation3 + $0x1f0] sm:$0xff]
        %v3906 = vld [vmem:[#allocation3 + $0x1f8] sm:$0xff]
        %v3907 = vld [vmem:[#allocation3 + $0x200] sm:$0xff]
        %v3908 = vld [vmem:[#allocation3 + $0x208] sm:$0xff]
        %v3909 = vld [vmem:[#allocation3 + $0x210] sm:$0xff]
        %v3910 = vld [vmem:[#allocation3 + $0x218] sm:$0xff]
        %v3911 = vld [vmem:[#allocation3 + $0x220] sm:$0xff]
        %v3912 = vld [vmem:[#allocation3 + $0x228] sm:$0xff]
        %v3913 = vld [vmem:[#allocation3 + $0x230] sm:$0xff]
        %v3914 = vld [vmem:[#allocation3 + $0x238] sm:$0xff]
        %v3915 = vld [vmem:[#allocation3 + $0x240] sm:$0xff]
        %v3916 = vld [vmem:[#allocation3 + $0x248] sm:$0xff]
        %v3917 = vld [vmem:[#allocation3 + $0x250] sm:$0xff]
        %v3918 = vld [vmem:[#allocation3 + $0x258] sm:$0xff]
        %v3919 = vld [vmem:[#allocation3 + $0x260] sm:$0xff]
        %v3920 = vld [vmem:[#allocation3 + $0x268] sm:$0xff]
        %v3921 = vld [vmem:[#allocation3 + $0x270] sm:$0xff]
        %v3922 = vld [vmem:[#allocation3 + $0x278] sm:$0xff]
        %v3923 = vld [vmem:[#allocation3 + $0x280] sm:$0xff]
        %v3924 = vld [vmem:[#allocation3 + $0x288] sm:$0xff]
        %v3925 = vld [vmem:[#allocation3 + $0x290] sm:$0xff]
        %v3926 = vld [vmem:[#allocation3 + $0x298] sm:$0xff]
        %v3927 = vld [vmem:[#allocation3 + $0x2a0] sm:$0xff]
        %v3928 = vld [vmem:[#allocation3 + $0x2a8] sm:$0xff]
        %v3929 = vld [vmem:[#allocation3 + $0x2b0] sm:$0xff]
        %v3930 = vld [vmem:[#allocation3 + $0x2b8] sm:$0xff]
        %v3931 = vld [vmem:[#allocation3 + $0x2c0] sm:$0xff]
        %v3932 = vld [vmem:[#allocation3 + $0x2c8] sm:$0xff]
        %v3933 = vld [vmem:[#allocation3 + $0x2d0] sm:$0xff]
        %v3934 = vld [vmem:[#allocation3 + $0x2d8] sm:$0xff]
        %v3935 = vld [vmem:[#allocation3 + $0x2e0] sm:$0xff]
        %v3936 = vld [vmem:[#allocation3 + $0x2e8] sm:$0xff]
        %v3937 = vld [vmem:[#allocation3 + $0x2f0] sm:$0xff]
        %v3938 = vld [vmem:[#allocation3 + $0x2f8] sm:$0xff]
        %v3939 = vld [vmem:[#allocation3 + $0x300] sm:$0xff]
        %v3940 = vld [vmem:[#allocation3 + $0x308] sm:$0xff]
        %v3941 = vld [vmem:[#allocation3 + $0x310] sm:$0xff]
        %v3942 = vld [vmem:[#allocation3 + $0x318] sm:$0xff]
        %v3943 = vld [vmem:[#allocation3 + $0x320] sm:$0xff]
        %v3944 = vld [vmem:[#allocation3 + $0x328] sm:$0xff]
        %v3945 = vld [vmem:[#allocation3 + $0x330] sm:$0xff]
        %v3946 = vld [vmem:[#allocation3 + $0x338] sm:$0xff]
        %v3947 = vld [vmem:[#allocation3 + $0x340] sm:$0xff]
        %v3948 = vld [vmem:[#allocation3 + $0x348] sm:$0xff]
        %v3949 = vld [vmem:[#allocation3 + $0x350] sm:$0xff]
        %v3950 = vld [vmem:[#allocation3 + $0x358] sm:$0xff]
        %v3951 = vld [vmem:[#allocation3 + $0x360] sm:$0xff]
        %v3952 = vld [vmem:[#allocation3 + $0x368] sm:$0xff]
        %v3953 = vld [vmem:[#allocation3 + $0x370] sm:$0xff]
        %v3954 = vld [vmem:[#allocation3 + $0x378] sm:$0xff]
        %v3955 = vld [vmem:[#allocation3 + $0x380] sm:$0xff]
        %v3956 = vld [vmem:[#allocation3 + $0x388] sm:$0xff]
        %v3957 = vld [vmem:[#allocation3 + $0x390] sm:$0xff]
        %v3958 = vld [vmem:[#allocation3 + $0x398] sm:$0xff]
        %v3959 = vld [vmem:[#allocation3 + $0x3a0] sm:$0xff]
        %v3960 = vld [vmem:[#allocation3 + $0x3a8] sm:$0xff]
        %v3961 = vld [vmem:[#allocation3 + $0x3b0] sm:$0xff]
        %v3962 = vld [vmem:[#allocation3 + $0x3b8] sm:$0xff]
        %v3963 = vld [vmem:[#allocation3 + $0x3c0] sm:$0xff]
        %v3964 = vld [vmem:[#allocation3 + $0x3c8] sm:$0xff]
        %v3965 = vld [vmem:[#allocation3 + $0x3d0] sm:$0xff]
        %v3966 = vld [vmem:[#allocation3 + $0x3d8] sm:$0xff]
        %v3967 = vld [vmem:[#allocation3 + $0x3e0] sm:$0xff]
        %v3968 = vld [vmem:[#allocation3 + $0x3e8] sm:$0xff]
        %v3969 = vld [vmem:[#allocation3 + $0x3f0] sm:$0xff]
        %v3970 = vld [vmem:[#allocation3 + $0x3f8] sm:$0xff]
        %v3971 = vld [vmem:[#allocation3 + $0x400] sm:$0xff]
        %v3972 = vld [vmem:[#allocation3 + $0x408] sm:$0xff]
        %v3973 = vld [vmem:[#allocation3 + $0x410] sm:$0xff]
        %v3974 = vld [vmem:[#allocation3 + $0x418] sm:$0xff]
        %v3975 = vld [vmem:[#allocation3 + $0x420] sm:$0xff]
        %v3976 = vld [vmem:[#allocation3 + $0x428] sm:$0xff]
        %v3977 = vld [vmem:[#allocation3 + $0x430] sm:$0xff]
        %v3978 = vld [vmem:[#allocation3 + $0x438] sm:$0xff]
        %v3979 = vld [vmem:[#allocation3 + $0x440] sm:$0xff]
        %v3980 = vld [vmem:[#allocation3 + $0x448] sm:$0xff]
        %v3981 = vld [vmem:[#allocation3 + $0x450] sm:$0xff]
        %v3982 = vld [vmem:[#allocation3 + $0x458] sm:$0xff]
        %v3983 = vld [vmem:[#allocation3 + $0x460] sm:$0xff]
        %v3984 = vld [vmem:[#allocation3 + $0x468] sm:$0xff]
        %v3985 = vld [vmem:[#allocation3 + $0x470] sm:$0xff]
        %v3986 = vld [vmem:[#allocation3 + $0x478] sm:$0xff]
        %v3987 = vld [vmem:[#allocation3 + $0x480] sm:$0xff]
        %v3988 = vld [vmem:[#allocation3 + $0x488] sm:$0xff]
        %v3989 = vld [vmem:[#allocation3 + $0x490] sm:$0xff]
        %v3990 = vld [vmem:[#allocation3 + $0x498] sm:$0xff]
        %v3991 = vld [vmem:[#allocation3 + $0x4a0] sm:$0xff]
        %v3992 = vld [vmem:[#allocation3 + $0x4a8] sm:$0xff]
        %v3993 = vld [vmem:[#allocation3 + $0x4b0] sm:$0xff]
        %v3994 = vld [vmem:[#allocation3 + $0x4b8] sm:$0xff]
        %v3995 = vld [vmem:[#allocation3 + $0x4c0] sm:$0xff]
        %v3996 = vld [vmem:[#allocation3 + $0x4c8] sm:$0xff]
        %v3997 = vld [vmem:[#allocation3 + $0x4d0] sm:$0xff]
        %v3998 = vld [vmem:[#allocation3 + $0x4d8] sm:$0xff]
        %v3999 = vld [vmem:[#allocation3 + $0x4e0] sm:$0xff]
        %v4000 = vld [vmem:[#allocation3 + $0x4e8] sm:$0xff]
        %v4001 = vld [vmem:[#allocation3 + $0x4f0] sm:$0xff]
        %v4002 = vld [vmem:[#allocation3 + $0x4f8] sm:$0xff]
        %v4003 = vld [vmem:[#allocation3 + $0x500] sm:$0xff]
        %v4004 = vld [vmem:[#allocation3 + $0x508] sm:$0xff]
        %v4005 = vld [vmem:[#allocation3 + $0x510] sm:$0xff]
        %v4006 = vld [vmem:[#allocation3 + $0x518] sm:$0xff]
        %v4007 = vld [vmem:[#allocation3 + $0x520] sm:$0xff]
        %v4008 = vld [vmem:[#allocation3 + $0x528] sm:$0xff]
        %v4009 = vld [vmem:[#allocation3 + $0x530] sm:$0xff]
        %v4010 = vld [vmem:[#allocation3 + $0x538] sm:$0xff]
        %v4011 = vld [vmem:[#allocation3 + $0x540] sm:$0xff]
        %v4012 = vld [vmem:[#allocation3 + $0x548] sm:$0xff]
        %v4013 = vld [vmem:[#allocation3 + $0x550] sm:$0xff]
        %v4014 = vld [vmem:[#allocation3 + $0x558] sm:$0xff]
        %v4015 = vld [vmem:[#allocation3 + $0x560] sm:$0xff]
        %v4016 = vld [vmem:[#allocation3 + $0x568] sm:$0xff]
        %v4017 = vld [vmem:[#allocation3 + $0x570] sm:$0xff]
        %v4018 = vld [vmem:[#allocation3 + $0x578] sm:$0xff]
        %v4019 = vld [vmem:[#allocation3 + $0x580] sm:$0xff]
        %v4020 = vld [vmem:[#allocation3 + $0x588] sm:$0xff]
        %v4021 = vld [vmem:[#allocation3 + $0x590] sm:$0xff]
        %v4022 = vld [vmem:[#allocation3 + $0x598] sm:$0xff]
        %v4023 = vld [vmem:[#allocation3 + $0x5a0] sm:$0xff]
        %v4024 = vld [vmem:[#allocation3 + $0x5a8] sm:$0xff]
        %v4025 = vld [vmem:[#allocation3 + $0x5b0] sm:$0xff]
        %v4026 = vld [vmem:[#allocation3 + $0x5b8] sm:$0xff]
        %v4027 = vld [vmem:[#allocation3 + $0x5c0] sm:$0xff]
        %v4028 = vld [vmem:[#allocation3 + $0x5c8] sm:$0xff]
        %v4029 = vld [vmem:[#allocation3 + $0x5d0] sm:$0xff]
        %v4030 = vld [vmem:[#allocation3 + $0x5d8] sm:$0xff]
        %v4031 = vld [vmem:[#allocation3 + $0x5e0] sm:$0xff]
        %v4032 = vld [vmem:[#allocation3 + $0x5e8] sm:$0xff]
        %v4033 = vld [vmem:[#allocation3 + $0x5f0] sm:$0xff]
        %v4034 = vld [vmem:[#allocation3 + $0x5f8] sm:$0xff]
        %v4035 = vld [vmem:[#allocation3 + $0x600] sm:$0xff]
        %v4036 = vld [vmem:[#allocation3 + $0x608] sm:$0xff]
        %v4037 = vld [vmem:[#allocation3 + $0x610] sm:$0xff]
        %v4038 = vld [vmem:[#allocation3 + $0x618] sm:$0xff]
        %v4039 = vld [vmem:[#allocation3 + $0x620] sm:$0xff]
        %v4040 = vld [vmem:[#allocation3 + $0x628] sm:$0xff]
        %v4041 = vld [vmem:[#allocation3 + $0x630] sm:$0xff]
        %v4042 = vld [vmem:[#allocation3 + $0x638] sm:$0xff]
        %v4043 = vld [vmem:[#allocation3 + $0x640] sm:$0xff]
        %v4044 = vld [vmem:[#allocation3 + $0x648] sm:$0xff]
        %v4045 = vld [vmem:[#allocation3 + $0x650] sm:$0xff]
        %v4046 = vld [vmem:[#allocation3 + $0x658] sm:$0xff]
        %v4047 = vld [vmem:[#allocation3 + $0x660] sm:$0xff]
        %v4048 = vld [vmem:[#allocation3 + $0x668] sm:$0xff]
        %v4049 = vld [vmem:[#allocation3 + $0x670] sm:$0xff]
        %v4050 = vld [vmem:[#allocation3 + $0x678] sm:$0xff]
        %v4051 = vld [vmem:[#allocation3 + $0x680] sm:$0xff]
        %v4052 = vld [vmem:[#allocation3 + $0x688] sm:$0xff]
        %v4053 = vld [vmem:[#allocation3 + $0x690] sm:$0xff]
        %v4054 = vld [vmem:[#allocation3 + $0x698] sm:$0xff]
        %v4055 = vld [vmem:[#allocation3 + $0x6a0] sm:$0xff]
        %v4056 = vld [vmem:[#allocation3 + $0x6a8] sm:$0xff]
        %v4057 = vld [vmem:[#allocation3 + $0x6b0] sm:$0xff]
        %v4058 = vld [vmem:[#allocation3 + $0x6b8] sm:$0xff]
        %v4059 = vld [vmem:[#allocation7] sm:$0xf]
        %v4060 = vld [vmem:[#allocation7 + $0x4] sm:$0xf]
        %v4061 = vld [vmem:[#allocation7 + $0x8] sm:$0xf]
        %v4062 = vld [vmem:[#allocation7 + $0xc] sm:$0xf]
        %v4063 = vld [vmem:[#allocation7 + $0x10] sm:$0xf]
        %v4064 = vld [vmem:[#allocation7 + $0x14] sm:$0xf]
        %v4065 = vld [vmem:[#allocation7 + $0x18] sm:$0xf]
        %v4066 = vld [vmem:[#allocation7 + $0x1c] sm:$0xf]
        %v4067 = vld [vmem:[#allocation7 + $0x20] sm:$0xf]
        %v4068 = vld [vmem:[#allocation7 + $0x24] sm:$0xf]
        %v4069 = vld [vmem:[#allocation7 + $0x28] sm:$0xf]
        %v4070 = vld [vmem:[#allocation7 + $0x2c] sm:$0xf]
        %v4071 = vld [vmem:[#allocation7 + $0x30] sm:$0xf]
        %v4072 = vld [vmem:[#allocation7 + $0x34] sm:$0xf]
        %v4073 = vld [vmem:[#allocation7 + $0x38] sm:$0xf]
        %v4074 = vld [vmem:[#allocation7 + $0x3c] sm:$0xf]
        %v4075 = vld [vmem:[#allocation7 + $0x40] sm:$0xf]
        %v4076 = vld [vmem:[#allocation7 + $0x44] sm:$0xf]
        %v4077 = vld [vmem:[#allocation7 + $0x48] sm:$0xf]
        %v4078 = vld [vmem:[#allocation7 + $0x4c] sm:$0xf]
        %v4079 = vld [vmem:[#allocation7 + $0x50] sm:$0xf]
        %v4080 = vld [vmem:[#allocation7 + $0x54] sm:$0xf]
        %v4081 = vld [vmem:[#allocation7 + $0x58] sm:$0xf]
        %v4082 = vld [vmem:[#allocation7 + $0x5c] sm:$0xf]
        %v4083 = vld [vmem:[#allocation7 + $0x60] sm:$0xf]
        %v4084 = vld [vmem:[#allocation7 + $0x64] sm:$0xf]
        %v4085 = vld [vmem:[#allocation7 + $0x68] sm:$0xf]
        %v4086 = vld [vmem:[#allocation7 + $0x6c] sm:$0xf]
        %v4087 = vld [vmem:[#allocation7 + $0x70] sm:$0xf]
        %v4088 = vld [vmem:[#allocation7 + $0x74] sm:$0xf]
        %v4089 = vld [vmem:[#allocation7 + $0x78] sm:$0xf]
        %v4090 = vld [vmem:[#allocation7 + $0x7c] sm:$0xf]
        %v4091 = vld [vmem:[#allocation7 + $0x80] sm:$0xf]
        %v4092 = vld [vmem:[#allocation7 + $0x84] sm:$0xf]
        %v4093 = vld [vmem:[#allocation7 + $0x88] sm:$0xf]
        %v4094 = vld [vmem:[#allocation7 + $0x8c] sm:$0xf]
        %v4095 = vld [vmem:[#allocation7 + $0x90] sm:$0xf]
        %v4096 = vld [vmem:[#allocation7 + $0x94] sm:$0xf]
        %v4097 = vld [vmem:[#allocation7 + $0x98] sm:$0xf]
        %v4098 = vld [vmem:[#allocation7 + $0x9c] sm:$0xf]
        %v4099 = vld [vmem:[#allocation7 + $0xa0] sm:$0xf]
        %v4100 = vld [vmem:[#allocation7 + $0xa4] sm:$0xf]
        %v4101 = vld [vmem:[#allocation7 + $0xa8] sm:$0xf]
        %v4102 = vld [vmem:[#allocation7 + $0xac] sm:$0xf]
        %v4103 = vld [vmem:[#allocation7 + $0xb0] sm:$0xf]
        %v4104 = vld [vmem:[#allocation7 + $0xb4] sm:$0xf]
        %v4105 = vld [vmem:[#allocation7 + $0xb8] sm:$0xf]
        %v4106 = vld [vmem:[#allocation7 + $0xbc] sm:$0xf]
        %v4107 = vld [vmem:[#allocation7 + $0xc0] sm:$0xf]
        %v4108 = vld [vmem:[#allocation7 + $0xc4] sm:$0xf]
        %v4109 = vld [vmem:[#allocation7 + $0xc8] sm:$0xf]
        %v4110 = vld [vmem:[#allocation7 + $0xcc] sm:$0xf]
        %v4111 = vld [vmem:[#allocation7 + $0xd0] sm:$0xf]
        %v4112 = vld [vmem:[#allocation7 + $0xd4] sm:$0xf]
        %v4113 = vld [vmem:[#allocation7 + $0xd8] sm:$0xf]
        %v4114 = vld [vmem:[#allocation7 + $0xdc] sm:$0xf]
        %v4115 = vld [vmem:[#allocation7 + $0xe0] sm:$0xf]
        %v4116 = vld [vmem:[#allocation7 + $0xe4] sm:$0xf]
        %v4117 = vld [vmem:[#allocation7 + $0xe8] sm:$0xf]
        %v4118 = vld [vmem:[#allocation7 + $0xec] sm:$0xf]
        %v4119 = vld [vmem:[#allocation7 + $0xf0] sm:$0xf]
        %v4120 = vld [vmem:[#allocation7 + $0xf4] sm:$0xf]
        %v4121 = vld [vmem:[#allocation7 + $0xf8] sm:$0xf]
        %v4122 = vld [vmem:[#allocation7 + $0xfc] sm:$0xf]
        %v4123 = vld [vmem:[#allocation7 + $0x100] sm:$0xf]
        %v4124 = vld [vmem:[#allocation7 + $0x104] sm:$0xf]
        %v4125 = vld [vmem:[#allocation7 + $0x108] sm:$0xf]
        %v4126 = vld [vmem:[#allocation7 + $0x10c] sm:$0xf]
        %v4127 = vld [vmem:[#allocation7 + $0x110] sm:$0xf]
        %v4128 = vld [vmem:[#allocation7 + $0x114] sm:$0xf]
        %v4129 = vld [vmem:[#allocation7 + $0x118] sm:$0xf]
        %v4130 = vld [vmem:[#allocation7 + $0x11c] sm:$0xf]
        %v4131 = vld [vmem:[#allocation7 + $0x120] sm:$0xf]
        %v4132 = vld [vmem:[#allocation7 + $0x124] sm:$0xf]
        %v4133 = vld [vmem:[#allocation7 + $0x128] sm:$0xf]
        %v4134 = vld [vmem:[#allocation7 + $0x12c] sm:$0xf]
        %v4135 = vld [vmem:[#allocation7 + $0x130] sm:$0xf]
        %v4136 = vld [vmem:[#allocation7 + $0x134] sm:$0xf]
        %v4137 = vld [vmem:[#allocation7 + $0x138] sm:$0xf]
        %v4138 = vld [vmem:[#allocation7 + $0x13c] sm:$0xf]
        %v4139 = vld [vmem:[#allocation7 + $0x140] sm:$0xf]
        %v4140 = vld [vmem:[#allocation7 + $0x144] sm:$0xf]
        %v4141 = vld [vmem:[#allocation7 + $0x148] sm:$0xf]
        %v4142 = vld [vmem:[#allocation7 + $0x14c] sm:$0xf]
        %v4143 = vld [vmem:[#allocation7 + $0x150] sm:$0xf]
        %v4144 = vld [vmem:[#allocation7 + $0x154] sm:$0xf]
        %v4145 = vld [vmem:[#allocation7 + $0x158] sm:$0xf]
        %v4146 = vld [vmem:[#allocation7 + $0x15c] sm:$0xf]
        %v4147 = vld [vmem:[#allocation7 + $0x160] sm:$0xf]
        %v4148 = vld [vmem:[#allocation7 + $0x164] sm:$0xf]
        %v4149 = vld [vmem:[#allocation7 + $0x168] sm:$0xf]
        %v4150 = vld [vmem:[#allocation7 + $0x16c] sm:$0xf]
        %v4151 = vld [vmem:[#allocation7 + $0x170] sm:$0xf]
        %v4152 = vld [vmem:[#allocation7 + $0x174] sm:$0xf]
        %v4153 = vld [vmem:[#allocation7 + $0x178] sm:$0xf]
        %v4154 = vld [vmem:[#allocation7 + $0x17c] sm:$0xf]
        %v4155 = vld [vmem:[#allocation7 + $0x180] sm:$0xf]
        %v4156 = vld [vmem:[#allocation7 + $0x184] sm:$0xf]
        %v4157 = vld [vmem:[#allocation7 + $0x188] sm:$0xf]
        %v4158 = vld [vmem:[#allocation7 + $0x18c] sm:$0xf]
        %v4159 = vld [vmem:[#allocation7 + $0x190] sm:$0xf]
        %v4160 = vld [vmem:[#allocation7 + $0x194] sm:$0xf]
        %v4161 = vld [vmem:[#allocation7 + $0x198] sm:$0xf]
        %v4162 = vld [vmem:[#allocation7 + $0x19c] sm:$0xf]
        %v4163 = vld [vmem:[#allocation7 + $0x1a0] sm:$0xf]
        %v4164 = vld [vmem:[#allocation7 + $0x1a4] sm:$0xf]
        %v4165 = vld [vmem:[#allocation7 + $0x1a8] sm:$0xf]
        %v4166 = vld [vmem:[#allocation7 + $0x1ac] sm:$0xf]
        %v4167 = vld [vmem:[#allocation7 + $0x1b0] sm:$0xf]
        %v4168 = vld [vmem:[#allocation7 + $0x1b4] sm:$0xf]
        %v4169 = vld [vmem:[#allocation7 + $0x1b8] sm:$0xf]
        %v4170 = vld [vmem:[#allocation7 + $0x1bc] sm:$0xf]
        %v4171 = vld [vmem:[#allocation7 + $0x1c0] sm:$0xf]
        %v4172 = vld [vmem:[#allocation7 + $0x1c4] sm:$0xf]
        %v4173 = vld [vmem:[#allocation7 + $0x1c8] sm:$0xf]
        %v4174 = vld [vmem:[#allocation7 + $0x1cc] sm:$0xf]
        %v4175 = vld [vmem:[#allocation7 + $0x1d0] sm:$0xf]
        %v4176 = vld [vmem:[#allocation7 + $0x1d4] sm:$0xf]
        %v4177 = vld [vmem:[#allocation7 + $0x1d8] sm:$0xf]
        %v4178 = vld [vmem:[#allocation7 + $0x1dc] sm:$0xf]
        %v4179 = vld [vmem:[#allocation7 + $0x1e0] sm:$0xf]
        %v4180 = vld [vmem:[#allocation7 + $0x1e4] sm:$0xf]
        %v4181 = vld [vmem:[#allocation7 + $0x1e8] sm:$0xf]
        %v4182 = vld [vmem:[#allocation7 + $0x1ec] sm:$0xf]
        %v4183 = vld [vmem:[#allocation7 + $0x1f0] sm:$0xf]
        %v4184 = vld [vmem:[#allocation7 + $0x1f4] sm:$0xf]
        %v4185 = vld [vmem:[#allocation7 + $0x1f8] sm:$0xf]
        %v4186 = vld [vmem:[#allocation7 + $0x1fc] sm:$0xf]
        %v4187 = vld [vmem:[#allocation7 + $0x200] sm:$0xf]
        %v4188 = vld [vmem:[#allocation7 + $0x204] sm:$0xf]
        %v4189 = vld [vmem:[#allocation7 + $0x208] sm:$0xf]
        %v4190 = vld [vmem:[#allocation7 + $0x20c] sm:$0xf]
        %v4191 = vld [vmem:[#allocation7 + $0x210] sm:$0xf]
        %v4192 = vld [vmem:[#allocation7 + $0x214] sm:$0xf]
        %v4193 = vld [vmem:[#allocation7 + $0x218] sm:$0xf]
        %v4194 = vld [vmem:[#allocation7 + $0x21c] sm:$0xf]
        %v4195 = vld [vmem:[#allocation7 + $0x220] sm:$0xf]
        %v4196 = vld [vmem:[#allocation7 + $0x224] sm:$0xf]
        %v4197 = vld [vmem:[#allocation7 + $0x228] sm:$0xf]
        %v4198 = vld [vmem:[#allocation7 + $0x22c] sm:$0xf]
        %v4199 = vld [vmem:[#allocation7 + $0x230] sm:$0xf]
        %v4200 = vld [vmem:[#allocation7 + $0x234] sm:$0xf]
        %v4201 = vld [vmem:[#allocation7 + $0x238] sm:$0xf]
        %v4202 = vld [vmem:[#allocation7 + $0x23c] sm:$0xf]
        %v4203 = vld [vmem:[%s3] sm:$0x1]
        %v4205 = vlaneseq
        %v4206 = vshrl.u32 %v4205, 7
        %v4207 = vsub.s32 0, %v4206
        %v4208 = vrot.slane %v4203, %v4207
        %v4354 = vunpack.c.l.b16 %v4059
        %v4355 = vunpack.c.l.b16 %v4060
        %v4356 = vunpack.c.l.b16 %v4061
        %v4357 = vunpack.c.l.b16 %v4062
        %v4358 = vunpack.c.l.b16 %v4063
        %v4359 = vunpack.c.l.b16 %v4064
        %v4360 = vunpack.c.l.b16 %v4065
        %v4361 = vunpack.c.l.b16 %v4066
        %v4362 = vunpack.c.l.b16 %v4067
        %v4363 = vunpack.c.l.b16 %v4068
        %v4364 = vunpack.c.l.b16 %v4069
        %v4365 = vunpack.c.l.b16 %v4070
        %v4366 = vunpack.c.l.b16 %v4071
        %v4367 = vunpack.c.l.b16 %v4072
        %v4368 = vunpack.c.l.b16 %v4073
        %v4369 = vunpack.c.l.b16 %v4074
        %v4370 = vunpack.c.l.b16 %v4075
        %v4371 = vunpack.c.l.b16 %v4076
        %v4372 = vunpack.c.l.b16 %v4077
        %v4373 = vunpack.c.l.b16 %v4078
        %v4374 = vunpack.c.l.b16 %v4079
        %v4375 = vunpack.c.l.b16 %v4080
        %v4376 = vunpack.c.l.b16 %v4081
        %v4377 = vunpack.c.l.b16 %v4082
        %v4378 = vunpack.c.l.b16 %v4083
        %v4379 = vunpack.c.l.b16 %v4084
        %v4380 = vunpack.c.l.b16 %v4085
        %v4381 = vunpack.c.l.b16 %v4086
        %v4382 = vunpack.c.l.b16 %v4087
        %v4383 = vunpack.c.l.b16 %v4088
        %v4384 = vunpack.c.l.b16 %v4089
        %v4385 = vunpack.c.l.b16 %v4090
        %v4386 = vunpack.c.l.b16 %v4091
        %v4387 = vunpack.c.l.b16 %v4092
        %v4388 = vunpack.c.l.b16 %v4093
        %v4389 = vunpack.c.l.b16 %v4094
        %v4390 = vunpack.c.l.b16 %v4095
        %v4391 = vunpack.c.l.b16 %v4096
        %v4392 = vunpack.c.l.b16 %v4097
        %v4393 = vunpack.c.l.b16 %v4098
        %v4394 = vunpack.c.l.b16 %v4099
        %v4395 = vunpack.c.l.b16 %v4100
        %v4396 = vunpack.c.l.b16 %v4101
        %v4397 = vunpack.c.l.b16 %v4102
        %v4398 = vunpack.c.l.b16 %v4103
        %v4399 = vunpack.c.l.b16 %v4104
        %v4400 = vunpack.c.l.b16 %v4105
        %v4401 = vunpack.c.l.b16 %v4106
        %v4402 = vunpack.c.l.b16 %v4107
        %v4403 = vunpack.c.l.b16 %v4108
        %v4404 = vunpack.c.l.b16 %v4109
        %v4405 = vunpack.c.l.b16 %v4110
        %v4406 = vunpack.c.l.b16 %v4111
        %v4407 = vunpack.c.l.b16 %v4112
        %v4408 = vunpack.c.l.b16 %v4113
        %v4409 = vunpack.c.l.b16 %v4114
        %v4410 = vunpack.c.l.b16 %v4115
        %v4411 = vunpack.c.l.b16 %v4116
        %v4412 = vunpack.c.l.b16 %v4117
        %v4413 = vunpack.c.l.b16 %v4118
        %v4414 = vunpack.c.l.b16 %v4119
        %v4415 = vunpack.c.l.b16 %v4120
        %v4416 = vunpack.c.l.b16 %v4121
        %v4417 = vunpack.c.l.b16 %v4122
        %v4418 = vunpack.c.l.b16 %v4123
        %v4419 = vunpack.c.l.b16 %v4124
        %v4420 = vunpack.c.l.b16 %v4125
        %v4421 = vunpack.c.l.b16 %v4126
        %v4422 = vunpack.c.l.b16 %v4127
        %v4423 = vunpack.c.l.b16 %v4128
        %v4424 = vunpack.c.l.b16 %v4129
        %v4425 = vunpack.c.l.b16 %v4130
        %v4426 = vunpack.c.l.b16 %v4131
        %v4427 = vunpack.c.l.b16 %v4132
        %v4428 = vunpack.c.l.b16 %v4133
        %v4429 = vunpack.c.l.b16 %v4134
        %v4430 = vunpack.c.l.b16 %v4135
        %v4431 = vunpack.c.l.b16 %v4136
        %v4432 = vunpack.c.l.b16 %v4137
        %v4433 = vunpack.c.l.b16 %v4138
        %v4434 = vunpack.c.l.b16 %v4139
        %v4435 = vunpack.c.l.b16 %v4140
        %v4436 = vunpack.c.l.b16 %v4141
        %v4437 = vunpack.c.l.b16 %v4142
        %v4438 = vunpack.c.l.b16 %v4143
        %v4439 = vunpack.c.l.b16 %v4144
        %v4440 = vunpack.c.l.b16 %v4145
        %v4441 = vunpack.c.l.b16 %v4146
        %v4442 = vunpack.c.l.b16 %v4147
        %v4443 = vunpack.c.l.b16 %v4148
        %v4444 = vunpack.c.l.b16 %v4149
        %v4445 = vunpack.c.l.b16 %v4150
        %v4446 = vunpack.c.l.b16 %v4151
        %v4447 = vunpack.c.l.b16 %v4152
        %v4448 = vunpack.c.l.b16 %v4153
        %v4449 = vunpack.c.l.b16 %v4154
        %v4450 = vunpack.c.l.b16 %v4155
        %v4451 = vunpack.c.l.b16 %v4156
        %v4452 = vunpack.c.l.b16 %v4157
        %v4453 = vunpack.c.l.b16 %v4158
        %v4454 = vunpack.c.l.b16 %v4159
        %v4455 = vunpack.c.l.b16 %v4160
        %v4456 = vunpack.c.l.b16 %v4161
        %v4457 = vunpack.c.l.b16 %v4162
        %v4458 = vunpack.c.l.b16 %v4163
        %v4459 = vunpack.c.l.b16 %v4164
        %v4460 = vunpack.c.l.b16 %v4165
        %v4461 = vunpack.c.l.b16 %v4166
        %v4462 = vunpack.c.l.b16 %v4167
        %v4463 = vunpack.c.l.b16 %v4168
        %v4464 = vunpack.c.l.b16 %v4169
        %v4465 = vunpack.c.l.b16 %v4170
        %v4466 = vunpack.c.l.b16 %v4171
        %v4467 = vunpack.c.l.b16 %v4172
        %v4468 = vunpack.c.l.b16 %v4173
        %v4469 = vunpack.c.l.b16 %v4174
        %v4470 = vunpack.c.l.b16 %v4175
        %v4471 = vunpack.c.l.b16 %v4176
        %v4472 = vunpack.c.l.b16 %v4177
        %v4473 = vunpack.c.l.b16 %v4178
        %v4474 = vunpack.c.l.b16 %v4179
        %v4475 = vunpack.c.l.b16 %v4180
        %v4476 = vunpack.c.l.b16 %v4181
        %v4477 = vunpack.c.l.b16 %v4182
        %v4478 = vunpack.c.l.b16 %v4183
        %v4479 = vunpack.c.l.b16 %v4184
        %v4480 = vunpack.c.l.b16 %v4185
        %v4481 = vunpack.c.l.b16 %v4186
        %v4482 = vunpack.c.l.b16 %v4187
        %v4483 = vunpack.c.l.b16 %v4188
        %v4484 = vunpack.c.l.b16 %v4189
        %v4485 = vunpack.c.l.b16 %v4190
        %v4486 = vunpack.c.l.b16 %v4191
        %v4487 = vunpack.c.l.b16 %v4192
        %v4488 = vunpack.c.l.b16 %v4193
        %v4489 = vunpack.c.l.b16 %v4194
        %v4490 = vunpack.c.l.b16 %v4195
        %v4491 = vunpack.c.l.b16 %v4196
        %v4492 = vunpack.c.l.b16 %v4197
        %v4493 = vunpack.c.l.b16 %v4198
        %v4494 = vunpack.c.l.b16 %v4199
        %v4495 = vunpack.c.l.b16 %v4200
        %v4496 = vunpack.c.l.b16 %v4201
        %v4497 = vunpack.c.l.b16 %v4202
        %v4498 = vpack.c.b16 %v4355, %v4354
        %v4499 = vpack.c.b16 %v4357, %v4356
        %v4500 = vpack.c.b16 %v4359, %v4358
        %v4501 = vpack.c.b16 %v4361, %v4360
        %v4502 = vpack.c.b16 %v4363, %v4362
        %v4503 = vpack.c.b16 %v4365, %v4364
        %v4504 = vpack.c.b16 %v4367, %v4366
        %v4505 = vpack.c.b16 %v4369, %v4368
        %v4506 = vpack.c.b16 %v4371, %v4370
        %v4507 = vpack.c.b16 %v4373, %v4372
        %v4508 = vpack.c.b16 %v4375, %v4374
        %v4509 = vpack.c.b16 %v4377, %v4376
        %v4510 = vpack.c.b16 %v4379, %v4378
        %v4511 = vpack.c.b16 %v4381, %v4380
        %v4512 = vpack.c.b16 %v4383, %v4382
        %v4513 = vpack.c.b16 %v4385, %v4384
        %v4514 = vpack.c.b16 %v4387, %v4386
        %v4515 = vpack.c.b16 %v4389, %v4388
        %v4516 = vpack.c.b16 %v4391, %v4390
        %v4517 = vpack.c.b16 %v4393, %v4392
        %v4518 = vpack.c.b16 %v4395, %v4394
        %v4519 = vpack.c.b16 %v4397, %v4396
        %v4520 = vpack.c.b16 %v4399, %v4398
        %v4521 = vpack.c.b16 %v4401, %v4400
        %v4522 = vpack.c.b16 %v4403, %v4402
        %v4523 = vpack.c.b16 %v4405, %v4404
        %v4524 = vpack.c.b16 %v4407, %v4406
        %v4525 = vpack.c.b16 %v4409, %v4408
        %v4526 = vpack.c.b16 %v4411, %v4410
        %v4527 = vpack.c.b16 %v4413, %v4412
        %v4528 = vpack.c.b16 %v4415, %v4414
        %v4529 = vpack.c.b16 %v4417, %v4416
        %v4530 = vpack.c.b16 %v4419, %v4418
        %v4531 = vpack.c.b16 %v4421, %v4420
        %v4532 = vpack.c.b16 %v4423, %v4422
        %v4533 = vpack.c.b16 %v4425, %v4424
        %v4534 = vpack.c.b16 %v4427, %v4426
        %v4535 = vpack.c.b16 %v4429, %v4428
        %v4536 = vpack.c.b16 %v4431, %v4430
        %v4537 = vpack.c.b16 %v4433, %v4432
        %v4538 = vpack.c.b16 %v4435, %v4434
        %v4539 = vpack.c.b16 %v4437, %v4436
        %v4540 = vpack.c.b16 %v4439, %v4438
        %v4541 = vpack.c.b16 %v4441, %v4440
        %v4542 = vpack.c.b16 %v4443, %v4442
        %v4543 = vpack.c.b16 %v4445, %v4444
        %v4544 = vpack.c.b16 %v4447, %v4446
        %v4545 = vpack.c.b16 %v4449, %v4448
        %v4546 = vpack.c.b16 %v4451, %v4450
        %v4547 = vpack.c.b16 %v4453, %v4452
        %v4548 = vpack.c.b16 %v4455, %v4454
        %v4549 = vpack.c.b16 %v4457, %v4456
        %v4550 = vpack.c.b16 %v4459, %v4458
        %v4551 = vpack.c.b16 %v4461, %v4460
        %v4552 = vpack.c.b16 %v4463, %v4462
        %v4553 = vpack.c.b16 %v4465, %v4464
        %v4554 = vpack.c.b16 %v4467, %v4466
        %v4555 = vpack.c.b16 %v4469, %v4468
        %v4556 = vpack.c.b16 %v4471, %v4470
        %v4557 = vpack.c.b16 %v4473, %v4472
        %v4558 = vpack.c.b16 %v4475, %v4474
        %v4559 = vpack.c.b16 %v4477, %v4476
        %v4560 = vpack.c.b16 %v4479, %v4478
        %v4561 = vpack.c.b16 %v4481, %v4480
        %v4562 = vpack.c.b16 %v4483, %v4482
        %v4563 = vpack.c.b16 %v4485, %v4484
        %v4564 = vpack.c.b16 %v4487, %v4486
        %v4565 = vpack.c.b16 %v4489, %v4488
        %v4566 = vpack.c.b16 %v4491, %v4490
        %v4567 = vpack.c.b16 %v4493, %v4492
        %v4568 = vpack.c.b16 %v4495, %v4494
        %v4569 = vpack.c.b16 %v4497, %v4496
        %4642 = vmatprep.subr.bf16.mxu0 0
        %4643 = vmatpush1.bf16.msra.mxu0 %v4498
        %4644 = vmatprep.subr.bf16.mxu0 0
        %4645 = vmatpush1.bf16.msra.mxu0 %v4499
        %4646 = vmatprep.subr.bf16.mxu0 0
        %4647 = vmatpush1.bf16.msra.mxu0 %v4500
        %4648 = vmatprep.subr.bf16.mxu0 0
        %4649 = vmatpush1.bf16.msra.mxu0 %v4501
        %4650 = vmatprep.subr.bf16.mxu0 0
        %4651 = vmatpush1.bf16.msra.mxu0 %v4502
        %4652 = vmatprep.subr.bf16.mxu0 0
        %4653 = vmatpush1.bf16.msra.mxu0 %v4503
        %4654 = vmatprep.subr.bf16.mxu0 0
        %4655 = vmatpush1.bf16.msra.mxu0 %v4504
        %4656 = vmatprep.subr.bf16.mxu0 0
        %4657 = vmatpush1.bf16.msra.mxu0 %v4505
        %4658 = vmatprep.subr.bf16.mxu0 0
        %4659 = vmatpush1.bf16.msra.mxu0 %v4506
        %4660 = vmatprep.subr.bf16.mxu0 0
        %4661 = vmatpush1.bf16.msra.mxu0 %v4507
        %4662 = vmatprep.subr.bf16.mxu0 0
        %4663 = vmatpush1.bf16.msra.mxu0 %v4508
        %4664 = vmatprep.subr.bf16.mxu0 0
        %4665 = vmatpush1.bf16.msra.mxu0 %v4509
        %4666 = vmatprep.subr.bf16.mxu0 0
        %4667 = vmatpush1.bf16.msra.mxu0 %v4510
        %4668 = vmatprep.subr.bf16.mxu0 0
        %4669 = vmatpush1.bf16.msra.mxu0 %v4511
        %4670 = vmatprep.subr.bf16.mxu0 0
        %4671 = vmatpush1.bf16.msra.mxu0 %v4512
        %4672 = vmatprep.subr.bf16.mxu0 0
        %4673 = vmatpush1.bf16.msra.mxu0 %v4513
        %4674 = vmatprep.mubr.bf16.mxu0 %v3844
        %4675 = vmatmul.mubr.bf16.gmra.mrb[0].mxu0 %v3843
        %v4676 = vpop.f32.mrb[0].mxu0
        %v4677 = vadd.f32 %v4208, %v4676
        %v4678 = vpop.f32.mrb[0].mxu0
        %v4679 = vpop.f32.mrb[0].mxu0
        %v4680 = vadd.f32 %v4208, %v4679
        %v4681 = vpop.f32.mrb[0].mxu0
        %4682 = vmatprep.mubr.bf16.mxu0 %v3853
        %4683 = vmatmul.mubr.bf16.gmra.mrb[0].mxu0 %v3852
        %v4684 = vpop.f32.mrb[0].mxu0
        %v4685 = vadd.f32 %v4208, %v4684
        %v4686 = vpop.f32.mrb[0].mxu0
        %v4687 = vpop.f32.mrb[0].mxu0
        %v4688 = vadd.f32 %v4208, %v4687
        %v4689 = vpop.f32.mrb[0].mxu0
        %4690 = vmatprep.mubr.bf16.mxu0 %v3862
        %4691 = vmatmul.mubr.bf16.gmra.mrb[0].mxu0 %v3861
        %v4692 = vpop.f32.mrb[0].mxu0
        %v4693 = vadd.f32 %v4208, %v4692
        %v4694 = vpop.f32.mrb[0].mxu0
        %v4695 = vpop.f32.mrb[0].mxu0
        %v4696 = vadd.f32 %v4208, %v4695
        %v4697 = vpop.f32.mrb[0].mxu0
        %4698 = vmatprep.mubr.bf16.mxu0 %v3871
        %4699 = vmatmul.mubr.bf16.gmra.mrb[0].mxu0 %v3870
        %v4700 = vpop.f32.mrb[0].mxu0
        %v4701 = vadd.f32 %v4208, %v4700
        %v4702 = vpop.f32.mrb[0].mxu0
        %v4703 = vpop.f32.mrb[0].mxu0
        %v4704 = vadd.f32 %v4208, %v4703
        %v4705 = vpop.f32.mrb[0].mxu0
        %4706 = vmatprep.mubr.bf16.mxu0 %v3880
        %4707 = vmatmul.mubr.bf16.gmra.mrb[0].mxu0 %v3879
        %v4708 = vpop.f32.mrb[0].mxu0
        %v4709 = vadd.f32 %v4208, %v4708
        %v4710 = vpop.f32.mrb[0].mxu0
        %v4711 = vpop.f32.mrb[0].mxu0
        %v4712 = vadd.f32 %v4208, %v4711
        %v4713 = vpop.f32.mrb[0].mxu0
        %4714 = vmatprep.mubr.bf16.mxu0 %v3889
        %4715 = vmatmul.mubr.bf16.gmra.mrb[0].mxu0 %v3888
        %v4716 = vpop.f32.mrb[0].mxu0
        %v4717 = vadd.f32 %v4208, %v4716
        %v4718 = vpop.f32.mrb[0].mxu0
        %v4719 = vpop.f32.mrb[0].mxu0
        %v4720 = vadd.f32 %v4208, %v4719
        %v4721 = vpop.f32.mrb[0].mxu0
        %4722 = vmatprep.mubr.bf16.mxu0 %v3898
        %4723 = vmatmul.mubr.bf16.gmra.mrb[0].mxu0 %v3897
        %v4724 = vpop.f32.mrb[0].mxu0
        %v4725 = vadd.f32 %v4208, %v4724
        %v4726 = vpop.f32.mrb[0].mxu0
        %v4727 = vpop.f32.mrb[0].mxu0
        %v4728 = vadd.f32 %v4208, %v4727
        %v4729 = vpop.f32.mrb[0].mxu0
        %4730 = vmatprep.mubr.bf16.mxu0 %v3907
        %4731 = vmatmul.mubr.bf16.gmra.mrb[0].mxu0 %v3906
        %v4732 = vpop.f32.mrb[0].mxu0
        %v4733 = vadd.f32 %v4208, %v4732
        %v4734 = vpop.f32.mrb[0].mxu0
        %v4735 = vpop.f32.mrb[0].mxu0
        %v4736 = vadd.f32 %v4208, %v4735
        %v4737 = vpop.f32.mrb[0].mxu0
        %4738 = vmatprep.mubr.bf16.mxu0 %v3916
        %4739 = vmatmul.mubr.bf16.gmra.mrb[0].mxu0 %v3915
        %v4740 = vpop.f32.mrb[0].mxu0
        %v4741 = vadd.f32 %v4208, %v4740
        %v4742 = vpop.f32.mrb[0].mxu0
        %v4743 = vpop.f32.mrb[0].mxu0
        %v4744 = vadd.f32 %v4208, %v4743
        %v4745 = vpop.f32.mrb[0].mxu0
        %4746 = vmatprep.mubr.bf16.mxu0 %v3925
        %4747 = vmatmul.mubr.bf16.gmra.mrb[0].mxu0 %v3924
        %v4748 = vpop.f32.mrb[0].mxu0
        %v4749 = vadd.f32 %v4208, %v4748
        %v4750 = vpop.f32.mrb[0].mxu0
        %v4751 = vpop.f32.mrb[0].mxu0
        %v4752 = vadd.f32 %v4208, %v4751
        %v4753 = vpop.f32.mrb[0].mxu0
        %4754 = vmatprep.mubr.bf16.mxu0 %v3934
        %4755 = vmatmul.mubr.bf16.gmra.mrb[0].mxu0 %v3933
        %v4756 = vpop.f32.mrb[0].mxu0
        %v4757 = vadd.f32 %v4208, %v4756
        %v4758 = vpop.f32.mrb[0].mxu0
        %v4759 = vpop.f32.mrb[0].mxu0
        %v4760 = vadd.f32 %v4208, %v4759
        %v4761 = vpop.f32.mrb[0].mxu0
        %4762 = vmatprep.mubr.bf16.mxu0 %v3943
        %4763 = vmatmul.mubr.bf16.gmra.mrb[0].mxu0 %v3942
        %v4764 = vpop.f32.mrb[0].mxu0
        %v4765 = vadd.f32 %v4208, %v4764
        %v4766 = vpop.f32.mrb[0].mxu0
        %v4767 = vpop.f32.mrb[0].mxu0
        %v4768 = vadd.f32 %v4208, %v4767
        %v4769 = vpop.f32.mrb[0].mxu0
        %4770 = vmatprep.mubr.bf16.mxu0 %v3952
        %4771 = vmatmul.mubr.bf16.gmra.mrb[0].mxu0 %v3951
        %v4772 = vpop.f32.mrb[0].mxu0
        %v4773 = vadd.f32 %v4208, %v4772
        %v4774 = vpop.f32.mrb[0].mxu0
        %v4775 = vpop.f32.mrb[0].mxu0
        %v4776 = vadd.f32 %v4208, %v4775
        %v4777 = vpop.f32.mrb[0].mxu0
        %4778 = vmatprep.mubr.bf16.mxu0 %v3961
        %4779 = vmatmul.mubr.bf16.gmra.mrb[0].mxu0 %v3960
        %v4780 = vpop.f32.mrb[0].mxu0
        %v4781 = vadd.f32 %v4208, %v4780
        %v4782 = vpop.f32.mrb[0].mxu0
        %v4783 = vpop.f32.mrb[0].mxu0
        %v4784 = vadd.f32 %v4208, %v4783
        %v4785 = vpop.f32.mrb[0].mxu0
        %4786 = vmatprep.mubr.bf16.mxu0 %v3970
        %4787 = vmatmul.mubr.bf16.gmra.mrb[0].mxu0 %v3969
        %v4788 = vpop.f32.mrb[0].mxu0
        %v4789 = vadd.f32 %v4208, %v4788
        %v4790 = vpop.f32.mrb[0].mxu0
        %v4791 = vpop.f32.mrb[0].mxu0
        %v4792 = vadd.f32 %v4208, %v4791
        %v4793 = vpop.f32.mrb[0].mxu0
        %4794 = vmatprep.mubr.bf16.mxu0 %v3979
        %4795 = vmatmul.mubr.bf16.gmra.mrb[0].mxu0 %v3978
        %v4796 = vpop.f32.mrb[0].mxu0
        %v4797 = vadd.f32 %v4208, %v4796
        %v4798 = vpop.f32.mrb[0].mxu0
        %v4799 = vpop.f32.mrb[0].mxu0
        %v4800 = vadd.f32 %v4208, %v4799
        %v4801 = vpop.f32.mrb[0].mxu0
        %4802 = vmatprep.mubr.bf16.mxu0 %v3988
        %4803 = vmatmul.mubr.bf16.gmra.mrb[0].mxu0 %v3987
        %v4804 = vpop.f32.mrb[0].mxu0
        %v4805 = vadd.f32 %v4208, %v4804
        %v4806 = vpop.f32.mrb[0].mxu0
        %v4807 = vpop.f32.mrb[0].mxu0
        %v4808 = vadd.f32 %v4208, %v4807
        %v4809 = vpop.f32.mrb[0].mxu0
        %4810 = vmatprep.mubr.bf16.mxu0 %v3997
        %4811 = vmatmul.mubr.bf16.gmra.mrb[0].mxu0 %v3996
        %v4812 = vpop.f32.mrb[0].mxu0
        %v4813 = vadd.f32 %v4208, %v4812
        %v4814 = vpop.f32.mrb[0].mxu0
        %v4815 = vpop.f32.mrb[0].mxu0
        %v4816 = vadd.f32 %v4208, %v4815
        %v4817 = vpop.f32.mrb[0].mxu0
        %4818 = vmatprep.mubr.bf16.mxu0 %v4006
        %4819 = vmatmul.mubr.bf16.gmra.mrb[0].mxu0 %v4005
        %v4820 = vpop.f32.mrb[0].mxu0
        %v4821 = vadd.f32 %v4208, %v4820
        %v4822 = vpop.f32.mrb[0].mxu0
        %v4823 = vpop.f32.mrb[0].mxu0
        %v4824 = vadd.f32 %v4208, %v4823
        %v4825 = vpop.f32.mrb[0].mxu0
        %4826 = vmatprep.mubr.bf16.mxu0 %v4015
        %4827 = vmatmul.mubr.bf16.gmra.mrb[0].mxu0 %v4014
        %v4828 = vpop.f32.mrb[0].mxu0
        %v4829 = vadd.f32 %v4208, %v4828
        %v4830 = vpop.f32.mrb[0].mxu0
        %v4831 = vpop.f32.mrb[0].mxu0
        %v4832 = vadd.f32 %v4208, %v4831
        %v4833 = vpop.f32.mrb[0].mxu0
        %4834 = vmatprep.mubr.bf16.mxu0 %v4024
        %4835 = vmatmul.mubr.bf16.gmra.mrb[0].mxu0 %v4023
        %v4836 = vpop.f32.mrb[0].mxu0
        %v4837 = vadd.f32 %v4208, %v4836
        %v4838 = vpop.f32.mrb[0].mxu0
        %v4839 = vpop.f32.mrb[0].mxu0
        %v4840 = vadd.f32 %v4208, %v4839
        %v4841 = vpop.f32.mrb[0].mxu0
        %4842 = vmatprep.mubr.bf16.mxu0 %v4033
        %4843 = vmatmul.mubr.bf16.gmra.mrb[0].mxu0 %v4032
        %v4844 = vpop.f32.mrb[0].mxu0
        %v4845 = vadd.f32 %v4208, %v4844
        %v4846 = vpop.f32.mrb[0].mxu0
        %v4847 = vpop.f32.mrb[0].mxu0
        %v4848 = vadd.f32 %v4208, %v4847
        %v4849 = vpop.f32.mrb[0].mxu0
        %4850 = vmatprep.mubr.bf16.mxu0 %v4042
        %4851 = vmatmul.mubr.bf16.gmra.mrb[0].mxu0 %v4041
        %v4852 = vpop.f32.mrb[0].mxu0
        %v4853 = vadd.f32 %v4208, %v4852
        %v4854 = vpop.f32.mrb[0].mxu0
        %v4855 = vpop.f32.mrb[0].mxu0
        %v4856 = vadd.f32 %v4208, %v4855
        %v4857 = vpop.f32.mrb[0].mxu0
        %4858 = vmatprep.mubr.bf16.mxu0 %v4051
        %4859 = vmatmul.mubr.bf16.gmra.mrb[0].mxu0 %v4050
        %v4860 = vpop.f32.mrb[0].mxu0
        %v4861 = vadd.f32 %v4208, %v4860
        %v4862 = vpop.f32.mrb[0].mxu0
        %v4863 = vpop.f32.mrb[0].mxu0
        %v4864 = vadd.f32 %v4208, %v4863
        %v4865 = vpop.f32.mrb[0].mxu0
        %4866 = vdwg.mxu0
        %4867 = vmatprep.subr.bf16.mxu0 0
        %4868 = vmatpush1.bf16.msra.mxu0 %v4514
        %4869 = vmatprep.subr.bf16.mxu0 0
        %4870 = vmatpush1.bf16.msra.mxu0 %v4515
        %4871 = vmatprep.subr.bf16.mxu0 0
        %4872 = vmatpush1.bf16.msra.mxu0 %v4516
        %4873 = vmatprep.subr.bf16.mxu0 0
        %4874 = vmatpush1.bf16.msra.mxu0 %v4517
        %4875 = vmatprep.subr.bf16.mxu0 0
        %4876 = vmatpush1.bf16.msra.mxu0 %v4518
        %4877 = vmatprep.subr.bf16.mxu0 0
        %4878 = vmatpush1.bf16.msra.mxu0 %v4519
        %4879 = vmatprep.subr.bf16.mxu0 0
        %4880 = vmatpush1.bf16.msra.mxu0 %v4520
        %4881 = vmatprep.subr.bf16.mxu0 0
        %4882 = vmatpush1.bf16.msra.mxu0 %v4521
        %4883 = vmatprep.subr.bf16.mxu0 0
        %4884 = vmatpush1.bf16.msra.mxu0 %v4522
        %4885 = vmatprep.subr.bf16.mxu0 0
        %4886 = vmatpush1.bf16.msra.mxu0 %v4523
        %4887 = vmatprep.subr.bf16.mxu0 0
        %4888 = vmatpush1.bf16.msra.mxu0 %v4524
        %4889 = vmatprep.subr.bf16.mxu0 0
        %4890 = vmatpush1.bf16.msra.mxu0 %v4525
        %4891 = vmatprep.subr.bf16.mxu0 0
        %4892 = vmatpush1.bf16.msra.mxu0 %v4526
        %4893 = vmatprep.subr.bf16.mxu0 0
        %4894 = vmatpush1.bf16.msra.mxu0 %v4527
        %4895 = vmatprep.subr.bf16.mxu0 0
        %4896 = vmatpush1.bf16.msra.mxu0 %v4528
        %4897 = vmatprep.subr.bf16.mxu0 0
        %4898 = vmatpush1.bf16.msra.mxu0 %v4529
        %4899 = vmatprep.mubr.bf16.mxu0 %v3846
        %4900 = vmatmul.mubr.bf16.gmra.mrb[0].mxu0 %v3845
        %v4901 = vpop.f32.mrb[0].mxu0
        %v4902 = vadd.f32 %v4677, %v4901
        %v4903 = vpop.f32.mrb[0].mxu0
        %v4904 = vpop.f32.mrb[0].mxu0
        %v4905 = vadd.f32 %v4680, %v4904
        %v4906 = vpop.f32.mrb[0].mxu0
        %4907 = vmatprep.mubr.bf16.mxu0 %v3855
        %4908 = vmatmul.mubr.bf16.gmra.mrb[0].mxu0 %v3854
        %v4909 = vpop.f32.mrb[0].mxu0
        %v4910 = vadd.f32 %v4685, %v4909
        %v4911 = vpop.f32.mrb[0].mxu0
        %v4912 = vpop.f32.mrb[0].mxu0
        %v4913 = vadd.f32 %v4688, %v4912
        %v4914 = vpop.f32.mrb[0].mxu0
        %4915 = vmatprep.mubr.bf16.mxu0 %v3864
        %4916 = vmatmul.mubr.bf16.gmra.mrb[0].mxu0 %v3863
        %v4917 = vpop.f32.mrb[0].mxu0
        %v4918 = vadd.f32 %v4693, %v4917
        %v4919 = vpop.f32.mrb[0].mxu0
        %v4920 = vpop.f32.mrb[0].mxu0
        %v4921 = vadd.f32 %v4696, %v4920
        %v4922 = vpop.f32.mrb[0].mxu0
        %4923 = vmatprep.mubr.bf16.mxu0 %v3873
        %4924 = vmatmul.mubr.bf16.gmra.mrb[0].mxu0 %v3872
        %v4925 = vpop.f32.mrb[0].mxu0
        %v4926 = vadd.f32 %v4701, %v4925
        %v4927 = vpop.f32.mrb[0].mxu0
        %v4928 = vpop.f32.mrb[0].mxu0
        %v4929 = vadd.f32 %v4704, %v4928
        %v4930 = vpop.f32.mrb[0].mxu0
        %4931 = vmatprep.mubr.bf16.mxu0 %v3882
        %4932 = vmatmul.mubr.bf16.gmra.mrb[0].mxu0 %v3881
        %v4933 = vpop.f32.mrb[0].mxu0
        %v4934 = vadd.f32 %v4709, %v4933
        %v4935 = vpop.f32.mrb[0].mxu0
        %v4936 = vpop.f32.mrb[0].mxu0
        %v4937 = vadd.f32 %v4712, %v4936
        %v4938 = vpop.f32.mrb[0].mxu0
        %4939 = vmatprep.mubr.bf16.mxu0 %v3891
        %4940 = vmatmul.mubr.bf16.gmra.mrb[0].mxu0 %v3890
        %v4941 = vpop.f32.mrb[0].mxu0
        %v4942 = vadd.f32 %v4717, %v4941
        %v4943 = vpop.f32.mrb[0].mxu0
        %v4944 = vpop.f32.mrb[0].mxu0
        %v4945 = vadd.f32 %v4720, %v4944
        %v4946 = vpop.f32.mrb[0].mxu0
        %4947 = vmatprep.mubr.bf16.mxu0 %v3900
        %4948 = vmatmul.mubr.bf16.gmra.mrb[0].mxu0 %v3899
        %v4949 = vpop.f32.mrb[0].mxu0
        %v4950 = vadd.f32 %v4725, %v4949
        %v4951 = vpop.f32.mrb[0].mxu0
        %v4952 = vpop.f32.mrb[0].mxu0
        %v4953 = vadd.f32 %v4728, %v4952
        %v4954 = vpop.f32.mrb[0].mxu0
        %4955 = vmatprep.mubr.bf16.mxu0 %v3909
        %4956 = vmatmul.mubr.bf16.gmra.mrb[0].mxu0 %v3908
        %v4957 = vpop.f32.mrb[0].mxu0
        %v4958 = vadd.f32 %v4733, %v4957
        %v4959 = vpop.f32.mrb[0].mxu0
        %v4960 = vpop.f32.mrb[0].mxu0
        %v4961 = vadd.f32 %v4736, %v4960
        %v4962 = vpop.f32.mrb[0].mxu0
        %4963 = vmatprep.mubr.bf16.mxu0 %v3918
        %4964 = vmatmul.mubr.bf16.gmra.mrb[0].mxu0 %v3917
        %v4965 = vpop.f32.mrb[0].mxu0
        %v4966 = vadd.f32 %v4741, %v4965
        %v4967 = vpop.f32.mrb[0].mxu0
        %v4968 = vpop.f32.mrb[0].mxu0
        %v4969 = vadd.f32 %v4744, %v4968
        %v4970 = vpop.f32.mrb[0].mxu0
        %4971 = vmatprep.mubr.bf16.mxu0 %v3927
        %4972 = vmatmul.mubr.bf16.gmra.mrb[0].mxu0 %v3926
        %v4973 = vpop.f32.mrb[0].mxu0
        %v4974 = vadd.f32 %v4749, %v4973
        %v4975 = vpop.f32.mrb[0].mxu0
        %v4976 = vpop.f32.mrb[0].mxu0
        %v4977 = vadd.f32 %v4752, %v4976
        %v4978 = vpop.f32.mrb[0].mxu0
        %4979 = vmatprep.mubr.bf16.mxu0 %v3936
        %4980 = vmatmul.mubr.bf16.gmra.mrb[0].mxu0 %v3935
        %v4981 = vpop.f32.mrb[0].mxu0
        %v4982 = vadd.f32 %v4757, %v4981
        %v4983 = vpop.f32.mrb[0].mxu0
        %v4984 = vpop.f32.mrb[0].mxu0
        %v4985 = vadd.f32 %v4760, %v4984
        %v4986 = vpop.f32.mrb[0].mxu0
        %4987 = vmatprep.mubr.bf16.mxu0 %v3945
        %4988 = vmatmul.mubr.bf16.gmra.mrb[0].mxu0 %v3944
        %v4989 = vpop.f32.mrb[0].mxu0
        %v4990 = vadd.f32 %v4765, %v4989
        %v4991 = vpop.f32.mrb[0].mxu0
        %v4992 = vpop.f32.mrb[0].mxu0
        %v4993 = vadd.f32 %v4768, %v4992
        %v4994 = vpop.f32.mrb[0].mxu0
        %4995 = vmatprep.mubr.bf16.mxu0 %v3954
        %4996 = vmatmul.mubr.bf16.gmra.mrb[0].mxu0 %v3953
        %v4997 = vpop.f32.mrb[0].mxu0
        %v4998 = vadd.f32 %v4773, %v4997
        %v4999 = vpop.f32.mrb[0].mxu0
        %v5000 = vpop.f32.mrb[0].mxu0
        %v5001 = vadd.f32 %v4776, %v5000
        %v5002 = vpop.f32.mrb[0].mxu0
        %5003 = vmatprep.mubr.bf16.mxu0 %v3963
        %5004 = vmatmul.mubr.bf16.gmra.mrb[0].mxu0 %v3962
        %v5005 = vpop.f32.mrb[0].mxu0
        %v5006 = vadd.f32 %v4781, %v5005
        %v5007 = vpop.f32.mrb[0].mxu0
        %v5008 = vpop.f32.mrb[0].mxu0
        %v5009 = vadd.f32 %v4784, %v5008
        %v5010 = vpop.f32.mrb[0].mxu0
        %5011 = vmatprep.mubr.bf16.mxu0 %v3972
        %5012 = vmatmul.mubr.bf16.gmra.mrb[0].mxu0 %v3971
        %v5013 = vpop.f32.mrb[0].mxu0
        %v5014 = vadd.f32 %v4789, %v5013
        %v5015 = vpop.f32.mrb[0].mxu0
        %v5016 = vpop.f32.mrb[0].mxu0
        %v5017 = vadd.f32 %v4792, %v5016
        %v5018 = vpop.f32.mrb[0].mxu0
        %5019 = vmatprep.mubr.bf16.mxu0 %v3981
        %5020 = vmatmul.mubr.bf16.gmra.mrb[0].mxu0 %v3980
        %v5021 = vpop.f32.mrb[0].mxu0
        %v5022 = vadd.f32 %v4797, %v5021
        %v5023 = vpop.f32.mrb[0].mxu0
        %v5024 = vpop.f32.mrb[0].mxu0
        %v5025 = vadd.f32 %v4800, %v5024
        %v5026 = vpop.f32.mrb[0].mxu0
        %5027 = vmatprep.mubr.bf16.mxu0 %v3990
        %5028 = vmatmul.mubr.bf16.gmra.mrb[0].mxu0 %v3989
        %v5029 = vpop.f32.mrb[0].mxu0
        %v5030 = vadd.f32 %v4805, %v5029
        %v5031 = vpop.f32.mrb[0].mxu0
        %v5032 = vpop.f32.mrb[0].mxu0
        %v5033 = vadd.f32 %v4808, %v5032
        %v5034 = vpop.f32.mrb[0].mxu0
        %5035 = vmatprep.mubr.bf16.mxu0 %v3999
        %5036 = vmatmul.mubr.bf16.gmra.mrb[0].mxu0 %v3998
        %v5037 = vpop.f32.mrb[0].mxu0
        %v5038 = vadd.f32 %v4813, %v5037
        %v5039 = vpop.f32.mrb[0].mxu0
        %v5040 = vpop.f32.mrb[0].mxu0
        %v5041 = vadd.f32 %v4816, %v5040
        %v5042 = vpop.f32.mrb[0].mxu0
        %5043 = vmatprep.mubr.bf16.mxu0 %v4008
        %5044 = vmatmul.mubr.bf16.gmra.mrb[0].mxu0 %v4007
        %v5045 = vpop.f32.mrb[0].mxu0
        %v5046 = vadd.f32 %v4821, %v5045
        %v5047 = vpop.f32.mrb[0].mxu0
        %v5048 = vpop.f32.mrb[0].mxu0
        %v5049 = vadd.f32 %v4824, %v5048
        %v5050 = vpop.f32.mrb[0].mxu0
        %5051 = vmatprep.mubr.bf16.mxu0 %v4017
        %5052 = vmatmul.mubr.bf16.gmra.mrb[0].mxu0 %v4016
        %v5053 = vpop.f32.mrb[0].mxu0
        %v5054 = vadd.f32 %v4829, %v5053
        %v5055 = vpop.f32.mrb[0].mxu0
        %v5056 = vpop.f32.mrb[0].mxu0
        %v5057 = vadd.f32 %v4832, %v5056
        %v5058 = vpop.f32.mrb[0].mxu0
        %5059 = vmatprep.mubr.bf16.mxu0 %v4026
        %5060 = vmatmul.mubr.bf16.gmra.mrb[0].mxu0 %v4025
        %v5061 = vpop.f32.mrb[0].mxu0
        %v5062 = vadd.f32 %v4837, %v5061
        %v5063 = vpop.f32.mrb[0].mxu0
        %v5064 = vpop.f32.mrb[0].mxu0
        %v5065 = vadd.f32 %v4840, %v5064
        %v5066 = vpop.f32.mrb[0].mxu0
        %5067 = vmatprep.mubr.bf16.mxu0 %v4035
        %5068 = vmatmul.mubr.bf16.gmra.mrb[0].mxu0 %v4034
        %v5069 = vpop.f32.mrb[0].mxu0
        %v5070 = vadd.f32 %v4845, %v5069
        %v5071 = vpop.f32.mrb[0].mxu0
        %v5072 = vpop.f32.mrb[0].mxu0
        %v5073 = vadd.f32 %v4848, %v5072
        %v5074 = vpop.f32.mrb[0].mxu0
        %5075 = vmatprep.mubr.bf16.mxu0 %v4044
        %5076 = vmatmul.mubr.bf16.gmra.mrb[0].mxu0 %v4043
        %v5077 = vpop.f32.mrb[0].mxu0
        %v5078 = vadd.f32 %v4853, %v5077
        %v5079 = vpop.f32.mrb[0].mxu0
        %v5080 = vpop.f32.mrb[0].mxu0
        %v5081 = vadd.f32 %v4856, %v5080
        %v5082 = vpop.f32.mrb[0].mxu0
        %5083 = vmatprep.mubr.bf16.mxu0 %v4053
        %5084 = vmatmul.mubr.bf16.gmra.mrb[0].mxu0 %v4052
        %v5085 = vpop.f32.mrb[0].mxu0
        %v5086 = vadd.f32 %v4861, %v5085
        %v5087 = vpop.f32.mrb[0].mxu0
        %v5088 = vpop.f32.mrb[0].mxu0
        %v5089 = vadd.f32 %v4864, %v5088
        %v5090 = vpop.f32.mrb[0].mxu0
        %5091 = vdwg.mxu0
        %5092 = vmatprep.subr.bf16.mxu0 0
        %5093 = vmatpush1.bf16.msra.mxu0 %v4530
        %5094 = vmatprep.subr.bf16.mxu0 0
        %5095 = vmatpush1.bf16.msra.mxu0 %v4531
        %5096 = vmatprep.subr.bf16.mxu0 0
        %5097 = vmatpush1.bf16.msra.mxu0 %v4532
        %5098 = vmatprep.subr.bf16.mxu0 0
        %5099 = vmatpush1.bf16.msra.mxu0 %v4533
        %5100 = vmatprep.subr.bf16.mxu0 0
        %5101 = vmatpush1.bf16.msra.mxu0 %v4534
        %5102 = vmatprep.subr.bf16.mxu0 0
        %5103 = vmatpush1.bf16.msra.mxu0 %v4535
        %5104 = vmatprep.subr.bf16.mxu0 0
        %5105 = vmatpush1.bf16.msra.mxu0 %v4536
        %5106 = vmatprep.subr.bf16.mxu0 0
        %5107 = vmatpush1.bf16.msra.mxu0 %v4537
        %5108 = vmatprep.subr.bf16.mxu0 0
        %5109 = vmatpush1.bf16.msra.mxu0 %v4538
        %5110 = vmatprep.subr.bf16.mxu0 0
        %5111 = vmatpush1.bf16.msra.mxu0 %v4539
        %5112 = vmatprep.subr.bf16.mxu0 0
        %5113 = vmatpush1.bf16.msra.mxu0 %v4540
        %5114 = vmatprep.subr.bf16.mxu0 0
        %5115 = vmatpush1.bf16.msra.mxu0 %v4541
        %5116 = vmatprep.subr.bf16.mxu0 0
        %5117 = vmatpush1.bf16.msra.mxu0 %v4542
        %5118 = vmatprep.subr.bf16.mxu0 0
        %5119 = vmatpush1.bf16.msra.mxu0 %v4543
        %5120 = vmatprep.subr.bf16.mxu0 0
        %5121 = vmatpush1.bf16.msra.mxu0 %v4544
        %5122 = vmatprep.subr.bf16.mxu0 0
        %5123 = vmatpush1.bf16.msra.mxu0 %v4545
        %5124 = vmatprep.mubr.bf16.mxu0 %v3848
        %5125 = vmatmul.mubr.bf16.gmra.mrb[0].mxu0 %v3847
        %v5126 = vpop.f32.mrb[0].mxu0
        %v5127 = vadd.f32 %v4902, %v5126
        %v5128 = vpop.f32.mrb[0].mxu0
        %v5129 = vpop.f32.mrb[0].mxu0
        %v5130 = vadd.f32 %v4905, %v5129
        %v5131 = vpop.f32.mrb[0].mxu0
        %5132 = vmatprep.mubr.bf16.mxu0 %v3857
        %5133 = vmatmul.mubr.bf16.gmra.mrb[0].mxu0 %v3856
        %v5134 = vpop.f32.mrb[0].mxu0
        %v5135 = vadd.f32 %v4910, %v5134
        %v5136 = vpop.f32.mrb[0].mxu0
        %v5137 = vpop.f32.mrb[0].mxu0
        %v5138 = vadd.f32 %v4913, %v5137
        %v5139 = vpop.f32.mrb[0].mxu0
        %5140 = vmatprep.mubr.bf16.mxu0 %v3866
        %5141 = vmatmul.mubr.bf16.gmra.mrb[0].mxu0 %v3865
        %v5142 = vpop.f32.mrb[0].mxu0
        %v5143 = vadd.f32 %v4918, %v5142
        %v5144 = vpop.f32.mrb[0].mxu0
        %v5145 = vpop.f32.mrb[0].mxu0
        %v5146 = vadd.f32 %v4921, %v5145
        %v5147 = vpop.f32.mrb[0].mxu0
        %5148 = vmatprep.mubr.bf16.mxu0 %v3875
        %5149 = vmatmul.mubr.bf16.gmra.mrb[0].mxu0 %v3874
        %v5150 = vpop.f32.mrb[0].mxu0
        %v5151 = vadd.f32 %v4926, %v5150
        %v5152 = vpop.f32.mrb[0].mxu0
        %v5153 = vpop.f32.mrb[0].mxu0
        %v5154 = vadd.f32 %v4929, %v5153
        %v5155 = vpop.f32.mrb[0].mxu0
        %5156 = vmatprep.mubr.bf16.mxu0 %v3884
        %5157 = vmatmul.mubr.bf16.gmra.mrb[0].mxu0 %v3883
        %v5158 = vpop.f32.mrb[0].mxu0
        %v5159 = vadd.f32 %v4934, %v5158
        %v5160 = vpop.f32.mrb[0].mxu0
        %v5161 = vpop.f32.mrb[0].mxu0
        %v5162 = vadd.f32 %v4937, %v5161
        %v5163 = vpop.f32.mrb[0].mxu0
        %5164 = vmatprep.mubr.bf16.mxu0 %v3893
        %5165 = vmatmul.mubr.bf16.gmra.mrb[0].mxu0 %v3892
        %v5166 = vpop.f32.mrb[0].mxu0
        %v5167 = vadd.f32 %v4942, %v5166
        %v5168 = vpop.f32.mrb[0].mxu0
        %v5169 = vpop.f32.mrb[0].mxu0
        %v5170 = vadd.f32 %v4945, %v5169
        %v5171 = vpop.f32.mrb[0].mxu0
        %5172 = vmatprep.mubr.bf16.mxu0 %v3902
        %5173 = vmatmul.mubr.bf16.gmra.mrb[0].mxu0 %v3901
        %v5174 = vpop.f32.mrb[0].mxu0
        %v5175 = vadd.f32 %v4950, %v5174
        %v5176 = vpop.f32.mrb[0].mxu0
        %v5177 = vpop.f32.mrb[0].mxu0
        %v5178 = vadd.f32 %v4953, %v5177
        %v5179 = vpop.f32.mrb[0].mxu0
        %5180 = vmatprep.mubr.bf16.mxu0 %v3911
        %5181 = vmatmul.mubr.bf16.gmra.mrb[0].mxu0 %v3910
        %v5182 = vpop.f32.mrb[0].mxu0
        %v5183 = vadd.f32 %v4958, %v5182
        %v5184 = vpop.f32.mrb[0].mxu0
        %v5185 = vpop.f32.mrb[0].mxu0
        %v5186 = vadd.f32 %v4961, %v5185
        %v5187 = vpop.f32.mrb[0].mxu0
        %5188 = vmatprep.mubr.bf16.mxu0 %v3920
        %5189 = vmatmul.mubr.bf16.gmra.mrb[0].mxu0 %v3919
        %v5190 = vpop.f32.mrb[0].mxu0
        %v5191 = vadd.f32 %v4966, %v5190
        %v5192 = vpop.f32.mrb[0].mxu0
        %v5193 = vpop.f32.mrb[0].mxu0
        %v5194 = vadd.f32 %v4969, %v5193
        %v5195 = vpop.f32.mrb[0].mxu0
        %5196 = vmatprep.mubr.bf16.mxu0 %v3929
        %5197 = vmatmul.mubr.bf16.gmra.mrb[0].mxu0 %v3928
        %v5198 = vpop.f32.mrb[0].mxu0
        %v5199 = vadd.f32 %v4974, %v5198
        %v5200 = vpop.f32.mrb[0].mxu0
        %v5201 = vpop.f32.mrb[0].mxu0
        %v5202 = vadd.f32 %v4977, %v5201
        %v5203 = vpop.f32.mrb[0].mxu0
        %5204 = vmatprep.mubr.bf16.mxu0 %v3938
        %5205 = vmatmul.mubr.bf16.gmra.mrb[0].mxu0 %v3937
        %v5206 = vpop.f32.mrb[0].mxu0
        %v5207 = vadd.f32 %v4982, %v5206
        %v5208 = vpop.f32.mrb[0].mxu0
        %v5209 = vpop.f32.mrb[0].mxu0
        %v5210 = vadd.f32 %v4985, %v5209
        %v5211 = vpop.f32.mrb[0].mxu0
        %5212 = vmatprep.mubr.bf16.mxu0 %v3947
        %5213 = vmatmul.mubr.bf16.gmra.mrb[0].mxu0 %v3946
        %v5214 = vpop.f32.mrb[0].mxu0
        %v5215 = vadd.f32 %v4990, %v5214
        %v5216 = vpop.f32.mrb[0].mxu0
        %v5217 = vpop.f32.mrb[0].mxu0
        %v5218 = vadd.f32 %v4993, %v5217
        %v5219 = vpop.f32.mrb[0].mxu0
        %5220 = vmatprep.mubr.bf16.mxu0 %v3956
        %5221 = vmatmul.mubr.bf16.gmra.mrb[0].mxu0 %v3955
        %v5222 = vpop.f32.mrb[0].mxu0
        %v5223 = vadd.f32 %v4998, %v5222
        %v5224 = vpop.f32.mrb[0].mxu0
        %v5225 = vpop.f32.mrb[0].mxu0
        %v5226 = vadd.f32 %v5001, %v5225
        %v5227 = vpop.f32.mrb[0].mxu0
        %5228 = vmatprep.mubr.bf16.mxu0 %v3965
        %5229 = vmatmul.mubr.bf16.gmra.mrb[0].mxu0 %v3964
        %v5230 = vpop.f32.mrb[0].mxu0
        %v5231 = vadd.f32 %v5006, %v5230
        %v5232 = vpop.f32.mrb[0].mxu0
        %v5233 = vpop.f32.mrb[0].mxu0
        %v5234 = vadd.f32 %v5009, %v5233
        %v5235 = vpop.f32.mrb[0].mxu0
        %5236 = vmatprep.mubr.bf16.mxu0 %v3974
        %5237 = vmatmul.mubr.bf16.gmra.mrb[0].mxu0 %v3973
        %v5238 = vpop.f32.mrb[0].mxu0
        %v5239 = vadd.f32 %v5014, %v5238
        %v5240 = vpop.f32.mrb[0].mxu0
        %v5241 = vpop.f32.mrb[0].mxu0
        %v5242 = vadd.f32 %v5017, %v5241
        %v5243 = vpop.f32.mrb[0].mxu0
        %5244 = vmatprep.mubr.bf16.mxu0 %v3983
        %5245 = vmatmul.mubr.bf16.gmra.mrb[0].mxu0 %v3982
        %v5246 = vpop.f32.mrb[0].mxu0
        %v5247 = vadd.f32 %v5022, %v5246
        %v5248 = vpop.f32.mrb[0].mxu0
        %v5249 = vpop.f32.mrb[0].mxu0
        %v5250 = vadd.f32 %v5025, %v5249
        %v5251 = vpop.f32.mrb[0].mxu0
        %5252 = vmatprep.mubr.bf16.mxu0 %v3992
        %5253 = vmatmul.mubr.bf16.gmra.mrb[0].mxu0 %v3991
        %v5254 = vpop.f32.mrb[0].mxu0
        %v5255 = vadd.f32 %v5030, %v5254
        %v5256 = vpop.f32.mrb[0].mxu0
        %v5257 = vpop.f32.mrb[0].mxu0
        %v5258 = vadd.f32 %v5033, %v5257
        %v5259 = vpop.f32.mrb[0].mxu0
        %5260 = vmatprep.mubr.bf16.mxu0 %v4001
        %5261 = vmatmul.mubr.bf16.gmra.mrb[0].mxu0 %v4000
        %v5262 = vpop.f32.mrb[0].mxu0
        %v5263 = vadd.f32 %v5038, %v5262
        %v5264 = vpop.f32.mrb[0].mxu0
        %v5265 = vpop.f32.mrb[0].mxu0
        %v5266 = vadd.f32 %v5041, %v5265
        %v5267 = vpop.f32.mrb[0].mxu0
        %5268 = vmatprep.mubr.bf16.mxu0 %v4010
        %5269 = vmatmul.mubr.bf16.gmra.mrb[0].mxu0 %v4009
        %v5270 = vpop.f32.mrb[0].mxu0
        %v5271 = vadd.f32 %v5046, %v5270
        %v5272 = vpop.f32.mrb[0].mxu0
        %v5273 = vpop.f32.mrb[0].mxu0
        %v5274 = vadd.f32 %v5049, %v5273
        %v5275 = vpop.f32.mrb[0].mxu0
        %5276 = vmatprep.mubr.bf16.mxu0 %v4019
        %5277 = vmatmul.mubr.bf16.gmra.mrb[0].mxu0 %v4018
        %v5278 = vpop.f32.mrb[0].mxu0
        %v5279 = vadd.f32 %v5054, %v5278
        %v5280 = vpop.f32.mrb[0].mxu0
        %v5281 = vpop.f32.mrb[0].mxu0
        %v5282 = vadd.f32 %v5057, %v5281
        %v5283 = vpop.f32.mrb[0].mxu0
        %5284 = vmatprep.mubr.bf16.mxu0 %v4028
        %5285 = vmatmul.mubr.bf16.gmra.mrb[0].mxu0 %v4027
        %v5286 = vpop.f32.mrb[0].mxu0
        %v5287 = vadd.f32 %v5062, %v5286
        %v5288 = vpop.f32.mrb[0].mxu0
        %v5289 = vpop.f32.mrb[0].mxu0
        %v5290 = vadd.f32 %v5065, %v5289
        %v5291 = vpop.f32.mrb[0].mxu0
        %5292 = vmatprep.mubr.bf16.mxu0 %v4037
        %5293 = vmatmul.mubr.bf16.gmra.mrb[0].mxu0 %v4036
        %v5294 = vpop.f32.mrb[0].mxu0
        %v5295 = vadd.f32 %v5070, %v5294
        %v5296 = vpop.f32.mrb[0].mxu0
        %v5297 = vpop.f32.mrb[0].mxu0
        %v5298 = vadd.f32 %v5073, %v5297
        %v5299 = vpop.f32.mrb[0].mxu0
        %5300 = vmatprep.mubr.bf16.mxu0 %v4046
        %5301 = vmatmul.mubr.bf16.gmra.mrb[0].mxu0 %v4045
        %v5302 = vpop.f32.mrb[0].mxu0
        %v5303 = vadd.f32 %v5078, %v5302
        %v5304 = vpop.f32.mrb[0].mxu0
        %v5305 = vpop.f32.mrb[0].mxu0
        %v5306 = vadd.f32 %v5081, %v5305
        %v5307 = vpop.f32.mrb[0].mxu0
        %5308 = vmatprep.mubr.bf16.mxu0 %v4055
        %5309 = vmatmul.mubr.bf16.gmra.mrb[0].mxu0 %v4054
        %v5310 = vpop.f32.mrb[0].mxu0
        %v5311 = vadd.f32 %v5086, %v5310
        %v5312 = vpop.f32.mrb[0].mxu0
        %v5313 = vpop.f32.mrb[0].mxu0
        %v5314 = vadd.f32 %v5089, %v5313
        %v5315 = vpop.f32.mrb[0].mxu0
        %5316 = vdwg.mxu0
        %5317 = vmatprep.subr.bf16.mxu0 0
        %5318 = vmatpush1.bf16.msra.mxu0 %v4546
        %5319 = vmatprep.subr.bf16.mxu0 0
        %5320 = vmatpush1.bf16.msra.mxu0 %v4547
        %5321 = vmatprep.subr.bf16.mxu0 0
        %5322 = vmatpush1.bf16.msra.mxu0 %v4548
        %5323 = vmatprep.subr.bf16.mxu0 0
        %5324 = vmatpush1.bf16.msra.mxu0 %v4549
        %5325 = vmatprep.subr.bf16.mxu0 0
        %5326 = vmatpush1.bf16.msra.mxu0 %v4550
        %5327 = vmatprep.subr.bf16.mxu0 0
        %5328 = vmatpush1.bf16.msra.mxu0 %v4551
        %5329 = vmatprep.subr.bf16.mxu0 0
        %5330 = vmatpush1.bf16.msra.mxu0 %v4552
        %5331 = vmatprep.subr.bf16.mxu0 0
        %5332 = vmatpush1.bf16.msra.mxu0 %v4553
        %5333 = vmatprep.subr.bf16.mxu0 0
        %5334 = vmatpush1.bf16.msra.mxu0 %v4554
        %5335 = vmatprep.subr.bf16.mxu0 0
        %5336 = vmatpush1.bf16.msra.mxu0 %v4555
        %5337 = vmatprep.subr.bf16.mxu0 0
        %5338 = vmatpush1.bf16.msra.mxu0 %v4556
        %5339 = vmatprep.subr.bf16.mxu0 0
        %5340 = vmatpush1.bf16.msra.mxu0 %v4557
        %5341 = vmatprep.subr.bf16.mxu0 0
        %5342 = vmatpush1.bf16.msra.mxu0 %v4558
        %5343 = vmatprep.subr.bf16.mxu0 0
        %5344 = vmatpush1.bf16.msra.mxu0 %v4559
        %5345 = vmatprep.subr.bf16.mxu0 0
        %5346 = vmatpush1.bf16.msra.mxu0 %v4560
        %5347 = vmatprep.subr.bf16.mxu0 0
        %5348 = vmatpush1.bf16.msra.mxu0 %v4561
        %5349 = vmatprep.mubr.bf16.mxu0 %v3850
        %5350 = vmatmul.mubr.bf16.gmra.mrb[0].mxu0 %v3849
        %v5351 = vpop.f32.mrb[0].mxu0
        %v5352 = vadd.f32 %v5127, %v5351
        %v5353 = vpop.f32.mrb[0].mxu0
        %v5354 = vpop.f32.mrb[0].mxu0
        %v5355 = vadd.f32 %v5130, %v5354
        %v5356 = vpop.f32.mrb[0].mxu0
        %5357 = vmatprep.mubr.bf16.mxu0 %v3859
        %5358 = vmatmul.mubr.bf16.gmra.mrb[0].mxu0 %v3858
        %v5359 = vpop.f32.mrb[0].mxu0
        %v5360 = vadd.f32 %v5135, %v5359
        %v5361 = vpop.f32.mrb[0].mxu0
        %v5362 = vpop.f32.mrb[0].mxu0
        %v5363 = vadd.f32 %v5138, %v5362
        %v5364 = vpop.f32.mrb[0].mxu0
        %5365 = vmatprep.mubr.bf16.mxu0 %v3868
        %5366 = vmatmul.mubr.bf16.gmra.mrb[0].mxu0 %v3867
        %v5367 = vpop.f32.mrb[0].mxu0
        %v5368 = vadd.f32 %v5143, %v5367
        %v5369 = vpop.f32.mrb[0].mxu0
        %v5370 = vpop.f32.mrb[0].mxu0
        %v5371 = vadd.f32 %v5146, %v5370
        %v5372 = vpop.f32.mrb[0].mxu0
        %5373 = vmatprep.mubr.bf16.mxu0 %v3877
        %5374 = vmatmul.mubr.bf16.gmra.mrb[0].mxu0 %v3876
        %v5375 = vpop.f32.mrb[0].mxu0
        %v5376 = vadd.f32 %v5151, %v5375
        %v5377 = vpop.f32.mrb[0].mxu0
        %v5378 = vpop.f32.mrb[0].mxu0
        %v5379 = vadd.f32 %v5154, %v5378
        %v5380 = vpop.f32.mrb[0].mxu0
        %5381 = vmatprep.mubr.bf16.mxu0 %v3886
        %5382 = vmatmul.mubr.bf16.gmra.mrb[0].mxu0 %v3885
        %v5383 = vpop.f32.mrb[0].mxu0
        %v5384 = vadd.f32 %v5159, %v5383
        %v5385 = vpop.f32.mrb[0].mxu0
        %v5386 = vpop.f32.mrb[0].mxu0
        %v5387 = vadd.f32 %v5162, %v5386
        %v5388 = vpop.f32.mrb[0].mxu0
        %5389 = vmatprep.mubr.bf16.mxu0 %v3895
        %5390 = vmatmul.mubr.bf16.gmra.mrb[0].mxu0 %v3894
        %v5391 = vpop.f32.mrb[0].mxu0
        %v5392 = vadd.f32 %v5167, %v5391
        %v5393 = vpop.f32.mrb[0].mxu0
        %v5394 = vpop.f32.mrb[0].mxu0
        %v5395 = vadd.f32 %v5170, %v5394
        %v5396 = vpop.f32.mrb[0].mxu0
        %5397 = vmatprep.mubr.bf16.mxu0 %v3904
        %5398 = vmatmul.mubr.bf16.gmra.mrb[0].mxu0 %v3903
        %v5399 = vpop.f32.mrb[0].mxu0
        %v5400 = vadd.f32 %v5175, %v5399
        %v5401 = vpop.f32.mrb[0].mxu0
        %v5402 = vpop.f32.mrb[0].mxu0
        %v5403 = vadd.f32 %v5178, %v5402
        %v5404 = vpop.f32.mrb[0].mxu0
        %5405 = vmatprep.mubr.bf16.mxu0 %v3913
        %5406 = vmatmul.mubr.bf16.gmra.mrb[0].mxu0 %v3912
        %v5407 = vpop.f32.mrb[0].mxu0
        %v5408 = vadd.f32 %v5183, %v5407
        %v5409 = vpop.f32.mrb[0].mxu0
        %v5410 = vpop.f32.mrb[0].mxu0
        %v5411 = vadd.f32 %v5186, %v5410
        %v5412 = vpop.f32.mrb[0].mxu0
        %5413 = vmatprep.mubr.bf16.mxu0 %v3922
        %5414 = vmatmul.mubr.bf16.gmra.mrb[0].mxu0 %v3921
        %v5415 = vpop.f32.mrb[0].mxu0
        %v5416 = vadd.f32 %v5191, %v5415
        %v5417 = vpop.f32.mrb[0].mxu0
        %v5418 = vpop.f32.mrb[0].mxu0
        %v5419 = vadd.f32 %v5194, %v5418
        %v5420 = vpop.f32.mrb[0].mxu0
        %5421 = vmatprep.mubr.bf16.mxu0 %v3931
        %5422 = vmatmul.mubr.bf16.gmra.mrb[0].mxu0 %v3930
        %v5423 = vpop.f32.mrb[0].mxu0
        %v5424 = vadd.f32 %v5199, %v5423
        %v5425 = vpop.f32.mrb[0].mxu0
        %v5426 = vpop.f32.mrb[0].mxu0
        %v5427 = vadd.f32 %v5202, %v5426
        %v5428 = vpop.f32.mrb[0].mxu0
        %5429 = vmatprep.mubr.bf16.mxu0 %v3940
        %5430 = vmatmul.mubr.bf16.gmra.mrb[0].mxu0 %v3939
        %v5431 = vpop.f32.mrb[0].mxu0
        %v5432 = vadd.f32 %v5207, %v5431
        %v5433 = vpop.f32.mrb[0].mxu0
        %v5434 = vpop.f32.mrb[0].mxu0
        %v5435 = vadd.f32 %v5210, %v5434
        %v5436 = vpop.f32.mrb[0].mxu0
        %5437 = vmatprep.mubr.bf16.mxu0 %v3949
        %5438 = vmatmul.mubr.bf16.gmra.mrb[0].mxu0 %v3948
        %v5439 = vpop.f32.mrb[0].mxu0
        %v5440 = vadd.f32 %v5215, %v5439
        %v5441 = vpop.f32.mrb[0].mxu0
        %v5442 = vpop.f32.mrb[0].mxu0
        %v5443 = vadd.f32 %v5218, %v5442
        %v5444 = vpop.f32.mrb[0].mxu0
        %5445 = vmatprep.mubr.bf16.mxu0 %v3958
        %5446 = vmatmul.mubr.bf16.gmra.mrb[0].mxu0 %v3957
        %v5447 = vpop.f32.mrb[0].mxu0
        %v5448 = vadd.f32 %v5223, %v5447
        %v5449 = vpop.f32.mrb[0].mxu0
        %v5450 = vpop.f32.mrb[0].mxu0
        %v5451 = vadd.f32 %v5226, %v5450
        %v5452 = vpop.f32.mrb[0].mxu0
        %5453 = vmatprep.mubr.bf16.mxu0 %v3967
        %5454 = vmatmul.mubr.bf16.gmra.mrb[0].mxu0 %v3966
        %v5455 = vpop.f32.mrb[0].mxu0
        %v5456 = vadd.f32 %v5231, %v5455
        %v5457 = vpop.f32.mrb[0].mxu0
        %v5458 = vpop.f32.mrb[0].mxu0
        %v5459 = vadd.f32 %v5234, %v5458
        %v5460 = vpop.f32.mrb[0].mxu0
        %5461 = vmatprep.mubr.bf16.mxu0 %v3976
        %5462 = vmatmul.mubr.bf16.gmra.mrb[0].mxu0 %v3975
        %v5463 = vpop.f32.mrb[0].mxu0
        %v5464 = vadd.f32 %v5239, %v5463
        %v5465 = vpop.f32.mrb[0].mxu0
        %v5466 = vpop.f32.mrb[0].mxu0
        %v5467 = vadd.f32 %v5242, %v5466
        %v5468 = vpop.f32.mrb[0].mxu0
        %5469 = vmatprep.mubr.bf16.mxu0 %v3985
        %5470 = vmatmul.mubr.bf16.gmra.mrb[0].mxu0 %v3984
        %v5471 = vpop.f32.mrb[0].mxu0
        %v5472 = vadd.f32 %v5247, %v5471
        %v5473 = vpop.f32.mrb[0].mxu0
        %v5474 = vpop.f32.mrb[0].mxu0
        %v5475 = vadd.f32 %v5250, %v5474
        %v5476 = vpop.f32.mrb[0].mxu0
        %5477 = vmatprep.mubr.bf16.mxu0 %v3994
        %5478 = vmatmul.mubr.bf16.gmra.mrb[0].mxu0 %v3993
        %v5479 = vpop.f32.mrb[0].mxu0
        %v5480 = vadd.f32 %v5255, %v5479
        %v5481 = vpop.f32.mrb[0].mxu0
        %v5482 = vpop.f32.mrb[0].mxu0
        %v5483 = vadd.f32 %v5258, %v5482
        %v5484 = vpop.f32.mrb[0].mxu0
        %5485 = vmatprep.mubr.bf16.mxu0 %v4003
        %5486 = vmatmul.mubr.bf16.gmra.mrb[0].mxu0 %v4002
        %v5487 = vpop.f32.mrb[0].mxu0
        %v5488 = vadd.f32 %v5263, %v5487
        %v5489 = vpop.f32.mrb[0].mxu0
        %v5490 = vpop.f32.mrb[0].mxu0
        %v5491 = vadd.f32 %v5266, %v5490
        %v5492 = vpop.f32.mrb[0].mxu0
        %5493 = vmatprep.mubr.bf16.mxu0 %v4012
        %5494 = vmatmul.mubr.bf16.gmra.mrb[0].mxu0 %v4011
        %v5495 = vpop.f32.mrb[0].mxu0
        %v5496 = vadd.f32 %v5271, %v5495
        %v5497 = vpop.f32.mrb[0].mxu0
        %v5498 = vpop.f32.mrb[0].mxu0
        %v5499 = vadd.f32 %v5274, %v5498
        %v5500 = vpop.f32.mrb[0].mxu0
        %5501 = vmatprep.mubr.bf16.mxu0 %v4021
        %5502 = vmatmul.mubr.bf16.gmra.mrb[0].mxu0 %v4020
        %v5503 = vpop.f32.mrb[0].mxu0
        %v5504 = vadd.f32 %v5279, %v5503
        %v5505 = vpop.f32.mrb[0].mxu0
        %v5506 = vpop.f32.mrb[0].mxu0
        %v5507 = vadd.f32 %v5282, %v5506
        %v5508 = vpop.f32.mrb[0].mxu0
        %5509 = vmatprep.mubr.bf16.mxu0 %v4030
        %5510 = vmatmul.mubr.bf16.gmra.mrb[0].mxu0 %v4029
        %v5511 = vpop.f32.mrb[0].mxu0
        %v5512 = vadd.f32 %v5287, %v5511
        %v5513 = vpop.f32.mrb[0].mxu0
        %v5514 = vpop.f32.mrb[0].mxu0
        %v5515 = vadd.f32 %v5290, %v5514
        %v5516 = vpop.f32.mrb[0].mxu0
        %5517 = vmatprep.mubr.bf16.mxu0 %v4039
        %5518 = vmatmul.mubr.bf16.gmra.mrb[0].mxu0 %v4038
        %v5519 = vpop.f32.mrb[0].mxu0
        %v5520 = vadd.f32 %v5295, %v5519
        %v5521 = vpop.f32.mrb[0].mxu0
        %v5522 = vpop.f32.mrb[0].mxu0
        %v5523 = vadd.f32 %v5298, %v5522
        %v5524 = vpop.f32.mrb[0].mxu0
        %5525 = vmatprep.mubr.bf16.mxu0 %v4048
        %5526 = vmatmul.mubr.bf16.gmra.mrb[0].mxu0 %v4047
        %v5527 = vpop.f32.mrb[0].mxu0
        %v5528 = vadd.f32 %v5303, %v5527
        %v5529 = vpop.f32.mrb[0].mxu0
        %v5530 = vpop.f32.mrb[0].mxu0
        %v5531 = vadd.f32 %v5306, %v5530
        %v5532 = vpop.f32.mrb[0].mxu0
        %5533 = vmatprep.mubr.bf16.mxu0 %v4057
        %5534 = vmatmul.mubr.bf16.gmra.mrb[0].mxu0 %v4056
        %v5535 = vpop.f32.mrb[0].mxu0
        %v5536 = vadd.f32 %v5311, %v5535
        %v5537 = vpop.f32.mrb[0].mxu0
        %v5538 = vpop.f32.mrb[0].mxu0
        %v5539 = vadd.f32 %v5314, %v5538
        %v5540 = vpop.f32.mrb[0].mxu0
        %5541 = vdwg.mxu0
        %5542 = vmatprep.subr.bf16.mxu0 0
        %5543 = vmatpush1.bf16.msra.mxu0 %v4562
        %5544 = vmatprep.subr.bf16.mxu0 0
        %5545 = vmatpush1.bf16.msra.mxu0 %v4563
        %5546 = vmatprep.subr.bf16.mxu0 0
        %5547 = vmatpush1.bf16.msra.mxu0 %v4564
        %5548 = vmatprep.subr.bf16.mxu0 0
        %5549 = vmatpush1.bf16.msra.mxu0 %v4565
        %5550 = vmatprep.subr.bf16.mxu0 0
        %5551 = vmatpush1.bf16.msra.mxu0 %v4566
        %5552 = vmatprep.subr.bf16.mxu0 0
        %5553 = vmatpush1.bf16.msra.mxu0 %v4567
        %5554 = vmatprep.subr.bf16.mxu0 0
        %5555 = vmatpush1.bf16.msra.mxu0 %v4568
        %5556 = vmatprep.subr.bf16.mxu0 0
        %5557 = vmatpush1.bf16.msra.mxu0 %v4569
        %5558 = vmatprep.subr.bf16.mxu0 0
        %5559 = vmatpush1.bf16.msra.mxu0 0
        %5560 = vmatprep.subr.bf16.mxu0 0
        %5561 = vmatpush1.bf16.msra.mxu0 0
        %5562 = vmatprep.subr.bf16.mxu0 0
        %5563 = vmatpush1.bf16.msra.mxu0 0
        %5564 = vmatprep.subr.bf16.mxu0 0
        %5565 = vmatpush1.bf16.msra.mxu0 0
        %5566 = vmatprep.subr.bf16.mxu0 0
        %5567 = vmatpush1.bf16.msra.mxu0 0
        %5568 = vmatprep.subr.bf16.mxu0 0
        %5569 = vmatpush1.bf16.msra.mxu0 0
        %5570 = vmatprep.subr.bf16.mxu0 0
        %5571 = vmatpush1.bf16.msra.mxu0 0
        %5572 = vmatprep.subr.bf16.mxu0 0
        %5573 = vmatpush1.bf16.msra.mxu0 0
        %5574 = vmatprep.mubr.bf16.mxu0 0
        %5575 = vmatmul.mubr.bf16.gmra.mrb[0].mxu0 %v3851
        %v5576 = vpop.f32.mrb[0].mxu0
        %v5577 = vadd.f32 %v5352, %v5576
        %v5578 = vpop.f32.mrb[0].mxu0
        %v5579 = vpop.f32.mrb[0].mxu0
        %v5580 = vadd.f32 %v5355, %v5579
        %v5581 = vpop.f32.mrb[0].mxu0
        %5582 = vmatprep.mubr.bf16.mxu0 0
        %5583 = vmatmul.mubr.bf16.gmra.mrb[0].mxu0 %v3860
        %v5584 = vpop.f32.mrb[0].mxu0
        %v5585 = vadd.f32 %v5360, %v5584
        %v5586 = vpop.f32.mrb[0].mxu0
        %v5587 = vpop.f32.mrb[0].mxu0
        %v5588 = vadd.f32 %v5363, %v5587
        %v5589 = vpop.f32.mrb[0].mxu0
        %5590 = vmatprep.mubr.bf16.mxu0 0
        %5591 = vmatmul.mubr.bf16.gmra.mrb[0].mxu0 %v3869
        %v5592 = vpop.f32.mrb[0].mxu0
        %v5593 = vadd.f32 %v5368, %v5592
        %v5594 = vpop.f32.mrb[0].mxu0
        %v5595 = vpop.f32.mrb[0].mxu0
        %v5596 = vadd.f32 %v5371, %v5595
        %v5597 = vpop.f32.mrb[0].mxu0
        %5598 = vmatprep.mubr.bf16.mxu0 0
        %5599 = vmatmul.mubr.bf16.gmra.mrb[0].mxu0 %v3878
        %v5600 = vpop.f32.mrb[0].mxu0
        %v5601 = vadd.f32 %v5376, %v5600
        %v5602 = vpop.f32.mrb[0].mxu0
        %v5603 = vpop.f32.mrb[0].mxu0
        %v5604 = vadd.f32 %v5379, %v5603
        %v5605 = vpop.f32.mrb[0].mxu0
        %5606 = vmatprep.mubr.bf16.mxu0 0
        %5607 = vmatmul.mubr.bf16.gmra.mrb[0].mxu0 %v3887
        %v5608 = vpop.f32.mrb[0].mxu0
        %v5609 = vadd.f32 %v5384, %v5608
        %v5610 = vpop.f32.mrb[0].mxu0
        %v5611 = vpop.f32.mrb[0].mxu0
        %v5612 = vadd.f32 %v5387, %v5611
        %v5613 = vpop.f32.mrb[0].mxu0
        %5614 = vmatprep.mubr.bf16.mxu0 0
        %5615 = vmatmul.mubr.bf16.gmra.mrb[0].mxu0 %v3896
        %v5616 = vpop.f32.mrb[0].mxu0
        %v5617 = vadd.f32 %v5392, %v5616
        %v5618 = vpop.f32.mrb[0].mxu0
        %v5619 = vpop.f32.mrb[0].mxu0
        %v5620 = vadd.f32 %v5395, %v5619
        %v5621 = vpop.f32.mrb[0].mxu0
        %5622 = vmatprep.mubr.bf16.mxu0 0
        %5623 = vmatmul.mubr.bf16.gmra.mrb[0].mxu0 %v3905
        %v5624 = vpop.f32.mrb[0].mxu0
        %v5625 = vadd.f32 %v5400, %v5624
        %v5626 = vpop.f32.mrb[0].mxu0
        %v5627 = vpop.f32.mrb[0].mxu0
        %v5628 = vadd.f32 %v5403, %v5627
        %v5629 = vpop.f32.mrb[0].mxu0
        %5630 = vmatprep.mubr.bf16.mxu0 0
        %5631 = vmatmul.mubr.bf16.gmra.mrb[0].mxu0 %v3914
        %v5632 = vpop.f32.mrb[0].mxu0
        %v5633 = vadd.f32 %v5408, %v5632
        %v5634 = vpop.f32.mrb[0].mxu0
        %v5635 = vpop.f32.mrb[0].mxu0
        %v5636 = vadd.f32 %v5411, %v5635
        %v5637 = vpop.f32.mrb[0].mxu0
        %5638 = vmatprep.mubr.bf16.mxu0 0
        %5639 = vmatmul.mubr.bf16.gmra.mrb[0].mxu0 %v3923
        %v5640 = vpop.f32.mrb[0].mxu0
        %v5641 = vadd.f32 %v5416, %v5640
        %v5642 = vpop.f32.mrb[0].mxu0
        %v5643 = vpop.f32.mrb[0].mxu0
        %v5644 = vadd.f32 %v5419, %v5643
        %v5645 = vpop.f32.mrb[0].mxu0
        %5646 = vmatprep.mubr.bf16.mxu0 0
        %5647 = vmatmul.mubr.bf16.gmra.mrb[0].mxu0 %v3932
        %v5648 = vpop.f32.mrb[0].mxu0
        %v5649 = vadd.f32 %v5424, %v5648
        %v5650 = vpop.f32.mrb[0].mxu0
        %v5651 = vpop.f32.mrb[0].mxu0
        %v5652 = vadd.f32 %v5427, %v5651
        %v5653 = vpop.f32.mrb[0].mxu0
        %5654 = vmatprep.mubr.bf16.mxu0 0
        %5655 = vmatmul.mubr.bf16.gmra.mrb[0].mxu0 %v3941
        %v5656 = vpop.f32.mrb[0].mxu0
        %v5657 = vadd.f32 %v5432, %v5656
        %v5658 = vpop.f32.mrb[0].mxu0
        %v5659 = vpop.f32.mrb[0].mxu0
        %v5660 = vadd.f32 %v5435, %v5659
        %v5661 = vpop.f32.mrb[0].mxu0
        %5662 = vmatprep.mubr.bf16.mxu0 0
        %5663 = vmatmul.mubr.bf16.gmra.mrb[0].mxu0 %v3950
        %v5664 = vpop.f32.mrb[0].mxu0
        %v5665 = vadd.f32 %v5440, %v5664
        %v5666 = vpop.f32.mrb[0].mxu0
        %v5667 = vpop.f32.mrb[0].mxu0
        %v5668 = vadd.f32 %v5443, %v5667
        %v5669 = vpop.f32.mrb[0].mxu0
        %5670 = vmatprep.mubr.bf16.mxu0 0
        %5671 = vmatmul.mubr.bf16.gmra.mrb[0].mxu0 %v3959
        %v5672 = vpop.f32.mrb[0].mxu0
        %v5673 = vadd.f32 %v5448, %v5672
        %v5674 = vpop.f32.mrb[0].mxu0
        %v5675 = vpop.f32.mrb[0].mxu0
        %v5676 = vadd.f32 %v5451, %v5675
        %v5677 = vpop.f32.mrb[0].mxu0
        %5678 = vmatprep.mubr.bf16.mxu0 0
        %5679 = vmatmul.mubr.bf16.gmra.mrb[0].mxu0 %v3968
        %v5680 = vpop.f32.mrb[0].mxu0
        %v5681 = vadd.f32 %v5456, %v5680
        %v5682 = vpop.f32.mrb[0].mxu0
        %v5683 = vpop.f32.mrb[0].mxu0
        %v5684 = vadd.f32 %v5459, %v5683
        %v5685 = vpop.f32.mrb[0].mxu0
        %5686 = vmatprep.mubr.bf16.mxu0 0
        %5687 = vmatmul.mubr.bf16.gmra.mrb[0].mxu0 %v3977
        %v5688 = vpop.f32.mrb[0].mxu0
        %v5689 = vadd.f32 %v5464, %v5688
        %v5690 = vpop.f32.mrb[0].mxu0
        %v5691 = vpop.f32.mrb[0].mxu0
        %v5692 = vadd.f32 %v5467, %v5691
        %v5693 = vpop.f32.mrb[0].mxu0
        %5694 = vmatprep.mubr.bf16.mxu0 0
        %5695 = vmatmul.mubr.bf16.gmra.mrb[0].mxu0 %v3986
        %v5696 = vpop.f32.mrb[0].mxu0
        %v5697 = vadd.f32 %v5472, %v5696
        %v5698 = vpop.f32.mrb[0].mxu0
        %v5699 = vpop.f32.mrb[0].mxu0
        %v5700 = vadd.f32 %v5475, %v5699
        %v5701 = vpop.f32.mrb[0].mxu0
        %5702 = vmatprep.mubr.bf16.mxu0 0
        %5703 = vmatmul.mubr.bf16.gmra.mrb[0].mxu0 %v3995
        %v5704 = vpop.f32.mrb[0].mxu0
        %v5705 = vadd.f32 %v5480, %v5704
        %v5706 = vpop.f32.mrb[0].mxu0
        %v5707 = vpop.f32.mrb[0].mxu0
        %v5708 = vadd.f32 %v5483, %v5707
        %v5709 = vpop.f32.mrb[0].mxu0
        %5710 = vmatprep.mubr.bf16.mxu0 0
        %5711 = vmatmul.mubr.bf16.gmra.mrb[0].mxu0 %v4004
        %v5712 = vpop.f32.mrb[0].mxu0
        %v5713 = vadd.f32 %v5488, %v5712
        %v5714 = vpop.f32.mrb[0].mxu0
        %v5715 = vpop.f32.mrb[0].mxu0
        %v5716 = vadd.f32 %v5491, %v5715
        %v5717 = vpop.f32.mrb[0].mxu0
        %5718 = vmatprep.mubr.bf16.mxu0 0
        %5719 = vmatmul.mubr.bf16.gmra.mrb[0].mxu0 %v4013
        %v5720 = vpop.f32.mrb[0].mxu0
        %v5721 = vadd.f32 %v5496, %v5720
        %v5722 = vpop.f32.mrb[0].mxu0
        %v5723 = vpop.f32.mrb[0].mxu0
        %v5724 = vadd.f32 %v5499, %v5723
        %v5725 = vpop.f32.mrb[0].mxu0
        %5726 = vmatprep.mubr.bf16.mxu0 0
        %5727 = vmatmul.mubr.bf16.gmra.mrb[0].mxu0 %v4022
        %v5728 = vpop.f32.mrb[0].mxu0
        %v5729 = vadd.f32 %v5504, %v5728
        %v5730 = vpop.f32.mrb[0].mxu0
        %v5731 = vpop.f32.mrb[0].mxu0
        %v5732 = vadd.f32 %v5507, %v5731
        %v5733 = vpop.f32.mrb[0].mxu0
        %5734 = vmatprep.mubr.bf16.mxu0 0
        %5735 = vmatmul.mubr.bf16.gmra.mrb[0].mxu0 %v4031
        %v5736 = vpop.f32.mrb[0].mxu0
        %v5737 = vadd.f32 %v5512, %v5736
        %v5738 = vpop.f32.mrb[0].mxu0
        %v5739 = vpop.f32.mrb[0].mxu0
        %v5740 = vadd.f32 %v5515, %v5739
        %v5741 = vpop.f32.mrb[0].mxu0
        %5742 = vmatprep.mubr.bf16.mxu0 0
        %5743 = vmatmul.mubr.bf16.gmra.mrb[0].mxu0 %v4040
        %v5744 = vpop.f32.mrb[0].mxu0
        %v5745 = vadd.f32 %v5520, %v5744
        %v5746 = vpop.f32.mrb[0].mxu0
        %v5747 = vpop.f32.mrb[0].mxu0
        %v5748 = vadd.f32 %v5523, %v5747
        %v5749 = vpop.f32.mrb[0].mxu0
        %5750 = vmatprep.mubr.bf16.mxu0 0
        %5751 = vmatmul.mubr.bf16.gmra.mrb[0].mxu0 %v4049
        %v5752 = vpop.f32.mrb[0].mxu0
        %v5753 = vadd.f32 %v5528, %v5752
        %v5754 = vpop.f32.mrb[0].mxu0
        %v5755 = vpop.f32.mrb[0].mxu0
        %v5756 = vadd.f32 %v5531, %v5755
        %v5757 = vpop.f32.mrb[0].mxu0
        %5758 = vmatprep.mubr.bf16.mxu0 0
        %5759 = vmatmul.mubr.bf16.gmra.mrb[0].mxu0 %v4058
        %v5760 = vpop.f32.mrb[0].mxu0
        %v5761 = vadd.f32 %v5536, %v5760
        %v5762 = vpop.f32.mrb[0].mxu0
        %v5763 = vpop.f32.mrb[0].mxu0
        %v5764 = vadd.f32 %v5539, %v5763
        %v5765 = vpop.f32.mrb[0].mxu0
        %5766 = vdwg.mxu0
        %v5767 = vmax.f32 %v5577, 0.0
        %v5768 = vmax.f32 %v5580, 0.0
        %v5769 = vmax.f32 %v5585, 0.0
        %v5770 = vmax.f32 %v5588, 0.0
        %v5771 = vmax.f32 %v5593, 0.0
        %v5772 = vmax.f32 %v5596, 0.0
        %v5773 = vmax.f32 %v5601, 0.0
        %v5774 = vmax.f32 %v5604, 0.0
        %v5775 = vmax.f32 %v5609, 0.0
        %v5776 = vmax.f32 %v5612, 0.0
        %v5777 = vmax.f32 %v5617, 0.0
        %v5778 = vmax.f32 %v5620, 0.0
        %v5779 = vmax.f32 %v5625, 0.0
        %v5780 = vmax.f32 %v5628, 0.0
        %v5781 = vmax.f32 %v5633, 0.0
        %v5782 = vmax.f32 %v5636, 0.0
        %v5783 = vmax.f32 %v5641, 0.0
        %v5784 = vmax.f32 %v5644, 0.0
        %v5785 = vmax.f32 %v5649, 0.0
        %v5786 = vmax.f32 %v5652, 0.0
        %v5787 = vmax.f32 %v5657, 0.0
        %v5788 = vmax.f32 %v5660, 0.0
        %v5789 = vmax.f32 %v5665, 0.0
        %v5790 = vmax.f32 %v5668, 0.0
        %v5791 = vmax.f32 %v5673, 0.0
        %v5792 = vmax.f32 %v5676, 0.0
        %v5793 = vmax.f32 %v5681, 0.0
        %v5794 = vmax.f32 %v5684, 0.0
        %v5795 = vmax.f32 %v5689, 0.0
        %v5796 = vmax.f32 %v5692, 0.0
        %v5797 = vmax.f32 %v5697, 0.0
        %v5798 = vmax.f32 %v5700, 0.0
        %v5799 = vmax.f32 %v5705, 0.0
        %v5800 = vmax.f32 %v5708, 0.0
        %v5801 = vmax.f32 %v5713, 0.0
        %v5802 = vmax.f32 %v5716, 0.0
        %v5803 = vmax.f32 %v5721, 0.0
        %v5804 = vmax.f32 %v5724, 0.0
        %v5805 = vmax.f32 %v5729, 0.0
        %v5806 = vmax.f32 %v5732, 0.0
        %v5807 = vmax.f32 %v5737, 0.0
        %v5808 = vmax.f32 %v5740, 0.0
        %v5809 = vmax.f32 %v5745, 0.0
        %v5810 = vmax.f32 %v5748, 0.0
        %v5811 = vmax.f32 %v5753, 0.0
        %v5812 = vmax.f32 %v5756, 0.0
        %v5813 = vmax.f32 %v5761, 0.0
        %v5814 = vmax.f32 %v5764, 0.0
        %v5815 = vsel %vm1090, 1, 0
        %v5816 = vsel %vm1091, 1, 0
        %v5817 = vsel %vm1092, 1, 0
        %v5818 = vsel %vm1093, 1, 0
        %v5819 = vsel %vm1094, 1, 0
        %v5820 = vsel %vm1095, 1, 0
        %v5821 = vsel %vm1096, 1, 0
        %v5822 = vsel %vm1097, 1, 0
        %v5823 = vsel %vm1098, 1, 0
        %v5824 = vsel %vm1099, 1, 0
        %v5825 = vsel %vm1100, 1, 0
        %v5826 = vsel %vm1101, 1, 0
        %v5827 = vsel %vm1102, 1, 0
        %v5828 = vsel %vm1103, 1, 0
        %v5829 = vsel %vm1104, 1, 0
        %v5830 = vsel %vm1105, 1, 0
        %v5831 = vsel %vm1106, 1, 0
        %v5832 = vsel %vm1107, 1, 0
        %v5833 = vsel %vm1108, 1, 0
        %v5834 = vsel %vm1109, 1, 0
        %v5835 = vsel %vm1110, 1, 0
        %v5836 = vsel %vm1111, 1, 0
        %v5837 = vsel %vm1112, 1, 0
        %v5838 = vsel %vm1113, 1, 0
        %v5839 = vsel %vm1114, 1, 0
        %v5840 = vsel %vm1115, 1, 0
        %v5841 = vsel %vm1116, 1, 0
        %v5842 = vsel %vm1117, 1, 0
        %v5843 = vsel %vm1118, 1, 0
        %v5844 = vsel %vm1119, 1, 0
        %v5845 = vsel %vm1120, 1, 0
        %v5846 = vsel %vm1121, 1, 0
        %v5847 = vsel %vm1122, 1, 0
        %v5848 = vsel %vm1123, 1, 0
        %v5849 = vsel %vm1124, 1, 0
        %v5850 = vsel %vm1125, 1, 0
        %v5851 = vsel %vm1126, 1, 0
        %v5852 = vsel %vm1127, 1, 0
        %v5853 = vsel %vm1128, 1, 0
        %v5854 = vsel %vm1129, 1, 0
        %v5855 = vsel %vm1130, 1, 0
        %v5856 = vsel %vm1131, 1, 0
        %v5857 = vsel %vm1132, 1, 0
        %v5858 = vsel %vm1133, 1, 0
        %v5859 = vsel %vm1134, 1, 0
        %v5860 = vsel %vm1135, 1, 0
        %v5861 = vsel %vm1136, 1, 0
        %v5862 = vsel %vm1137, 1, 0
        %vm5863 = vcmp.eq.s32.totalorder %v5815, 1
        %vm5864 = vcmp.eq.s32.totalorder %v5816, 1
        %vm5865 = vcmp.eq.s32.totalorder %v5817, 1
        %vm5866 = vcmp.eq.s32.totalorder %v5818, 1
        %vm5867 = vcmp.eq.s32.totalorder %v5819, 1
        %vm5868 = vcmp.eq.s32.totalorder %v5820, 1
        %vm5869 = vcmp.eq.s32.totalorder %v5821, 1
        %vm5870 = vcmp.eq.s32.totalorder %v5822, 1
        %vm5871 = vcmp.eq.s32.totalorder %v5823, 1
        %vm5872 = vcmp.eq.s32.totalorder %v5824, 1
        %vm5873 = vcmp.eq.s32.totalorder %v5825, 1
        %vm5874 = vcmp.eq.s32.totalorder %v5826, 1
        %vm5875 = vcmp.eq.s32.totalorder %v5827, 1
        %vm5876 = vcmp.eq.s32.totalorder %v5828, 1
        %vm5877 = vcmp.eq.s32.totalorder %v5829, 1
        %vm5878 = vcmp.eq.s32.totalorder %v5830, 1
        %vm5879 = vcmp.eq.s32.totalorder %v5831, 1
        %vm5880 = vcmp.eq.s32.totalorder %v5832, 1
        %vm5881 = vcmp.eq.s32.totalorder %v5833, 1
        %vm5882 = vcmp.eq.s32.totalorder %v5834, 1
        %vm5883 = vcmp.eq.s32.totalorder %v5835, 1
        %vm5884 = vcmp.eq.s32.totalorder %v5836, 1
        %vm5885 = vcmp.eq.s32.totalorder %v5837, 1
        %vm5886 = vcmp.eq.s32.totalorder %v5838, 1
        %vm5887 = vcmp.eq.s32.totalorder %v5839, 1
        %vm5888 = vcmp.eq.s32.totalorder %v5840, 1
        %vm5889 = vcmp.eq.s32.totalorder %v5841, 1
        %vm5890 = vcmp.eq.s32.totalorder %v5842, 1
        %vm5891 = vcmp.eq.s32.totalorder %v5843, 1
        %vm5892 = vcmp.eq.s32.totalorder %v5844, 1
        %vm5893 = vcmp.eq.s32.totalorder %v5845, 1
        %vm5894 = vcmp.eq.s32.totalorder %v5846, 1
        %vm5895 = vcmp.eq.s32.totalorder %v5847, 1
        %vm5896 = vcmp.eq.s32.totalorder %v5848, 1
        %vm5897 = vcmp.eq.s32.totalorder %v5849, 1
        %vm5898 = vcmp.eq.s32.totalorder %v5850, 1
        %vm5899 = vcmp.eq.s32.totalorder %v5851, 1
        %vm5900 = vcmp.eq.s32.totalorder %v5852, 1
        %vm5901 = vcmp.eq.s32.totalorder %v5853, 1
        %vm5902 = vcmp.eq.s32.totalorder %v5854, 1
        %vm5903 = vcmp.eq.s32.totalorder %v5855, 1
        %vm5904 = vcmp.eq.s32.totalorder %v5856, 1
        %vm5905 = vcmp.eq.s32.totalorder %v5857, 1
        %vm5906 = vcmp.eq.s32.totalorder %v5858, 1
        %vm5907 = vcmp.eq.s32.totalorder %v5859, 1
        %vm5908 = vcmp.eq.s32.totalorder %v5860, 1
        %vm5909 = vcmp.eq.s32.totalorder %v5861, 1
        %vm5910 = vcmp.eq.s32.totalorder %v5862, 1
        %v5911 = vsel %vm5863, %v5767, 0.0
        %v5912 = vsel %vm5864, %v5768, 0.0
        %v5913 = vsel %vm5865, %v5769, 0.0
        %v5914 = vsel %vm5866, %v5770, 0.0
        %v5915 = vsel %vm5867, %v5771, 0.0
        %v5916 = vsel %vm5868, %v5772, 0.0
        %v5917 = vsel %vm5869, %v5773, 0.0
        %v5918 = vsel %vm5870, %v5774, 0.0
        %v5919 = vsel %vm5871, %v5775, 0.0
        %v5920 = vsel %vm5872, %v5776, 0.0
        %v5921 = vsel %vm5873, %v5777, 0.0
        %v5922 = vsel %vm5874, %v5778, 0.0
        %v5923 = vsel %vm5875, %v5779, 0.0
        %v5924 = vsel %vm5876, %v5780, 0.0
        %v5925 = vsel %vm5877, %v5781, 0.0
        %v5926 = vsel %vm5878, %v5782, 0.0
        %v5927 = vsel %vm5879, %v5783, 0.0
        %v5928 = vsel %vm5880, %v5784, 0.0
        %v5929 = vsel %vm5881, %v5785, 0.0
        %v5930 = vsel %vm5882, %v5786, 0.0
        %v5931 = vsel %vm5883, %v5787, 0.0
        %v5932 = vsel %vm5884, %v5788, 0.0
        %v5933 = vsel %vm5885, %v5789, 0.0
        %v5934 = vsel %vm5886, %v5790, 0.0
        %v5935 = vsel %vm5887, %v5791, 0.0
        %v5936 = vsel %vm5888, %v5792, 0.0
        %v5937 = vsel %vm5889, %v5793, 0.0
        %v5938 = vsel %vm5890, %v5794, 0.0
        %v5939 = vsel %vm5891, %v5795, 0.0
        %v5940 = vsel %vm5892, %v5796, 0.0
        %v5941 = vsel %vm5893, %v5797, 0.0
        %v5942 = vsel %vm5894, %v5798, 0.0
        %v5943 = vsel %vm5895, %v5799, 0.0
        %v5944 = vsel %vm5896, %v5800, 0.0
        %v5945 = vsel %vm5897, %v5801, 0.0
        %v5946 = vsel %vm5898, %v5802, 0.0
        %v5947 = vsel %vm5899, %v5803, 0.0
        %v5948 = vsel %vm5900, %v5804, 0.0
        %v5949 = vsel %vm5901, %v5805, 0.0
        %v5950 = vsel %vm5902, %v5806, 0.0
        %v5951 = vsel %vm5903, %v5807, 0.0
        %v5952 = vsel %vm5904, %v5808, 0.0
        %v5953 = vsel %vm5905, %v5809, 0.0
        %v5954 = vsel %vm5906, %v5810, 0.0
        %v5955 = vsel %vm5907, %v5811, 0.0
        %v5956 = vsel %vm5908, %v5812, 0.0
        %v5957 = vsel %vm5909, %v5813, 0.0
        %v5958 = vsel %vm5910, %v5814, 0.0
        %5959 = vst [vmem:[#allocation2] sm:$0xf] 0
        %5960 = vst [vmem:[#allocation2 + $0x4] sm:$0xf] 0
        %5961 = vst [vmem:[#allocation2 + $0x8] sm:$0xf] 0
        %5962 = vst [vmem:[#allocation2 + $0xc] sm:$0xf] 0
        %5963 = vst [vmem:[#allocation2 + $0x10] sm:$0xf] 0
        %5964 = vst [vmem:[#allocation2 + $0x14] sm:$0xf] 0
        %5965 = vst [vmem:[#allocation2 + $0xcc] sm:$0xf] 0
        %5966 = vst [vmem:[#allocation2 + $0xd0] sm:$0xf] 0
        %5967 = vst [vmem:[#allocation2 + $0xd4] sm:$0xf] 0
        %5968 = vst [vmem:[#allocation2 + $0xd8] sm:$0xf] 0
        %5969 = vst [vmem:[#allocation2 + $0xdc] sm:$0xf] 0
        %5970 = vst [vmem:[#allocation2 + $0xe0] sm:$0xf] 0
        %v5971 = vpack.c.bf16 %v5912, %v5911
        %v5972 = vpack.c.bf16 %v5914, %v5913
        %v5973 = vpack.c.bf16 %v5916, %v5915
        %v5974 = vpack.c.bf16 %v5918, %v5917
        %v5975 = vpack.c.bf16 %v5920, %v5919
        %v5976 = vpack.c.bf16 %v5922, %v5921
        %v5977 = vpack.c.bf16 %v5924, %v5923
        %v5978 = vpack.c.bf16 %v5926, %v5925
        %v5979 = vpack.c.bf16 %v5928, %v5927
        %v5980 = vpack.c.bf16 %v5930, %v5929
        %v5981 = vpack.c.bf16 %v5932, %v5931
        %v5982 = vpack.c.bf16 %v5934, %v5933
        %v5983 = vpack.c.bf16 %v5936, %v5935
        %v5984 = vpack.c.bf16 %v5938, %v5937
        %v5985 = vpack.c.bf16 %v5940, %v5939
        %v5986 = vpack.c.bf16 %v5942, %v5941
        %v5987 = vpack.c.bf16 %v5944, %v5943
        %v5988 = vpack.c.bf16 %v5946, %v5945
        %v5989 = vpack.c.bf16 %v5948, %v5947
        %v5990 = vpack.c.bf16 %v5950, %v5949
        %v5991 = vpack.c.bf16 %v5952, %v5951
        %v5992 = vpack.c.bf16 %v5954, %v5953
        %v5993 = vpack.c.bf16 %v5956, %v5955
        %v5994 = vpack.c.bf16 %v5958, %v5957
        %v6019 = vunpack.c.l.b16 %v5971
        %v6020 = vunpack.c.h.b16 %v5971
        %v6021 = vunpack.c.l.b16 %v5972
        %v6022 = vunpack.c.h.b16 %v5972
        %v6023 = vunpack.c.l.b16 %v5973
        %v6024 = vunpack.c.h.b16 %v5973
        %v6025 = vunpack.c.l.b16 %v5974
        %v6026 = vunpack.c.h.b16 %v5974
        %v6027 = vunpack.c.l.b16 %v5975
        %v6028 = vunpack.c.h.b16 %v5975
        %v6029 = vunpack.c.l.b16 %v5976
        %v6030 = vunpack.c.h.b16 %v5976
        %v6031 = vunpack.c.l.b16 %v5977
        %v6032 = vunpack.c.h.b16 %v5977
        %v6033 = vunpack.c.l.b16 %v5978
        %v6034 = vunpack.c.h.b16 %v5978
        %v6035 = vunpack.c.l.b16 %v5979
        %v6036 = vunpack.c.h.b16 %v5979
        %v6037 = vunpack.c.l.b16 %v5980
        %v6038 = vunpack.c.h.b16 %v5980
        %v6039 = vunpack.c.l.b16 %v5981
        %v6040 = vunpack.c.h.b16 %v5981
        %v6041 = vunpack.c.l.b16 %v5982
        %v6042 = vunpack.c.h.b16 %v5982
        %v6043 = vunpack.c.l.b16 %v5983
        %v6044 = vunpack.c.h.b16 %v5983
        %v6045 = vunpack.c.l.b16 %v5984
        %v6046 = vunpack.c.h.b16 %v5984
        %v6047 = vunpack.c.l.b16 %v5985
        %v6048 = vunpack.c.h.b16 %v5985
        %v6049 = vunpack.c.l.b16 %v5986
        %v6050 = vunpack.c.h.b16 %v5986
        %v6051 = vunpack.c.l.b16 %v5987
        %v6052 = vunpack.c.h.b16 %v5987
        %v6053 = vunpack.c.l.b16 %v5988
        %v6054 = vunpack.c.h.b16 %v5988
        %v6055 = vunpack.c.l.b16 %v5989
        %v6056 = vunpack.c.h.b16 %v5989
        %v6057 = vunpack.c.l.b16 %v5990
        %v6058 = vunpack.c.h.b16 %v5990
        %v6059 = vunpack.c.l.b16 %v5991
        %v6060 = vunpack.c.h.b16 %v5991
        %v6061 = vunpack.c.l.b16 %v5992
        %v6062 = vunpack.c.h.b16 %v5992
        %v6063 = vunpack.c.l.b16 %v5993
        %v6064 = vunpack.c.h.b16 %v5993
        %v6065 = vunpack.c.l.b16 %v5994
        %v6066 = vunpack.c.h.b16 %v5994
        %v6067 = vpack.c.b16 %v6019, %v6019
        %v6068 = vpack.c.b16 %v6020, %v6020
        %v6069 = vpack.c.b16 %v6021, %v6021
        %v6070 = vpack.c.b16 %v6022, %v6022
        %v6071 = vpack.c.b16 %v6023, %v6023
        %v6072 = vpack.c.b16 %v6024, %v6024
        %v6073 = vpack.c.b16 %v6025, %v6025
        %v6074 = vpack.c.b16 %v6026, %v6026
        %v6075 = vpack.c.b16 %v6027, %v6027
        %v6076 = vpack.c.b16 %v6028, %v6028
        %v6077 = vpack.c.b16 %v6029, %v6029
        %v6078 = vpack.c.b16 %v6030, %v6030
        %v6079 = vpack.c.b16 %v6031, %v6031
        %v6080 = vpack.c.b16 %v6032, %v6032
        %v6081 = vpack.c.b16 %v6033, %v6033
        %v6082 = vpack.c.b16 %v6034, %v6034
        %v6083 = vpack.c.b16 %v6035, %v6035
        %v6084 = vpack.c.b16 %v6036, %v6036
        %v6085 = vpack.c.b16 %v6037, %v6037
        %v6086 = vpack.c.b16 %v6038, %v6038
        %v6087 = vpack.c.b16 %v6039, %v6039
        %v6088 = vpack.c.b16 %v6040, %v6040
        %v6089 = vpack.c.b16 %v6041, %v6041
        %v6090 = vpack.c.b16 %v6042, %v6042
        %v6091 = vpack.c.b16 %v6043, %v6043
        %v6092 = vpack.c.b16 %v6044, %v6044
        %v6093 = vpack.c.b16 %v6045, %v6045
        %v6094 = vpack.c.b16 %v6046, %v6046
        %v6095 = vpack.c.b16 %v6047, %v6047
        %v6096 = vpack.c.b16 %v6048, %v6048
        %v6097 = vpack.c.b16 %v6049, %v6049
        %v6098 = vpack.c.b16 %v6050, %v6050
        %v6099 = vpack.c.b16 %v6051, %v6051
        %v6100 = vpack.c.b16 %v6052, %v6052
        %v6101 = vpack.c.b16 %v6053, %v6053
        %v6102 = vpack.c.b16 %v6054, %v6054
        %v6103 = vpack.c.b16 %v6055, %v6055
        %v6104 = vpack.c.b16 %v6056, %v6056
        %v6105 = vpack.c.b16 %v6057, %v6057
        %v6106 = vpack.c.b16 %v6058, %v6058
        %v6107 = vpack.c.b16 %v6059, %v6059
        %v6108 = vpack.c.b16 %v6060, %v6060
        %v6109 = vpack.c.b16 %v6061, %v6061
        %v6110 = vpack.c.b16 %v6062, %v6062
        %v6111 = vpack.c.b16 %v6063, %v6063
        %v6112 = vpack.c.b16 %v6064, %v6064
        %v6113 = vpack.c.b16 %v6065, %v6065
        %v6114 = vpack.c.b16 %v6066, %v6066
        %vm6115 = vsmask.f32 256
        %vm6116 = vsmask.f32 4368
        %vm6117 = vmor %vm6115, %vm6116
        %v6119 = vshrl.u32 %v6067, 16
        %v6121 = vrot.slane %v6119, 7
        %v6122 = vshll.u32 %v6067, 16
        %v6124 = vor.u32 %v6121, %v6122
        %v6125 = vrot.slane %v6121, 4
        %v6127 = vshrl.u32 %v6068, 16
        %v6129 = vrot.slane %v6127, 7
        %v6130 = vshll.u32 %v6068, 16
        %v6132 = vor.u32 %v6129, %v6130
        %v6133 = vsel %vm6117, %v6125, %v6132
        %v6134 = vrot.slane %v6129, 4
        %v6136 = vshrl.u32 %v6069, 16
        %v6138 = vrot.slane %v6136, 7
        %v6139 = vshll.u32 %v6069, 16
        %v6141 = vor.u32 %v6138, %v6139
        %v6142 = vsel %vm6117, %v6134, %v6141
        %v6143 = vrot.slane %v6138, 4
        %v6145 = vshrl.u32 %v6070, 16
        %v6147 = vrot.slane %v6145, 7
        %v6148 = vshll.u32 %v6070, 16
        %v6150 = vor.u32 %v6147, %v6148
        %v6151 = vsel %vm6117, %v6143, %v6150
        %v6152 = vrot.slane %v6147, 4
        %v6154 = vshrl.u32 %v6071, 16
        %v6156 = vrot.slane %v6154, 7
        %v6157 = vshll.u32 %v6071, 16
        %v6159 = vor.u32 %v6156, %v6157
        %v6160 = vsel %vm6117, %v6152, %v6159
        %v6161 = vrot.slane %v6156, 4
        %v6163 = vshrl.u32 %v6072, 16
        %v6165 = vrot.slane %v6163, 7
        %v6166 = vshll.u32 %v6072, 16
        %v6168 = vor.u32 %v6165, %v6166
        %v6169 = vsel %vm6117, %v6161, %v6168
        %v6170 = vrot.slane %v6165, 4
        %v6172 = vshrl.u32 %v6073, 16
        %v6174 = vrot.slane %v6172, 7
        %v6175 = vshll.u32 %v6073, 16
        %v6177 = vor.u32 %v6174, %v6175
        %v6178 = vsel %vm6117, %v6170, %v6177
        %v6179 = vrot.slane %v6174, 4
        %v6181 = vshrl.u32 %v6074, 16
        %v6183 = vrot.slane %v6181, 7
        %v6184 = vshll.u32 %v6074, 16
        %v6186 = vor.u32 %v6183, %v6184
        %v6187 = vsel %vm6117, %v6179, %v6186
        %v6188 = vrot.slane %v6183, 4
        %v6190 = vshrl.u32 %v6075, 16
        %v6192 = vrot.slane %v6190, 7
        %v6193 = vshll.u32 %v6075, 16
        %v6195 = vor.u32 %v6192, %v6193
        %v6196 = vsel %vm6117, %v6188, %v6195
        %v6197 = vrot.slane %v6192, 4
        %v6199 = vshrl.u32 %v6076, 16
        %v6201 = vrot.slane %v6199, 7
        %v6202 = vshll.u32 %v6076, 16
        %v6204 = vor.u32 %v6201, %v6202
        %v6205 = vsel %vm6117, %v6197, %v6204
        %v6206 = vrot.slane %v6201, 4
        %v6208 = vshrl.u32 %v6077, 16
        %v6210 = vrot.slane %v6208, 7
        %v6211 = vshll.u32 %v6077, 16
        %v6213 = vor.u32 %v6210, %v6211
        %v6214 = vsel %vm6117, %v6206, %v6213
        %v6215 = vrot.slane %v6210, 4
        %v6217 = vshrl.u32 %v6078, 16
        %v6219 = vrot.slane %v6217, 7
        %v6220 = vshll.u32 %v6078, 16
        %v6222 = vor.u32 %v6219, %v6220
        %v6223 = vsel %vm6117, %v6215, %v6222
        %v6224 = vrot.slane %v6219, 4
        %v6226 = vshrl.u32 %v6079, 16
        %v6228 = vrot.slane %v6226, 7
        %v6229 = vshll.u32 %v6079, 16
        %v6231 = vor.u32 %v6228, %v6229
        %v6232 = vsel %vm6117, %v6224, %v6231
        %v6233 = vrot.slane %v6228, 4
        %v6235 = vshrl.u32 %v6080, 16
        %v6237 = vrot.slane %v6235, 7
        %v6238 = vshll.u32 %v6080, 16
        %v6240 = vor.u32 %v6237, %v6238
        %v6241 = vsel %vm6117, %v6233, %v6240
        %v6242 = vrot.slane %v6237, 4
        %v6244 = vshrl.u32 %v6081, 16
        %v6246 = vrot.slane %v6244, 7
        %v6247 = vshll.u32 %v6081, 16
        %v6249 = vor.u32 %v6246, %v6247
        %v6250 = vsel %vm6117, %v6242, %v6249
        %v6251 = vrot.slane %v6246, 4
        %v6253 = vshrl.u32 %v6082, 16
        %v6255 = vrot.slane %v6253, 7
        %v6256 = vshll.u32 %v6082, 16
        %v6258 = vor.u32 %v6255, %v6256
        %v6259 = vsel %vm6117, %v6251, %v6258
        %v6260 = vrot.slane %v6255, 4
        %v6262 = vshrl.u32 %v6083, 16
        %v6264 = vrot.slane %v6262, 7
        %v6265 = vshll.u32 %v6083, 16
        %v6267 = vor.u32 %v6264, %v6265
        %v6268 = vsel %vm6117, %v6260, %v6267
        %v6269 = vrot.slane %v6264, 4
        %v6271 = vshrl.u32 %v6084, 16
        %v6273 = vrot.slane %v6271, 7
        %v6274 = vshll.u32 %v6084, 16
        %v6276 = vor.u32 %v6273, %v6274
        %v6277 = vsel %vm6117, %v6269, %v6276
        %v6278 = vrot.slane %v6273, 4
        %v6280 = vshrl.u32 %v6085, 16
        %v6282 = vrot.slane %v6280, 7
        %v6283 = vshll.u32 %v6085, 16
        %v6285 = vor.u32 %v6282, %v6283
        %v6286 = vsel %vm6117, %v6278, %v6285
        %v6287 = vrot.slane %v6282, 4
        %v6289 = vshrl.u32 %v6086, 16
        %v6291 = vrot.slane %v6289, 7
        %v6292 = vshll.u32 %v6086, 16
        %v6294 = vor.u32 %v6291, %v6292
        %v6295 = vsel %vm6117, %v6287, %v6294
        %v6296 = vrot.slane %v6291, 4
        %v6298 = vshrl.u32 %v6087, 16
        %v6300 = vrot.slane %v6298, 7
        %v6301 = vshll.u32 %v6087, 16
        %v6303 = vor.u32 %v6300, %v6301
        %v6304 = vsel %vm6117, %v6296, %v6303
        %v6305 = vrot.slane %v6300, 4
        %v6307 = vshrl.u32 %v6088, 16
        %v6309 = vrot.slane %v6307, 7
        %v6310 = vshll.u32 %v6088, 16
        %v6312 = vor.u32 %v6309, %v6310
        %v6313 = vsel %vm6117, %v6305, %v6312
        %v6314 = vrot.slane %v6309, 4
        %v6316 = vshrl.u32 %v6089, 16
        %v6318 = vrot.slane %v6316, 7
        %v6319 = vshll.u32 %v6089, 16
        %v6321 = vor.u32 %v6318, %v6319
        %v6322 = vsel %vm6117, %v6314, %v6321
        %v6323 = vrot.slane %v6318, 4
        %v6325 = vshrl.u32 %v6090, 16
        %v6327 = vrot.slane %v6325, 7
        %v6328 = vshll.u32 %v6090, 16
        %v6330 = vor.u32 %v6327, %v6328
        %v6331 = vsel %vm6117, %v6323, %v6330
        %v6332 = vrot.slane %v6327, 4
        %v6334 = vshrl.u32 %v6091, 16
        %v6336 = vrot.slane %v6334, 7
        %v6337 = vshll.u32 %v6091, 16
        %v6339 = vor.u32 %v6336, %v6337
        %v6340 = vsel %vm6117, %v6332, %v6339
        %v6341 = vrot.slane %v6336, 4
        %v6343 = vshrl.u32 %v6092, 16
        %v6345 = vrot.slane %v6343, 7
        %v6346 = vshll.u32 %v6092, 16
        %v6348 = vor.u32 %v6345, %v6346
        %v6349 = vsel %vm6117, %v6341, %v6348
        %v6350 = vrot.slane %v6345, 4
        %v6352 = vshrl.u32 %v6093, 16
        %v6354 = vrot.slane %v6352, 7
        %v6355 = vshll.u32 %v6093, 16
        %v6357 = vor.u32 %v6354, %v6355
        %v6358 = vsel %vm6117, %v6350, %v6357
        %v6359 = vrot.slane %v6354, 4
        %v6361 = vshrl.u32 %v6094, 16
        %v6363 = vrot.slane %v6361, 7
        %v6364 = vshll.u32 %v6094, 16
        %v6366 = vor.u32 %v6363, %v6364
        %v6367 = vsel %vm6117, %v6359, %v6366
        %v6368 = vrot.slane %v6363, 4
        %v6370 = vshrl.u32 %v6095, 16
        %v6372 = vrot.slane %v6370, 7
        %v6373 = vshll.u32 %v6095, 16
        %v6375 = vor.u32 %v6372, %v6373
        %v6376 = vsel %vm6117, %v6368, %v6375
        %v6377 = vrot.slane %v6372, 4
        %v6379 = vshrl.u32 %v6096, 16
        %v6381 = vrot.slane %v6379, 7
        %v6382 = vshll.u32 %v6096, 16
        %v6384 = vor.u32 %v6381, %v6382
        %v6385 = vsel %vm6117, %v6377, %v6384
        %v6386 = vrot.slane %v6381, 4
        %v6388 = vshrl.u32 %v6097, 16
        %v6390 = vrot.slane %v6388, 7
        %v6391 = vshll.u32 %v6097, 16
        %v6393 = vor.u32 %v6390, %v6391
        %v6394 = vsel %vm6117, %v6386, %v6393
        %v6395 = vrot.slane %v6390, 4
        %v6397 = vshrl.u32 %v6098, 16
        %v6399 = vrot.slane %v6397, 7
        %v6400 = vshll.u32 %v6098, 16
        %v6402 = vor.u32 %v6399, %v6400
        %v6403 = vsel %vm6117, %v6395, %v6402
        %v6404 = vrot.slane %v6399, 4
        %v6406 = vshrl.u32 %v6099, 16
        %v6408 = vrot.slane %v6406, 7
        %v6409 = vshll.u32 %v6099, 16
        %v6411 = vor.u32 %v6408, %v6409
        %v6412 = vsel %vm6117, %v6404, %v6411
        %v6413 = vrot.slane %v6408, 4
        %v6415 = vshrl.u32 %v6100, 16
        %v6417 = vrot.slane %v6415, 7
        %v6418 = vshll.u32 %v6100, 16
        %v6420 = vor.u32 %v6417, %v6418
        %v6421 = vsel %vm6117, %v6413, %v6420
        %v6422 = vrot.slane %v6417, 4
        %v6424 = vshrl.u32 %v6101, 16
        %v6426 = vrot.slane %v6424, 7
        %v6427 = vshll.u32 %v6101, 16
        %v6429 = vor.u32 %v6426, %v6427
        %v6430 = vsel %vm6117, %v6422, %v6429
        %v6431 = vrot.slane %v6426, 4
        %v6433 = vshrl.u32 %v6102, 16
        %v6435 = vrot.slane %v6433, 7
        %v6436 = vshll.u32 %v6102, 16
        %v6438 = vor.u32 %v6435, %v6436
        %v6439 = vsel %vm6117, %v6431, %v6438
        %v6440 = vrot.slane %v6435, 4
        %v6442 = vshrl.u32 %v6103, 16
        %v6444 = vrot.slane %v6442, 7
        %v6445 = vshll.u32 %v6103, 16
        %v6447 = vor.u32 %v6444, %v6445
        %v6448 = vsel %vm6117, %v6440, %v6447
        %v6449 = vrot.slane %v6444, 4
        %v6451 = vshrl.u32 %v6104, 16
        %v6453 = vrot.slane %v6451, 7
        %v6454 = vshll.u32 %v6104, 16
        %v6456 = vor.u32 %v6453, %v6454
        %v6457 = vsel %vm6117, %v6449, %v6456
        %v6458 = vrot.slane %v6453, 4
        %v6460 = vshrl.u32 %v6105, 16
        %v6462 = vrot.slane %v6460, 7
        %v6463 = vshll.u32 %v6105, 16
        %v6465 = vor.u32 %v6462, %v6463
        %v6466 = vsel %vm6117, %v6458, %v6465
        %v6467 = vrot.slane %v6462, 4
        %v6469 = vshrl.u32 %v6106, 16
        %v6471 = vrot.slane %v6469, 7
        %v6472 = vshll.u32 %v6106, 16
        %v6474 = vor.u32 %v6471, %v6472
        %v6475 = vsel %vm6117, %v6467, %v6474
        %v6476 = vrot.slane %v6471, 4
        %v6478 = vshrl.u32 %v6107, 16
        %v6480 = vrot.slane %v6478, 7
        %v6481 = vshll.u32 %v6107, 16
        %v6483 = vor.u32 %v6480, %v6481
        %v6484 = vsel %vm6117, %v6476, %v6483
        %v6485 = vrot.slane %v6480, 4
        %v6487 = vshrl.u32 %v6108, 16
        %v6489 = vrot.slane %v6487, 7
        %v6490 = vshll.u32 %v6108, 16
        %v6492 = vor.u32 %v6489, %v6490
        %v6493 = vsel %vm6117, %v6485, %v6492
        %v6494 = vrot.slane %v6489, 4
        %v6496 = vshrl.u32 %v6109, 16
        %v6498 = vrot.slane %v6496, 7
        %v6499 = vshll.u32 %v6109, 16
        %v6501 = vor.u32 %v6498, %v6499
        %v6502 = vsel %vm6117, %v6494, %v6501
        %v6503 = vrot.slane %v6498, 4
        %v6505 = vshrl.u32 %v6110, 16
        %v6507 = vrot.slane %v6505, 7
        %v6508 = vshll.u32 %v6110, 16
        %v6510 = vor.u32 %v6507, %v6508
        %v6511 = vsel %vm6117, %v6503, %v6510
        %v6512 = vrot.slane %v6507, 4
        %v6514 = vshrl.u32 %v6111, 16
        %v6516 = vrot.slane %v6514, 7
        %v6517 = vshll.u32 %v6111, 16
        %v6519 = vor.u32 %v6516, %v6517
        %v6520 = vsel %vm6117, %v6512, %v6519
        %v6521 = vrot.slane %v6516, 4
        %v6523 = vshrl.u32 %v6112, 16
        %v6525 = vrot.slane %v6523, 7
        %v6526 = vshll.u32 %v6112, 16
        %v6528 = vor.u32 %v6525, %v6526
        %v6529 = vsel %vm6117, %v6521, %v6528
        %v6530 = vrot.slane %v6525, 4
        %v6532 = vshrl.u32 %v6113, 16
        %v6534 = vrot.slane %v6532, 7
        %v6535 = vshll.u32 %v6113, 16
        %v6537 = vor.u32 %v6534, %v6535
        %v6538 = vsel %vm6117, %v6530, %v6537
        %v6539 = vrot.slane %v6534, 4
        %v6541 = vshrl.u32 %v6114, 16
        %v6543 = vrot.slane %v6541, 7
        %v6544 = vshll.u32 %v6114, 16
        %v6546 = vor.u32 %v6543, %v6544
        %v6547 = vsel %vm6117, %v6539, %v6546
        %v6548 = vrot.slane %v6543, 4
        %vm6598 = vcmask 1043456
        %vm6599 = vsmask.f32 7938
        %vm6600 = vmand %vm6598, %vm6599
        %v6601 = vld [vmem:[#allocation2 + $0xc] sm:$0xf]
        %v6602 = vsel %vm6600, %v6124, %v6601
        %6603 = vst [vmem:[#allocation2 + $0xc] sm:$0xf] %v6602
        %6604 = vst [vmem:[#allocation2 + $0x10] sm:$0xf] %v6133
        %6605 = vst [vmem:[#allocation2 + $0x14] sm:$0xf] %v6142
        %6606 = vst [vmem:[#allocation2 + $0x18] sm:$0xf] %v6151
        %6607 = vst [vmem:[#allocation2 + $0x1c] sm:$0xf] %v6160
        %6608 = vst [vmem:[#allocation2 + $0x20] sm:$0xf] %v6169
        %6609 = vst [vmem:[#allocation2 + $0x24] sm:$0xf] %v6178
        %6610 = vst [vmem:[#allocation2 + $0x28] sm:$0xf] %v6187
        %6611 = vst [vmem:[#allocation2 + $0x2c] sm:$0xf] %v6196
        %6612 = vst [vmem:[#allocation2 + $0x30] sm:$0xf] %v6205
        %6613 = vst [vmem:[#allocation2 + $0x34] sm:$0xf] %v6214
        %6614 = vst [vmem:[#allocation2 + $0x38] sm:$0xf] %v6223
        %6615 = vst [vmem:[#allocation2 + $0x3c] sm:$0xf] %v6232
        %6616 = vst [vmem:[#allocation2 + $0x40] sm:$0xf] %v6241
        %6617 = vst [vmem:[#allocation2 + $0x44] sm:$0xf] %v6250
        %6618 = vst [vmem:[#allocation2 + $0x48] sm:$0xf] %v6259
        %6619 = vst [vmem:[#allocation2 + $0x4c] sm:$0xf] %v6268
        %6620 = vst [vmem:[#allocation2 + $0x50] sm:$0xf] %v6277
        %6621 = vst [vmem:[#allocation2 + $0x54] sm:$0xf] %v6286
        %6622 = vst [vmem:[#allocation2 + $0x58] sm:$0xf] %v6295
        %6623 = vst [vmem:[#allocation2 + $0x5c] sm:$0xf] %v6304
        %6624 = vst [vmem:[#allocation2 + $0x60] sm:$0xf] %v6313
        %6625 = vst [vmem:[#allocation2 + $0x64] sm:$0xf] %v6322
        %6626 = vst [vmem:[#allocation2 + $0x68] sm:$0xf] %v6331
        %6627 = vst [vmem:[#allocation2 + $0x6c] sm:$0xf] %v6340
        %6628 = vst [vmem:[#allocation2 + $0x70] sm:$0xf] %v6349
        %6629 = vst [vmem:[#allocation2 + $0x74] sm:$0xf] %v6358
        %6630 = vst [vmem:[#allocation2 + $0x78] sm:$0xf] %v6367
        %6631 = vst [vmem:[#allocation2 + $0x7c] sm:$0xf] %v6376
        %6632 = vst [vmem:[#allocation2 + $0x80] sm:$0xf] %v6385
        %6633 = vst [vmem:[#allocation2 + $0x84] sm:$0xf] %v6394
        %6634 = vst [vmem:[#allocation2 + $0x88] sm:$0xf] %v6403
        %6635 = vst [vmem:[#allocation2 + $0x8c] sm:$0xf] %v6412
        %6636 = vst [vmem:[#allocation2 + $0x90] sm:$0xf] %v6421
        %6637 = vst [vmem:[#allocation2 + $0x94] sm:$0xf] %v6430
        %6638 = vst [vmem:[#allocation2 + $0x98] sm:$0xf] %v6439
        %6639 = vst [vmem:[#allocation2 + $0x9c] sm:$0xf] %v6448
        %6640 = vst [vmem:[#allocation2 + $0xa0] sm:$0xf] %v6457
        %6641 = vst [vmem:[#allocation2 + $0xa4] sm:$0xf] %v6466
        %6642 = vst [vmem:[#allocation2 + $0xa8] sm:$0xf] %v6475
        %6643 = vst [vmem:[#allocation2 + $0xac] sm:$0xf] %v6484
        %6644 = vst [vmem:[#allocation2 + $0xb0] sm:$0xf] %v6493
        %6645 = vst [vmem:[#allocation2 + $0xb4] sm:$0xf] %v6502
        %6646 = vst [vmem:[#allocation2 + $0xb8] sm:$0xf] %v6511
        %6647 = vst [vmem:[#allocation2 + $0xbc] sm:$0xf] %v6520
        %6648 = vst [vmem:[#allocation2 + $0xc0] sm:$0xf] %v6529
        %6649 = vst [vmem:[#allocation2 + $0xc4] sm:$0xf] %v6538
        %6650 = vst [vmem:[#allocation2 + $0xc8] sm:$0xf] %v6547
        %vm6651 = vcmask 1040384
        %vm6652 = vmand %vm6651, %vm6115
        %v6653 = vld [vmem:[#allocation2 + $0xcc] sm:$0x1]
        %v6654 = vsel %vm6652, %v6548, %v6653
        %6655 = vst [vmem:[#allocation2 + $0xcc] sm:$0x1] %v6654
        %v6656 = vld [vmem:[#allocation2] sm:$0xf]
        %v6657 = vld [vmem:[#allocation2 + $0x4] sm:$0xf]
        %v6658 = vld [vmem:[#allocation2 + $0x8] sm:$0xf]
        %v6659 = vld [vmem:[#allocation2 + $0xc] sm:$0xf]
        %v6660 = vld [vmem:[#allocation2 + $0x10] sm:$0xf]
        %v6661 = vld [vmem:[#allocation2 + $0x14] sm:$0xf]
        %v6662 = vld [vmem:[#allocation2 + $0x18] sm:$0xf]
        %v6663 = vld [vmem:[#allocation2 + $0x1c] sm:$0xf]
        %v6664 = vld [vmem:[#allocation2 + $0x20] sm:$0xf]
        %v6665 = vld [vmem:[#allocation2 + $0x24] sm:$0xf]
        %v6666 = vld [vmem:[#allocation2 + $0x28] sm:$0xf]
        %v6667 = vld [vmem:[#allocation2 + $0x2c] sm:$0xf]
        %v6668 = vld [vmem:[#allocation2 + $0x30] sm:$0xf]
        %v6669 = vld [vmem:[#allocation2 + $0x34] sm:$0xf]
        %v6670 = vld [vmem:[#allocation2 + $0x38] sm:$0xf]
        %v6671 = vld [vmem:[#allocation2 + $0x3c] sm:$0xf]
        %v6672 = vld [vmem:[#allocation2 + $0x40] sm:$0xf]
        %v6673 = vld [vmem:[#allocation2 + $0x44] sm:$0xf]
        %v6674 = vld [vmem:[#allocation2 + $0x48] sm:$0xf]
        %v6675 = vld [vmem:[#allocation2 + $0x4c] sm:$0xf]
        %v6676 = vld [vmem:[#allocation2 + $0x50] sm:$0xf]
        %v6677 = vld [vmem:[#allocation2 + $0x54] sm:$0xf]
        %v6678 = vld [vmem:[#allocation2 + $0x58] sm:$0xf]
        %v6679 = vld [vmem:[#allocation2 + $0x5c] sm:$0xf]
        %v6680 = vld [vmem:[#allocation2 + $0x60] sm:$0xf]
        %v6681 = vld [vmem:[#allocation2 + $0x64] sm:$0xf]
        %v6682 = vld [vmem:[#allocation2 + $0x68] sm:$0xf]
        %v6683 = vld [vmem:[#allocation2 + $0x6c] sm:$0xf]
        %v6684 = vld [vmem:[#allocation2 + $0x70] sm:$0xf]
        %v6685 = vld [vmem:[#allocation2 + $0x74] sm:$0xf]
        %v6686 = vld [vmem:[#allocation2 + $0x78] sm:$0xf]
        %v6687 = vld [vmem:[#allocation2 + $0x7c] sm:$0xf]
        %v6688 = vld [vmem:[#allocation2 + $0x80] sm:$0xf]
        %v6689 = vld [vmem:[#allocation2 + $0x84] sm:$0xf]
        %v6690 = vld [vmem:[#allocation2 + $0x88] sm:$0xf]
        %v6691 = vld [vmem:[#allocation2 + $0x8c] sm:$0xf]
        %v6692 = vld [vmem:[#allocation2 + $0x90] sm:$0xf]
        %v6693 = vld [vmem:[#allocation2 + $0x94] sm:$0xf]
        %v6694 = vld [vmem:[#allocation2 + $0x98] sm:$0xf]
        %v6695 = vld [vmem:[#allocation2 + $0x9c] sm:$0xf]
        %v6696 = vld [vmem:[#allocation2 + $0xa0] sm:$0xf]
        %v6697 = vld [vmem:[#allocation2 + $0xa4] sm:$0xf]
        %v6698 = vld [vmem:[#allocation2 + $0xa8] sm:$0xf]
        %v6699 = vld [vmem:[#allocation2 + $0xac] sm:$0xf]
        %v6700 = vld [vmem:[#allocation2 + $0xb0] sm:$0xf]
        %v6701 = vld [vmem:[#allocation2 + $0xb4] sm:$0xf]
        %v6702 = vld [vmem:[#allocation2 + $0xb8] sm:$0xf]
        %v6703 = vld [vmem:[#allocation2 + $0xbc] sm:$0xf]
        %v6752 = vunpack.c.l.b16 %v6656
        %v6753 = vunpack.c.l.b16 %v6657
        %v6754 = vunpack.c.l.b16 %v6658
        %v6755 = vunpack.c.l.b16 %v6659
        %v6756 = vunpack.c.l.b16 %v6660
        %v6757 = vunpack.c.l.b16 %v6661
        %v6758 = vunpack.c.l.b16 %v6662
        %v6759 = vunpack.c.l.b16 %v6663
        %v6760 = vunpack.c.l.b16 %v6664
        %v6761 = vunpack.c.l.b16 %v6665
        %v6762 = vunpack.c.l.b16 %v6666
        %v6763 = vunpack.c.l.b16 %v6667
        %v6764 = vunpack.c.l.b16 %v6668
        %v6765 = vunpack.c.l.b16 %v6669
        %v6766 = vunpack.c.l.b16 %v6670
        %v6767 = vunpack.c.l.b16 %v6671
        %v6768 = vunpack.c.l.b16 %v6672
        %v6769 = vunpack.c.l.b16 %v6673
        %v6770 = vunpack.c.l.b16 %v6674
        %v6771 = vunpack.c.l.b16 %v6675
        %v6772 = vunpack.c.l.b16 %v6676
        %v6773 = vunpack.c.l.b16 %v6677
        %v6774 = vunpack.c.l.b16 %v6678
        %v6775 = vunpack.c.l.b16 %v6679
        %v6776 = vunpack.c.l.b16 %v6680
        %v6777 = vunpack.c.l.b16 %v6681
        %v6778 = vunpack.c.l.b16 %v6682
        %v6779 = vunpack.c.l.b16 %v6683
        %v6780 = vunpack.c.l.b16 %v6684
        %v6781 = vunpack.c.l.b16 %v6685
        %v6782 = vunpack.c.l.b16 %v6686
        %v6783 = vunpack.c.l.b16 %v6687
        %v6784 = vunpack.c.l.b16 %v6688
        %v6785 = vunpack.c.l.b16 %v6689
        %v6786 = vunpack.c.l.b16 %v6690
        %v6787 = vunpack.c.l.b16 %v6691
        %v6788 = vunpack.c.l.b16 %v6692
        %v6789 = vunpack.c.l.b16 %v6693
        %v6790 = vunpack.c.l.b16 %v6694
        %v6791 = vunpack.c.l.b16 %v6695
        %v6792 = vunpack.c.l.b16 %v6696
        %v6793 = vunpack.c.l.b16 %v6697
        %v6794 = vunpack.c.l.b16 %v6698
        %v6795 = vunpack.c.l.b16 %v6699
        %v6796 = vunpack.c.l.b16 %v6700
        %v6797 = vunpack.c.l.b16 %v6701
        %v6798 = vunpack.c.l.b16 %v6702
        %v6799 = vunpack.c.l.b16 %v6703
        %v6800 = vpack.c.b16 %v6753, %v6752
        %v6801 = vpack.c.b16 %v6755, %v6754
        %v6802 = vpack.c.b16 %v6757, %v6756
        %v6803 = vpack.c.b16 %v6759, %v6758
        %v6804 = vpack.c.b16 %v6761, %v6760
        %v6805 = vpack.c.b16 %v6763, %v6762
        %v6806 = vpack.c.b16 %v6765, %v6764
        %v6807 = vpack.c.b16 %v6767, %v6766
        %v6808 = vpack.c.b16 %v6769, %v6768
        %v6809 = vpack.c.b16 %v6771, %v6770
        %v6810 = vpack.c.b16 %v6773, %v6772
        %v6811 = vpack.c.b16 %v6775, %v6774
        %v6812 = vpack.c.b16 %v6777, %v6776
        %v6813 = vpack.c.b16 %v6779, %v6778
        %v6814 = vpack.c.b16 %v6781, %v6780
        %v6815 = vpack.c.b16 %v6783, %v6782
        %v6816 = vpack.c.b16 %v6785, %v6784
        %v6817 = vpack.c.b16 %v6787, %v6786
        %v6818 = vpack.c.b16 %v6789, %v6788
        %v6819 = vpack.c.b16 %v6791, %v6790
        %v6820 = vpack.c.b16 %v6793, %v6792
        %v6821 = vpack.c.b16 %v6795, %v6794
        %v6822 = vpack.c.b16 %v6797, %v6796
        %v6823 = vpack.c.b16 %v6799, %v6798
        %6848 = vst [vmem:[#allocation3] sm:$0xff] %v6800
        %6849 = vst [vmem:[#allocation3 + $0x48] sm:$0xff] %v6801
        %6850 = vst [vmem:[#allocation3 + $0x90] sm:$0xff] %v6802
        %6851 = vst [vmem:[#allocation3 + $0xd8] sm:$0xff] %v6803
        %6852 = vst [vmem:[#allocation3 + $0x120] sm:$0xff] %v6804
        %6853 = vst [vmem:[#allocation3 + $0x168] sm:$0xff] %v6805
        %6854 = vst [vmem:[#allocation3 + $0x1b0] sm:$0xff] %v6806
        %6855 = vst [vmem:[#allocation3 + $0x1f8] sm:$0xff] %v6807
        %6856 = vst [vmem:[#allocation3 + $0x240] sm:$0xff] %v6808
        %6857 = vst [vmem:[#allocation3 + $0x288] sm:$0xff] %v6809
        %6858 = vst [vmem:[#allocation3 + $0x2d0] sm:$0xff] %v6810
        %6859 = vst [vmem:[#allocation3 + $0x318] sm:$0xff] %v6811
        %6860 = vst [vmem:[#allocation3 + $0x360] sm:$0xff] %v6812
        %6861 = vst [vmem:[#allocation3 + $0x3a8] sm:$0xff] %v6813
        %6862 = vst [vmem:[#allocation3 + $0x3f0] sm:$0xff] %v6814
        %6863 = vst [vmem:[#allocation3 + $0x438] sm:$0xff] %v6815
        %6864 = vst [vmem:[#allocation3 + $0x480] sm:$0xff] %v6816
        %6865 = vst [vmem:[#allocation3 + $0x4c8] sm:$0xff] %v6817
        %6866 = vst [vmem:[#allocation3 + $0x510] sm:$0xff] %v6818
        %6867 = vst [vmem:[#allocation3 + $0x558] sm:$0xff] %v6819
        %6868 = vst [vmem:[#allocation3 + $0x5a0] sm:$0xff] %v6820
        %6869 = vst [vmem:[#allocation3 + $0x5e8] sm:$0xff] %v6821
        %6870 = vst [vmem:[#allocation3 + $0x630] sm:$0xff] %v6822
        %6871 = vst [vmem:[#allocation3 + $0x678] sm:$0xff] %v6823
        %v6872 = vld [vmem:[#allocation2] sm:$0xf]
        %v6873 = vld [vmem:[#allocation2 + $0x4] sm:$0xf]
        %v6874 = vld [vmem:[#allocation2 + $0x8] sm:$0xf]
        %v6875 = vld [vmem:[#allocation2 + $0xc] sm:$0xf]
        %v6876 = vld [vmem:[#allocation2 + $0x10] sm:$0xf]
        %v6877 = vld [vmem:[#allocation2 + $0x14] sm:$0xf]
        %v6878 = vld [vmem:[#allocation2 + $0x18] sm:$0xf]
        %v6879 = vld [vmem:[#allocation2 + $0x1c] sm:$0xf]
        %v6880 = vld [vmem:[#allocation2 + $0x20] sm:$0xf]
        %v6881 = vld [vmem:[#allocation2 + $0x24] sm:$0xf]
        %v6882 = vld [vmem:[#allocation2 + $0x28] sm:$0xf]
        %v6883 = vld [vmem:[#allocation2 + $0x2c] sm:$0xf]
        %v6884 = vld [vmem:[#allocation2 + $0x30] sm:$0xf]
        %v6885 = vld [vmem:[#allocation2 + $0x34] sm:$0xf]
        %v6886 = vld [vmem:[#allocation2 + $0x38] sm:$0xf]
        %v6887 = vld [vmem:[#allocation2 + $0x3c] sm:$0xf]
        %v6888 = vld [vmem:[#allocation2 + $0x40] sm:$0xf]
        %v6889 = vld [vmem:[#allocation2 + $0x44] sm:$0xf]
        %v6890 = vld [vmem:[#allocation2 + $0x48] sm:$0xf]
        %v6891 = vld [vmem:[#allocation2 + $0x4c] sm:$0xf]
        %v6892 = vld [vmem:[#allocation2 + $0x50] sm:$0xf]
        %v6893 = vld [vmem:[#allocation2 + $0x54] sm:$0xf]
        %v6894 = vld [vmem:[#allocation2 + $0x58] sm:$0xf]
        %v6895 = vld [vmem:[#allocation2 + $0x5c] sm:$0xf]
        %v6896 = vld [vmem:[#allocation2 + $0x60] sm:$0xf]
        %v6897 = vld [vmem:[#allocation2 + $0x64] sm:$0xf]
        %v6898 = vld [vmem:[#allocation2 + $0x68] sm:$0xf]
        %v6899 = vld [vmem:[#allocation2 + $0x6c] sm:$0xf]
        %v6900 = vld [vmem:[#allocation2 + $0x70] sm:$0xf]
        %v6901 = vld [vmem:[#allocation2 + $0x74] sm:$0xf]
        %v6902 = vld [vmem:[#allocation2 + $0x78] sm:$0xf]
        %v6903 = vld [vmem:[#allocation2 + $0x7c] sm:$0xf]
        %v6904 = vld [vmem:[#allocation2 + $0x80] sm:$0xf]
        %v6905 = vld [vmem:[#allocation2 + $0x84] sm:$0xf]
        %v6906 = vld [vmem:[#allocation2 + $0x88] sm:$0xf]
        %v6907 = vld [vmem:[#allocation2 + $0x8c] sm:$0xf]
        %v6908 = vld [vmem:[#allocation2 + $0x90] sm:$0xf]
        %v6909 = vld [vmem:[#allocation2 + $0x94] sm:$0xf]
        %v6910 = vld [vmem:[#allocation2 + $0x98] sm:$0xf]
        %v6911 = vld [vmem:[#allocation2 + $0x9c] sm:$0xf]
        %v6912 = vld [vmem:[#allocation2 + $0xa0] sm:$0xf]
        %v6913 = vld [vmem:[#allocation2 + $0xa4] sm:$0xf]
        %v6914 = vld [vmem:[#allocation2 + $0xa8] sm:$0xf]
        %v6915 = vld [vmem:[#allocation2 + $0xac] sm:$0xf]
        %v6916 = vld [vmem:[#allocation2 + $0xb0] sm:$0xf]
        %v6917 = vld [vmem:[#allocation2 + $0xb4] sm:$0xf]
        %v6918 = vld [vmem:[#allocation2 + $0xb8] sm:$0xf]
        %v6919 = vld [vmem:[#allocation2 + $0xbc] sm:$0xf]
        %v6920 = vld [vmem:[#allocation2 + $0xc0] sm:$0x1]
        %v6970 = vunpack.c.l.b16 %v6872
        %v6971 = vunpack.c.l.b16 %v6873
        %v6972 = vunpack.c.l.b16 %v6874
        %v6973 = vunpack.c.l.b16 %v6875
        %v6974 = vunpack.c.l.b16 %v6876
        %v6975 = vunpack.c.l.b16 %v6877
        %v6976 = vunpack.c.l.b16 %v6878
        %v6977 = vunpack.c.l.b16 %v6879
        %v6978 = vunpack.c.l.b16 %v6880
        %v6979 = vunpack.c.l.b16 %v6881
        %v6980 = vunpack.c.l.b16 %v6882
        %v6981 = vunpack.c.l.b16 %v6883
        %v6982 = vunpack.c.l.b16 %v6884
        %v6983 = vunpack.c.l.b16 %v6885
        %v6984 = vunpack.c.l.b16 %v6886
        %v6985 = vunpack.c.l.b16 %v6887
        %v6986 = vunpack.c.l.b16 %v6888
        %v6987 = vunpack.c.l.b16 %v6889
        %v6988 = vunpack.c.l.b16 %v6890
        %v6989 = vunpack.c.l.b16 %v6891
        %v6990 = vunpack.c.l.b16 %v6892
        %v6991 = vunpack.c.l.b16 %v6893
        %v6992 = vunpack.c.l.b16 %v6894
        %v6993 = vunpack.c.l.b16 %v6895
        %v6994 = vunpack.c.l.b16 %v6896
        %v6995 = vunpack.c.l.b16 %v6897
        %v6996 = vunpack.c.l.b16 %v6898
        %v6997 = vunpack.c.l.b16 %v6899
        %v6998 = vunpack.c.l.b16 %v6900
        %v6999 = vunpack.c.l.b16 %v6901
        %v7000 = vunpack.c.l.b16 %v6902
        %v7001 = vunpack.c.l.b16 %v6903
        %v7002 = vunpack.c.l.b16 %v6904
        %v7003 = vunpack.c.l.b16 %v6905
        %v7004 = vunpack.c.l.b16 %v6906
        %v7005 = vunpack.c.l.b16 %v6907
        %v7006 = vunpack.c.l.b16 %v6908
        %v7007 = vunpack.c.l.b16 %v6909
        %v7008 = vunpack.c.l.b16 %v6910
        %v7009 = vunpack.c.l.b16 %v6911
        %v7010 = vunpack.c.l.b16 %v6912
        %v7011 = vunpack.c.l.b16 %v6913
        %v7012 = vunpack.c.l.b16 %v6914
        %v7013 = vunpack.c.l.b16 %v6915
        %v7014 = vunpack.c.l.b16 %v6916
        %v7015 = vunpack.c.l.b16 %v6917
        %v7016 = vunpack.c.l.b16 %v6918
        %v7017 = vunpack.c.l.b16 %v6919
        %v7018 = vunpack.c.l.b16 %v6920
        %v7019 = vpack.c.b16 %v6971, %v6970
        %v7020 = vpack.c.b16 %v6973, %v6972
        %v7021 = vpack.c.b16 %v6975, %v6974
        %v7022 = vpack.c.b16 %v6977, %v6976
        %v7023 = vpack.c.b16 %v6979, %v6978
        %v7024 = vpack.c.b16 %v6981, %v6980
        %v7025 = vpack.c.b16 %v6983, %v6982
        %v7026 = vpack.c.b16 %v6985, %v6984
        %v7027 = vpack.c.b16 %v6987, %v6986
        %v7028 = vpack.c.b16 %v6989, %v6988
        %v7029 = vpack.c.b16 %v6991, %v6990
        %v7030 = vpack.c.b16 %v6993, %v6992
        %v7031 = vpack.c.b16 %v6995, %v6994
        %v7032 = vpack.c.b16 %v6997, %v6996
        %v7033 = vpack.c.b16 %v6999, %v6998
        %v7034 = vpack.c.b16 %v7001, %v7000
        %v7035 = vpack.c.b16 %v7003, %v7002
        %v7036 = vpack.c.b16 %v7005, %v7004
        %v7037 = vpack.c.b16 %v7007, %v7006
        %v7038 = vpack.c.b16 %v7009, %v7008
        %v7039 = vpack.c.b16 %v7011, %v7010
        %v7040 = vpack.c.b16 %v7013, %v7012
        %v7041 = vpack.c.b16 %v7015, %v7014
        %v7042 = vpack.c.b16 %v7017, %v7016
        %v7043 = vpack.c.b16 %v7018, %v7018
        %v7045 = vshrl.u32 %v7019, 16
        %v7047 = vshll.u32 %v7019, 16
        %v7049 = vrot.slane %v7047, 1
        %v7050 = vor.u32 %v7045, %v7049
        %v7052 = vshll.u32 %v7020, 16
        %v7054 = vrot.slane %v7052, 1
        %v7055 = vsel %vm1526, %v7050, %v7054
        %v7056 = vshrl.u32 %v7020, 16
        %v7058 = vor.u32 %v7056, %v7054
        %v7060 = vshll.u32 %v7021, 16
        %v7062 = vrot.slane %v7060, 1
        %v7063 = vsel %vm1526, %v7058, %v7062
        %v7064 = vshrl.u32 %v7021, 16
        %v7066 = vor.u32 %v7064, %v7062
        %v7068 = vshll.u32 %v7022, 16
        %v7070 = vrot.slane %v7068, 1
        %v7071 = vsel %vm1526, %v7066, %v7070
        %v7072 = vshrl.u32 %v7022, 16
        %v7074 = vor.u32 %v7072, %v7070
        %v7076 = vshll.u32 %v7023, 16
        %v7078 = vrot.slane %v7076, 1
        %v7079 = vsel %vm1526, %v7074, %v7078
        %v7080 = vshrl.u32 %v7023, 16
        %v7082 = vor.u32 %v7080, %v7078
        %v7084 = vshll.u32 %v7024, 16
        %v7086 = vrot.slane %v7084, 1
        %v7087 = vsel %vm1526, %v7082, %v7086
        %v7088 = vshrl.u32 %v7024, 16
        %v7090 = vor.u32 %v7088, %v7086
        %v7092 = vshll.u32 %v7025, 16
        %v7094 = vrot.slane %v7092, 1
        %v7095 = vsel %vm1526, %v7090, %v7094
        %v7096 = vshrl.u32 %v7025, 16
        %v7098 = vor.u32 %v7096, %v7094
        %v7100 = vshll.u32 %v7026, 16
        %v7102 = vrot.slane %v7100, 1
        %v7103 = vsel %vm1526, %v7098, %v7102
        %v7104 = vshrl.u32 %v7026, 16
        %v7106 = vor.u32 %v7104, %v7102
        %v7108 = vshll.u32 %v7027, 16
        %v7110 = vrot.slane %v7108, 1
        %v7111 = vsel %vm1526, %v7106, %v7110
        %v7112 = vshrl.u32 %v7027, 16
        %v7114 = vor.u32 %v7112, %v7110
        %v7116 = vshll.u32 %v7028, 16
        %v7118 = vrot.slane %v7116, 1
        %v7119 = vsel %vm1526, %v7114, %v7118
        %v7120 = vshrl.u32 %v7028, 16
        %v7122 = vor.u32 %v7120, %v7118
        %v7124 = vshll.u32 %v7029, 16
        %v7126 = vrot.slane %v7124, 1
        %v7127 = vsel %vm1526, %v7122, %v7126
        %v7128 = vshrl.u32 %v7029, 16
        %v7130 = vor.u32 %v7128, %v7126
        %v7132 = vshll.u32 %v7030, 16
        %v7134 = vrot.slane %v7132, 1
        %v7135 = vsel %vm1526, %v7130, %v7134
        %v7136 = vshrl.u32 %v7030, 16
        %v7138 = vor.u32 %v7136, %v7134
        %v7140 = vshll.u32 %v7031, 16
        %v7142 = vrot.slane %v7140, 1
        %v7143 = vsel %vm1526, %v7138, %v7142
        %v7144 = vshrl.u32 %v7031, 16
        %v7146 = vor.u32 %v7144, %v7142
        %v7148 = vshll.u32 %v7032, 16
        %v7150 = vrot.slane %v7148, 1
        %v7151 = vsel %vm1526, %v7146, %v7150
        %v7152 = vshrl.u32 %v7032, 16
        %v7154 = vor.u32 %v7152, %v7150
        %v7156 = vshll.u32 %v7033, 16
        %v7158 = vrot.slane %v7156, 1
        %v7159 = vsel %vm1526, %v7154, %v7158
        %v7160 = vshrl.u32 %v7033, 16
        %v7162 = vor.u32 %v7160, %v7158
        %v7164 = vshll.u32 %v7034, 16
        %v7166 = vrot.slane %v7164, 1
        %v7167 = vsel %vm1526, %v7162, %v7166
        %v7168 = vshrl.u32 %v7034, 16
        %v7170 = vor.u32 %v7168, %v7166
        %v7172 = vshll.u32 %v7035, 16
        %v7174 = vrot.slane %v7172, 1
        %v7175 = vsel %vm1526, %v7170, %v7174
        %v7176 = vshrl.u32 %v7035, 16
        %v7178 = vor.u32 %v7176, %v7174
        %v7180 = vshll.u32 %v7036, 16
        %v7182 = vrot.slane %v7180, 1
        %v7183 = vsel %vm1526, %v7178, %v7182
        %v7184 = vshrl.u32 %v7036, 16
        %v7186 = vor.u32 %v7184, %v7182
        %v7188 = vshll.u32 %v7037, 16
        %v7190 = vrot.slane %v7188, 1
        %v7191 = vsel %vm1526, %v7186, %v7190
        %v7192 = vshrl.u32 %v7037, 16
        %v7194 = vor.u32 %v7192, %v7190
        %v7196 = vshll.u32 %v7038, 16
        %v7198 = vrot.slane %v7196, 1
        %v7199 = vsel %vm1526, %v7194, %v7198
        %v7200 = vshrl.u32 %v7038, 16
        %v7202 = vor.u32 %v7200, %v7198
        %v7204 = vshll.u32 %v7039, 16
        %v7206 = vrot.slane %v7204, 1
        %v7207 = vsel %vm1526, %v7202, %v7206
        %v7208 = vshrl.u32 %v7039, 16
        %v7210 = vor.u32 %v7208, %v7206
        %v7212 = vshll.u32 %v7040, 16
        %v7214 = vrot.slane %v7212, 1
        %v7215 = vsel %vm1526, %v7210, %v7214
        %v7216 = vshrl.u32 %v7040, 16
        %v7218 = vor.u32 %v7216, %v7214
        %v7220 = vshll.u32 %v7041, 16
        %v7222 = vrot.slane %v7220, 1
        %v7223 = vsel %vm1526, %v7218, %v7222
        %v7224 = vshrl.u32 %v7041, 16
        %v7226 = vor.u32 %v7224, %v7222
        %v7228 = vshll.u32 %v7042, 16
        %v7230 = vrot.slane %v7228, 1
        %v7231 = vsel %vm1526, %v7226, %v7230
        %v7232 = vshrl.u32 %v7042, 16
        %v7234 = vor.u32 %v7232, %v7230
        %v7236 = vshll.u32 %v7043, 16
        %v7238 = vrot.slane %v7236, 1
        %v7239 = vsel %vm1526, %v7234, %v7238
        %7264 = vst [vmem:[#allocation3 + $0x8] sm:$0xff] %v7055
        %7265 = vst [vmem:[#allocation3 + $0x50] sm:$0xff] %v7063
        %7266 = vst [vmem:[#allocation3 + $0x98] sm:$0xff] %v7071
        %7267 = vst [vmem:[#allocation3 + $0xe0] sm:$0xff] %v7079
        %7268 = vst [vmem:[#allocation3 + $0x128] sm:$0xff] %v7087
        %7269 = vst [vmem:[#allocation3 + $0x170] sm:$0xff] %v7095
        %7270 = vst [vmem:[#allocation3 + $0x1b8] sm:$0xff] %v7103
        %7271 = vst [vmem:[#allocation3 + $0x200] sm:$0xff] %v7111
        %7272 = vst [vmem:[#allocation3 + $0x248] sm:$0xff] %v7119
        %7273 = vst [vmem:[#allocation3 + $0x290] sm:$0xff] %v7127
        %7274 = vst [vmem:[#allocation3 + $0x2d8] sm:$0xff] %v7135
        %7275 = vst [vmem:[#allocation3 + $0x320] sm:$0xff] %v7143
        %7276 = vst [vmem:[#allocation3 + $0x368] sm:$0xff] %v7151
        %7277 = vst [vmem:[#allocation3 + $0x3b0] sm:$0xff] %v7159
        %7278 = vst [vmem:[#allocation3 + $0x3f8] sm:$0xff] %v7167
        %7279 = vst [vmem:[#allocation3 + $0x440] sm:$0xff] %v7175
        %7280 = vst [vmem:[#allocation3 + $0x488] sm:$0xff] %v7183
        %7281 = vst [vmem:[#allocation3 + $0x4d0] sm:$0xff] %v7191
        %7282 = vst [vmem:[#allocation3 + $0x518] sm:$0xff] %v7199
        %7283 = vst [vmem:[#allocation3 + $0x560] sm:$0xff] %v7207
        %7284 = vst [vmem:[#allocation3 + $0x5a8] sm:$0xff] %v7215
        %7285 = vst [vmem:[#allocation3 + $0x5f0] sm:$0xff] %v7223
        %7286 = vst [vmem:[#allocation3 + $0x638] sm:$0xff] %v7231
        %7287 = vst [vmem:[#allocation3 + $0x680] sm:$0xff] %v7239
        %v7288 = vld [vmem:[#allocation2] sm:$0xe]
        %v7289 = vld [vmem:[#allocation2 + $0x4] sm:$0xf]
        %v7290 = vld [vmem:[#allocation2 + $0x8] sm:$0xf]
        %v7291 = vld [vmem:[#allocation2 + $0xc] sm:$0xf]
        %v7292 = vld [vmem:[#allocation2 + $0x10] sm:$0xf]
        %v7293 = vld [vmem:[#allocation2 + $0x14] sm:$0xf]
        %v7294 = vld [vmem:[#allocation2 + $0x18] sm:$0xf]
        %v7295 = vld [vmem:[#allocation2 + $0x1c] sm:$0xf]
        %v7296 = vld [vmem:[#allocation2 + $0x20] sm:$0xf]
        %v7297 = vld [vmem:[#allocation2 + $0x24] sm:$0xf]
        %v7298 = vld [vmem:[#allocation2 + $0x28] sm:$0xf]
        %v7299 = vld [vmem:[#allocation2 + $0x2c] sm:$0xf]
        %v7300 = vld [vmem:[#allocation2 + $0x30] sm:$0xf]
        %v7301 = vld [vmem:[#allocation2 + $0x34] sm:$0xf]
        %v7302 = vld [vmem:[#allocation2 + $0x38] sm:$0xf]
        %v7303 = vld [vmem:[#allocation2 + $0x3c] sm:$0xf]
        %v7304 = vld [vmem:[#allocation2 + $0x40] sm:$0xf]
        %v7305 = vld [vmem:[#allocation2 + $0x44] sm:$0xf]
        %v7306 = vld [vmem:[#allocation2 + $0x48] sm:$0xf]
        %v7307 = vld [vmem:[#allocation2 + $0x4c] sm:$0xf]
        %v7308 = vld [vmem:[#allocation2 + $0x50] sm:$0xf]
        %v7309 = vld [vmem:[#allocation2 + $0x54] sm:$0xf]
        %v7310 = vld [vmem:[#allocation2 + $0x58] sm:$0xf]
        %v7311 = vld [vmem:[#allocation2 + $0x5c] sm:$0xf]
        %v7312 = vld [vmem:[#allocation2 + $0x60] sm:$0xf]
        %v7313 = vld [vmem:[#allocation2 + $0x64] sm:$0xf]
        %v7314 = vld [vmem:[#allocation2 + $0x68] sm:$0xf]
        %v7315 = vld [vmem:[#allocation2 + $0x6c] sm:$0xf]
        %v7316 = vld [vmem:[#allocation2 + $0x70] sm:$0xf]
        %v7317 = vld [vmem:[#allocation2 + $0x74] sm:$0xf]
        %v7318 = vld [vmem:[#allocation2 + $0x78] sm:$0xf]
        %v7319 = vld [vmem:[#allocation2 + $0x7c] sm:$0xf]
        %v7320 = vld [vmem:[#allocation2 + $0x80] sm:$0xf]
        %v7321 = vld [vmem:[#allocation2 + $0x84] sm:$0xf]
        %v7322 = vld [vmem:[#allocation2 + $0x88] sm:$0xf]
        %v7323 = vld [vmem:[#allocation2 + $0x8c] sm:$0xf]
        %v7324 = vld [vmem:[#allocation2 + $0x90] sm:$0xf]
        %v7325 = vld [vmem:[#allocation2 + $0x94] sm:$0xf]
        %v7326 = vld [vmem:[#allocation2 + $0x98] sm:$0xf]
        %v7327 = vld [vmem:[#allocation2 + $0x9c] sm:$0xf]
        %v7328 = vld [vmem:[#allocation2 + $0xa0] sm:$0xf]
        %v7329 = vld [vmem:[#allocation2 + $0xa4] sm:$0xf]
        %v7330 = vld [vmem:[#allocation2 + $0xa8] sm:$0xf]
        %v7331 = vld [vmem:[#allocation2 + $0xac] sm:$0xf]
        %v7332 = vld [vmem:[#allocation2 + $0xb0] sm:$0xf]
        %v7333 = vld [vmem:[#allocation2 + $0xb4] sm:$0xf]
        %v7334 = vld [vmem:[#allocation2 + $0xb8] sm:$0xf]
        %v7335 = vld [vmem:[#allocation2 + $0xbc] sm:$0xf]
        %v7336 = vld [vmem:[#allocation2 + $0xc0] sm:$0x1]
        %v7386 = vunpack.c.l.b16 %v7288
        %v7387 = vunpack.c.l.b16 %v7289
        %v7388 = vunpack.c.l.b16 %v7290
        %v7389 = vunpack.c.l.b16 %v7291
        %v7390 = vunpack.c.l.b16 %v7292
        %v7391 = vunpack.c.l.b16 %v7293
        %v7392 = vunpack.c.l.b16 %v7294
        %v7393 = vunpack.c.l.b16 %v7295
        %v7394 = vunpack.c.l.b16 %v7296
        %v7395 = vunpack.c.l.b16 %v7297
        %v7396 = vunpack.c.l.b16 %v7298
        %v7397 = vunpack.c.l.b16 %v7299
        %v7398 = vunpack.c.l.b16 %v7300
        %v7399 = vunpack.c.l.b16 %v7301
        %v7400 = vunpack.c.l.b16 %v7302
        %v7401 = vunpack.c.l.b16 %v7303
        %v7402 = vunpack.c.l.b16 %v7304
        %v7403 = vunpack.c.l.b16 %v7305
        %v7404 = vunpack.c.l.b16 %v7306
        %v7405 = vunpack.c.l.b16 %v7307
        %v7406 = vunpack.c.l.b16 %v7308
        %v7407 = vunpack.c.l.b16 %v7309
        %v7408 = vunpack.c.l.b16 %v7310
        %v7409 = vunpack.c.l.b16 %v7311
        %v7410 = vunpack.c.l.b16 %v7312
        %v7411 = vunpack.c.l.b16 %v7313
        %v7412 = vunpack.c.l.b16 %v7314
        %v7413 = vunpack.c.l.b16 %v7315
        %v7414 = vunpack.c.l.b16 %v7316
        %v7415 = vunpack.c.l.b16 %v7317
        %v7416 = vunpack.c.l.b16 %v7318
        %v7417 = vunpack.c.l.b16 %v7319
        %v7418 = vunpack.c.l.b16 %v7320
        %v7419 = vunpack.c.l.b16 %v7321
        %v7420 = vunpack.c.l.b16 %v7322
        %v7421 = vunpack.c.l.b16 %v7323
        %v7422 = vunpack.c.l.b16 %v7324
        %v7423 = vunpack.c.l.b16 %v7325
        %v7424 = vunpack.c.l.b16 %v7326
        %v7425 = vunpack.c.l.b16 %v7327
        %v7426 = vunpack.c.l.b16 %v7328
        %v7427 = vunpack.c.l.b16 %v7329
        %v7428 = vunpack.c.l.b16 %v7330
        %v7429 = vunpack.c.l.b16 %v7331
        %v7430 = vunpack.c.l.b16 %v7332
        %v7431 = vunpack.c.l.b16 %v7333
        %v7432 = vunpack.c.l.b16 %v7334
        %v7433 = vunpack.c.l.b16 %v7335
        %v7434 = vunpack.c.l.b16 %v7336
        %v7435 = vpack.c.b16 %v7387, %v7386
        %v7436 = vpack.c.b16 %v7389, %v7388
        %v7437 = vpack.c.b16 %v7391, %v7390
        %v7438 = vpack.c.b16 %v7393, %v7392
        %v7439 = vpack.c.b16 %v7395, %v7394
        %v7440 = vpack.c.b16 %v7397, %v7396
        %v7441 = vpack.c.b16 %v7399, %v7398
        %v7442 = vpack.c.b16 %v7401, %v7400
        %v7443 = vpack.c.b16 %v7403, %v7402
        %v7444 = vpack.c.b16 %v7405, %v7404
        %v7445 = vpack.c.b16 %v7407, %v7406
        %v7446 = vpack.c.b16 %v7409, %v7408
        %v7447 = vpack.c.b16 %v7411, %v7410
        %v7448 = vpack.c.b16 %v7413, %v7412
        %v7449 = vpack.c.b16 %v7415, %v7414
        %v7450 = vpack.c.b16 %v7417, %v7416
        %v7451 = vpack.c.b16 %v7419, %v7418
        %v7452 = vpack.c.b16 %v7421, %v7420
        %v7453 = vpack.c.b16 %v7423, %v7422
        %v7454 = vpack.c.b16 %v7425, %v7424
        %v7455 = vpack.c.b16 %v7427, %v7426
        %v7456 = vpack.c.b16 %v7429, %v7428
        %v7457 = vpack.c.b16 %v7431, %v7430
        %v7458 = vpack.c.b16 %v7433, %v7432
        %v7459 = vpack.c.b16 %v7434, %v7434
        %v7460 = vrot.slane %v7435, 1
        %v7461 = vrot.slane %v7436, 1
        %v7462 = vsel %vm1943, %v7460, %v7461
        %v7463 = vrot.slane %v7437, 1
        %v7464 = vsel %vm1943, %v7461, %v7463
        %v7465 = vrot.slane %v7438, 1
        %v7466 = vsel %vm1943, %v7463, %v7465
        %v7467 = vrot.slane %v7439, 1
        %v7468 = vsel %vm1943, %v7465, %v7467
        %v7469 = vrot.slane %v7440, 1
        %v7470 = vsel %vm1943, %v7467, %v7469
        %v7471 = vrot.slane %v7441, 1
        %v7472 = vsel %vm1943, %v7469, %v7471
        %v7473 = vrot.slane %v7442, 1
        %v7474 = vsel %vm1943, %v7471, %v7473
        %v7475 = vrot.slane %v7443, 1
        %v7476 = vsel %vm1943, %v7473, %v7475
        %v7477 = vrot.slane %v7444, 1
        %v7478 = vsel %vm1943, %v7475, %v7477
        %v7479 = vrot.slane %v7445, 1
        %v7480 = vsel %vm1943, %v7477, %v7479
        %v7481 = vrot.slane %v7446, 1
        %v7482 = vsel %vm1943, %v7479, %v7481
        %v7483 = vrot.slane %v7447, 1
        %v7484 = vsel %vm1943, %v7481, %v7483
        %v7485 = vrot.slane %v7448, 1
        %v7486 = vsel %vm1943, %v7483, %v7485
        %v7487 = vrot.slane %v7449, 1
        %v7488 = vsel %vm1943, %v7485, %v7487
        %v7489 = vrot.slane %v7450, 1
        %v7490 = vsel %vm1943, %v7487, %v7489
        %v7491 = vrot.slane %v7451, 1
        %v7492 = vsel %vm1943, %v7489, %v7491
        %v7493 = vrot.slane %v7452, 1
        %v7494 = vsel %vm1943, %v7491, %v7493
        %v7495 = vrot.slane %v7453, 1
        %v7496 = vsel %vm1943, %v7493, %v7495
        %v7497 = vrot.slane %v7454, 1
        %v7498 = vsel %vm1943, %v7495, %v7497
        %v7499 = vrot.slane %v7455, 1
        %v7500 = vsel %vm1943, %v7497, %v7499
        %v7501 = vrot.slane %v7456, 1
        %v7502 = vsel %vm1943, %v7499, %v7501
        %v7503 = vrot.slane %v7457, 1
        %v7504 = vsel %vm1943, %v7501, %v7503
        %v7505 = vrot.slane %v7458, 1
        %v7506 = vsel %vm1943, %v7503, %v7505
        %v7507 = vrot.slane %v7459, 1
        %v7508 = vsel %vm1943, %v7505, %v7507
        %7533 = vst [vmem:[#allocation3 + $0x10] sm:$0xff] %v7462
        %7534 = vst [vmem:[#allocation3 + $0x58] sm:$0xff] %v7464
        %7535 = vst [vmem:[#allocation3 + $0xa0] sm:$0xff] %v7466
        %7536 = vst [vmem:[#allocation3 + $0xe8] sm:$0xff] %v7468
        %7537 = vst [vmem:[#allocation3 + $0x130] sm:$0xff] %v7470
        %7538 = vst [vmem:[#allocation3 + $0x178] sm:$0xff] %v7472
        %7539 = vst [vmem:[#allocation3 + $0x1c0] sm:$0xff] %v7474
        %7540 = vst [vmem:[#allocation3 + $0x208] sm:$0xff] %v7476
        %7541 = vst [vmem:[#allocation3 + $0x250] sm:$0xff] %v7478
        %7542 = vst [vmem:[#allocation3 + $0x298] sm:$0xff] %v7480
        %7543 = vst [vmem:[#allocation3 + $0x2e0] sm:$0xff] %v7482
        %7544 = vst [vmem:[#allocation3 + $0x328] sm:$0xff] %v7484
        %7545 = vst [vmem:[#allocation3 + $0x370] sm:$0xff] %v7486
        %7546 = vst [vmem:[#allocation3 + $0x3b8] sm:$0xff] %v7488
        %7547 = vst [vmem:[#allocation3 + $0x400] sm:$0xff] %v7490
        %7548 = vst [vmem:[#allocation3 + $0x448] sm:$0xff] %v7492
        %7549 = vst [vmem:[#allocation3 + $0x490] sm:$0xff] %v7494
        %7550 = vst [vmem:[#allocation3 + $0x4d8] sm:$0xff] %v7496
        %7551 = vst [vmem:[#allocation3 + $0x520] sm:$0xff] %v7498
        %7552 = vst [vmem:[#allocation3 + $0x568] sm:$0xff] %v7500
        %7553 = vst [vmem:[#allocation3 + $0x5b0] sm:$0xff] %v7502
        %7554 = vst [vmem:[#allocation3 + $0x5f8] sm:$0xff] %v7504
        %7555 = vst [vmem:[#allocation3 + $0x640] sm:$0xff] %v7506
        %7556 = vst [vmem:[#allocation3 + $0x688] sm:$0xff] %v7508
        %v7557 = vld [vmem:[#allocation2 + $0xc] sm:$0xf]
        %v7558 = vld [vmem:[#allocation2 + $0x10] sm:$0xf]
        %v7559 = vld [vmem:[#allocation2 + $0x14] sm:$0xf]
        %v7560 = vld [vmem:[#allocation2 + $0x18] sm:$0xf]
        %v7561 = vld [vmem:[#allocation2 + $0x1c] sm:$0xf]
        %v7562 = vld [vmem:[#allocation2 + $0x20] sm:$0xf]
        %v7563 = vld [vmem:[#allocation2 + $0x24] sm:$0xf]
        %v7564 = vld [vmem:[#allocation2 + $0x28] sm:$0xf]
        %v7565 = vld [vmem:[#allocation2 + $0x2c] sm:$0xf]
        %v7566 = vld [vmem:[#allocation2 + $0x30] sm:$0xf]
        %v7567 = vld [vmem:[#allocation2 + $0x34] sm:$0xf]
        %v7568 = vld [vmem:[#allocation2 + $0x38] sm:$0xf]
        %v7569 = vld [vmem:[#allocation2 + $0x3c] sm:$0xf]
        %v7570 = vld [vmem:[#allocation2 + $0x40] sm:$0xf]
        %v7571 = vld [vmem:[#allocation2 + $0x44] sm:$0xf]
        %v7572 = vld [vmem:[#allocation2 + $0x48] sm:$0xf]
        %v7573 = vld [vmem:[#allocation2 + $0x4c] sm:$0xf]
        %v7574 = vld [vmem:[#allocation2 + $0x50] sm:$0xf]
        %v7575 = vld [vmem:[#allocation2 + $0x54] sm:$0xf]
        %v7576 = vld [vmem:[#allocation2 + $0x58] sm:$0xf]
        %v7577 = vld [vmem:[#allocation2 + $0x5c] sm:$0xf]
        %v7578 = vld [vmem:[#allocation2 + $0x60] sm:$0xf]
        %v7579 = vld [vmem:[#allocation2 + $0x64] sm:$0xf]
        %v7580 = vld [vmem:[#allocation2 + $0x68] sm:$0xf]
        %v7581 = vld [vmem:[#allocation2 + $0x6c] sm:$0xf]
        %v7582 = vld [vmem:[#allocation2 + $0x70] sm:$0xf]
        %v7583 = vld [vmem:[#allocation2 + $0x74] sm:$0xf]
        %v7584 = vld [vmem:[#allocation2 + $0x78] sm:$0xf]
        %v7585 = vld [vmem:[#allocation2 + $0x7c] sm:$0xf]
        %v7586 = vld [vmem:[#allocation2 + $0x80] sm:$0xf]
        %v7587 = vld [vmem:[#allocation2 + $0x84] sm:$0xf]
        %v7588 = vld [vmem:[#allocation2 + $0x88] sm:$0xf]
        %v7589 = vld [vmem:[#allocation2 + $0x8c] sm:$0xf]
        %v7590 = vld [vmem:[#allocation2 + $0x90] sm:$0xf]
        %v7591 = vld [vmem:[#allocation2 + $0x94] sm:$0xf]
        %v7592 = vld [vmem:[#allocation2 + $0x98] sm:$0xf]
        %v7593 = vld [vmem:[#allocation2 + $0x9c] sm:$0xf]
        %v7594 = vld [vmem:[#allocation2 + $0xa0] sm:$0xf]
        %v7595 = vld [vmem:[#allocation2 + $0xa4] sm:$0xf]
        %v7596 = vld [vmem:[#allocation2 + $0xa8] sm:$0xf]
        %v7597 = vld [vmem:[#allocation2 + $0xac] sm:$0xf]
        %v7598 = vld [vmem:[#allocation2 + $0xb0] sm:$0xf]
        %v7599 = vld [vmem:[#allocation2 + $0xb4] sm:$0xf]
        %v7600 = vld [vmem:[#allocation2 + $0xb8] sm:$0xf]
        %v7601 = vld [vmem:[#allocation2 + $0xbc] sm:$0xf]
        %v7602 = vld [vmem:[#allocation2 + $0xc0] sm:$0xf]
        %v7603 = vld [vmem:[#allocation2 + $0xc4] sm:$0xf]
        %v7604 = vld [vmem:[#allocation2 + $0xc8] sm:$0xf]
        %v7653 = vunpack.c.l.b16 %v7557
        %v7654 = vunpack.c.l.b16 %v7558
        %v7655 = vunpack.c.l.b16 %v7559
        %v7656 = vunpack.c.l.b16 %v7560
        %v7657 = vunpack.c.l.b16 %v7561
        %v7658 = vunpack.c.l.b16 %v7562
        %v7659 = vunpack.c.l.b16 %v7563
        %v7660 = vunpack.c.l.b16 %v7564
        %v7661 = vunpack.c.l.b16 %v7565
        %v7662 = vunpack.c.l.b16 %v7566
        %v7663 = vunpack.c.l.b16 %v7567
        %v7664 = vunpack.c.l.b16 %v7568
        %v7665 = vunpack.c.l.b16 %v7569
        %v7666 = vunpack.c.l.b16 %v7570
        %v7667 = vunpack.c.l.b16 %v7571
        %v7668 = vunpack.c.l.b16 %v7572
        %v7669 = vunpack.c.l.b16 %v7573
        %v7670 = vunpack.c.l.b16 %v7574
        %v7671 = vunpack.c.l.b16 %v7575
        %v7672 = vunpack.c.l.b16 %v7576
        %v7673 = vunpack.c.l.b16 %v7577
        %v7674 = vunpack.c.l.b16 %v7578
        %v7675 = vunpack.c.l.b16 %v7579
        %v7676 = vunpack.c.l.b16 %v7580
        %v7677 = vunpack.c.l.b16 %v7581
        %v7678 = vunpack.c.l.b16 %v7582
        %v7679 = vunpack.c.l.b16 %v7583
        %v7680 = vunpack.c.l.b16 %v7584
        %v7681 = vunpack.c.l.b16 %v7585
        %v7682 = vunpack.c.l.b16 %v7586
        %v7683 = vunpack.c.l.b16 %v7587
        %v7684 = vunpack.c.l.b16 %v7588
        %v7685 = vunpack.c.l.b16 %v7589
        %v7686 = vunpack.c.l.b16 %v7590
        %v7687 = vunpack.c.l.b16 %v7591
        %v7688 = vunpack.c.l.b16 %v7592
        %v7689 = vunpack.c.l.b16 %v7593
        %v7690 = vunpack.c.l.b16 %v7594
        %v7691 = vunpack.c.l.b16 %v7595
        %v7692 = vunpack.c.l.b16 %v7596
        %v7693 = vunpack.c.l.b16 %v7597
        %v7694 = vunpack.c.l.b16 %v7598
        %v7695 = vunpack.c.l.b16 %v7599
        %v7696 = vunpack.c.l.b16 %v7600
        %v7697 = vunpack.c.l.b16 %v7601
        %v7698 = vunpack.c.l.b16 %v7602
        %v7699 = vunpack.c.l.b16 %v7603
        %v7700 = vunpack.c.l.b16 %v7604
        %v7701 = vpack.c.b16 %v7654, %v7653
        %v7702 = vpack.c.b16 %v7656, %v7655
        %v7703 = vpack.c.b16 %v7658, %v7657
        %v7704 = vpack.c.b16 %v7660, %v7659
        %v7705 = vpack.c.b16 %v7662, %v7661
        %v7706 = vpack.c.b16 %v7664, %v7663
        %v7707 = vpack.c.b16 %v7666, %v7665
        %v7708 = vpack.c.b16 %v7668, %v7667
        %v7709 = vpack.c.b16 %v7670, %v7669
        %v7710 = vpack.c.b16 %v7672, %v7671
        %v7711 = vpack.c.b16 %v7674, %v7673
        %v7712 = vpack.c.b16 %v7676, %v7675
        %v7713 = vpack.c.b16 %v7678, %v7677
        %v7714 = vpack.c.b16 %v7680, %v7679
        %v7715 = vpack.c.b16 %v7682, %v7681
        %v7716 = vpack.c.b16 %v7684, %v7683
        %v7717 = vpack.c.b16 %v7686, %v7685
        %v7718 = vpack.c.b16 %v7688, %v7687
        %v7719 = vpack.c.b16 %v7690, %v7689
        %v7720 = vpack.c.b16 %v7692, %v7691
        %v7721 = vpack.c.b16 %v7694, %v7693
        %v7722 = vpack.c.b16 %v7696, %v7695
        %v7723 = vpack.c.b16 %v7698, %v7697
        %v7724 = vpack.c.b16 %v7700, %v7699
        %7749 = vst [vmem:[#allocation3 + $0x18] sm:$0xff] %v7701
        %7750 = vst [vmem:[#allocation3 + $0x60] sm:$0xff] %v7702
        %7751 = vst [vmem:[#allocation3 + $0xa8] sm:$0xff] %v7703
        %7752 = vst [vmem:[#allocation3 + $0xf0] sm:$0xff] %v7704
        %7753 = vst [vmem:[#allocation3 + $0x138] sm:$0xff] %v7705
        %7754 = vst [vmem:[#allocation3 + $0x180] sm:$0xff] %v7706
        %7755 = vst [vmem:[#allocation3 + $0x1c8] sm:$0xff] %v7707
        %7756 = vst [vmem:[#allocation3 + $0x210] sm:$0xff] %v7708
        %7757 = vst [vmem:[#allocation3 + $0x258] sm:$0xff] %v7709
        %7758 = vst [vmem:[#allocation3 + $0x2a0] sm:$0xff] %v7710
        %7759 = vst [vmem:[#allocation3 + $0x2e8] sm:$0xff] %v7711
        %7760 = vst [vmem:[#allocation3 + $0x330] sm:$0xff] %v7712
        %7761 = vst [vmem:[#allocation3 + $0x378] sm:$0xff] %v7713
        %7762 = vst [vmem:[#allocation3 + $0x3c0] sm:$0xff] %v7714
        %7763 = vst [vmem:[#allocation3 + $0x408] sm:$0xff] %v7715
        %7764 = vst [vmem:[#allocation3 + $0x450] sm:$0xff] %v7716
        %7765 = vst [vmem:[#allocation3 + $0x498] sm:$0xff] %v7717
        %7766 = vst [vmem:[#allocation3 + $0x4e0] sm:$0xff] %v7718
        %7767 = vst [vmem:[#allocation3 + $0x528] sm:$0xff] %v7719
        %7768 = vst [vmem:[#allocation3 + $0x570] sm:$0xff] %v7720
        %7769 = vst [vmem:[#allocation3 + $0x5b8] sm:$0xff] %v7721
        %7770 = vst [vmem:[#allocation3 + $0x600] sm:$0xff] %v7722
        %7771 = vst [vmem:[#allocation3 + $0x648] sm:$0xff] %v7723
        %7772 = vst [vmem:[#allocation3 + $0x690] sm:$0xff] %v7724
        %v7773 = vld [vmem:[#allocation2 + $0xc] sm:$0xf]
        %v7774 = vld [vmem:[#allocation2 + $0x10] sm:$0xf]
        %v7775 = vld [vmem:[#allocation2 + $0x14] sm:$0xf]
        %v7776 = vld [vmem:[#allocation2 + $0x18] sm:$0xf]
        %v7777 = vld [vmem:[#allocation2 + $0x1c] sm:$0xf]
        %v7778 = vld [vmem:[#allocation2 + $0x20] sm:$0xf]
        %v7779 = vld [vmem:[#allocation2 + $0x24] sm:$0xf]
        %v7780 = vld [vmem:[#allocation2 + $0x28] sm:$0xf]
        %v7781 = vld [vmem:[#allocation2 + $0x2c] sm:$0xf]
        %v7782 = vld [vmem:[#allocation2 + $0x30] sm:$0xf]
        %v7783 = vld [vmem:[#allocation2 + $0x34] sm:$0xf]
        %v7784 = vld [vmem:[#allocation2 + $0x38] sm:$0xf]
        %v7785 = vld [vmem:[#allocation2 + $0x3c] sm:$0xf]
        %v7786 = vld [vmem:[#allocation2 + $0x40] sm:$0xf]
        %v7787 = vld [vmem:[#allocation2 + $0x44] sm:$0xf]
        %v7788 = vld [vmem:[#allocation2 + $0x48] sm:$0xf]
        %v7789 = vld [vmem:[#allocation2 + $0x4c] sm:$0xf]
        %v7790 = vld [vmem:[#allocation2 + $0x50] sm:$0xf]
        %v7791 = vld [vmem:[#allocation2 + $0x54] sm:$0xf]
        %v7792 = vld [vmem:[#allocation2 + $0x58] sm:$0xf]
        %v7793 = vld [vmem:[#allocation2 + $0x5c] sm:$0xf]
        %v7794 = vld [vmem:[#allocation2 + $0x60] sm:$0xf]
        %v7795 = vld [vmem:[#allocation2 + $0x64] sm:$0xf]
        %v7796 = vld [vmem:[#allocation2 + $0x68] sm:$0xf]
        %v7797 = vld [vmem:[#allocation2 + $0x6c] sm:$0xf]
        %v7798 = vld [vmem:[#allocation2 + $0x70] sm:$0xf]
        %v7799 = vld [vmem:[#allocation2 + $0x74] sm:$0xf]
        %v7800 = vld [vmem:[#allocation2 + $0x78] sm:$0xf]
        %v7801 = vld [vmem:[#allocation2 + $0x7c] sm:$0xf]
        %v7802 = vld [vmem:[#allocation2 + $0x80] sm:$0xf]
        %v7803 = vld [vmem:[#allocation2 + $0x84] sm:$0xf]
        %v7804 = vld [vmem:[#allocation2 + $0x88] sm:$0xf]
        %v7805 = vld [vmem:[#allocation2 + $0x8c] sm:$0xf]
        %v7806 = vld [vmem:[#allocation2 + $0x90] sm:$0xf]
        %v7807 = vld [vmem:[#allocation2 + $0x94] sm:$0xf]
        %v7808 = vld [vmem:[#allocation2 + $0x98] sm:$0xf]
        %v7809 = vld [vmem:[#allocation2 + $0x9c] sm:$0xf]
        %v7810 = vld [vmem:[#allocation2 + $0xa0] sm:$0xf]
        %v7811 = vld [vmem:[#allocation2 + $0xa4] sm:$0xf]
        %v7812 = vld [vmem:[#allocation2 + $0xa8] sm:$0xf]
        %v7813 = vld [vmem:[#allocation2 + $0xac] sm:$0xf]
        %v7814 = vld [vmem:[#allocation2 + $0xb0] sm:$0xf]
        %v7815 = vld [vmem:[#allocation2 + $0xb4] sm:$0xf]
        %v7816 = vld [vmem:[#allocation2 + $0xb8] sm:$0xf]
        %v7817 = vld [vmem:[#allocation2 + $0xbc] sm:$0xf]
        %v7818 = vld [vmem:[#allocation2 + $0xc0] sm:$0xf]
        %v7819 = vld [vmem:[#allocation2 + $0xc4] sm:$0xf]
        %v7820 = vld [vmem:[#allocation2 + $0xc8] sm:$0xf]
        %v7821 = vld [vmem:[#allocation2 + $0xcc] sm:$0x1]
        %v7871 = vunpack.c.l.b16 %v7773
        %v7872 = vunpack.c.l.b16 %v7774
        %v7873 = vunpack.c.l.b16 %v7775
        %v7874 = vunpack.c.l.b16 %v7776
        %v7875 = vunpack.c.l.b16 %v7777
        %v7876 = vunpack.c.l.b16 %v7778
        %v7877 = vunpack.c.l.b16 %v7779
        %v7878 = vunpack.c.l.b16 %v7780
        %v7879 = vunpack.c.l.b16 %v7781
        %v7880 = vunpack.c.l.b16 %v7782
        %v7881 = vunpack.c.l.b16 %v7783
        %v7882 = vunpack.c.l.b16 %v7784
        %v7883 = vunpack.c.l.b16 %v7785
        %v7884 = vunpack.c.l.b16 %v7786
        %v7885 = vunpack.c.l.b16 %v7787
        %v7886 = vunpack.c.l.b16 %v7788
        %v7887 = vunpack.c.l.b16 %v7789
        %v7888 = vunpack.c.l.b16 %v7790
        %v7889 = vunpack.c.l.b16 %v7791
        %v7890 = vunpack.c.l.b16 %v7792
        %v7891 = vunpack.c.l.b16 %v7793
        %v7892 = vunpack.c.l.b16 %v7794
        %v7893 = vunpack.c.l.b16 %v7795
        %v7894 = vunpack.c.l.b16 %v7796
        %v7895 = vunpack.c.l.b16 %v7797
        %v7896 = vunpack.c.l.b16 %v7798
        %v7897 = vunpack.c.l.b16 %v7799
        %v7898 = vunpack.c.l.b16 %v7800
        %v7899 = vunpack.c.l.b16 %v7801
        %v7900 = vunpack.c.l.b16 %v7802
        %v7901 = vunpack.c.l.b16 %v7803
        %v7902 = vunpack.c.l.b16 %v7804
        %v7903 = vunpack.c.l.b16 %v7805
        %v7904 = vunpack.c.l.b16 %v7806
        %v7905 = vunpack.c.l.b16 %v7807
        %v7906 = vunpack.c.l.b16 %v7808
        %v7907 = vunpack.c.l.b16 %v7809
        %v7908 = vunpack.c.l.b16 %v7810
        %v7909 = vunpack.c.l.b16 %v7811
        %v7910 = vunpack.c.l.b16 %v7812
        %v7911 = vunpack.c.l.b16 %v7813
        %v7912 = vunpack.c.l.b16 %v7814
        %v7913 = vunpack.c.l.b16 %v7815
        %v7914 = vunpack.c.l.b16 %v7816
        %v7915 = vunpack.c.l.b16 %v7817
        %v7916 = vunpack.c.l.b16 %v7818
        %v7917 = vunpack.c.l.b16 %v7819
        %v7918 = vunpack.c.l.b16 %v7820
        %v7919 = vunpack.c.l.b16 %v7821
        %v7920 = vpack.c.b16 %v7872, %v7871
        %v7921 = vpack.c.b16 %v7874, %v7873
        %v7922 = vpack.c.b16 %v7876, %v7875
        %v7923 = vpack.c.b16 %v7878, %v7877
        %v7924 = vpack.c.b16 %v7880, %v7879
        %v7925 = vpack.c.b16 %v7882, %v7881
        %v7926 = vpack.c.b16 %v7884, %v7883
        %v7927 = vpack.c.b16 %v7886, %v7885
        %v7928 = vpack.c.b16 %v7888, %v7887
        %v7929 = vpack.c.b16 %v7890, %v7889
        %v7930 = vpack.c.b16 %v7892, %v7891
        %v7931 = vpack.c.b16 %v7894, %v7893
        %v7932 = vpack.c.b16 %v7896, %v7895
        %v7933 = vpack.c.b16 %v7898, %v7897
        %v7934 = vpack.c.b16 %v7900, %v7899
        %v7935 = vpack.c.b16 %v7902, %v7901
        %v7936 = vpack.c.b16 %v7904, %v7903
        %v7937 = vpack.c.b16 %v7906, %v7905
        %v7938 = vpack.c.b16 %v7908, %v7907
        %v7939 = vpack.c.b16 %v7910, %v7909
        %v7940 = vpack.c.b16 %v7912, %v7911
        %v7941 = vpack.c.b16 %v7914, %v7913
        %v7942 = vpack.c.b16 %v7916, %v7915
        %v7943 = vpack.c.b16 %v7918, %v7917
        %v7944 = vpack.c.b16 %v7919, %v7919
        %v7946 = vshrl.u32 %v7920, 16
        %v7948 = vshll.u32 %v7920, 16
        %v7950 = vrot.slane %v7948, 1
        %v7951 = vor.u32 %v7946, %v7950
        %v7953 = vshll.u32 %v7921, 16
        %v7955 = vrot.slane %v7953, 1
        %v7956 = vsel %vm1526, %v7951, %v7955
        %v7957 = vshrl.u32 %v7921, 16
        %v7959 = vor.u32 %v7957, %v7955
        %v7961 = vshll.u32 %v7922, 16
        %v7963 = vrot.slane %v7961, 1
        %v7964 = vsel %vm1526, %v7959, %v7963
        %v7965 = vshrl.u32 %v7922, 16
        %v7967 = vor.u32 %v7965, %v7963
        %v7969 = vshll.u32 %v7923, 16
        %v7971 = vrot.slane %v7969, 1
        %v7972 = vsel %vm1526, %v7967, %v7971
        %v7973 = vshrl.u32 %v7923, 16
        %v7975 = vor.u32 %v7973, %v7971
        %v7977 = vshll.u32 %v7924, 16
        %v7979 = vrot.slane %v7977, 1
        %v7980 = vsel %vm1526, %v7975, %v7979
        %v7981 = vshrl.u32 %v7924, 16
        %v7983 = vor.u32 %v7981, %v7979
        %v7985 = vshll.u32 %v7925, 16
        %v7987 = vrot.slane %v7985, 1
        %v7988 = vsel %vm1526, %v7983, %v7987
        %v7989 = vshrl.u32 %v7925, 16
        %v7991 = vor.u32 %v7989, %v7987
        %v7993 = vshll.u32 %v7926, 16
        %v7995 = vrot.slane %v7993, 1
        %v7996 = vsel %vm1526, %v7991, %v7995
        %v7997 = vshrl.u32 %v7926, 16
        %v7999 = vor.u32 %v7997, %v7995
        %v8001 = vshll.u32 %v7927, 16
        %v8003 = vrot.slane %v8001, 1
        %v8004 = vsel %vm1526, %v7999, %v8003
        %v8005 = vshrl.u32 %v7927, 16
        %v8007 = vor.u32 %v8005, %v8003
        %v8009 = vshll.u32 %v7928, 16
        %v8011 = vrot.slane %v8009, 1
        %v8012 = vsel %vm1526, %v8007, %v8011
        %v8013 = vshrl.u32 %v7928, 16
        %v8015 = vor.u32 %v8013, %v8011
        %v8017 = vshll.u32 %v7929, 16
        %v8019 = vrot.slane %v8017, 1
        %v8020 = vsel %vm1526, %v8015, %v8019
        %v8021 = vshrl.u32 %v7929, 16
        %v8023 = vor.u32 %v8021, %v8019
        %v8025 = vshll.u32 %v7930, 16
        %v8027 = vrot.slane %v8025, 1
        %v8028 = vsel %vm1526, %v8023, %v8027
        %v8029 = vshrl.u32 %v7930, 16
        %v8031 = vor.u32 %v8029, %v8027
        %v8033 = vshll.u32 %v7931, 16
        %v8035 = vrot.slane %v8033, 1
        %v8036 = vsel %vm1526, %v8031, %v8035
        %v8037 = vshrl.u32 %v7931, 16
        %v8039 = vor.u32 %v8037, %v8035
        %v8041 = vshll.u32 %v7932, 16
        %v8043 = vrot.slane %v8041, 1
        %v8044 = vsel %vm1526, %v8039, %v8043
        %v8045 = vshrl.u32 %v7932, 16
        %v8047 = vor.u32 %v8045, %v8043
        %v8049 = vshll.u32 %v7933, 16
        %v8051 = vrot.slane %v8049, 1
        %v8052 = vsel %vm1526, %v8047, %v8051
        %v8053 = vshrl.u32 %v7933, 16
        %v8055 = vor.u32 %v8053, %v8051
        %v8057 = vshll.u32 %v7934, 16
        %v8059 = vrot.slane %v8057, 1
        %v8060 = vsel %vm1526, %v8055, %v8059
        %v8061 = vshrl.u32 %v7934, 16
        %v8063 = vor.u32 %v8061, %v8059
        %v8065 = vshll.u32 %v7935, 16
        %v8067 = vrot.slane %v8065, 1
        %v8068 = vsel %vm1526, %v8063, %v8067
        %v8069 = vshrl.u32 %v7935, 16
        %v8071 = vor.u32 %v8069, %v8067
        %v8073 = vshll.u32 %v7936, 16
        %v8075 = vrot.slane %v8073, 1
        %v8076 = vsel %vm1526, %v8071, %v8075
        %v8077 = vshrl.u32 %v7936, 16
        %v8079 = vor.u32 %v8077, %v8075
        %v8081 = vshll.u32 %v7937, 16
        %v8083 = vrot.slane %v8081, 1
        %v8084 = vsel %vm1526, %v8079, %v8083
        %v8085 = vshrl.u32 %v7937, 16
        %v8087 = vor.u32 %v8085, %v8083
        %v8089 = vshll.u32 %v7938, 16
        %v8091 = vrot.slane %v8089, 1
        %v8092 = vsel %vm1526, %v8087, %v8091
        %v8093 = vshrl.u32 %v7938, 16
        %v8095 = vor.u32 %v8093, %v8091
        %v8097 = vshll.u32 %v7939, 16
        %v8099 = vrot.slane %v8097, 1
        %v8100 = vsel %vm1526, %v8095, %v8099
        %v8101 = vshrl.u32 %v7939, 16
        %v8103 = vor.u32 %v8101, %v8099
        %v8105 = vshll.u32 %v7940, 16
        %v8107 = vrot.slane %v8105, 1
        %v8108 = vsel %vm1526, %v8103, %v8107
        %v8109 = vshrl.u32 %v7940, 16
        %v8111 = vor.u32 %v8109, %v8107
        %v8113 = vshll.u32 %v7941, 16
        %v8115 = vrot.slane %v8113, 1
        %v8116 = vsel %vm1526, %v8111, %v8115
        %v8117 = vshrl.u32 %v7941, 16
        %v8119 = vor.u32 %v8117, %v8115
        %v8121 = vshll.u32 %v7942, 16
        %v8123 = vrot.slane %v8121, 1
        %v8124 = vsel %vm1526, %v8119, %v8123
        %v8125 = vshrl.u32 %v7942, 16
        %v8127 = vor.u32 %v8125, %v8123
        %v8129 = vshll.u32 %v7943, 16
        %v8131 = vrot.slane %v8129, 1
        %v8132 = vsel %vm1526, %v8127, %v8131
        %v8133 = vshrl.u32 %v7943, 16
        %v8135 = vor.u32 %v8133, %v8131
        %v8137 = vshll.u32 %v7944, 16
        %v8139 = vrot.slane %v8137, 1
        %v8140 = vsel %vm1526, %v8135, %v8139
        %8165 = vst [vmem:[#allocation3 + $0x20] sm:$0xff] %v7956
        %8166 = vst [vmem:[#allocation3 + $0x68] sm:$0xff] %v7964
        %8167 = vst [vmem:[#allocation3 + $0xb0] sm:$0xff] %v7972
        %8168 = vst [vmem:[#allocation3 + $0xf8] sm:$0xff] %v7980
        %8169 = vst [vmem:[#allocation3 + $0x140] sm:$0xff] %v7988
        %8170 = vst [vmem:[#allocation3 + $0x188] sm:$0xff] %v7996
        %8171 = vst [vmem:[#allocation3 + $0x1d0] sm:$0xff] %v8004
        %8172 = vst [vmem:[#allocation3 + $0x218] sm:$0xff] %v8012
        %8173 = vst [vmem:[#allocation3 + $0x260] sm:$0xff] %v8020
        %8174 = vst [vmem:[#allocation3 + $0x2a8] sm:$0xff] %v8028
        %8175 = vst [vmem:[#allocation3 + $0x2f0] sm:$0xff] %v8036
        %8176 = vst [vmem:[#allocation3 + $0x338] sm:$0xff] %v8044
        %8177 = vst [vmem:[#allocation3 + $0x380] sm:$0xff] %v8052
        %8178 = vst [vmem:[#allocation3 + $0x3c8] sm:$0xff] %v8060
        %8179 = vst [vmem:[#allocation3 + $0x410] sm:$0xff] %v8068
        %8180 = vst [vmem:[#allocation3 + $0x458] sm:$0xff] %v8076
        %8181 = vst [vmem:[#allocation3 + $0x4a0] sm:$0xff] %v8084
        %8182 = vst [vmem:[#allocation3 + $0x4e8] sm:$0xff] %v8092
        %8183 = vst [vmem:[#allocation3 + $0x530] sm:$0xff] %v8100
        %8184 = vst [vmem:[#allocation3 + $0x578] sm:$0xff] %v8108
        %8185 = vst [vmem:[#allocation3 + $0x5c0] sm:$0xff] %v8116
        %8186 = vst [vmem:[#allocation3 + $0x608] sm:$0xff] %v8124
        %8187 = vst [vmem:[#allocation3 + $0x650] sm:$0xff] %v8132
        %8188 = vst [vmem:[#allocation3 + $0x698] sm:$0xff] %v8140
        %v8189 = vld [vmem:[#allocation2 + $0xc] sm:$0xe]
        %v8190 = vld [vmem:[#allocation2 + $0x10] sm:$0xf]
        %v8191 = vld [vmem:[#allocation2 + $0x14] sm:$0xf]
        %v8192 = vld [vmem:[#allocation2 + $0x18] sm:$0xf]
        %v8193 = vld [vmem:[#allocation2 + $0x1c] sm:$0xf]
        %v8194 = vld [vmem:[#allocation2 + $0x20] sm:$0xf]
        %v8195 = vld [vmem:[#allocation2 + $0x24] sm:$0xf]
        %v8196 = vld [vmem:[#allocation2 + $0x28] sm:$0xf]
        %v8197 = vld [vmem:[#allocation2 + $0x2c] sm:$0xf]
        %v8198 = vld [vmem:[#allocation2 + $0x30] sm:$0xf]
        %v8199 = vld [vmem:[#allocation2 + $0x34] sm:$0xf]
        %v8200 = vld [vmem:[#allocation2 + $0x38] sm:$0xf]
        %v8201 = vld [vmem:[#allocation2 + $0x3c] sm:$0xf]
        %v8202 = vld [vmem:[#allocation2 + $0x40] sm:$0xf]
        %v8203 = vld [vmem:[#allocation2 + $0x44] sm:$0xf]
        %v8204 = vld [vmem:[#allocation2 + $0x48] sm:$0xf]
        %v8205 = vld [vmem:[#allocation2 + $0x4c] sm:$0xf]
        %v8206 = vld [vmem:[#allocation2 + $0x50] sm:$0xf]
        %v8207 = vld [vmem:[#allocation2 + $0x54] sm:$0xf]
        %v8208 = vld [vmem:[#allocation2 + $0x58] sm:$0xf]
        %v8209 = vld [vmem:[#allocation2 + $0x5c] sm:$0xf]
        %v8210 = vld [vmem:[#allocation2 + $0x60] sm:$0xf]
        %v8211 = vld [vmem:[#allocation2 + $0x64] sm:$0xf]
        %v8212 = vld [vmem:[#allocation2 + $0x68] sm:$0xf]
        %v8213 = vld [vmem:[#allocation2 + $0x6c] sm:$0xf]
        %v8214 = vld [vmem:[#allocation2 + $0x70] sm:$0xf]
        %v8215 = vld [vmem:[#allocation2 + $0x74] sm:$0xf]
        %v8216 = vld [vmem:[#allocation2 + $0x78] sm:$0xf]
        %v8217 = vld [vmem:[#allocation2 + $0x7c] sm:$0xf]
        %v8218 = vld [vmem:[#allocation2 + $0x80] sm:$0xf]
        %v8219 = vld [vmem:[#allocation2 + $0x84] sm:$0xf]
        %v8220 = vld [vmem:[#allocation2 + $0x88] sm:$0xf]
        %v8221 = vld [vmem:[#allocation2 + $0x8c] sm:$0xf]
        %v8222 = vld [vmem:[#allocation2 + $0x90] sm:$0xf]
        %v8223 = vld [vmem:[#allocation2 + $0x94] sm:$0xf]
        %v8224 = vld [vmem:[#allocation2 + $0x98] sm:$0xf]
        %v8225 = vld [vmem:[#allocation2 + $0x9c] sm:$0xf]
        %v8226 = vld [vmem:[#allocation2 + $0xa0] sm:$0xf]
        %v8227 = vld [vmem:[#allocation2 + $0xa4] sm:$0xf]
        %v8228 = vld [vmem:[#allocation2 + $0xa8] sm:$0xf]
        %v8229 = vld [vmem:[#allocation2 + $0xac] sm:$0xf]
        %v8230 = vld [vmem:[#allocation2 + $0xb0] sm:$0xf]
        %v8231 = vld [vmem:[#allocation2 + $0xb4] sm:$0xf]
        %v8232 = vld [vmem:[#allocation2 + $0xb8] sm:$0xf]
        %v8233 = vld [vmem:[#allocation2 + $0xbc] sm:$0xf]
        %v8234 = vld [vmem:[#allocation2 + $0xc0] sm:$0xf]
        %v8235 = vld [vmem:[#allocation2 + $0xc4] sm:$0xf]
        %v8236 = vld [vmem:[#allocation2 + $0xc8] sm:$0xf]
        %v8237 = vld [vmem:[#allocation2 + $0xcc] sm:$0x1]
        %v8287 = vunpack.c.l.b16 %v8189
        %v8288 = vunpack.c.l.b16 %v8190
        %v8289 = vunpack.c.l.b16 %v8191
        %v8290 = vunpack.c.l.b16 %v8192
        %v8291 = vunpack.c.l.b16 %v8193
        %v8292 = vunpack.c.l.b16 %v8194
        %v8293 = vunpack.c.l.b16 %v8195
        %v8294 = vunpack.c.l.b16 %v8196
        %v8295 = vunpack.c.l.b16 %v8197
        %v8296 = vunpack.c.l.b16 %v8198
        %v8297 = vunpack.c.l.b16 %v8199
        %v8298 = vunpack.c.l.b16 %v8200
        %v8299 = vunpack.c.l.b16 %v8201
        %v8300 = vunpack.c.l.b16 %v8202
        %v8301 = vunpack.c.l.b16 %v8203
        %v8302 = vunpack.c.l.b16 %v8204
        %v8303 = vunpack.c.l.b16 %v8205
        %v8304 = vunpack.c.l.b16 %v8206
        %v8305 = vunpack.c.l.b16 %v8207
        %v8306 = vunpack.c.l.b16 %v8208
        %v8307 = vunpack.c.l.b16 %v8209
        %v8308 = vunpack.c.l.b16 %v8210
        %v8309 = vunpack.c.l.b16 %v8211
        %v8310 = vunpack.c.l.b16 %v8212
        %v8311 = vunpack.c.l.b16 %v8213
        %v8312 = vunpack.c.l.b16 %v8214
        %v8313 = vunpack.c.l.b16 %v8215
        %v8314 = vunpack.c.l.b16 %v8216
        %v8315 = vunpack.c.l.b16 %v8217
        %v8316 = vunpack.c.l.b16 %v8218
        %v8317 = vunpack.c.l.b16 %v8219
        %v8318 = vunpack.c.l.b16 %v8220
        %v8319 = vunpack.c.l.b16 %v8221
        %v8320 = vunpack.c.l.b16 %v8222
        %v8321 = vunpack.c.l.b16 %v8223
        %v8322 = vunpack.c.l.b16 %v8224
        %v8323 = vunpack.c.l.b16 %v8225
        %v8324 = vunpack.c.l.b16 %v8226
        %v8325 = vunpack.c.l.b16 %v8227
        %v8326 = vunpack.c.l.b16 %v8228
        %v8327 = vunpack.c.l.b16 %v8229
        %v8328 = vunpack.c.l.b16 %v8230
        %v8329 = vunpack.c.l.b16 %v8231
        %v8330 = vunpack.c.l.b16 %v8232
        %v8331 = vunpack.c.l.b16 %v8233
        %v8332 = vunpack.c.l.b16 %v8234
        %v8333 = vunpack.c.l.b16 %v8235
        %v8334 = vunpack.c.l.b16 %v8236
        %v8335 = vunpack.c.l.b16 %v8237
        %v8336 = vpack.c.b16 %v8288, %v8287
        %v8337 = vpack.c.b16 %v8290, %v8289
        %v8338 = vpack.c.b16 %v8292, %v8291
        %v8339 = vpack.c.b16 %v8294, %v8293
        %v8340 = vpack.c.b16 %v8296, %v8295
        %v8341 = vpack.c.b16 %v8298, %v8297
        %v8342 = vpack.c.b16 %v8300, %v8299
        %v8343 = vpack.c.b16 %v8302, %v8301
        %v8344 = vpack.c.b16 %v8304, %v8303
        %v8345 = vpack.c.b16 %v8306, %v8305
        %v8346 = vpack.c.b16 %v8308, %v8307
        %v8347 = vpack.c.b16 %v8310, %v8309
        %v8348 = vpack.c.b16 %v8312, %v8311
        %v8349 = vpack.c.b16 %v8314, %v8313
        %v8350 = vpack.c.b16 %v8316, %v8315
        %v8351 = vpack.c.b16 %v8318, %v8317
        %v8352 = vpack.c.b16 %v8320, %v8319
        %v8353 = vpack.c.b16 %v8322, %v8321
        %v8354 = vpack.c.b16 %v8324, %v8323
        %v8355 = vpack.c.b16 %v8326, %v8325
        %v8356 = vpack.c.b16 %v8328, %v8327
        %v8357 = vpack.c.b16 %v8330, %v8329
        %v8358 = vpack.c.b16 %v8332, %v8331
        %v8359 = vpack.c.b16 %v8334, %v8333
        %v8360 = vpack.c.b16 %v8335, %v8335
        %v8361 = vrot.slane %v8336, 1
        %v8362 = vrot.slane %v8337, 1
        %v8363 = vsel %vm1943, %v8361, %v8362
        %v8364 = vrot.slane %v8338, 1
        %v8365 = vsel %vm1943, %v8362, %v8364
        %v8366 = vrot.slane %v8339, 1
        %v8367 = vsel %vm1943, %v8364, %v8366
        %v8368 = vrot.slane %v8340, 1
        %v8369 = vsel %vm1943, %v8366, %v8368
        %v8370 = vrot.slane %v8341, 1
        %v8371 = vsel %vm1943, %v8368, %v8370
        %v8372 = vrot.slane %v8342, 1
        %v8373 = vsel %vm1943, %v8370, %v8372
        %v8374 = vrot.slane %v8343, 1
        %v8375 = vsel %vm1943, %v8372, %v8374
        %v8376 = vrot.slane %v8344, 1
        %v8377 = vsel %vm1943, %v8374, %v8376
        %v8378 = vrot.slane %v8345, 1
        %v8379 = vsel %vm1943, %v8376, %v8378
        %v8380 = vrot.slane %v8346, 1
        %v8381 = vsel %vm1943, %v8378, %v8380
        %v8382 = vrot.slane %v8347, 1
        %v8383 = vsel %vm1943, %v8380, %v8382
        %v8384 = vrot.slane %v8348, 1
        %v8385 = vsel %vm1943, %v8382, %v8384
        %v8386 = vrot.slane %v8349, 1
        %v8387 = vsel %vm1943, %v8384, %v8386
        %v8388 = vrot.slane %v8350, 1
        %v8389 = vsel %vm1943, %v8386, %v8388
        %v8390 = vrot.slane %v8351, 1
        %v8391 = vsel %vm1943, %v8388, %v8390
        %v8392 = vrot.slane %v8352, 1
        %v8393 = vsel %vm1943, %v8390, %v8392
        %v8394 = vrot.slane %v8353, 1
        %v8395 = vsel %vm1943, %v8392, %v8394
        %v8396 = vrot.slane %v8354, 1
        %v8397 = vsel %vm1943, %v8394, %v8396
        %v8398 = vrot.slane %v8355, 1
        %v8399 = vsel %vm1943, %v8396, %v8398
        %v8400 = vrot.slane %v8356, 1
        %v8401 = vsel %vm1943, %v8398, %v8400
        %v8402 = vrot.slane %v8357, 1
        %v8403 = vsel %vm1943, %v8400, %v8402
        %v8404 = vrot.slane %v8358, 1
        %v8405 = vsel %vm1943, %v8402, %v8404
        %v8406 = vrot.slane %v8359, 1
        %v8407 = vsel %vm1943, %v8404, %v8406
        %v8408 = vrot.slane %v8360, 1
        %v8409 = vsel %vm1943, %v8406, %v8408
        %8434 = vst [vmem:[#allocation3 + $0x28] sm:$0xff] %v8363
        %8435 = vst [vmem:[#allocation3 + $0x70] sm:$0xff] %v8365
        %8436 = vst [vmem:[#allocation3 + $0xb8] sm:$0xff] %v8367
        %8437 = vst [vmem:[#allocation3 + $0x100] sm:$0xff] %v8369
        %8438 = vst [vmem:[#allocation3 + $0x148] sm:$0xff] %v8371
        %8439 = vst [vmem:[#allocation3 + $0x190] sm:$0xff] %v8373
        %8440 = vst [vmem:[#allocation3 + $0x1d8] sm:$0xff] %v8375
        %8441 = vst [vmem:[#allocation3 + $0x220] sm:$0xff] %v8377
        %8442 = vst [vmem:[#allocation3 + $0x268] sm:$0xff] %v8379
        %8443 = vst [vmem:[#allocation3 + $0x2b0] sm:$0xff] %v8381
        %8444 = vst [vmem:[#allocation3 + $0x2f8] sm:$0xff] %v8383
        %8445 = vst [vmem:[#allocation3 + $0x340] sm:$0xff] %v8385
        %8446 = vst [vmem:[#allocation3 + $0x388] sm:$0xff] %v8387
        %8447 = vst [vmem:[#allocation3 + $0x3d0] sm:$0xff] %v8389
        %8448 = vst [vmem:[#allocation3 + $0x418] sm:$0xff] %v8391
        %8449 = vst [vmem:[#allocation3 + $0x460] sm:$0xff] %v8393
        %8450 = vst [vmem:[#allocation3 + $0x4a8] sm:$0xff] %v8395
        %8451 = vst [vmem:[#allocation3 + $0x4f0] sm:$0xff] %v8397
        %8452 = vst [vmem:[#allocation3 + $0x538] sm:$0xff] %v8399
        %8453 = vst [vmem:[#allocation3 + $0x580] sm:$0xff] %v8401
        %8454 = vst [vmem:[#allocation3 + $0x5c8] sm:$0xff] %v8403
        %8455 = vst [vmem:[#allocation3 + $0x610] sm:$0xff] %v8405
        %8456 = vst [vmem:[#allocation3 + $0x658] sm:$0xff] %v8407
        %8457 = vst [vmem:[#allocation3 + $0x6a0] sm:$0xff] %v8409
        %v8458 = vld [vmem:[#allocation2 + $0x18] sm:$0xf]
        %v8459 = vld [vmem:[#allocation2 + $0x1c] sm:$0xf]
        %v8460 = vld [vmem:[#allocation2 + $0x20] sm:$0xf]
        %v8461 = vld [vmem:[#allocation2 + $0x24] sm:$0xf]
        %v8462 = vld [vmem:[#allocation2 + $0x28] sm:$0xf]
        %v8463 = vld [vmem:[#allocation2 + $0x2c] sm:$0xf]
        %v8464 = vld [vmem:[#allocation2 + $0x30] sm:$0xf]
        %v8465 = vld [vmem:[#allocation2 + $0x34] sm:$0xf]
        %v8466 = vld [vmem:[#allocation2 + $0x38] sm:$0xf]
        %v8467 = vld [vmem:[#allocation2 + $0x3c] sm:$0xf]
        %v8468 = vld [vmem:[#allocation2 + $0x40] sm:$0xf]
        %v8469 = vld [vmem:[#allocation2 + $0x44] sm:$0xf]
        %v8470 = vld [vmem:[#allocation2 + $0x48] sm:$0xf]
        %v8471 = vld [vmem:[#allocation2 + $0x4c] sm:$0xf]
        %v8472 = vld [vmem:[#allocation2 + $0x50] sm:$0xf]
        %v8473 = vld [vmem:[#allocation2 + $0x54] sm:$0xf]
        %v8474 = vld [vmem:[#allocation2 + $0x58] sm:$0xf]
        %v8475 = vld [vmem:[#allocation2 + $0x5c] sm:$0xf]
        %v8476 = vld [vmem:[#allocation2 + $0x60] sm:$0xf]
        %v8477 = vld [vmem:[#allocation2 + $0x64] sm:$0xf]
        %v8478 = vld [vmem:[#allocation2 + $0x68] sm:$0xf]
        %v8479 = vld [vmem:[#allocation2 + $0x6c] sm:$0xf]
        %v8480 = vld [vmem:[#allocation2 + $0x70] sm:$0xf]
        %v8481 = vld [vmem:[#allocation2 + $0x74] sm:$0xf]
        %v8482 = vld [vmem:[#allocation2 + $0x78] sm:$0xf]
        %v8483 = vld [vmem:[#allocation2 + $0x7c] sm:$0xf]
        %v8484 = vld [vmem:[#allocation2 + $0x80] sm:$0xf]
        %v8485 = vld [vmem:[#allocation2 + $0x84] sm:$0xf]
        %v8486 = vld [vmem:[#allocation2 + $0x88] sm:$0xf]
        %v8487 = vld [vmem:[#allocation2 + $0x8c] sm:$0xf]
        %v8488 = vld [vmem:[#allocation2 + $0x90] sm:$0xf]
        %v8489 = vld [vmem:[#allocation2 + $0x94] sm:$0xf]
        %v8490 = vld [vmem:[#allocation2 + $0x98] sm:$0xf]
        %v8491 = vld [vmem:[#allocation2 + $0x9c] sm:$0xf]
        %v8492 = vld [vmem:[#allocation2 + $0xa0] sm:$0xf]
        %v8493 = vld [vmem:[#allocation2 + $0xa4] sm:$0xf]
        %v8494 = vld [vmem:[#allocation2 + $0xa8] sm:$0xf]
        %v8495 = vld [vmem:[#allocation2 + $0xac] sm:$0xf]
        %v8496 = vld [vmem:[#allocation2 + $0xb0] sm:$0xf]
        %v8497 = vld [vmem:[#allocation2 + $0xb4] sm:$0xf]
        %v8498 = vld [vmem:[#allocation2 + $0xb8] sm:$0xf]
        %v8499 = vld [vmem:[#allocation2 + $0xbc] sm:$0xf]
        %v8500 = vld [vmem:[#allocation2 + $0xc0] sm:$0xf]
        %v8501 = vld [vmem:[#allocation2 + $0xc4] sm:$0xf]
        %v8502 = vld [vmem:[#allocation2 + $0xc8] sm:$0xf]
        %v8503 = vld [vmem:[#allocation2 + $0xcc] sm:$0xf]
        %v8504 = vld [vmem:[#allocation2 + $0xd0] sm:$0xf]
        %v8505 = vld [vmem:[#allocation2 + $0xd4] sm:$0xf]
        %v8554 = vunpack.c.l.b16 %v8458
        %v8555 = vunpack.c.l.b16 %v8459
        %v8556 = vunpack.c.l.b16 %v8460
        %v8557 = vunpack.c.l.b16 %v8461
        %v8558 = vunpack.c.l.b16 %v8462
        %v8559 = vunpack.c.l.b16 %v8463
        %v8560 = vunpack.c.l.b16 %v8464
        %v8561 = vunpack.c.l.b16 %v8465
        %v8562 = vunpack.c.l.b16 %v8466
        %v8563 = vunpack.c.l.b16 %v8467
        %v8564 = vunpack.c.l.b16 %v8468
        %v8565 = vunpack.c.l.b16 %v8469
        %v8566 = vunpack.c.l.b16 %v8470
        %v8567 = vunpack.c.l.b16 %v8471
        %v8568 = vunpack.c.l.b16 %v8472
        %v8569 = vunpack.c.l.b16 %v8473
        %v8570 = vunpack.c.l.b16 %v8474
        %v8571 = vunpack.c.l.b16 %v8475
        %v8572 = vunpack.c.l.b16 %v8476
        %v8573 = vunpack.c.l.b16 %v8477
        %v8574 = vunpack.c.l.b16 %v8478
        %v8575 = vunpack.c.l.b16 %v8479
        %v8576 = vunpack.c.l.b16 %v8480
        %v8577 = vunpack.c.l.b16 %v8481
        %v8578 = vunpack.c.l.b16 %v8482
        %v8579 = vunpack.c.l.b16 %v8483
        %v8580 = vunpack.c.l.b16 %v8484
        %v8581 = vunpack.c.l.b16 %v8485
        %v8582 = vunpack.c.l.b16 %v8486
        %v8583 = vunpack.c.l.b16 %v8487
        %v8584 = vunpack.c.l.b16 %v8488
        %v8585 = vunpack.c.l.b16 %v8489
        %v8586 = vunpack.c.l.b16 %v8490
        %v8587 = vunpack.c.l.b16 %v8491
        %v8588 = vunpack.c.l.b16 %v8492
        %v8589 = vunpack.c.l.b16 %v8493
        %v8590 = vunpack.c.l.b16 %v8494
        %v8591 = vunpack.c.l.b16 %v8495
        %v8592 = vunpack.c.l.b16 %v8496
        %v8593 = vunpack.c.l.b16 %v8497
        %v8594 = vunpack.c.l.b16 %v8498
        %v8595 = vunpack.c.l.b16 %v8499
        %v8596 = vunpack.c.l.b16 %v8500
        %v8597 = vunpack.c.l.b16 %v8501
        %v8598 = vunpack.c.l.b16 %v8502
        %v8599 = vunpack.c.l.b16 %v8503
        %v8600 = vunpack.c.l.b16 %v8504
        %v8601 = vunpack.c.l.b16 %v8505
        %v8602 = vpack.c.b16 %v8555, %v8554
        %v8603 = vpack.c.b16 %v8557, %v8556
        %v8604 = vpack.c.b16 %v8559, %v8558
        %v8605 = vpack.c.b16 %v8561, %v8560
        %v8606 = vpack.c.b16 %v8563, %v8562
        %v8607 = vpack.c.b16 %v8565, %v8564
        %v8608 = vpack.c.b16 %v8567, %v8566
        %v8609 = vpack.c.b16 %v8569, %v8568
        %v8610 = vpack.c.b16 %v8571, %v8570
        %v8611 = vpack.c.b16 %v8573, %v8572
        %v8612 = vpack.c.b16 %v8575, %v8574
        %v8613 = vpack.c.b16 %v8577, %v8576
        %v8614 = vpack.c.b16 %v8579, %v8578
        %v8615 = vpack.c.b16 %v8581, %v8580
        %v8616 = vpack.c.b16 %v8583, %v8582
        %v8617 = vpack.c.b16 %v8585, %v8584
        %v8618 = vpack.c.b16 %v8587, %v8586
        %v8619 = vpack.c.b16 %v8589, %v8588
        %v8620 = vpack.c.b16 %v8591, %v8590
        %v8621 = vpack.c.b16 %v8593, %v8592
        %v8622 = vpack.c.b16 %v8595, %v8594
        %v8623 = vpack.c.b16 %v8597, %v8596
        %v8624 = vpack.c.b16 %v8599, %v8598
        %v8625 = vpack.c.b16 %v8601, %v8600
        %8650 = vst [vmem:[#allocation3 + $0x30] sm:$0xff] %v8602
        %8651 = vst [vmem:[#allocation3 + $0x78] sm:$0xff] %v8603
        %8652 = vst [vmem:[#allocation3 + $0xc0] sm:$0xff] %v8604
        %8653 = vst [vmem:[#allocation3 + $0x108] sm:$0xff] %v8605
        %8654 = vst [vmem:[#allocation3 + $0x150] sm:$0xff] %v8606
        %8655 = vst [vmem:[#allocation3 + $0x198] sm:$0xff] %v8607
        %8656 = vst [vmem:[#allocation3 + $0x1e0] sm:$0xff] %v8608
        %8657 = vst [vmem:[#allocation3 + $0x228] sm:$0xff] %v8609
        %8658 = vst [vmem:[#allocation3 + $0x270] sm:$0xff] %v8610
        %8659 = vst [vmem:[#allocation3 + $0x2b8] sm:$0xff] %v8611
        %8660 = vst [vmem:[#allocation3 + $0x300] sm:$0xff] %v8612
        %8661 = vst [vmem:[#allocation3 + $0x348] sm:$0xff] %v8613
        %8662 = vst [vmem:[#allocation3 + $0x390] sm:$0xff] %v8614
        %8663 = vst [vmem:[#allocation3 + $0x3d8] sm:$0xff] %v8615
        %8664 = vst [vmem:[#allocation3 + $0x420] sm:$0xff] %v8616
        %8665 = vst [vmem:[#allocation3 + $0x468] sm:$0xff] %v8617
        %8666 = vst [vmem:[#allocation3 + $0x4b0] sm:$0xff] %v8618
        %8667 = vst [vmem:[#allocation3 + $0x4f8] sm:$0xff] %v8619
        %8668 = vst [vmem:[#allocation3 + $0x540] sm:$0xff] %v8620
        %8669 = vst [vmem:[#allocation3 + $0x588] sm:$0xff] %v8621
        %8670 = vst [vmem:[#allocation3 + $0x5d0] sm:$0xff] %v8622
        %8671 = vst [vmem:[#allocation3 + $0x618] sm:$0xff] %v8623
        %8672 = vst [vmem:[#allocation3 + $0x660] sm:$0xff] %v8624
        %8673 = vst [vmem:[#allocation3 + $0x6a8] sm:$0xff] %v8625
        %v8674 = vld [vmem:[#allocation2 + $0x18] sm:$0xf]
        %v8675 = vld [vmem:[#allocation2 + $0x1c] sm:$0xf]
        %v8676 = vld [vmem:[#allocation2 + $0x20] sm:$0xf]
        %v8677 = vld [vmem:[#allocation2 + $0x24] sm:$0xf]
        %v8678 = vld [vmem:[#allocation2 + $0x28] sm:$0xf]
        %v8679 = vld [vmem:[#allocation2 + $0x2c] sm:$0xf]
        %v8680 = vld [vmem:[#allocation2 + $0x30] sm:$0xf]
        %v8681 = vld [vmem:[#allocation2 + $0x34] sm:$0xf]
        %v8682 = vld [vmem:[#allocation2 + $0x38] sm:$0xf]
        %v8683 = vld [vmem:[#allocation2 + $0x3c] sm:$0xf]
        %v8684 = vld [vmem:[#allocation2 + $0x40] sm:$0xf]
        %v8685 = vld [vmem:[#allocation2 + $0x44] sm:$0xf]
        %v8686 = vld [vmem:[#allocation2 + $0x48] sm:$0xf]
        %v8687 = vld [vmem:[#allocation2 + $0x4c] sm:$0xf]
        %v8688 = vld [vmem:[#allocation2 + $0x50] sm:$0xf]
        %v8689 = vld [vmem:[#allocation2 + $0x54] sm:$0xf]
        %v8690 = vld [vmem:[#allocation2 + $0x58] sm:$0xf]
        %v8691 = vld [vmem:[#allocation2 + $0x5c] sm:$0xf]
        %v8692 = vld [vmem:[#allocation2 + $0x60] sm:$0xf]
        %v8693 = vld [vmem:[#allocation2 + $0x64] sm:$0xf]
        %v8694 = vld [vmem:[#allocation2 + $0x68] sm:$0xf]
        %v8695 = vld [vmem:[#allocation2 + $0x6c] sm:$0xf]
        %v8696 = vld [vmem:[#allocation2 + $0x70] sm:$0xf]
        %v8697 = vld [vmem:[#allocation2 + $0x74] sm:$0xf]
        %v8698 = vld [vmem:[#allocation2 + $0x78] sm:$0xf]
        %v8699 = vld [vmem:[#allocation2 + $0x7c] sm:$0xf]
        %v8700 = vld [vmem:[#allocation2 + $0x80] sm:$0xf]
        %v8701 = vld [vmem:[#allocation2 + $0x84] sm:$0xf]
        %v8702 = vld [vmem:[#allocation2 + $0x88] sm:$0xf]
        %v8703 = vld [vmem:[#allocation2 + $0x8c] sm:$0xf]
        %v8704 = vld [vmem:[#allocation2 + $0x90] sm:$0xf]
        %v8705 = vld [vmem:[#allocation2 + $0x94] sm:$0xf]
        %v8706 = vld [vmem:[#allocation2 + $0x98] sm:$0xf]
        %v8707 = vld [vmem:[#allocation2 + $0x9c] sm:$0xf]
        %v8708 = vld [vmem:[#allocation2 + $0xa0] sm:$0xf]
        %v8709 = vld [vmem:[#allocation2 + $0xa4] sm:$0xf]
        %v8710 = vld [vmem:[#allocation2 + $0xa8] sm:$0xf]
        %v8711 = vld [vmem:[#allocation2 + $0xac] sm:$0xf]
        %v8712 = vld [vmem:[#allocation2 + $0xb0] sm:$0xf]
        %v8713 = vld [vmem:[#allocation2 + $0xb4] sm:$0xf]
        %v8714 = vld [vmem:[#allocation2 + $0xb8] sm:$0xf]
        %v8715 = vld [vmem:[#allocation2 + $0xbc] sm:$0xf]
        %v8716 = vld [vmem:[#allocation2 + $0xc0] sm:$0xf]
        %v8717 = vld [vmem:[#allocation2 + $0xc4] sm:$0xf]
        %v8718 = vld [vmem:[#allocation2 + $0xc8] sm:$0xf]
        %v8719 = vld [vmem:[#allocation2 + $0xcc] sm:$0xf]
        %v8720 = vld [vmem:[#allocation2 + $0xd0] sm:$0xf]
        %v8721 = vld [vmem:[#allocation2 + $0xd4] sm:$0xf]
        %v8722 = vld [vmem:[#allocation2 + $0xd8] sm:$0x1]
        %v8772 = vunpack.c.l.b16 %v8674
        %v8773 = vunpack.c.l.b16 %v8675
        %v8774 = vunpack.c.l.b16 %v8676
        %v8775 = vunpack.c.l.b16 %v8677
        %v8776 = vunpack.c.l.b16 %v8678
        %v8777 = vunpack.c.l.b16 %v8679
        %v8778 = vunpack.c.l.b16 %v8680
        %v8779 = vunpack.c.l.b16 %v8681
        %v8780 = vunpack.c.l.b16 %v8682
        %v8781 = vunpack.c.l.b16 %v8683
        %v8782 = vunpack.c.l.b16 %v8684
        %v8783 = vunpack.c.l.b16 %v8685
        %v8784 = vunpack.c.l.b16 %v8686
        %v8785 = vunpack.c.l.b16 %v8687
        %v8786 = vunpack.c.l.b16 %v8688
        %v8787 = vunpack.c.l.b16 %v8689
        %v8788 = vunpack.c.l.b16 %v8690
        %v8789 = vunpack.c.l.b16 %v8691
        %v8790 = vunpack.c.l.b16 %v8692
        %v8791 = vunpack.c.l.b16 %v8693
        %v8792 = vunpack.c.l.b16 %v8694
        %v8793 = vunpack.c.l.b16 %v8695
        %v8794 = vunpack.c.l.b16 %v8696
        %v8795 = vunpack.c.l.b16 %v8697
        %v8796 = vunpack.c.l.b16 %v8698
        %v8797 = vunpack.c.l.b16 %v8699
        %v8798 = vunpack.c.l.b16 %v8700
        %v8799 = vunpack.c.l.b16 %v8701
        %v8800 = vunpack.c.l.b16 %v8702
        %v8801 = vunpack.c.l.b16 %v8703
        %v8802 = vunpack.c.l.b16 %v8704
        %v8803 = vunpack.c.l.b16 %v8705
        %v8804 = vunpack.c.l.b16 %v8706
        %v8805 = vunpack.c.l.b16 %v8707
        %v8806 = vunpack.c.l.b16 %v8708
        %v8807 = vunpack.c.l.b16 %v8709
        %v8808 = vunpack.c.l.b16 %v8710
        %v8809 = vunpack.c.l.b16 %v8711
        %v8810 = vunpack.c.l.b16 %v8712
        %v8811 = vunpack.c.l.b16 %v8713
        %v8812 = vunpack.c.l.b16 %v8714
        %v8813 = vunpack.c.l.b16 %v8715
        %v8814 = vunpack.c.l.b16 %v8716
        %v8815 = vunpack.c.l.b16 %v8717
        %v8816 = vunpack.c.l.b16 %v8718
        %v8817 = vunpack.c.l.b16 %v8719
        %v8818 = vunpack.c.l.b16 %v8720
        %v8819 = vunpack.c.l.b16 %v8721
        %v8820 = vunpack.c.l.b16 %v8722
        %v8821 = vpack.c.b16 %v8773, %v8772
        %v8822 = vpack.c.b16 %v8775, %v8774
        %v8823 = vpack.c.b16 %v8777, %v8776
        %v8824 = vpack.c.b16 %v8779, %v8778
        %v8825 = vpack.c.b16 %v8781, %v8780
        %v8826 = vpack.c.b16 %v8783, %v8782
        %v8827 = vpack.c.b16 %v8785, %v8784
        %v8828 = vpack.c.b16 %v8787, %v8786
        %v8829 = vpack.c.b16 %v8789, %v8788
        %v8830 = vpack.c.b16 %v8791, %v8790
        %v8831 = vpack.c.b16 %v8793, %v8792
        %v8832 = vpack.c.b16 %v8795, %v8794
        %v8833 = vpack.c.b16 %v8797, %v8796
        %v8834 = vpack.c.b16 %v8799, %v8798
        %v8835 = vpack.c.b16 %v8801, %v8800
        %v8836 = vpack.c.b16 %v8803, %v8802
        %v8837 = vpack.c.b16 %v8805, %v8804
        %v8838 = vpack.c.b16 %v8807, %v8806
        %v8839 = vpack.c.b16 %v8809, %v8808
        %v8840 = vpack.c.b16 %v8811, %v8810
        %v8841 = vpack.c.b16 %v8813, %v8812
        %v8842 = vpack.c.b16 %v8815, %v8814
        %v8843 = vpack.c.b16 %v8817, %v8816
        %v8844 = vpack.c.b16 %v8819, %v8818
        %v8845 = vpack.c.b16 %v8820, %v8820
        %v8847 = vshrl.u32 %v8821, 16
        %v8849 = vshll.u32 %v8821, 16
        %v8851 = vrot.slane %v8849, 1
        %v8852 = vor.u32 %v8847, %v8851
        %v8854 = vshll.u32 %v8822, 16
        %v8856 = vrot.slane %v8854, 1
        %v8857 = vsel %vm1526, %v8852, %v8856
        %v8858 = vshrl.u32 %v8822, 16
        %v8860 = vor.u32 %v8858, %v8856
        %v8862 = vshll.u32 %v8823, 16
        %v8864 = vrot.slane %v8862, 1
        %v8865 = vsel %vm1526, %v8860, %v8864
        %v8866 = vshrl.u32 %v8823, 16
        %v8868 = vor.u32 %v8866, %v8864
        %v8870 = vshll.u32 %v8824, 16
        %v8872 = vrot.slane %v8870, 1
        %v8873 = vsel %vm1526, %v8868, %v8872
        %v8874 = vshrl.u32 %v8824, 16
        %v8876 = vor.u32 %v8874, %v8872
        %v8878 = vshll.u32 %v8825, 16
        %v8880 = vrot.slane %v8878, 1
        %v8881 = vsel %vm1526, %v8876, %v8880
        %v8882 = vshrl.u32 %v8825, 16
        %v8884 = vor.u32 %v8882, %v8880
        %v8886 = vshll.u32 %v8826, 16
        %v8888 = vrot.slane %v8886, 1
        %v8889 = vsel %vm1526, %v8884, %v8888
        %v8890 = vshrl.u32 %v8826, 16
        %v8892 = vor.u32 %v8890, %v8888
        %v8894 = vshll.u32 %v8827, 16
        %v8896 = vrot.slane %v8894, 1
        %v8897 = vsel %vm1526, %v8892, %v8896
        %v8898 = vshrl.u32 %v8827, 16
        %v8900 = vor.u32 %v8898, %v8896
        %v8902 = vshll.u32 %v8828, 16
        %v8904 = vrot.slane %v8902, 1
        %v8905 = vsel %vm1526, %v8900, %v8904
        %v8906 = vshrl.u32 %v8828, 16
        %v8908 = vor.u32 %v8906, %v8904
        %v8910 = vshll.u32 %v8829, 16
        %v8912 = vrot.slane %v8910, 1
        %v8913 = vsel %vm1526, %v8908, %v8912
        %v8914 = vshrl.u32 %v8829, 16
        %v8916 = vor.u32 %v8914, %v8912
        %v8918 = vshll.u32 %v8830, 16
        %v8920 = vrot.slane %v8918, 1
        %v8921 = vsel %vm1526, %v8916, %v8920
        %v8922 = vshrl.u32 %v8830, 16
        %v8924 = vor.u32 %v8922, %v8920
        %v8926 = vshll.u32 %v8831, 16
        %v8928 = vrot.slane %v8926, 1
        %v8929 = vsel %vm1526, %v8924, %v8928
        %v8930 = vshrl.u32 %v8831, 16
        %v8932 = vor.u32 %v8930, %v8928
        %v8934 = vshll.u32 %v8832, 16
        %v8936 = vrot.slane %v8934, 1
        %v8937 = vsel %vm1526, %v8932, %v8936
        %v8938 = vshrl.u32 %v8832, 16
        %v8940 = vor.u32 %v8938, %v8936
        %v8942 = vshll.u32 %v8833, 16
        %v8944 = vrot.slane %v8942, 1
        %v8945 = vsel %vm1526, %v8940, %v8944
        %v8946 = vshrl.u32 %v8833, 16
        %v8948 = vor.u32 %v8946, %v8944
        %v8950 = vshll.u32 %v8834, 16
        %v8952 = vrot.slane %v8950, 1
        %v8953 = vsel %vm1526, %v8948, %v8952
        %v8954 = vshrl.u32 %v8834, 16
        %v8956 = vor.u32 %v8954, %v8952
        %v8958 = vshll.u32 %v8835, 16
        %v8960 = vrot.slane %v8958, 1
        %v8961 = vsel %vm1526, %v8956, %v8960
        %v8962 = vshrl.u32 %v8835, 16
        %v8964 = vor.u32 %v8962, %v8960
        %v8966 = vshll.u32 %v8836, 16
        %v8968 = vrot.slane %v8966, 1
        %v8969 = vsel %vm1526, %v8964, %v8968
        %v8970 = vshrl.u32 %v8836, 16
        %v8972 = vor.u32 %v8970, %v8968
        %v8974 = vshll.u32 %v8837, 16
        %v8976 = vrot.slane %v8974, 1
        %v8977 = vsel %vm1526, %v8972, %v8976
        %v8978 = vshrl.u32 %v8837, 16
        %v8980 = vor.u32 %v8978, %v8976
        %v8982 = vshll.u32 %v8838, 16
        %v8984 = vrot.slane %v8982, 1
        %v8985 = vsel %vm1526, %v8980, %v8984
        %v8986 = vshrl.u32 %v8838, 16
        %v8988 = vor.u32 %v8986, %v8984
        %v8990 = vshll.u32 %v8839, 16
        %v8992 = vrot.slane %v8990, 1
        %v8993 = vsel %vm1526, %v8988, %v8992
        %v8994 = vshrl.u32 %v8839, 16
        %v8996 = vor.u32 %v8994, %v8992
        %v8998 = vshll.u32 %v8840, 16
        %v9000 = vrot.slane %v8998, 1
        %v9001 = vsel %vm1526, %v8996, %v9000
        %v9002 = vshrl.u32 %v8840, 16
        %v9004 = vor.u32 %v9002, %v9000
        %v9006 = vshll.u32 %v8841, 16
        %v9008 = vrot.slane %v9006, 1
        %v9009 = vsel %vm1526, %v9004, %v9008
        %v9010 = vshrl.u32 %v8841, 16
        %v9012 = vor.u32 %v9010, %v9008
        %v9014 = vshll.u32 %v8842, 16
        %v9016 = vrot.slane %v9014, 1
        %v9017 = vsel %vm1526, %v9012, %v9016
        %v9018 = vshrl.u32 %v8842, 16
        %v9020 = vor.u32 %v9018, %v9016
        %v9022 = vshll.u32 %v8843, 16
        %v9024 = vrot.slane %v9022, 1
        %v9025 = vsel %vm1526, %v9020, %v9024
        %v9026 = vshrl.u32 %v8843, 16
        %v9028 = vor.u32 %v9026, %v9024
        %v9030 = vshll.u32 %v8844, 16
        %v9032 = vrot.slane %v9030, 1
        %v9033 = vsel %vm1526, %v9028, %v9032
        %v9034 = vshrl.u32 %v8844, 16
        %v9036 = vor.u32 %v9034, %v9032
        %v9038 = vshll.u32 %v8845, 16
        %v9040 = vrot.slane %v9038, 1
        %v9041 = vsel %vm1526, %v9036, %v9040
        %9066 = vst [vmem:[#allocation3 + $0x38] sm:$0xff] %v8857
        %9067 = vst [vmem:[#allocation3 + $0x80] sm:$0xff] %v8865
        %9068 = vst [vmem:[#allocation3 + $0xc8] sm:$0xff] %v8873
        %9069 = vst [vmem:[#allocation3 + $0x110] sm:$0xff] %v8881
        %9070 = vst [vmem:[#allocation3 + $0x158] sm:$0xff] %v8889
        %9071 = vst [vmem:[#allocation3 + $0x1a0] sm:$0xff] %v8897
        %9072 = vst [vmem:[#allocation3 + $0x1e8] sm:$0xff] %v8905
        %9073 = vst [vmem:[#allocation3 + $0x230] sm:$0xff] %v8913
        %9074 = vst [vmem:[#allocation3 + $0x278] sm:$0xff] %v8921
        %9075 = vst [vmem:[#allocation3 + $0x2c0] sm:$0xff] %v8929
        %9076 = vst [vmem:[#allocation3 + $0x308] sm:$0xff] %v8937
        %9077 = vst [vmem:[#allocation3 + $0x350] sm:$0xff] %v8945
        %9078 = vst [vmem:[#allocation3 + $0x398] sm:$0xff] %v8953
        %9079 = vst [vmem:[#allocation3 + $0x3e0] sm:$0xff] %v8961
        %9080 = vst [vmem:[#allocation3 + $0x428] sm:$0xff] %v8969
        %9081 = vst [vmem:[#allocation3 + $0x470] sm:$0xff] %v8977
        %9082 = vst [vmem:[#allocation3 + $0x4b8] sm:$0xff] %v8985
        %9083 = vst [vmem:[#allocation3 + $0x500] sm:$0xff] %v8993
        %9084 = vst [vmem:[#allocation3 + $0x548] sm:$0xff] %v9001
        %9085 = vst [vmem:[#allocation3 + $0x590] sm:$0xff] %v9009
        %9086 = vst [vmem:[#allocation3 + $0x5d8] sm:$0xff] %v9017
        %9087 = vst [vmem:[#allocation3 + $0x620] sm:$0xff] %v9025
        %9088 = vst [vmem:[#allocation3 + $0x668] sm:$0xff] %v9033
        %9089 = vst [vmem:[#allocation3 + $0x6b0] sm:$0xff] %v9041
        %v9090 = vld [vmem:[#allocation2 + $0x18] sm:$0xe]
        %v9091 = vld [vmem:[#allocation2 + $0x1c] sm:$0xf]
        %v9092 = vld [vmem:[#allocation2 + $0x20] sm:$0xf]
        %v9093 = vld [vmem:[#allocation2 + $0x24] sm:$0xf]
        %v9094 = vld [vmem:[#allocation2 + $0x28] sm:$0xf]
        %v9095 = vld [vmem:[#allocation2 + $0x2c] sm:$0xf]
        %v9096 = vld [vmem:[#allocation2 + $0x30] sm:$0xf]
        %v9097 = vld [vmem:[#allocation2 + $0x34] sm:$0xf]
        %v9098 = vld [vmem:[#allocation2 + $0x38] sm:$0xf]
        %v9099 = vld [vmem:[#allocation2 + $0x3c] sm:$0xf]
        %v9100 = vld [vmem:[#allocation2 + $0x40] sm:$0xf]
        %v9101 = vld [vmem:[#allocation2 + $0x44] sm:$0xf]
        %v9102 = vld [vmem:[#allocation2 + $0x48] sm:$0xf]
        %v9103 = vld [vmem:[#allocation2 + $0x4c] sm:$0xf]
        %v9104 = vld [vmem:[#allocation2 + $0x50] sm:$0xf]
        %v9105 = vld [vmem:[#allocation2 + $0x54] sm:$0xf]
        %v9106 = vld [vmem:[#allocation2 + $0x58] sm:$0xf]
        %v9107 = vld [vmem:[#allocation2 + $0x5c] sm:$0xf]
        %v9108 = vld [vmem:[#allocation2 + $0x60] sm:$0xf]
        %v9109 = vld [vmem:[#allocation2 + $0x64] sm:$0xf]
        %v9110 = vld [vmem:[#allocation2 + $0x68] sm:$0xf]
        %v9111 = vld [vmem:[#allocation2 + $0x6c] sm:$0xf]
        %v9112 = vld [vmem:[#allocation2 + $0x70] sm:$0xf]
        %v9113 = vld [vmem:[#allocation2 + $0x74] sm:$0xf]
        %v9114 = vld [vmem:[#allocation2 + $0x78] sm:$0xf]
        %v9115 = vld [vmem:[#allocation2 + $0x7c] sm:$0xf]
        %v9116 = vld [vmem:[#allocation2 + $0x80] sm:$0xf]
        %v9117 = vld [vmem:[#allocation2 + $0x84] sm:$0xf]
        %v9118 = vld [vmem:[#allocation2 + $0x88] sm:$0xf]
        %v9119 = vld [vmem:[#allocation2 + $0x8c] sm:$0xf]
        %v9120 = vld [vmem:[#allocation2 + $0x90] sm:$0xf]
        %v9121 = vld [vmem:[#allocation2 + $0x94] sm:$0xf]
        %v9122 = vld [vmem:[#allocation2 + $0x98] sm:$0xf]
        %v9123 = vld [vmem:[#allocation2 + $0x9c] sm:$0xf]
        %v9124 = vld [vmem:[#allocation2 + $0xa0] sm:$0xf]
        %v9125 = vld [vmem:[#allocation2 + $0xa4] sm:$0xf]
        %v9126 = vld [vmem:[#allocation2 + $0xa8] sm:$0xf]
        %v9127 = vld [vmem:[#allocation2 + $0xac] sm:$0xf]
        %v9128 = vld [vmem:[#allocation2 + $0xb0] sm:$0xf]
        %v9129 = vld [vmem:[#allocation2 + $0xb4] sm:$0xf]
        %v9130 = vld [vmem:[#allocation2 + $0xb8] sm:$0xf]
        %v9131 = vld [vmem:[#allocation2 + $0xbc] sm:$0xf]
        %v9132 = vld [vmem:[#allocation2 + $0xc0] sm:$0xf]
        %v9133 = vld [vmem:[#allocation2 + $0xc4] sm:$0xf]
        %v9134 = vld [vmem:[#allocation2 + $0xc8] sm:$0xf]
        %v9135 = vld [vmem:[#allocation2 + $0xcc] sm:$0xf]
        %v9136 = vld [vmem:[#allocation2 + $0xd0] sm:$0xf]
        %v9137 = vld [vmem:[#allocation2 + $0xd4] sm:$0xf]
        %v9138 = vld [vmem:[#allocation2 + $0xd8] sm:$0x1]
        %v9188 = vunpack.c.l.b16 %v9090
        %v9189 = vunpack.c.l.b16 %v9091
        %v9190 = vunpack.c.l.b16 %v9092
        %v9191 = vunpack.c.l.b16 %v9093
        %v9192 = vunpack.c.l.b16 %v9094
        %v9193 = vunpack.c.l.b16 %v9095
        %v9194 = vunpack.c.l.b16 %v9096
        %v9195 = vunpack.c.l.b16 %v9097
        %v9196 = vunpack.c.l.b16 %v9098
        %v9197 = vunpack.c.l.b16 %v9099
        %v9198 = vunpack.c.l.b16 %v9100
        %v9199 = vunpack.c.l.b16 %v9101
        %v9200 = vunpack.c.l.b16 %v9102
        %v9201 = vunpack.c.l.b16 %v9103
        %v9202 = vunpack.c.l.b16 %v9104
        %v9203 = vunpack.c.l.b16 %v9105
        %v9204 = vunpack.c.l.b16 %v9106
        %v9205 = vunpack.c.l.b16 %v9107
        %v9206 = vunpack.c.l.b16 %v9108
        %v9207 = vunpack.c.l.b16 %v9109
        %v9208 = vunpack.c.l.b16 %v9110
        %v9209 = vunpack.c.l.b16 %v9111
        %v9210 = vunpack.c.l.b16 %v9112
        %v9211 = vunpack.c.l.b16 %v9113
        %v9212 = vunpack.c.l.b16 %v9114
        %v9213 = vunpack.c.l.b16 %v9115
        %v9214 = vunpack.c.l.b16 %v9116
        %v9215 = vunpack.c.l.b16 %v9117
        %v9216 = vunpack.c.l.b16 %v9118
        %v9217 = vunpack.c.l.b16 %v9119
        %v9218 = vunpack.c.l.b16 %v9120
        %v9219 = vunpack.c.l.b16 %v9121
        %v9220 = vunpack.c.l.b16 %v9122
        %v9221 = vunpack.c.l.b16 %v9123
        %v9222 = vunpack.c.l.b16 %v9124
        %v9223 = vunpack.c.l.b16 %v9125
        %v9224 = vunpack.c.l.b16 %v9126
        %v9225 = vunpack.c.l.b16 %v9127
        %v9226 = vunpack.c.l.b16 %v9128
        %v9227 = vunpack.c.l.b16 %v9129
        %v9228 = vunpack.c.l.b16 %v9130
        %v9229 = vunpack.c.l.b16 %v9131
        %v9230 = vunpack.c.l.b16 %v9132
        %v9231 = vunpack.c.l.b16 %v9133
        %v9232 = vunpack.c.l.b16 %v9134
        %v9233 = vunpack.c.l.b16 %v9135
        %v9234 = vunpack.c.l.b16 %v9136
        %v9235 = vunpack.c.l.b16 %v9137
        %v9236 = vunpack.c.l.b16 %v9138
        %v9237 = vpack.c.b16 %v9189, %v9188
        %v9238 = vpack.c.b16 %v9191, %v9190
        %v9239 = vpack.c.b16 %v9193, %v9192
        %v9240 = vpack.c.b16 %v9195, %v9194
        %v9241 = vpack.c.b16 %v9197, %v9196
        %v9242 = vpack.c.b16 %v9199, %v9198
        %v9243 = vpack.c.b16 %v9201, %v9200
        %v9244 = vpack.c.b16 %v9203, %v9202
        %v9245 = vpack.c.b16 %v9205, %v9204
        %v9246 = vpack.c.b16 %v9207, %v9206
        %v9247 = vpack.c.b16 %v9209, %v9208
        %v9248 = vpack.c.b16 %v9211, %v9210
        %v9249 = vpack.c.b16 %v9213, %v9212
        %v9250 = vpack.c.b16 %v9215, %v9214
        %v9251 = vpack.c.b16 %v9217, %v9216
        %v9252 = vpack.c.b16 %v9219, %v9218
        %v9253 = vpack.c.b16 %v9221, %v9220
        %v9254 = vpack.c.b16 %v9223, %v9222
        %v9255 = vpack.c.b16 %v9225, %v9224
        %v9256 = vpack.c.b16 %v9227, %v9226
        %v9257 = vpack.c.b16 %v9229, %v9228
        %v9258 = vpack.c.b16 %v9231, %v9230
        %v9259 = vpack.c.b16 %v9233, %v9232
        %v9260 = vpack.c.b16 %v9235, %v9234
        %v9261 = vpack.c.b16 %v9236, %v9236
        %v9262 = vrot.slane %v9237, 1
        %v9263 = vrot.slane %v9238, 1
        %v9264 = vsel %vm1943, %v9262, %v9263
        %v9265 = vrot.slane %v9239, 1
        %v9266 = vsel %vm1943, %v9263, %v9265
        %v9267 = vrot.slane %v9240, 1
        %v9268 = vsel %vm1943, %v9265, %v9267
        %v9269 = vrot.slane %v9241, 1
        %v9270 = vsel %vm1943, %v9267, %v9269
        %v9271 = vrot.slane %v9242, 1
        %v9272 = vsel %vm1943, %v9269, %v9271
        %v9273 = vrot.slane %v9243, 1
        %v9274 = vsel %vm1943, %v9271, %v9273
        %v9275 = vrot.slane %v9244, 1
        %v9276 = vsel %vm1943, %v9273, %v9275
        %v9277 = vrot.slane %v9245, 1
        %v9278 = vsel %vm1943, %v9275, %v9277
        %v9279 = vrot.slane %v9246, 1
        %v9280 = vsel %vm1943, %v9277, %v9279
        %v9281 = vrot.slane %v9247, 1
        %v9282 = vsel %vm1943, %v9279, %v9281
        %v9283 = vrot.slane %v9248, 1
        %v9284 = vsel %vm1943, %v9281, %v9283
        %v9285 = vrot.slane %v9249, 1
        %v9286 = vsel %vm1943, %v9283, %v9285
        %v9287 = vrot.slane %v9250, 1
        %v9288 = vsel %vm1943, %v9285, %v9287
        %v9289 = vrot.slane %v9251, 1
        %v9290 = vsel %vm1943, %v9287, %v9289
        %v9291 = vrot.slane %v9252, 1
        %v9292 = vsel %vm1943, %v9289, %v9291
        %v9293 = vrot.slane %v9253, 1
        %v9294 = vsel %vm1943, %v9291, %v9293
        %v9295 = vrot.slane %v9254, 1
        %v9296 = vsel %vm1943, %v9293, %v9295
        %v9297 = vrot.slane %v9255, 1
        %v9298 = vsel %vm1943, %v9295, %v9297
        %v9299 = vrot.slane %v9256, 1
        %v9300 = vsel %vm1943, %v9297, %v9299
        %v9301 = vrot.slane %v9257, 1
        %v9302 = vsel %vm1943, %v9299, %v9301
        %v9303 = vrot.slane %v9258, 1
        %v9304 = vsel %vm1943, %v9301, %v9303
        %v9305 = vrot.slane %v9259, 1
        %v9306 = vsel %vm1943, %v9303, %v9305
        %v9307 = vrot.slane %v9260, 1
        %v9308 = vsel %vm1943, %v9305, %v9307
        %v9309 = vrot.slane %v9261, 1
        %v9310 = vsel %vm1943, %v9307, %v9309
        %9335 = vst [vmem:[#allocation3 + $0x40] sm:$0xff] %v9264
        %9336 = vst [vmem:[#allocation3 + $0x88] sm:$0xff] %v9266
        %9337 = vst [vmem:[#allocation3 + $0xd0] sm:$0xff] %v9268
        %9338 = vst [vmem:[#allocation3 + $0x118] sm:$0xff] %v9270
        %9339 = vst [vmem:[#allocation3 + $0x160] sm:$0xff] %v9272
        %9340 = vst [vmem:[#allocation3 + $0x1a8] sm:$0xff] %v9274
        %9341 = vst [vmem:[#allocation3 + $0x1f0] sm:$0xff] %v9276
        %9342 = vst [vmem:[#allocation3 + $0x238] sm:$0xff] %v9278
        %9343 = vst [vmem:[#allocation3 + $0x280] sm:$0xff] %v9280
        %9344 = vst [vmem:[#allocation3 + $0x2c8] sm:$0xff] %v9282
        %9345 = vst [vmem:[#allocation3 + $0x310] sm:$0xff] %v9284
        %9346 = vst [vmem:[#allocation3 + $0x358] sm:$0xff] %v9286
        %9347 = vst [vmem:[#allocation3 + $0x3a0] sm:$0xff] %v9288
        %9348 = vst [vmem:[#allocation3 + $0x3e8] sm:$0xff] %v9290
        %9349 = vst [vmem:[#allocation3 + $0x430] sm:$0xff] %v9292
        %9350 = vst [vmem:[#allocation3 + $0x478] sm:$0xff] %v9294
        %9351 = vst [vmem:[#allocation3 + $0x4c0] sm:$0xff] %v9296
        %9352 = vst [vmem:[#allocation3 + $0x508] sm:$0xff] %v9298
        %9353 = vst [vmem:[#allocation3 + $0x550] sm:$0xff] %v9300
        %9354 = vst [vmem:[#allocation3 + $0x598] sm:$0xff] %v9302
        %9355 = vst [vmem:[#allocation3 + $0x5e0] sm:$0xff] %v9304
        %9356 = vst [vmem:[#allocation3 + $0x628] sm:$0xff] %v9306
        %9357 = vst [vmem:[#allocation3 + $0x670] sm:$0xff] %v9308
        %9358 = vst [vmem:[#allocation3 + $0x6b8] sm:$0xff] %v9310
        %v9359 = vld [vmem:[#allocation3] sm:$0xff]
        %v9360 = vld [vmem:[#allocation3 + $0x8] sm:$0xff]
        %v9361 = vld [vmem:[#allocation3 + $0x10] sm:$0xff]
        %v9362 = vld [vmem:[#allocation3 + $0x18] sm:$0xff]
        %v9363 = vld [vmem:[#allocation3 + $0x20] sm:$0xff]
        %v9364 = vld [vmem:[#allocation3 + $0x28] sm:$0xff]
        %v9365 = vld [vmem:[#allocation3 + $0x30] sm:$0xff]
        %v9366 = vld [vmem:[#allocation3 + $0x38] sm:$0xff]
        %v9367 = vld [vmem:[#allocation3 + $0x40] sm:$0xff]
        %v9368 = vld [vmem:[#allocation3 + $0x48] sm:$0xff]
        %v9369 = vld [vmem:[#allocation3 + $0x50] sm:$0xff]
        %v9370 = vld [vmem:[#allocation3 + $0x58] sm:$0xff]
        %v9371 = vld [vmem:[#allocation3 + $0x60] sm:$0xff]
        %v9372 = vld [vmem:[#allocation3 + $0x68] sm:$0xff]
        %v9373 = vld [vmem:[#allocation3 + $0x70] sm:$0xff]
        %v9374 = vld [vmem:[#allocation3 + $0x78] sm:$0xff]
        %v9375 = vld [vmem:[#allocation3 + $0x80] sm:$0xff]
        %v9376 = vld [vmem:[#allocation3 + $0x88] sm:$0xff]
        %v9377 = vld [vmem:[#allocation3 + $0x90] sm:$0xff]
        %v9378 = vld [vmem:[#allocation3 + $0x98] sm:$0xff]
        %v9379 = vld [vmem:[#allocation3 + $0xa0] sm:$0xff]
        %v9380 = vld [vmem:[#allocation3 + $0xa8] sm:$0xff]
        %v9381 = vld [vmem:[#allocation3 + $0xb0] sm:$0xff]
        %v9382 = vld [vmem:[#allocation3 + $0xb8] sm:$0xff]
        %v9383 = vld [vmem:[#allocation3 + $0xc0] sm:$0xff]
        %v9384 = vld [vmem:[#allocation3 + $0xc8] sm:$0xff]
        %v9385 = vld [vmem:[#allocation3 + $0xd0] sm:$0xff]
        %v9386 = vld [vmem:[#allocation3 + $0xd8] sm:$0xff]
        %v9387 = vld [vmem:[#allocation3 + $0xe0] sm:$0xff]
        %v9388 = vld [vmem:[#allocation3 + $0xe8] sm:$0xff]
        %v9389 = vld [vmem:[#allocation3 + $0xf0] sm:$0xff]
        %v9390 = vld [vmem:[#allocation3 + $0xf8] sm:$0xff]
        %v9391 = vld [vmem:[#allocation3 + $0x100] sm:$0xff]
        %v9392 = vld [vmem:[#allocation3 + $0x108] sm:$0xff]
        %v9393 = vld [vmem:[#allocation3 + $0x110] sm:$0xff]
        %v9394 = vld [vmem:[#allocation3 + $0x118] sm:$0xff]
        %v9395 = vld [vmem:[#allocation3 + $0x120] sm:$0xff]
        %v9396 = vld [vmem:[#allocation3 + $0x128] sm:$0xff]
        %v9397 = vld [vmem:[#allocation3 + $0x130] sm:$0xff]
        %v9398 = vld [vmem:[#allocation3 + $0x138] sm:$0xff]
        %v9399 = vld [vmem:[#allocation3 + $0x140] sm:$0xff]
        %v9400 = vld [vmem:[#allocation3 + $0x148] sm:$0xff]
        %v9401 = vld [vmem:[#allocation3 + $0x150] sm:$0xff]
        %v9402 = vld [vmem:[#allocation3 + $0x158] sm:$0xff]
        %v9403 = vld [vmem:[#allocation3 + $0x160] sm:$0xff]
        %v9404 = vld [vmem:[#allocation3 + $0x168] sm:$0xff]
        %v9405 = vld [vmem:[#allocation3 + $0x170] sm:$0xff]
        %v9406 = vld [vmem:[#allocation3 + $0x178] sm:$0xff]
        %v9407 = vld [vmem:[#allocation3 + $0x180] sm:$0xff]
        %v9408 = vld [vmem:[#allocation3 + $0x188] sm:$0xff]
        %v9409 = vld [vmem:[#allocation3 + $0x190] sm:$0xff]
        %v9410 = vld [vmem:[#allocation3 + $0x198] sm:$0xff]
        %v9411 = vld [vmem:[#allocation3 + $0x1a0] sm:$0xff]
        %v9412 = vld [vmem:[#allocation3 + $0x1a8] sm:$0xff]
        %v9413 = vld [vmem:[#allocation3 + $0x1b0] sm:$0xff]
        %v9414 = vld [vmem:[#allocation3 + $0x1b8] sm:$0xff]
        %v9415 = vld [vmem:[#allocation3 + $0x1c0] sm:$0xff]
        %v9416 = vld [vmem:[#allocation3 + $0x1c8] sm:$0xff]
        %v9417 = vld [vmem:[#allocation3 + $0x1d0] sm:$0xff]
        %v9418 = vld [vmem:[#allocation3 + $0x1d8] sm:$0xff]
        %v9419 = vld [vmem:[#allocation3 + $0x1e0] sm:$0xff]
        %v9420 = vld [vmem:[#allocation3 + $0x1e8] sm:$0xff]
        %v9421 = vld [vmem:[#allocation3 + $0x1f0] sm:$0xff]
        %v9422 = vld [vmem:[#allocation3 + $0x1f8] sm:$0xff]
        %v9423 = vld [vmem:[#allocation3 + $0x200] sm:$0xff]
        %v9424 = vld [vmem:[#allocation3 + $0x208] sm:$0xff]
        %v9425 = vld [vmem:[#allocation3 + $0x210] sm:$0xff]
        %v9426 = vld [vmem:[#allocation3 + $0x218] sm:$0xff]
        %v9427 = vld [vmem:[#allocation3 + $0x220] sm:$0xff]
        %v9428 = vld [vmem:[#allocation3 + $0x228] sm:$0xff]
        %v9429 = vld [vmem:[#allocation3 + $0x230] sm:$0xff]
        %v9430 = vld [vmem:[#allocation3 + $0x238] sm:$0xff]
        %v9431 = vld [vmem:[#allocation3 + $0x240] sm:$0xff]
        %v9432 = vld [vmem:[#allocation3 + $0x248] sm:$0xff]
        %v9433 = vld [vmem:[#allocation3 + $0x250] sm:$0xff]
        %v9434 = vld [vmem:[#allocation3 + $0x258] sm:$0xff]
        %v9435 = vld [vmem:[#allocation3 + $0x260] sm:$0xff]
        %v9436 = vld [vmem:[#allocation3 + $0x268] sm:$0xff]
        %v9437 = vld [vmem:[#allocation3 + $0x270] sm:$0xff]
        %v9438 = vld [vmem:[#allocation3 + $0x278] sm:$0xff]
        %v9439 = vld [vmem:[#allocation3 + $0x280] sm:$0xff]
        %v9440 = vld [vmem:[#allocation3 + $0x288] sm:$0xff]
        %v9441 = vld [vmem:[#allocation3 + $0x290] sm:$0xff]
        %v9442 = vld [vmem:[#allocation3 + $0x298] sm:$0xff]
        %v9443 = vld [vmem:[#allocation3 + $0x2a0] sm:$0xff]
        %v9444 = vld [vmem:[#allocation3 + $0x2a8] sm:$0xff]
        %v9445 = vld [vmem:[#allocation3 + $0x2b0] sm:$0xff]
        %v9446 = vld [vmem:[#allocation3 + $0x2b8] sm:$0xff]
        %v9447 = vld [vmem:[#allocation3 + $0x2c0] sm:$0xff]
        %v9448 = vld [vmem:[#allocation3 + $0x2c8] sm:$0xff]
        %v9449 = vld [vmem:[#allocation3 + $0x2d0] sm:$0xff]
        %v9450 = vld [vmem:[#allocation3 + $0x2d8] sm:$0xff]
        %v9451 = vld [vmem:[#allocation3 + $0x2e0] sm:$0xff]
        %v9452 = vld [vmem:[#allocation3 + $0x2e8] sm:$0xff]
        %v9453 = vld [vmem:[#allocation3 + $0x2f0] sm:$0xff]
        %v9454 = vld [vmem:[#allocation3 + $0x2f8] sm:$0xff]
        %v9455 = vld [vmem:[#allocation3 + $0x300] sm:$0xff]
        %v9456 = vld [vmem:[#allocation3 + $0x308] sm:$0xff]
        %v9457 = vld [vmem:[#allocation3 + $0x310] sm:$0xff]
        %v9458 = vld [vmem:[#allocation3 + $0x318] sm:$0xff]
        %v9459 = vld [vmem:[#allocation3 + $0x320] sm:$0xff]
        %v9460 = vld [vmem:[#allocation3 + $0x328] sm:$0xff]
        %v9461 = vld [vmem:[#allocation3 + $0x330] sm:$0xff]
        %v9462 = vld [vmem:[#allocation3 + $0x338] sm:$0xff]
        %v9463 = vld [vmem:[#allocation3 + $0x340] sm:$0xff]
        %v9464 = vld [vmem:[#allocation3 + $0x348] sm:$0xff]
        %v9465 = vld [vmem:[#allocation3 + $0x350] sm:$0xff]
        %v9466 = vld [vmem:[#allocation3 + $0x358] sm:$0xff]
        %v9467 = vld [vmem:[#allocation3 + $0x360] sm:$0xff]
        %v9468 = vld [vmem:[#allocation3 + $0x368] sm:$0xff]
        %v9469 = vld [vmem:[#allocation3 + $0x370] sm:$0xff]
        %v9470 = vld [vmem:[#allocation3 + $0x378] sm:$0xff]
        %v9471 = vld [vmem:[#allocation3 + $0x380] sm:$0xff]
        %v9472 = vld [vmem:[#allocation3 + $0x388] sm:$0xff]
        %v9473 = vld [vmem:[#allocation3 + $0x390] sm:$0xff]
        %v9474 = vld [vmem:[#allocation3 + $0x398] sm:$0xff]
        %v9475 = vld [vmem:[#allocation3 + $0x3a0] sm:$0xff]
        %v9476 = vld [vmem:[#allocation3 + $0x3a8] sm:$0xff]
        %v9477 = vld [vmem:[#allocation3 + $0x3b0] sm:$0xff]
        %v9478 = vld [vmem:[#allocation3 + $0x3b8] sm:$0xff]
        %v9479 = vld [vmem:[#allocation3 + $0x3c0] sm:$0xff]
        %v9480 = vld [vmem:[#allocation3 + $0x3c8] sm:$0xff]
        %v9481 = vld [vmem:[#allocation3 + $0x3d0] sm:$0xff]
        %v9482 = vld [vmem:[#allocation3 + $0x3d8] sm:$0xff]
        %v9483 = vld [vmem:[#allocation3 + $0x3e0] sm:$0xff]
        %v9484 = vld [vmem:[#allocation3 + $0x3e8] sm:$0xff]
        %v9485 = vld [vmem:[#allocation3 + $0x3f0] sm:$0xff]
        %v9486 = vld [vmem:[#allocation3 + $0x3f8] sm:$0xff]
        %v9487 = vld [vmem:[#allocation3 + $0x400] sm:$0xff]
        %v9488 = vld [vmem:[#allocation3 + $0x408] sm:$0xff]
        %v9489 = vld [vmem:[#allocation3 + $0x410] sm:$0xff]
        %v9490 = vld [vmem:[#allocation3 + $0x418] sm:$0xff]
        %v9491 = vld [vmem:[#allocation3 + $0x420] sm:$0xff]
        %v9492 = vld [vmem:[#allocation3 + $0x428] sm:$0xff]
        %v9493 = vld [vmem:[#allocation3 + $0x430] sm:$0xff]
        %v9494 = vld [vmem:[#allocation3 + $0x438] sm:$0xff]
        %v9495 = vld [vmem:[#allocation3 + $0x440] sm:$0xff]
        %v9496 = vld [vmem:[#allocation3 + $0x448] sm:$0xff]
        %v9497 = vld [vmem:[#allocation3 + $0x450] sm:$0xff]
        %v9498 = vld [vmem:[#allocation3 + $0x458] sm:$0xff]
        %v9499 = vld [vmem:[#allocation3 + $0x460] sm:$0xff]
        %v9500 = vld [vmem:[#allocation3 + $0x468] sm:$0xff]
        %v9501 = vld [vmem:[#allocation3 + $0x470] sm:$0xff]
        %v9502 = vld [vmem:[#allocation3 + $0x478] sm:$0xff]
        %v9503 = vld [vmem:[#allocation3 + $0x480] sm:$0xff]
        %v9504 = vld [vmem:[#allocation3 + $0x488] sm:$0xff]
        %v9505 = vld [vmem:[#allocation3 + $0x490] sm:$0xff]
        %v9506 = vld [vmem:[#allocation3 + $0x498] sm:$0xff]
        %v9507 = vld [vmem:[#allocation3 + $0x4a0] sm:$0xff]
        %v9508 = vld [vmem:[#allocation3 + $0x4a8] sm:$0xff]
        %v9509 = vld [vmem:[#allocation3 + $0x4b0] sm:$0xff]
        %v9510 = vld [vmem:[#allocation3 + $0x4b8] sm:$0xff]
        %v9511 = vld [vmem:[#allocation3 + $0x4c0] sm:$0xff]
        %v9512 = vld [vmem:[#allocation3 + $0x4c8] sm:$0xff]
        %v9513 = vld [vmem:[#allocation3 + $0x4d0] sm:$0xff]
        %v9514 = vld [vmem:[#allocation3 + $0x4d8] sm:$0xff]
        %v9515 = vld [vmem:[#allocation3 + $0x4e0] sm:$0xff]
        %v9516 = vld [vmem:[#allocation3 + $0x4e8] sm:$0xff]
        %v9517 = vld [vmem:[#allocation3 + $0x4f0] sm:$0xff]
        %v9518 = vld [vmem:[#allocation3 + $0x4f8] sm:$0xff]
        %v9519 = vld [vmem:[#allocation3 + $0x500] sm:$0xff]
        %v9520 = vld [vmem:[#allocation3 + $0x508] sm:$0xff]
        %v9521 = vld [vmem:[#allocation3 + $0x510] sm:$0xff]
        %v9522 = vld [vmem:[#allocation3 + $0x518] sm:$0xff]
        %v9523 = vld [vmem:[#allocation3 + $0x520] sm:$0xff]
        %v9524 = vld [vmem:[#allocation3 + $0x528] sm:$0xff]
        %v9525 = vld [vmem:[#allocation3 + $0x530] sm:$0xff]
        %v9526 = vld [vmem:[#allocation3 + $0x538] sm:$0xff]
        %v9527 = vld [vmem:[#allocation3 + $0x540] sm:$0xff]
        %v9528 = vld [vmem:[#allocation3 + $0x548] sm:$0xff]
        %v9529 = vld [vmem:[#allocation3 + $0x550] sm:$0xff]
        %v9530 = vld [vmem:[#allocation3 + $0x558] sm:$0xff]
        %v9531 = vld [vmem:[#allocation3 + $0x560] sm:$0xff]
        %v9532 = vld [vmem:[#allocation3 + $0x568] sm:$0xff]
        %v9533 = vld [vmem:[#allocation3 + $0x570] sm:$0xff]
        %v9534 = vld [vmem:[#allocation3 + $0x578] sm:$0xff]
        %v9535 = vld [vmem:[#allocation3 + $0x580] sm:$0xff]
        %v9536 = vld [vmem:[#allocation3 + $0x588] sm:$0xff]
        %v9537 = vld [vmem:[#allocation3 + $0x590] sm:$0xff]
        %v9538 = vld [vmem:[#allocation3 + $0x598] sm:$0xff]
        %v9539 = vld [vmem:[#allocation3 + $0x5a0] sm:$0xff]
        %v9540 = vld [vmem:[#allocation3 + $0x5a8] sm:$0xff]
        %v9541 = vld [vmem:[#allocation3 + $0x5b0] sm:$0xff]
        %v9542 = vld [vmem:[#allocation3 + $0x5b8] sm:$0xff]
        %v9543 = vld [vmem:[#allocation3 + $0x5c0] sm:$0xff]
        %v9544 = vld [vmem:[#allocation3 + $0x5c8] sm:$0xff]
        %v9545 = vld [vmem:[#allocation3 + $0x5d0] sm:$0xff]
        %v9546 = vld [vmem:[#allocation3 + $0x5d8] sm:$0xff]
        %v9547 = vld [vmem:[#allocation3 + $0x5e0] sm:$0xff]
        %v9548 = vld [vmem:[#allocation3 + $0x5e8] sm:$0xff]
        %v9549 = vld [vmem:[#allocation3 + $0x5f0] sm:$0xff]
        %v9550 = vld [vmem:[#allocation3 + $0x5f8] sm:$0xff]
        %v9551 = vld [vmem:[#allocation3 + $0x600] sm:$0xff]
        %v9552 = vld [vmem:[#allocation3 + $0x608] sm:$0xff]
        %v9553 = vld [vmem:[#allocation3 + $0x610] sm:$0xff]
        %v9554 = vld [vmem:[#allocation3 + $0x618] sm:$0xff]
        %v9555 = vld [vmem:[#allocation3 + $0x620] sm:$0xff]
        %v9556 = vld [vmem:[#allocation3 + $0x628] sm:$0xff]
        %v9557 = vld [vmem:[#allocation3 + $0x630] sm:$0xff]
        %v9558 = vld [vmem:[#allocation3 + $0x638] sm:$0xff]
        %v9559 = vld [vmem:[#allocation3 + $0x640] sm:$0xff]
        %v9560 = vld [vmem:[#allocation3 + $0x648] sm:$0xff]
        %v9561 = vld [vmem:[#allocation3 + $0x650] sm:$0xff]
        %v9562 = vld [vmem:[#allocation3 + $0x658] sm:$0xff]
        %v9563 = vld [vmem:[#allocation3 + $0x660] sm:$0xff]
        %v9564 = vld [vmem:[#allocation3 + $0x668] sm:$0xff]
        %v9565 = vld [vmem:[#allocation3 + $0x670] sm:$0xff]
        %v9566 = vld [vmem:[#allocation3 + $0x678] sm:$0xff]
        %v9567 = vld [vmem:[#allocation3 + $0x680] sm:$0xff]
        %v9568 = vld [vmem:[#allocation3 + $0x688] sm:$0xff]
        %v9569 = vld [vmem:[#allocation3 + $0x690] sm:$0xff]
        %v9570 = vld [vmem:[#allocation3 + $0x698] sm:$0xff]
        %v9571 = vld [vmem:[#allocation3 + $0x6a0] sm:$0xff]
        %v9572 = vld [vmem:[#allocation3 + $0x6a8] sm:$0xff]
        %v9573 = vld [vmem:[#allocation3 + $0x6b0] sm:$0xff]
        %v9574 = vld [vmem:[#allocation3 + $0x6b8] sm:$0xff]
        %v9575 = vld [vmem:[#allocation9] sm:$0xf]
        %v9576 = vld [vmem:[#allocation9 + $0x4] sm:$0xf]
        %v9577 = vld [vmem:[#allocation9 + $0x8] sm:$0xf]
        %v9578 = vld [vmem:[#allocation9 + $0xc] sm:$0xf]
        %v9579 = vld [vmem:[#allocation9 + $0x10] sm:$0xf]
        %v9580 = vld [vmem:[#allocation9 + $0x14] sm:$0xf]
        %v9581 = vld [vmem:[#allocation9 + $0x18] sm:$0xf]
        %v9582 = vld [vmem:[#allocation9 + $0x1c] sm:$0xf]
        %v9583 = vld [vmem:[#allocation9 + $0x20] sm:$0xf]
        %v9584 = vld [vmem:[#allocation9 + $0x24] sm:$0xf]
        %v9585 = vld [vmem:[#allocation9 + $0x28] sm:$0xf]
        %v9586 = vld [vmem:[#allocation9 + $0x2c] sm:$0xf]
        %v9587 = vld [vmem:[#allocation9 + $0x30] sm:$0xf]
        %v9588 = vld [vmem:[#allocation9 + $0x34] sm:$0xf]
        %v9589 = vld [vmem:[#allocation9 + $0x38] sm:$0xf]
        %v9590 = vld [vmem:[#allocation9 + $0x3c] sm:$0xf]
        %v9591 = vld [vmem:[#allocation9 + $0x40] sm:$0xf]
        %v9592 = vld [vmem:[#allocation9 + $0x44] sm:$0xf]
        %v9593 = vld [vmem:[#allocation9 + $0x48] sm:$0xf]
        %v9594 = vld [vmem:[#allocation9 + $0x4c] sm:$0xf]
        %v9595 = vld [vmem:[#allocation9 + $0x50] sm:$0xf]
        %v9596 = vld [vmem:[#allocation9 + $0x54] sm:$0xf]
        %v9597 = vld [vmem:[#allocation9 + $0x58] sm:$0xf]
        %v9598 = vld [vmem:[#allocation9 + $0x5c] sm:$0xf]
        %v9599 = vld [vmem:[#allocation9 + $0x60] sm:$0xf]
        %v9600 = vld [vmem:[#allocation9 + $0x64] sm:$0xf]
        %v9601 = vld [vmem:[#allocation9 + $0x68] sm:$0xf]
        %v9602 = vld [vmem:[#allocation9 + $0x6c] sm:$0xf]
        %v9603 = vld [vmem:[#allocation9 + $0x70] sm:$0xf]
        %v9604 = vld [vmem:[#allocation9 + $0x74] sm:$0xf]
        %v9605 = vld [vmem:[#allocation9 + $0x78] sm:$0xf]
        %v9606 = vld [vmem:[#allocation9 + $0x7c] sm:$0xf]
        %v9607 = vld [vmem:[#allocation9 + $0x80] sm:$0xf]
        %v9608 = vld [vmem:[#allocation9 + $0x84] sm:$0xf]
        %v9609 = vld [vmem:[#allocation9 + $0x88] sm:$0xf]
        %v9610 = vld [vmem:[#allocation9 + $0x8c] sm:$0xf]
        %v9611 = vld [vmem:[#allocation9 + $0x90] sm:$0xf]
        %v9612 = vld [vmem:[#allocation9 + $0x94] sm:$0xf]
        %v9613 = vld [vmem:[#allocation9 + $0x98] sm:$0xf]
        %v9614 = vld [vmem:[#allocation9 + $0x9c] sm:$0xf]
        %v9615 = vld [vmem:[#allocation9 + $0xa0] sm:$0xf]
        %v9616 = vld [vmem:[#allocation9 + $0xa4] sm:$0xf]
        %v9617 = vld [vmem:[#allocation9 + $0xa8] sm:$0xf]
        %v9618 = vld [vmem:[#allocation9 + $0xac] sm:$0xf]
        %v9619 = vld [vmem:[#allocation9 + $0xb0] sm:$0xf]
        %v9620 = vld [vmem:[#allocation9 + $0xb4] sm:$0xf]
        %v9621 = vld [vmem:[#allocation9 + $0xb8] sm:$0xf]
        %v9622 = vld [vmem:[#allocation9 + $0xbc] sm:$0xf]
        %v9623 = vld [vmem:[#allocation9 + $0xc0] sm:$0xf]
        %v9624 = vld [vmem:[#allocation9 + $0xc4] sm:$0xf]
        %v9625 = vld [vmem:[#allocation9 + $0xc8] sm:$0xf]
        %v9626 = vld [vmem:[#allocation9 + $0xcc] sm:$0xf]
        %v9627 = vld [vmem:[#allocation9 + $0xd0] sm:$0xf]
        %v9628 = vld [vmem:[#allocation9 + $0xd4] sm:$0xf]
        %v9629 = vld [vmem:[#allocation9 + $0xd8] sm:$0xf]
        %v9630 = vld [vmem:[#allocation9 + $0xdc] sm:$0xf]
        %v9631 = vld [vmem:[#allocation9 + $0xe0] sm:$0xf]
        %v9632 = vld [vmem:[#allocation9 + $0xe4] sm:$0xf]
        %v9633 = vld [vmem:[#allocation9 + $0xe8] sm:$0xf]
        %v9634 = vld [vmem:[#allocation9 + $0xec] sm:$0xf]
        %v9635 = vld [vmem:[#allocation9 + $0xf0] sm:$0xf]
        %v9636 = vld [vmem:[#allocation9 + $0xf4] sm:$0xf]
        %v9637 = vld [vmem:[#allocation9 + $0xf8] sm:$0xf]
        %v9638 = vld [vmem:[#allocation9 + $0xfc] sm:$0xf]
        %v9639 = vld [vmem:[#allocation9 + $0x100] sm:$0xf]
        %v9640 = vld [vmem:[#allocation9 + $0x104] sm:$0xf]
        %v9641 = vld [vmem:[#allocation9 + $0x108] sm:$0xf]
        %v9642 = vld [vmem:[#allocation9 + $0x10c] sm:$0xf]
        %v9643 = vld [vmem:[#allocation9 + $0x110] sm:$0xf]
        %v9644 = vld [vmem:[#allocation9 + $0x114] sm:$0xf]
        %v9645 = vld [vmem:[#allocation9 + $0x118] sm:$0xf]
        %v9646 = vld [vmem:[#allocation9 + $0x11c] sm:$0xf]
        %v9647 = vld [vmem:[#allocation9 + $0x120] sm:$0xf]
        %v9648 = vld [vmem:[#allocation9 + $0x124] sm:$0xf]
        %v9649 = vld [vmem:[#allocation9 + $0x128] sm:$0xf]
        %v9650 = vld [vmem:[#allocation9 + $0x12c] sm:$0xf]
        %v9651 = vld [vmem:[#allocation9 + $0x130] sm:$0xf]
        %v9652 = vld [vmem:[#allocation9 + $0x134] sm:$0xf]
        %v9653 = vld [vmem:[#allocation9 + $0x138] sm:$0xf]
        %v9654 = vld [vmem:[#allocation9 + $0x13c] sm:$0xf]
        %v9655 = vld [vmem:[#allocation9 + $0x140] sm:$0xf]
        %v9656 = vld [vmem:[#allocation9 + $0x144] sm:$0xf]
        %v9657 = vld [vmem:[#allocation9 + $0x148] sm:$0xf]
        %v9658 = vld [vmem:[#allocation9 + $0x14c] sm:$0xf]
        %v9659 = vld [vmem:[#allocation9 + $0x150] sm:$0xf]
        %v9660 = vld [vmem:[#allocation9 + $0x154] sm:$0xf]
        %v9661 = vld [vmem:[#allocation9 + $0x158] sm:$0xf]
        %v9662 = vld [vmem:[#allocation9 + $0x15c] sm:$0xf]
        %v9663 = vld [vmem:[#allocation9 + $0x160] sm:$0xf]
        %v9664 = vld [vmem:[#allocation9 + $0x164] sm:$0xf]
        %v9665 = vld [vmem:[#allocation9 + $0x168] sm:$0xf]
        %v9666 = vld [vmem:[#allocation9 + $0x16c] sm:$0xf]
        %v9667 = vld [vmem:[#allocation9 + $0x170] sm:$0xf]
        %v9668 = vld [vmem:[#allocation9 + $0x174] sm:$0xf]
        %v9669 = vld [vmem:[#allocation9 + $0x178] sm:$0xf]
        %v9670 = vld [vmem:[#allocation9 + $0x17c] sm:$0xf]
        %v9671 = vld [vmem:[#allocation9 + $0x180] sm:$0xf]
        %v9672 = vld [vmem:[#allocation9 + $0x184] sm:$0xf]
        %v9673 = vld [vmem:[#allocation9 + $0x188] sm:$0xf]
        %v9674 = vld [vmem:[#allocation9 + $0x18c] sm:$0xf]
        %v9675 = vld [vmem:[#allocation9 + $0x190] sm:$0xf]
        %v9676 = vld [vmem:[#allocation9 + $0x194] sm:$0xf]
        %v9677 = vld [vmem:[#allocation9 + $0x198] sm:$0xf]
        %v9678 = vld [vmem:[#allocation9 + $0x19c] sm:$0xf]
        %v9679 = vld [vmem:[#allocation9 + $0x1a0] sm:$0xf]
        %v9680 = vld [vmem:[#allocation9 + $0x1a4] sm:$0xf]
        %v9681 = vld [vmem:[#allocation9 + $0x1a8] sm:$0xf]
        %v9682 = vld [vmem:[#allocation9 + $0x1ac] sm:$0xf]
        %v9683 = vld [vmem:[#allocation9 + $0x1b0] sm:$0xf]
        %v9684 = vld [vmem:[#allocation9 + $0x1b4] sm:$0xf]
        %v9685 = vld [vmem:[#allocation9 + $0x1b8] sm:$0xf]
        %v9686 = vld [vmem:[#allocation9 + $0x1bc] sm:$0xf]
        %v9687 = vld [vmem:[#allocation9 + $0x1c0] sm:$0xf]
        %v9688 = vld [vmem:[#allocation9 + $0x1c4] sm:$0xf]
        %v9689 = vld [vmem:[#allocation9 + $0x1c8] sm:$0xf]
        %v9690 = vld [vmem:[#allocation9 + $0x1cc] sm:$0xf]
        %v9691 = vld [vmem:[#allocation9 + $0x1d0] sm:$0xf]
        %v9692 = vld [vmem:[#allocation9 + $0x1d4] sm:$0xf]
        %v9693 = vld [vmem:[#allocation9 + $0x1d8] sm:$0xf]
        %v9694 = vld [vmem:[#allocation9 + $0x1dc] sm:$0xf]
        %v9695 = vld [vmem:[#allocation9 + $0x1e0] sm:$0xf]
        %v9696 = vld [vmem:[#allocation9 + $0x1e4] sm:$0xf]
        %v9697 = vld [vmem:[#allocation9 + $0x1e8] sm:$0xf]
        %v9698 = vld [vmem:[#allocation9 + $0x1ec] sm:$0xf]
        %v9699 = vld [vmem:[#allocation9 + $0x1f0] sm:$0xf]
        %v9700 = vld [vmem:[#allocation9 + $0x1f4] sm:$0xf]
        %v9701 = vld [vmem:[#allocation9 + $0x1f8] sm:$0xf]
        %v9702 = vld [vmem:[#allocation9 + $0x1fc] sm:$0xf]
        %v9703 = vld [vmem:[#allocation9 + $0x200] sm:$0xf]
        %v9704 = vld [vmem:[#allocation9 + $0x204] sm:$0xf]
        %v9705 = vld [vmem:[#allocation9 + $0x208] sm:$0xf]
        %v9706 = vld [vmem:[#allocation9 + $0x20c] sm:$0xf]
        %v9707 = vld [vmem:[#allocation9 + $0x210] sm:$0xf]
        %v9708 = vld [vmem:[#allocation9 + $0x214] sm:$0xf]
        %v9709 = vld [vmem:[#allocation9 + $0x218] sm:$0xf]
        %v9710 = vld [vmem:[#allocation9 + $0x21c] sm:$0xf]
        %v9711 = vld [vmem:[#allocation9 + $0x220] sm:$0xf]
        %v9712 = vld [vmem:[#allocation9 + $0x224] sm:$0xf]
        %v9713 = vld [vmem:[#allocation9 + $0x228] sm:$0xf]
        %v9714 = vld [vmem:[#allocation9 + $0x22c] sm:$0xf]
        %v9715 = vld [vmem:[#allocation9 + $0x230] sm:$0xf]
        %v9716 = vld [vmem:[#allocation9 + $0x234] sm:$0xf]
        %v9717 = vld [vmem:[#allocation9 + $0x238] sm:$0xf]
        %v9718 = vld [vmem:[#allocation9 + $0x23c] sm:$0xf]
        %v9719 = vld [vmem:[%s4] sm:$0x1]
        %v9721 = vlaneseq
        %v9722 = vshrl.u32 %v9721, 7
        %v9723 = vsub.s32 0, %v9722
        %v9724 = vrot.slane %v9719, %v9723
        %v9870 = vunpack.c.l.b16 %v9575
        %v9871 = vunpack.c.l.b16 %v9576
        %v9872 = vunpack.c.l.b16 %v9577
        %v9873 = vunpack.c.l.b16 %v9578
        %v9874 = vunpack.c.l.b16 %v9579
        %v9875 = vunpack.c.l.b16 %v9580
        %v9876 = vunpack.c.l.b16 %v9581
        %v9877 = vunpack.c.l.b16 %v9582
        %v9878 = vunpack.c.l.b16 %v9583
        %v9879 = vunpack.c.l.b16 %v9584
        %v9880 = vunpack.c.l.b16 %v9585
        %v9881 = vunpack.c.l.b16 %v9586
        %v9882 = vunpack.c.l.b16 %v9587
        %v9883 = vunpack.c.l.b16 %v9588
        %v9884 = vunpack.c.l.b16 %v9589
        %v9885 = vunpack.c.l.b16 %v9590
        %v9886 = vunpack.c.l.b16 %v9591
        %v9887 = vunpack.c.l.b16 %v9592
        %v9888 = vunpack.c.l.b16 %v9593
        %v9889 = vunpack.c.l.b16 %v9594
        %v9890 = vunpack.c.l.b16 %v9595
        %v9891 = vunpack.c.l.b16 %v9596
        %v9892 = vunpack.c.l.b16 %v9597
        %v9893 = vunpack.c.l.b16 %v9598
        %v9894 = vunpack.c.l.b16 %v9599
        %v9895 = vunpack.c.l.b16 %v9600
        %v9896 = vunpack.c.l.b16 %v9601
        %v9897 = vunpack.c.l.b16 %v9602
        %v9898 = vunpack.c.l.b16 %v9603
        %v9899 = vunpack.c.l.b16 %v9604
        %v9900 = vunpack.c.l.b16 %v9605
        %v9901 = vunpack.c.l.b16 %v9606
        %v9902 = vunpack.c.l.b16 %v9607
        %v9903 = vunpack.c.l.b16 %v9608
        %v9904 = vunpack.c.l.b16 %v9609
        %v9905 = vunpack.c.l.b16 %v9610
        %v9906 = vunpack.c.l.b16 %v9611
        %v9907 = vunpack.c.l.b16 %v9612
        %v9908 = vunpack.c.l.b16 %v9613
        %v9909 = vunpack.c.l.b16 %v9614
        %v9910 = vunpack.c.l.b16 %v9615
        %v9911 = vunpack.c.l.b16 %v9616
        %v9912 = vunpack.c.l.b16 %v9617
        %v9913 = vunpack.c.l.b16 %v9618
        %v9914 = vunpack.c.l.b16 %v9619
        %v9915 = vunpack.c.l.b16 %v9620
        %v9916 = vunpack.c.l.b16 %v9621
        %v9917 = vunpack.c.l.b16 %v9622
        %v9918 = vunpack.c.l.b16 %v9623
        %v9919 = vunpack.c.l.b16 %v9624
        %v9920 = vunpack.c.l.b16 %v9625
        %v9921 = vunpack.c.l.b16 %v9626
        %v9922 = vunpack.c.l.b16 %v9627
        %v9923 = vunpack.c.l.b16 %v9628
        %v9924 = vunpack.c.l.b16 %v9629
        %v9925 = vunpack.c.l.b16 %v9630
        %v9926 = vunpack.c.l.b16 %v9631
        %v9927 = vunpack.c.l.b16 %v9632
        %v9928 = vunpack.c.l.b16 %v9633
        %v9929 = vunpack.c.l.b16 %v9634
        %v9930 = vunpack.c.l.b16 %v9635
        %v9931 = vunpack.c.l.b16 %v9636
        %v9932 = vunpack.c.l.b16 %v9637
        %v9933 = vunpack.c.l.b16 %v9638
        %v9934 = vunpack.c.l.b16 %v9639
        %v9935 = vunpack.c.l.b16 %v9640
        %v9936 = vunpack.c.l.b16 %v9641
        %v9937 = vunpack.c.l.b16 %v9642
        %v9938 = vunpack.c.l.b16 %v9643
        %v9939 = vunpack.c.l.b16 %v9644
        %v9940 = vunpack.c.l.b16 %v9645
        %v9941 = vunpack.c.l.b16 %v9646
        %v9942 = vunpack.c.l.b16 %v9647
        %v9943 = vunpack.c.l.b16 %v9648
        %v9944 = vunpack.c.l.b16 %v9649
        %v9945 = vunpack.c.l.b16 %v9650
        %v9946 = vunpack.c.l.b16 %v9651
        %v9947 = vunpack.c.l.b16 %v9652
        %v9948 = vunpack.c.l.b16 %v9653
        %v9949 = vunpack.c.l.b16 %v9654
        %v9950 = vunpack.c.l.b16 %v9655
        %v9951 = vunpack.c.l.b16 %v9656
        %v9952 = vunpack.c.l.b16 %v9657
        %v9953 = vunpack.c.l.b16 %v9658
        %v9954 = vunpack.c.l.b16 %v9659
        %v9955 = vunpack.c.l.b16 %v9660
        %v9956 = vunpack.c.l.b16 %v9661
        %v9957 = vunpack.c.l.b16 %v9662
        %v9958 = vunpack.c.l.b16 %v9663
        %v9959 = vunpack.c.l.b16 %v9664
        %v9960 = vunpack.c.l.b16 %v9665
        %v9961 = vunpack.c.l.b16 %v9666
        %v9962 = vunpack.c.l.b16 %v9667
        %v9963 = vunpack.c.l.b16 %v9668
        %v9964 = vunpack.c.l.b16 %v9669
        %v9965 = vunpack.c.l.b16 %v9670
        %v9966 = vunpack.c.l.b16 %v9671
        %v9967 = vunpack.c.l.b16 %v9672
        %v9968 = vunpack.c.l.b16 %v9673
        %v9969 = vunpack.c.l.b16 %v9674
        %v9970 = vunpack.c.l.b16 %v9675
        %v9971 = vunpack.c.l.b16 %v9676
        %v9972 = vunpack.c.l.b16 %v9677
        %v9973 = vunpack.c.l.b16 %v9678
        %v9974 = vunpack.c.l.b16 %v9679
        %v9975 = vunpack.c.l.b16 %v9680
        %v9976 = vunpack.c.l.b16 %v9681
        %v9977 = vunpack.c.l.b16 %v9682
        %v9978 = vunpack.c.l.b16 %v9683
        %v9979 = vunpack.c.l.b16 %v9684
        %v9980 = vunpack.c.l.b16 %v9685
        %v9981 = vunpack.c.l.b16 %v9686
        %v9982 = vunpack.c.l.b16 %v9687
        %v9983 = vunpack.c.l.b16 %v9688
        %v9984 = vunpack.c.l.b16 %v9689
        %v9985 = vunpack.c.l.b16 %v9690
        %v9986 = vunpack.c.l.b16 %v9691
        %v9987 = vunpack.c.l.b16 %v9692
        %v9988 = vunpack.c.l.b16 %v9693
        %v9989 = vunpack.c.l.b16 %v9694
        %v9990 = vunpack.c.l.b16 %v9695
        %v9991 = vunpack.c.l.b16 %v9696
        %v9992 = vunpack.c.l.b16 %v9697
        %v9993 = vunpack.c.l.b16 %v9698
        %v9994 = vunpack.c.l.b16 %v9699
        %v9995 = vunpack.c.l.b16 %v9700
        %v9996 = vunpack.c.l.b16 %v9701
        %v9997 = vunpack.c.l.b16 %v9702
        %v9998 = vunpack.c.l.b16 %v9703
        %v9999 = vunpack.c.l.b16 %v9704
        %v10000 = vunpack.c.l.b16 %v9705
        %v10001 = vunpack.c.l.b16 %v9706
        %v10002 = vunpack.c.l.b16 %v9707
        %v10003 = vunpack.c.l.b16 %v9708
        %v10004 = vunpack.c.l.b16 %v9709
        %v10005 = vunpack.c.l.b16 %v9710
        %v10006 = vunpack.c.l.b16 %v9711
        %v10007 = vunpack.c.l.b16 %v9712
        %v10008 = vunpack.c.l.b16 %v9713
        %v10009 = vunpack.c.l.b16 %v9714
        %v10010 = vunpack.c.l.b16 %v9715
        %v10011 = vunpack.c.l.b16 %v9716
        %v10012 = vunpack.c.l.b16 %v9717
        %v10013 = vunpack.c.l.b16 %v9718
        %v10014 = vpack.c.b16 %v9871, %v9870
        %v10015 = vpack.c.b16 %v9873, %v9872
        %v10016 = vpack.c.b16 %v9875, %v9874
        %v10017 = vpack.c.b16 %v9877, %v9876
        %v10018 = vpack.c.b16 %v9879, %v9878
        %v10019 = vpack.c.b16 %v9881, %v9880
        %v10020 = vpack.c.b16 %v9883, %v9882
        %v10021 = vpack.c.b16 %v9885, %v9884
        %v10022 = vpack.c.b16 %v9887, %v9886
        %v10023 = vpack.c.b16 %v9889, %v9888
        %v10024 = vpack.c.b16 %v9891, %v9890
        %v10025 = vpack.c.b16 %v9893, %v9892
        %v10026 = vpack.c.b16 %v9895, %v9894
        %v10027 = vpack.c.b16 %v9897, %v9896
        %v10028 = vpack.c.b16 %v9899, %v9898
        %v10029 = vpack.c.b16 %v9901, %v9900
        %v10030 = vpack.c.b16 %v9903, %v9902
        %v10031 = vpack.c.b16 %v9905, %v9904
        %v10032 = vpack.c.b16 %v9907, %v9906
        %v10033 = vpack.c.b16 %v9909, %v9908
        %v10034 = vpack.c.b16 %v9911, %v9910
        %v10035 = vpack.c.b16 %v9913, %v9912
        %v10036 = vpack.c.b16 %v9915, %v9914
        %v10037 = vpack.c.b16 %v9917, %v9916
        %v10038 = vpack.c.b16 %v9919, %v9918
        %v10039 = vpack.c.b16 %v9921, %v9920
        %v10040 = vpack.c.b16 %v9923, %v9922
        %v10041 = vpack.c.b16 %v9925, %v9924
        %v10042 = vpack.c.b16 %v9927, %v9926
        %v10043 = vpack.c.b16 %v9929, %v9928
        %v10044 = vpack.c.b16 %v9931, %v9930
        %v10045 = vpack.c.b16 %v9933, %v9932
        %v10046 = vpack.c.b16 %v9935, %v9934
        %v10047 = vpack.c.b16 %v9937, %v9936
        %v10048 = vpack.c.b16 %v9939, %v9938
        %v10049 = vpack.c.b16 %v9941, %v9940
        %v10050 = vpack.c.b16 %v9943, %v9942
        %v10051 = vpack.c.b16 %v9945, %v9944
        %v10052 = vpack.c.b16 %v9947, %v9946
        %v10053 = vpack.c.b16 %v9949, %v9948
        %v10054 = vpack.c.b16 %v9951, %v9950
        %v10055 = vpack.c.b16 %v9953, %v9952
        %v10056 = vpack.c.b16 %v9955, %v9954
        %v10057 = vpack.c.b16 %v9957, %v9956
        %v10058 = vpack.c.b16 %v9959, %v9958
        %v10059 = vpack.c.b16 %v9961, %v9960
        %v10060 = vpack.c.b16 %v9963, %v9962
        %v10061 = vpack.c.b16 %v9965, %v9964
        %v10062 = vpack.c.b16 %v9967, %v9966
        %v10063 = vpack.c.b16 %v9969, %v9968
        %v10064 = vpack.c.b16 %v9971, %v9970
        %v10065 = vpack.c.b16 %v9973, %v9972
        %v10066 = vpack.c.b16 %v9975, %v9974
        %v10067 = vpack.c.b16 %v9977, %v9976
        %v10068 = vpack.c.b16 %v9979, %v9978
        %v10069 = vpack.c.b16 %v9981, %v9980
        %v10070 = vpack.c.b16 %v9983, %v9982
        %v10071 = vpack.c.b16 %v9985, %v9984
        %v10072 = vpack.c.b16 %v9987, %v9986
        %v10073 = vpack.c.b16 %v9989, %v9988
        %v10074 = vpack.c.b16 %v9991, %v9990
        %v10075 = vpack.c.b16 %v9993, %v9992
        %v10076 = vpack.c.b16 %v9995, %v9994
        %v10077 = vpack.c.b16 %v9997, %v9996
        %v10078 = vpack.c.b16 %v9999, %v9998
        %v10079 = vpack.c.b16 %v10001, %v10000
        %v10080 = vpack.c.b16 %v10003, %v10002
        %v10081 = vpack.c.b16 %v10005, %v10004
        %v10082 = vpack.c.b16 %v10007, %v10006
        %v10083 = vpack.c.b16 %v10009, %v10008
        %v10084 = vpack.c.b16 %v10011, %v10010
        %v10085 = vpack.c.b16 %v10013, %v10012
        %10158 = vmatprep.subr.bf16.mxu0 0
        %10159 = vmatpush1.bf16.msra.mxu0 %v10014
        %10160 = vmatprep.subr.bf16.mxu0 0
        %10161 = vmatpush1.bf16.msra.mxu0 %v10015
        %10162 = vmatprep.subr.bf16.mxu0 0
        %10163 = vmatpush1.bf16.msra.mxu0 %v10016
        %10164 = vmatprep.subr.bf16.mxu0 0
        %10165 = vmatpush1.bf16.msra.mxu0 %v10017
        %10166 = vmatprep.subr.bf16.mxu0 0
        %10167 = vmatpush1.bf16.msra.mxu0 %v10018
        %10168 = vmatprep.subr.bf16.mxu0 0
        %10169 = vmatpush1.bf16.msra.mxu0 %v10019
        %10170 = vmatprep.subr.bf16.mxu0 0
        %10171 = vmatpush1.bf16.msra.mxu0 %v10020
        %10172 = vmatprep.subr.bf16.mxu0 0
        %10173 = vmatpush1.bf16.msra.mxu0 %v10021
        %10174 = vmatprep.subr.bf16.mxu0 0
        %10175 = vmatpush1.bf16.msra.mxu0 %v10022
        %10176 = vmatprep.subr.bf16.mxu0 0
        %10177 = vmatpush1.bf16.msra.mxu0 %v10023
        %10178 = vmatprep.subr.bf16.mxu0 0
        %10179 = vmatpush1.bf16.msra.mxu0 %v10024
        %10180 = vmatprep.subr.bf16.mxu0 0
        %10181 = vmatpush1.bf16.msra.mxu0 %v10025
        %10182 = vmatprep.subr.bf16.mxu0 0
        %10183 = vmatpush1.bf16.msra.mxu0 %v10026
        %10184 = vmatprep.subr.bf16.mxu0 0
        %10185 = vmatpush1.bf16.msra.mxu0 %v10027
        %10186 = vmatprep.subr.bf16.mxu0 0
        %10187 = vmatpush1.bf16.msra.mxu0 %v10028
        %10188 = vmatprep.subr.bf16.mxu0 0
        %10189 = vmatpush1.bf16.msra.mxu0 %v10029
        %10190 = vmatprep.mubr.bf16.mxu0 %v9360
        %10191 = vmatmul.mubr.bf16.gmra.mrb[0].mxu0 %v9359
        %v10192 = vpop.f32.mrb[0].mxu0
        %v10193 = vadd.f32 %v9724, %v10192
        %v10194 = vpop.f32.mrb[0].mxu0
        %v10195 = vpop.f32.mrb[0].mxu0
        %v10196 = vadd.f32 %v9724, %v10195
        %v10197 = vpop.f32.mrb[0].mxu0
        %10198 = vmatprep.mubr.bf16.mxu0 %v9369
        %10199 = vmatmul.mubr.bf16.gmra.mrb[0].mxu0 %v9368
        %v10200 = vpop.f32.mrb[0].mxu0
        %v10201 = vadd.f32 %v9724, %v10200
        %v10202 = vpop.f32.mrb[0].mxu0
        %v10203 = vpop.f32.mrb[0].mxu0
        %v10204 = vadd.f32 %v9724, %v10203
        %v10205 = vpop.f32.mrb[0].mxu0
        %10206 = vmatprep.mubr.bf16.mxu0 %v9378
        %10207 = vmatmul.mubr.bf16.gmra.mrb[0].mxu0 %v9377
        %v10208 = vpop.f32.mrb[0].mxu0
        %v10209 = vadd.f32 %v9724, %v10208
        %v10210 = vpop.f32.mrb[0].mxu0
        %v10211 = vpop.f32.mrb[0].mxu0
        %v10212 = vadd.f32 %v9724, %v10211
        %v10213 = vpop.f32.mrb[0].mxu0
        %10214 = vmatprep.mubr.bf16.mxu0 %v9387
        %10215 = vmatmul.mubr.bf16.gmra.mrb[0].mxu0 %v9386
        %v10216 = vpop.f32.mrb[0].mxu0
        %v10217 = vadd.f32 %v9724, %v10216
        %v10218 = vpop.f32.mrb[0].mxu0
        %v10219 = vpop.f32.mrb[0].mxu0
        %v10220 = vadd.f32 %v9724, %v10219
        %v10221 = vpop.f32.mrb[0].mxu0
        %10222 = vmatprep.mubr.bf16.mxu0 %v9396
        %10223 = vmatmul.mubr.bf16.gmra.mrb[0].mxu0 %v9395
        %v10224 = vpop.f32.mrb[0].mxu0
        %v10225 = vadd.f32 %v9724, %v10224
        %v10226 = vpop.f32.mrb[0].mxu0
        %v10227 = vpop.f32.mrb[0].mxu0
        %v10228 = vadd.f32 %v9724, %v10227
        %v10229 = vpop.f32.mrb[0].mxu0
        %10230 = vmatprep.mubr.bf16.mxu0 %v9405
        %10231 = vmatmul.mubr.bf16.gmra.mrb[0].mxu0 %v9404
        %v10232 = vpop.f32.mrb[0].mxu0
        %v10233 = vadd.f32 %v9724, %v10232
        %v10234 = vpop.f32.mrb[0].mxu0
        %v10235 = vpop.f32.mrb[0].mxu0
        %v10236 = vadd.f32 %v9724, %v10235
        %v10237 = vpop.f32.mrb[0].mxu0
        %10238 = vmatprep.mubr.bf16.mxu0 %v9414
        %10239 = vmatmul.mubr.bf16.gmra.mrb[0].mxu0 %v9413
        %v10240 = vpop.f32.mrb[0].mxu0
        %v10241 = vadd.f32 %v9724, %v10240
        %v10242 = vpop.f32.mrb[0].mxu0
        %v10243 = vpop.f32.mrb[0].mxu0
        %v10244 = vadd.f32 %v9724, %v10243
        %v10245 = vpop.f32.mrb[0].mxu0
        %10246 = vmatprep.mubr.bf16.mxu0 %v9423
        %10247 = vmatmul.mubr.bf16.gmra.mrb[0].mxu0 %v9422
        %v10248 = vpop.f32.mrb[0].mxu0
        %v10249 = vadd.f32 %v9724, %v10248
        %v10250 = vpop.f32.mrb[0].mxu0
        %v10251 = vpop.f32.mrb[0].mxu0
        %v10252 = vadd.f32 %v9724, %v10251
        %v10253 = vpop.f32.mrb[0].mxu0
        %10254 = vmatprep.mubr.bf16.mxu0 %v9432
        %10255 = vmatmul.mubr.bf16.gmra.mrb[0].mxu0 %v9431
        %v10256 = vpop.f32.mrb[0].mxu0
        %v10257 = vadd.f32 %v9724, %v10256
        %v10258 = vpop.f32.mrb[0].mxu0
        %v10259 = vpop.f32.mrb[0].mxu0
        %v10260 = vadd.f32 %v9724, %v10259
        %v10261 = vpop.f32.mrb[0].mxu0
        %10262 = vmatprep.mubr.bf16.mxu0 %v9441
        %10263 = vmatmul.mubr.bf16.gmra.mrb[0].mxu0 %v9440
        %v10264 = vpop.f32.mrb[0].mxu0
        %v10265 = vadd.f32 %v9724, %v10264
        %v10266 = vpop.f32.mrb[0].mxu0
        %v10267 = vpop.f32.mrb[0].mxu0
        %v10268 = vadd.f32 %v9724, %v10267
        %v10269 = vpop.f32.mrb[0].mxu0
        %10270 = vmatprep.mubr.bf16.mxu0 %v9450
        %10271 = vmatmul.mubr.bf16.gmra.mrb[0].mxu0 %v9449
        %v10272 = vpop.f32.mrb[0].mxu0
        %v10273 = vadd.f32 %v9724, %v10272
        %v10274 = vpop.f32.mrb[0].mxu0
        %v10275 = vpop.f32.mrb[0].mxu0
        %v10276 = vadd.f32 %v9724, %v10275
        %v10277 = vpop.f32.mrb[0].mxu0
        %10278 = vmatprep.mubr.bf16.mxu0 %v9459
        %10279 = vmatmul.mubr.bf16.gmra.mrb[0].mxu0 %v9458
        %v10280 = vpop.f32.mrb[0].mxu0
        %v10281 = vadd.f32 %v9724, %v10280
        %v10282 = vpop.f32.mrb[0].mxu0
        %v10283 = vpop.f32.mrb[0].mxu0
        %v10284 = vadd.f32 %v9724, %v10283
        %v10285 = vpop.f32.mrb[0].mxu0
        %10286 = vmatprep.mubr.bf16.mxu0 %v9468
        %10287 = vmatmul.mubr.bf16.gmra.mrb[0].mxu0 %v9467
        %v10288 = vpop.f32.mrb[0].mxu0
        %v10289 = vadd.f32 %v9724, %v10288
        %v10290 = vpop.f32.mrb[0].mxu0
        %v10291 = vpop.f32.mrb[0].mxu0
        %v10292 = vadd.f32 %v9724, %v10291
        %v10293 = vpop.f32.mrb[0].mxu0
        %10294 = vmatprep.mubr.bf16.mxu0 %v9477
        %10295 = vmatmul.mubr.bf16.gmra.mrb[0].mxu0 %v9476
        %v10296 = vpop.f32.mrb[0].mxu0
        %v10297 = vadd.f32 %v9724, %v10296
        %v10298 = vpop.f32.mrb[0].mxu0
        %v10299 = vpop.f32.mrb[0].mxu0
        %v10300 = vadd.f32 %v9724, %v10299
        %v10301 = vpop.f32.mrb[0].mxu0
        %10302 = vmatprep.mubr.bf16.mxu0 %v9486
        %10303 = vmatmul.mubr.bf16.gmra.mrb[0].mxu0 %v9485
        %v10304 = vpop.f32.mrb[0].mxu0
        %v10305 = vadd.f32 %v9724, %v10304
        %v10306 = vpop.f32.mrb[0].mxu0
        %v10307 = vpop.f32.mrb[0].mxu0
        %v10308 = vadd.f32 %v9724, %v10307
        %v10309 = vpop.f32.mrb[0].mxu0
        %10310 = vmatprep.mubr.bf16.mxu0 %v9495
        %10311 = vmatmul.mubr.bf16.gmra.mrb[0].mxu0 %v9494
        %v10312 = vpop.f32.mrb[0].mxu0
        %v10313 = vadd.f32 %v9724, %v10312
        %v10314 = vpop.f32.mrb[0].mxu0
        %v10315 = vpop.f32.mrb[0].mxu0
        %v10316 = vadd.f32 %v9724, %v10315
        %v10317 = vpop.f32.mrb[0].mxu0
        %10318 = vmatprep.mubr.bf16.mxu0 %v9504
        %10319 = vmatmul.mubr.bf16.gmra.mrb[0].mxu0 %v9503
        %v10320 = vpop.f32.mrb[0].mxu0
        %v10321 = vadd.f32 %v9724, %v10320
        %v10322 = vpop.f32.mrb[0].mxu0
        %v10323 = vpop.f32.mrb[0].mxu0
        %v10324 = vadd.f32 %v9724, %v10323
        %v10325 = vpop.f32.mrb[0].mxu0
        %10326 = vmatprep.mubr.bf16.mxu0 %v9513
        %10327 = vmatmul.mubr.bf16.gmra.mrb[0].mxu0 %v9512
        %v10328 = vpop.f32.mrb[0].mxu0
        %v10329 = vadd.f32 %v9724, %v10328
        %v10330 = vpop.f32.mrb[0].mxu0
        %v10331 = vpop.f32.mrb[0].mxu0
        %v10332 = vadd.f32 %v9724, %v10331
        %v10333 = vpop.f32.mrb[0].mxu0
        %10334 = vmatprep.mubr.bf16.mxu0 %v9522
        %10335 = vmatmul.mubr.bf16.gmra.mrb[0].mxu0 %v9521
        %v10336 = vpop.f32.mrb[0].mxu0
        %v10337 = vadd.f32 %v9724, %v10336
        %v10338 = vpop.f32.mrb[0].mxu0
        %v10339 = vpop.f32.mrb[0].mxu0
        %v10340 = vadd.f32 %v9724, %v10339
        %v10341 = vpop.f32.mrb[0].mxu0
        %10342 = vmatprep.mubr.bf16.mxu0 %v9531
        %10343 = vmatmul.mubr.bf16.gmra.mrb[0].mxu0 %v9530
        %v10344 = vpop.f32.mrb[0].mxu0
        %v10345 = vadd.f32 %v9724, %v10344
        %v10346 = vpop.f32.mrb[0].mxu0
        %v10347 = vpop.f32.mrb[0].mxu0
        %v10348 = vadd.f32 %v9724, %v10347
        %v10349 = vpop.f32.mrb[0].mxu0
        %10350 = vmatprep.mubr.bf16.mxu0 %v9540
        %10351 = vmatmul.mubr.bf16.gmra.mrb[0].mxu0 %v9539
        %v10352 = vpop.f32.mrb[0].mxu0
        %v10353 = vadd.f32 %v9724, %v10352
        %v10354 = vpop.f32.mrb[0].mxu0
        %v10355 = vpop.f32.mrb[0].mxu0
        %v10356 = vadd.f32 %v9724, %v10355
        %v10357 = vpop.f32.mrb[0].mxu0
        %10358 = vmatprep.mubr.bf16.mxu0 %v9549
        %10359 = vmatmul.mubr.bf16.gmra.mrb[0].mxu0 %v9548
        %v10360 = vpop.f32.mrb[0].mxu0
        %v10361 = vadd.f32 %v9724, %v10360
        %v10362 = vpop.f32.mrb[0].mxu0
        %v10363 = vpop.f32.mrb[0].mxu0
        %v10364 = vadd.f32 %v9724, %v10363
        %v10365 = vpop.f32.mrb[0].mxu0
        %10366 = vmatprep.mubr.bf16.mxu0 %v9558
        %10367 = vmatmul.mubr.bf16.gmra.mrb[0].mxu0 %v9557
        %v10368 = vpop.f32.mrb[0].mxu0
        %v10369 = vadd.f32 %v9724, %v10368
        %v10370 = vpop.f32.mrb[0].mxu0
        %v10371 = vpop.f32.mrb[0].mxu0
        %v10372 = vadd.f32 %v9724, %v10371
        %v10373 = vpop.f32.mrb[0].mxu0
        %10374 = vmatprep.mubr.bf16.mxu0 %v9567
        %10375 = vmatmul.mubr.bf16.gmra.mrb[0].mxu0 %v9566
        %v10376 = vpop.f32.mrb[0].mxu0
        %v10377 = vadd.f32 %v9724, %v10376
        %v10378 = vpop.f32.mrb[0].mxu0
        %v10379 = vpop.f32.mrb[0].mxu0
        %v10380 = vadd.f32 %v9724, %v10379
        %v10381 = vpop.f32.mrb[0].mxu0
        %10382 = vdwg.mxu0
        %10383 = vmatprep.subr.bf16.mxu0 0
        %10384 = vmatpush1.bf16.msra.mxu0 %v10030
        %10385 = vmatprep.subr.bf16.mxu0 0
        %10386 = vmatpush1.bf16.msra.mxu0 %v10031
        %10387 = vmatprep.subr.bf16.mxu0 0
        %10388 = vmatpush1.bf16.msra.mxu0 %v10032
        %10389 = vmatprep.subr.bf16.mxu0 0
        %10390 = vmatpush1.bf16.msra.mxu0 %v10033
        %10391 = vmatprep.subr.bf16.mxu0 0
        %10392 = vmatpush1.bf16.msra.mxu0 %v10034
        %10393 = vmatprep.subr.bf16.mxu0 0
        %10394 = vmatpush1.bf16.msra.mxu0 %v10035
        %10395 = vmatprep.subr.bf16.mxu0 0
        %10396 = vmatpush1.bf16.msra.mxu0 %v10036
        %10397 = vmatprep.subr.bf16.mxu0 0
        %10398 = vmatpush1.bf16.msra.mxu0 %v10037
        %10399 = vmatprep.subr.bf16.mxu0 0
        %10400 = vmatpush1.bf16.msra.mxu0 %v10038
        %10401 = vmatprep.subr.bf16.mxu0 0
        %10402 = vmatpush1.bf16.msra.mxu0 %v10039
        %10403 = vmatprep.subr.bf16.mxu0 0
        %10404 = vmatpush1.bf16.msra.mxu0 %v10040
        %10405 = vmatprep.subr.bf16.mxu0 0
        %10406 = vmatpush1.bf16.msra.mxu0 %v10041
        %10407 = vmatprep.subr.bf16.mxu0 0
        %10408 = vmatpush1.bf16.msra.mxu0 %v10042
        %10409 = vmatprep.subr.bf16.mxu0 0
        %10410 = vmatpush1.bf16.msra.mxu0 %v10043
        %10411 = vmatprep.subr.bf16.mxu0 0
        %10412 = vmatpush1.bf16.msra.mxu0 %v10044
        %10413 = vmatprep.subr.bf16.mxu0 0
        %10414 = vmatpush1.bf16.msra.mxu0 %v10045
        %10415 = vmatprep.mubr.bf16.mxu0 %v9362
        %10416 = vmatmul.mubr.bf16.gmra.mrb[0].mxu0 %v9361
        %v10417 = vpop.f32.mrb[0].mxu0
        %v10418 = vadd.f32 %v10193, %v10417
        %v10419 = vpop.f32.mrb[0].mxu0
        %v10420 = vpop.f32.mrb[0].mxu0
        %v10421 = vadd.f32 %v10196, %v10420
        %v10422 = vpop.f32.mrb[0].mxu0
        %10423 = vmatprep.mubr.bf16.mxu0 %v9371
        %10424 = vmatmul.mubr.bf16.gmra.mrb[0].mxu0 %v9370
        %v10425 = vpop.f32.mrb[0].mxu0
        %v10426 = vadd.f32 %v10201, %v10425
        %v10427 = vpop.f32.mrb[0].mxu0
        %v10428 = vpop.f32.mrb[0].mxu0
        %v10429 = vadd.f32 %v10204, %v10428
        %v10430 = vpop.f32.mrb[0].mxu0
        %10431 = vmatprep.mubr.bf16.mxu0 %v9380
        %10432 = vmatmul.mubr.bf16.gmra.mrb[0].mxu0 %v9379
        %v10433 = vpop.f32.mrb[0].mxu0
        %v10434 = vadd.f32 %v10209, %v10433
        %v10435 = vpop.f32.mrb[0].mxu0
        %v10436 = vpop.f32.mrb[0].mxu0
        %v10437 = vadd.f32 %v10212, %v10436
        %v10438 = vpop.f32.mrb[0].mxu0
        %10439 = vmatprep.mubr.bf16.mxu0 %v9389
        %10440 = vmatmul.mubr.bf16.gmra.mrb[0].mxu0 %v9388
        %v10441 = vpop.f32.mrb[0].mxu0
        %v10442 = vadd.f32 %v10217, %v10441
        %v10443 = vpop.f32.mrb[0].mxu0
        %v10444 = vpop.f32.mrb[0].mxu0
        %v10445 = vadd.f32 %v10220, %v10444
        %v10446 = vpop.f32.mrb[0].mxu0
        %10447 = vmatprep.mubr.bf16.mxu0 %v9398
        %10448 = vmatmul.mubr.bf16.gmra.mrb[0].mxu0 %v9397
        %v10449 = vpop.f32.mrb[0].mxu0
        %v10450 = vadd.f32 %v10225, %v10449
        %v10451 = vpop.f32.mrb[0].mxu0
        %v10452 = vpop.f32.mrb[0].mxu0
        %v10453 = vadd.f32 %v10228, %v10452
        %v10454 = vpop.f32.mrb[0].mxu0
        %10455 = vmatprep.mubr.bf16.mxu0 %v9407
        %10456 = vmatmul.mubr.bf16.gmra.mrb[0].mxu0 %v9406
        %v10457 = vpop.f32.mrb[0].mxu0
        %v10458 = vadd.f32 %v10233, %v10457
        %v10459 = vpop.f32.mrb[0].mxu0
        %v10460 = vpop.f32.mrb[0].mxu0
        %v10461 = vadd.f32 %v10236, %v10460
        %v10462 = vpop.f32.mrb[0].mxu0
        %10463 = vmatprep.mubr.bf16.mxu0 %v9416
        %10464 = vmatmul.mubr.bf16.gmra.mrb[0].mxu0 %v9415
        %v10465 = vpop.f32.mrb[0].mxu0
        %v10466 = vadd.f32 %v10241, %v10465
        %v10467 = vpop.f32.mrb[0].mxu0
        %v10468 = vpop.f32.mrb[0].mxu0
        %v10469 = vadd.f32 %v10244, %v10468
        %v10470 = vpop.f32.mrb[0].mxu0
        %10471 = vmatprep.mubr.bf16.mxu0 %v9425
        %10472 = vmatmul.mubr.bf16.gmra.mrb[0].mxu0 %v9424
        %v10473 = vpop.f32.mrb[0].mxu0
        %v10474 = vadd.f32 %v10249, %v10473
        %v10475 = vpop.f32.mrb[0].mxu0
        %v10476 = vpop.f32.mrb[0].mxu0
        %v10477 = vadd.f32 %v10252, %v10476
        %v10478 = vpop.f32.mrb[0].mxu0
        %10479 = vmatprep.mubr.bf16.mxu0 %v9434
        %10480 = vmatmul.mubr.bf16.gmra.mrb[0].mxu0 %v9433
        %v10481 = vpop.f32.mrb[0].mxu0
        %v10482 = vadd.f32 %v10257, %v10481
        %v10483 = vpop.f32.mrb[0].mxu0
        %v10484 = vpop.f32.mrb[0].mxu0
        %v10485 = vadd.f32 %v10260, %v10484
        %v10486 = vpop.f32.mrb[0].mxu0
        %10487 = vmatprep.mubr.bf16.mxu0 %v9443
        %10488 = vmatmul.mubr.bf16.gmra.mrb[0].mxu0 %v9442
        %v10489 = vpop.f32.mrb[0].mxu0
        %v10490 = vadd.f32 %v10265, %v10489
        %v10491 = vpop.f32.mrb[0].mxu0
        %v10492 = vpop.f32.mrb[0].mxu0
        %v10493 = vadd.f32 %v10268, %v10492
        %v10494 = vpop.f32.mrb[0].mxu0
        %10495 = vmatprep.mubr.bf16.mxu0 %v9452
        %10496 = vmatmul.mubr.bf16.gmra.mrb[0].mxu0 %v9451
        %v10497 = vpop.f32.mrb[0].mxu0
        %v10498 = vadd.f32 %v10273, %v10497
        %v10499 = vpop.f32.mrb[0].mxu0
        %v10500 = vpop.f32.mrb[0].mxu0
        %v10501 = vadd.f32 %v10276, %v10500
        %v10502 = vpop.f32.mrb[0].mxu0
        %10503 = vmatprep.mubr.bf16.mxu0 %v9461
        %10504 = vmatmul.mubr.bf16.gmra.mrb[0].mxu0 %v9460
        %v10505 = vpop.f32.mrb[0].mxu0
        %v10506 = vadd.f32 %v10281, %v10505
        %v10507 = vpop.f32.mrb[0].mxu0
        %v10508 = vpop.f32.mrb[0].mxu0
        %v10509 = vadd.f32 %v10284, %v10508
        %v10510 = vpop.f32.mrb[0].mxu0
        %10511 = vmatprep.mubr.bf16.mxu0 %v9470
        %10512 = vmatmul.mubr.bf16.gmra.mrb[0].mxu0 %v9469
        %v10513 = vpop.f32.mrb[0].mxu0
        %v10514 = vadd.f32 %v10289, %v10513
        %v10515 = vpop.f32.mrb[0].mxu0
        %v10516 = vpop.f32.mrb[0].mxu0
        %v10517 = vadd.f32 %v10292, %v10516
        %v10518 = vpop.f32.mrb[0].mxu0
        %10519 = vmatprep.mubr.bf16.mxu0 %v9479
        %10520 = vmatmul.mubr.bf16.gmra.mrb[0].mxu0 %v9478
        %v10521 = vpop.f32.mrb[0].mxu0
        %v10522 = vadd.f32 %v10297, %v10521
        %v10523 = vpop.f32.mrb[0].mxu0
        %v10524 = vpop.f32.mrb[0].mxu0
        %v10525 = vadd.f32 %v10300, %v10524
        %v10526 = vpop.f32.mrb[0].mxu0
        %10527 = vmatprep.mubr.bf16.mxu0 %v9488
        %10528 = vmatmul.mubr.bf16.gmra.mrb[0].mxu0 %v9487
        %v10529 = vpop.f32.mrb[0].mxu0
        %v10530 = vadd.f32 %v10305, %v10529
        %v10531 = vpop.f32.mrb[0].mxu0
        %v10532 = vpop.f32.mrb[0].mxu0
        %v10533 = vadd.f32 %v10308, %v10532
        %v10534 = vpop.f32.mrb[0].mxu0
        %10535 = vmatprep.mubr.bf16.mxu0 %v9497
        %10536 = vmatmul.mubr.bf16.gmra.mrb[0].mxu0 %v9496
        %v10537 = vpop.f32.mrb[0].mxu0
        %v10538 = vadd.f32 %v10313, %v10537
        %v10539 = vpop.f32.mrb[0].mxu0
        %v10540 = vpop.f32.mrb[0].mxu0
        %v10541 = vadd.f32 %v10316, %v10540
        %v10542 = vpop.f32.mrb[0].mxu0
        %10543 = vmatprep.mubr.bf16.mxu0 %v9506
        %10544 = vmatmul.mubr.bf16.gmra.mrb[0].mxu0 %v9505
        %v10545 = vpop.f32.mrb[0].mxu0
        %v10546 = vadd.f32 %v10321, %v10545
        %v10547 = vpop.f32.mrb[0].mxu0
        %v10548 = vpop.f32.mrb[0].mxu0
        %v10549 = vadd.f32 %v10324, %v10548
        %v10550 = vpop.f32.mrb[0].mxu0
        %10551 = vmatprep.mubr.bf16.mxu0 %v9515
        %10552 = vmatmul.mubr.bf16.gmra.mrb[0].mxu0 %v9514
        %v10553 = vpop.f32.mrb[0].mxu0
        %v10554 = vadd.f32 %v10329, %v10553
        %v10555 = vpop.f32.mrb[0].mxu0
        %v10556 = vpop.f32.mrb[0].mxu0
        %v10557 = vadd.f32 %v10332, %v10556
        %v10558 = vpop.f32.mrb[0].mxu0
        %10559 = vmatprep.mubr.bf16.mxu0 %v9524
        %10560 = vmatmul.mubr.bf16.gmra.mrb[0].mxu0 %v9523
        %v10561 = vpop.f32.mrb[0].mxu0
        %v10562 = vadd.f32 %v10337, %v10561
        %v10563 = vpop.f32.mrb[0].mxu0
        %v10564 = vpop.f32.mrb[0].mxu0
        %v10565 = vadd.f32 %v10340, %v10564
        %v10566 = vpop.f32.mrb[0].mxu0
        %10567 = vmatprep.mubr.bf16.mxu0 %v9533
        %10568 = vmatmul.mubr.bf16.gmra.mrb[0].mxu0 %v9532
        %v10569 = vpop.f32.mrb[0].mxu0
        %v10570 = vadd.f32 %v10345, %v10569
        %v10571 = vpop.f32.mrb[0].mxu0
        %v10572 = vpop.f32.mrb[0].mxu0
        %v10573 = vadd.f32 %v10348, %v10572
        %v10574 = vpop.f32.mrb[0].mxu0
        %10575 = vmatprep.mubr.bf16.mxu0 %v9542
        %10576 = vmatmul.mubr.bf16.gmra.mrb[0].mxu0 %v9541
        %v10577 = vpop.f32.mrb[0].mxu0
        %v10578 = vadd.f32 %v10353, %v10577
        %v10579 = vpop.f32.mrb[0].mxu0
        %v10580 = vpop.f32.mrb[0].mxu0
        %v10581 = vadd.f32 %v10356, %v10580
        %v10582 = vpop.f32.mrb[0].mxu0
        %10583 = vmatprep.mubr.bf16.mxu0 %v9551
        %10584 = vmatmul.mubr.bf16.gmra.mrb[0].mxu0 %v9550
        %v10585 = vpop.f32.mrb[0].mxu0
        %v10586 = vadd.f32 %v10361, %v10585
        %v10587 = vpop.f32.mrb[0].mxu0
        %v10588 = vpop.f32.mrb[0].mxu0
        %v10589 = vadd.f32 %v10364, %v10588
        %v10590 = vpop.f32.mrb[0].mxu0
        %10591 = vmatprep.mubr.bf16.mxu0 %v9560
        %10592 = vmatmul.mubr.bf16.gmra.mrb[0].mxu0 %v9559
        %v10593 = vpop.f32.mrb[0].mxu0
        %v10594 = vadd.f32 %v10369, %v10593
        %v10595 = vpop.f32.mrb[0].mxu0
        %v10596 = vpop.f32.mrb[0].mxu0
        %v10597 = vadd.f32 %v10372, %v10596
        %v10598 = vpop.f32.mrb[0].mxu0
        %10599 = vmatprep.mubr.bf16.mxu0 %v9569
        %10600 = vmatmul.mubr.bf16.gmra.mrb[0].mxu0 %v9568
        %v10601 = vpop.f32.mrb[0].mxu0
        %v10602 = vadd.f32 %v10377, %v10601
        %v10603 = vpop.f32.mrb[0].mxu0
        %v10604 = vpop.f32.mrb[0].mxu0
        %v10605 = vadd.f32 %v10380, %v10604
        %v10606 = vpop.f32.mrb[0].mxu0
        %10607 = vdwg.mxu0
        %10608 = vmatprep.subr.bf16.mxu0 0
        %10609 = vmatpush1.bf16.msra.mxu0 %v10046
        %10610 = vmatprep.subr.bf16.mxu0 0
        %10611 = vmatpush1.bf16.msra.mxu0 %v10047
        %10612 = vmatprep.subr.bf16.mxu0 0
        %10613 = vmatpush1.bf16.msra.mxu0 %v10048
        %10614 = vmatprep.subr.bf16.mxu0 0
        %10615 = vmatpush1.bf16.msra.mxu0 %v10049
        %10616 = vmatprep.subr.bf16.mxu0 0
        %10617 = vmatpush1.bf16.msra.mxu0 %v10050
        %10618 = vmatprep.subr.bf16.mxu0 0
        %10619 = vmatpush1.bf16.msra.mxu0 %v10051
        %10620 = vmatprep.subr.bf16.mxu0 0
        %10621 = vmatpush1.bf16.msra.mxu0 %v10052
        %10622 = vmatprep.subr.bf16.mxu0 0
        %10623 = vmatpush1.bf16.msra.mxu0 %v10053
        %10624 = vmatprep.subr.bf16.mxu0 0
        %10625 = vmatpush1.bf16.msra.mxu0 %v10054
        %10626 = vmatprep.subr.bf16.mxu0 0
        %10627 = vmatpush1.bf16.msra.mxu0 %v10055
        %10628 = vmatprep.subr.bf16.mxu0 0
        %10629 = vmatpush1.bf16.msra.mxu0 %v10056
        %10630 = vmatprep.subr.bf16.mxu0 0
        %10631 = vmatpush1.bf16.msra.mxu0 %v10057
        %10632 = vmatprep.subr.bf16.mxu0 0
        %10633 = vmatpush1.bf16.msra.mxu0 %v10058
        %10634 = vmatprep.subr.bf16.mxu0 0
        %10635 = vmatpush1.bf16.msra.mxu0 %v10059
        %10636 = vmatprep.subr.bf16.mxu0 0
        %10637 = vmatpush1.bf16.msra.mxu0 %v10060
        %10638 = vmatprep.subr.bf16.mxu0 0
        %10639 = vmatpush1.bf16.msra.mxu0 %v10061
        %10640 = vmatprep.mubr.bf16.mxu0 %v9364
        %10641 = vmatmul.mubr.bf16.gmra.mrb[0].mxu0 %v9363
        %v10642 = vpop.f32.mrb[0].mxu0
        %v10643 = vadd.f32 %v10418, %v10642
        %v10644 = vpop.f32.mrb[0].mxu0
        %v10645 = vpop.f32.mrb[0].mxu0
        %v10646 = vadd.f32 %v10421, %v10645
        %v10647 = vpop.f32.mrb[0].mxu0
        %10648 = vmatprep.mubr.bf16.mxu0 %v9373
        %10649 = vmatmul.mubr.bf16.gmra.mrb[0].mxu0 %v9372
        %v10650 = vpop.f32.mrb[0].mxu0
        %v10651 = vadd.f32 %v10426, %v10650
        %v10652 = vpop.f32.mrb[0].mxu0
        %v10653 = vpop.f32.mrb[0].mxu0
        %v10654 = vadd.f32 %v10429, %v10653
        %v10655 = vpop.f32.mrb[0].mxu0
        %10656 = vmatprep.mubr.bf16.mxu0 %v9382
        %10657 = vmatmul.mubr.bf16.gmra.mrb[0].mxu0 %v9381
        %v10658 = vpop.f32.mrb[0].mxu0
        %v10659 = vadd.f32 %v10434, %v10658
        %v10660 = vpop.f32.mrb[0].mxu0
        %v10661 = vpop.f32.mrb[0].mxu0
        %v10662 = vadd.f32 %v10437, %v10661
        %v10663 = vpop.f32.mrb[0].mxu0
        %10664 = vmatprep.mubr.bf16.mxu0 %v9391
        %10665 = vmatmul.mubr.bf16.gmra.mrb[0].mxu0 %v9390
        %v10666 = vpop.f32.mrb[0].mxu0
        %v10667 = vadd.f32 %v10442, %v10666
        %v10668 = vpop.f32.mrb[0].mxu0
        %v10669 = vpop.f32.mrb[0].mxu0
        %v10670 = vadd.f32 %v10445, %v10669
        %v10671 = vpop.f32.mrb[0].mxu0
        %10672 = vmatprep.mubr.bf16.mxu0 %v9400
        %10673 = vmatmul.mubr.bf16.gmra.mrb[0].mxu0 %v9399
        %v10674 = vpop.f32.mrb[0].mxu0
        %v10675 = vadd.f32 %v10450, %v10674
        %v10676 = vpop.f32.mrb[0].mxu0
        %v10677 = vpop.f32.mrb[0].mxu0
        %v10678 = vadd.f32 %v10453, %v10677
        %v10679 = vpop.f32.mrb[0].mxu0
        %10680 = vmatprep.mubr.bf16.mxu0 %v9409
        %10681 = vmatmul.mubr.bf16.gmra.mrb[0].mxu0 %v9408
        %v10682 = vpop.f32.mrb[0].mxu0
        %v10683 = vadd.f32 %v10458, %v10682
        %v10684 = vpop.f32.mrb[0].mxu0
        %v10685 = vpop.f32.mrb[0].mxu0
        %v10686 = vadd.f32 %v10461, %v10685
        %v10687 = vpop.f32.mrb[0].mxu0
        %10688 = vmatprep.mubr.bf16.mxu0 %v9418
        %10689 = vmatmul.mubr.bf16.gmra.mrb[0].mxu0 %v9417
        %v10690 = vpop.f32.mrb[0].mxu0
        %v10691 = vadd.f32 %v10466, %v10690
        %v10692 = vpop.f32.mrb[0].mxu0
        %v10693 = vpop.f32.mrb[0].mxu0
        %v10694 = vadd.f32 %v10469, %v10693
        %v10695 = vpop.f32.mrb[0].mxu0
        %10696 = vmatprep.mubr.bf16.mxu0 %v9427
        %10697 = vmatmul.mubr.bf16.gmra.mrb[0].mxu0 %v9426
        %v10698 = vpop.f32.mrb[0].mxu0
        %v10699 = vadd.f32 %v10474, %v10698
        %v10700 = vpop.f32.mrb[0].mxu0
        %v10701 = vpop.f32.mrb[0].mxu0
        %v10702 = vadd.f32 %v10477, %v10701
        %v10703 = vpop.f32.mrb[0].mxu0
        %10704 = vmatprep.mubr.bf16.mxu0 %v9436
        %10705 = vmatmul.mubr.bf16.gmra.mrb[0].mxu0 %v9435
        %v10706 = vpop.f32.mrb[0].mxu0
        %v10707 = vadd.f32 %v10482, %v10706
        %v10708 = vpop.f32.mrb[0].mxu0
        %v10709 = vpop.f32.mrb[0].mxu0
        %v10710 = vadd.f32 %v10485, %v10709
        %v10711 = vpop.f32.mrb[0].mxu0
        %10712 = vmatprep.mubr.bf16.mxu0 %v9445
        %10713 = vmatmul.mubr.bf16.gmra.mrb[0].mxu0 %v9444
        %v10714 = vpop.f32.mrb[0].mxu0
        %v10715 = vadd.f32 %v10490, %v10714
        %v10716 = vpop.f32.mrb[0].mxu0
        %v10717 = vpop.f32.mrb[0].mxu0
        %v10718 = vadd.f32 %v10493, %v10717
        %v10719 = vpop.f32.mrb[0].mxu0
        %10720 = vmatprep.mubr.bf16.mxu0 %v9454
        %10721 = vmatmul.mubr.bf16.gmra.mrb[0].mxu0 %v9453
        %v10722 = vpop.f32.mrb[0].mxu0
        %v10723 = vadd.f32 %v10498, %v10722
        %v10724 = vpop.f32.mrb[0].mxu0
        %v10725 = vpop.f32.mrb[0].mxu0
        %v10726 = vadd.f32 %v10501, %v10725
        %v10727 = vpop.f32.mrb[0].mxu0
        %10728 = vmatprep.mubr.bf16.mxu0 %v9463
        %10729 = vmatmul.mubr.bf16.gmra.mrb[0].mxu0 %v9462
        %v10730 = vpop.f32.mrb[0].mxu0
        %v10731 = vadd.f32 %v10506, %v10730
        %v10732 = vpop.f32.mrb[0].mxu0
        %v10733 = vpop.f32.mrb[0].mxu0
        %v10734 = vadd.f32 %v10509, %v10733
        %v10735 = vpop.f32.mrb[0].mxu0
        %10736 = vmatprep.mubr.bf16.mxu0 %v9472
        %10737 = vmatmul.mubr.bf16.gmra.mrb[0].mxu0 %v9471
        %v10738 = vpop.f32.mrb[0].mxu0
        %v10739 = vadd.f32 %v10514, %v10738
        %v10740 = vpop.f32.mrb[0].mxu0
        %v10741 = vpop.f32.mrb[0].mxu0
        %v10742 = vadd.f32 %v10517, %v10741
        %v10743 = vpop.f32.mrb[0].mxu0
        %10744 = vmatprep.mubr.bf16.mxu0 %v9481
        %10745 = vmatmul.mubr.bf16.gmra.mrb[0].mxu0 %v9480
        %v10746 = vpop.f32.mrb[0].mxu0
        %v10747 = vadd.f32 %v10522, %v10746
        %v10748 = vpop.f32.mrb[0].mxu0
        %v10749 = vpop.f32.mrb[0].mxu0
        %v10750 = vadd.f32 %v10525, %v10749
        %v10751 = vpop.f32.mrb[0].mxu0
        %10752 = vmatprep.mubr.bf16.mxu0 %v9490
        %10753 = vmatmul.mubr.bf16.gmra.mrb[0].mxu0 %v9489
        %v10754 = vpop.f32.mrb[0].mxu0
        %v10755 = vadd.f32 %v10530, %v10754
        %v10756 = vpop.f32.mrb[0].mxu0
        %v10757 = vpop.f32.mrb[0].mxu0
        %v10758 = vadd.f32 %v10533, %v10757
        %v10759 = vpop.f32.mrb[0].mxu0
        %10760 = vmatprep.mubr.bf16.mxu0 %v9499
        %10761 = vmatmul.mubr.bf16.gmra.mrb[0].mxu0 %v9498
        %v10762 = vpop.f32.mrb[0].mxu0
        %v10763 = vadd.f32 %v10538, %v10762
        %v10764 = vpop.f32.mrb[0].mxu0
        %v10765 = vpop.f32.mrb[0].mxu0
        %v10766 = vadd.f32 %v10541, %v10765
        %v10767 = vpop.f32.mrb[0].mxu0
        %10768 = vmatprep.mubr.bf16.mxu0 %v9508
        %10769 = vmatmul.mubr.bf16.gmra.mrb[0].mxu0 %v9507
        %v10770 = vpop.f32.mrb[0].mxu0
        %v10771 = vadd.f32 %v10546, %v10770
        %v10772 = vpop.f32.mrb[0].mxu0
        %v10773 = vpop.f32.mrb[0].mxu0
        %v10774 = vadd.f32 %v10549, %v10773
        %v10775 = vpop.f32.mrb[0].mxu0
        %10776 = vmatprep.mubr.bf16.mxu0 %v9517
        %10777 = vmatmul.mubr.bf16.gmra.mrb[0].mxu0 %v9516
        %v10778 = vpop.f32.mrb[0].mxu0
        %v10779 = vadd.f32 %v10554, %v10778
        %v10780 = vpop.f32.mrb[0].mxu0
        %v10781 = vpop.f32.mrb[0].mxu0
        %v10782 = vadd.f32 %v10557, %v10781
        %v10783 = vpop.f32.mrb[0].mxu0
        %10784 = vmatprep.mubr.bf16.mxu0 %v9526
        %10785 = vmatmul.mubr.bf16.gmra.mrb[0].mxu0 %v9525
        %v10786 = vpop.f32.mrb[0].mxu0
        %v10787 = vadd.f32 %v10562, %v10786
        %v10788 = vpop.f32.mrb[0].mxu0
        %v10789 = vpop.f32.mrb[0].mxu0
        %v10790 = vadd.f32 %v10565, %v10789
        %v10791 = vpop.f32.mrb[0].mxu0
        %10792 = vmatprep.mubr.bf16.mxu0 %v9535
        %10793 = vmatmul.mubr.bf16.gmra.mrb[0].mxu0 %v9534
        %v10794 = vpop.f32.mrb[0].mxu0
        %v10795 = vadd.f32 %v10570, %v10794
        %v10796 = vpop.f32.mrb[0].mxu0
        %v10797 = vpop.f32.mrb[0].mxu0
        %v10798 = vadd.f32 %v10573, %v10797
        %v10799 = vpop.f32.mrb[0].mxu0
        %10800 = vmatprep.mubr.bf16.mxu0 %v9544
        %10801 = vmatmul.mubr.bf16.gmra.mrb[0].mxu0 %v9543
        %v10802 = vpop.f32.mrb[0].mxu0
        %v10803 = vadd.f32 %v10578, %v10802
        %v10804 = vpop.f32.mrb[0].mxu0
        %v10805 = vpop.f32.mrb[0].mxu0
        %v10806 = vadd.f32 %v10581, %v10805
        %v10807 = vpop.f32.mrb[0].mxu0
        %10808 = vmatprep.mubr.bf16.mxu0 %v9553
        %10809 = vmatmul.mubr.bf16.gmra.mrb[0].mxu0 %v9552
        %v10810 = vpop.f32.mrb[0].mxu0
        %v10811 = vadd.f32 %v10586, %v10810
        %v10812 = vpop.f32.mrb[0].mxu0
        %v10813 = vpop.f32.mrb[0].mxu0
        %v10814 = vadd.f32 %v10589, %v10813
        %v10815 = vpop.f32.mrb[0].mxu0
        %10816 = vmatprep.mubr.bf16.mxu0 %v9562
        %10817 = vmatmul.mubr.bf16.gmra.mrb[0].mxu0 %v9561
        %v10818 = vpop.f32.mrb[0].mxu0
        %v10819 = vadd.f32 %v10594, %v10818
        %v10820 = vpop.f32.mrb[0].mxu0
        %v10821 = vpop.f32.mrb[0].mxu0
        %v10822 = vadd.f32 %v10597, %v10821
        %v10823 = vpop.f32.mrb[0].mxu0
        %10824 = vmatprep.mubr.bf16.mxu0 %v9571
        %10825 = vmatmul.mubr.bf16.gmra.mrb[0].mxu0 %v9570
        %v10826 = vpop.f32.mrb[0].mxu0
        %v10827 = vadd.f32 %v10602, %v10826
        %v10828 = vpop.f32.mrb[0].mxu0
        %v10829 = vpop.f32.mrb[0].mxu0
        %v10830 = vadd.f32 %v10605, %v10829
        %v10831 = vpop.f32.mrb[0].mxu0
        %10832 = vdwg.mxu0
        %10833 = vmatprep.subr.bf16.mxu0 0
        %10834 = vmatpush1.bf16.msra.mxu0 %v10062
        %10835 = vmatprep.subr.bf16.mxu0 0
        %10836 = vmatpush1.bf16.msra.mxu0 %v10063
        %10837 = vmatprep.subr.bf16.mxu0 0
        %10838 = vmatpush1.bf16.msra.mxu0 %v10064
        %10839 = vmatprep.subr.bf16.mxu0 0
        %10840 = vmatpush1.bf16.msra.mxu0 %v10065
        %10841 = vmatprep.subr.bf16.mxu0 0
        %10842 = vmatpush1.bf16.msra.mxu0 %v10066
        %10843 = vmatprep.subr.bf16.mxu0 0
        %10844 = vmatpush1.bf16.msra.mxu0 %v10067
        %10845 = vmatprep.subr.bf16.mxu0 0
        %10846 = vmatpush1.bf16.msra.mxu0 %v10068
        %10847 = vmatprep.subr.bf16.mxu0 0
        %10848 = vmatpush1.bf16.msra.mxu0 %v10069
        %10849 = vmatprep.subr.bf16.mxu0 0
        %10850 = vmatpush1.bf16.msra.mxu0 %v10070
        %10851 = vmatprep.subr.bf16.mxu0 0
        %10852 = vmatpush1.bf16.msra.mxu0 %v10071
        %10853 = vmatprep.subr.bf16.mxu0 0
        %10854 = vmatpush1.bf16.msra.mxu0 %v10072
        %10855 = vmatprep.subr.bf16.mxu0 0
        %10856 = vmatpush1.bf16.msra.mxu0 %v10073
        %10857 = vmatprep.subr.bf16.mxu0 0
        %10858 = vmatpush1.bf16.msra.mxu0 %v10074
        %10859 = vmatprep.subr.bf16.mxu0 0
        %10860 = vmatpush1.bf16.msra.mxu0 %v10075
        %10861 = vmatprep.subr.bf16.mxu0 0
        %10862 = vmatpush1.bf16.msra.mxu0 %v10076
        %10863 = vmatprep.subr.bf16.mxu0 0
        %10864 = vmatpush1.bf16.msra.mxu0 %v10077
        %10865 = vmatprep.mubr.bf16.mxu0 %v9366
        %10866 = vmatmul.mubr.bf16.gmra.mrb[0].mxu0 %v9365
        %v10867 = vpop.f32.mrb[0].mxu0
        %v10868 = vadd.f32 %v10643, %v10867
        %v10869 = vpop.f32.mrb[0].mxu0
        %v10870 = vpop.f32.mrb[0].mxu0
        %v10871 = vadd.f32 %v10646, %v10870
        %v10872 = vpop.f32.mrb[0].mxu0
        %10873 = vmatprep.mubr.bf16.mxu0 %v9375
        %10874 = vmatmul.mubr.bf16.gmra.mrb[0].mxu0 %v9374
        %v10875 = vpop.f32.mrb[0].mxu0
        %v10876 = vadd.f32 %v10651, %v10875
        %v10877 = vpop.f32.mrb[0].mxu0
        %v10878 = vpop.f32.mrb[0].mxu0
        %v10879 = vadd.f32 %v10654, %v10878
        %v10880 = vpop.f32.mrb[0].mxu0
        %10881 = vmatprep.mubr.bf16.mxu0 %v9384
        %10882 = vmatmul.mubr.bf16.gmra.mrb[0].mxu0 %v9383
        %v10883 = vpop.f32.mrb[0].mxu0
        %v10884 = vadd.f32 %v10659, %v10883
        %v10885 = vpop.f32.mrb[0].mxu0
        %v10886 = vpop.f32.mrb[0].mxu0
        %v10887 = vadd.f32 %v10662, %v10886
        %v10888 = vpop.f32.mrb[0].mxu0
        %10889 = vmatprep.mubr.bf16.mxu0 %v9393
        %10890 = vmatmul.mubr.bf16.gmra.mrb[0].mxu0 %v9392
        %v10891 = vpop.f32.mrb[0].mxu0
        %v10892 = vadd.f32 %v10667, %v10891
        %v10893 = vpop.f32.mrb[0].mxu0
        %v10894 = vpop.f32.mrb[0].mxu0
        %v10895 = vadd.f32 %v10670, %v10894
        %v10896 = vpop.f32.mrb[0].mxu0
        %10897 = vmatprep.mubr.bf16.mxu0 %v9402
        %10898 = vmatmul.mubr.bf16.gmra.mrb[0].mxu0 %v9401
        %v10899 = vpop.f32.mrb[0].mxu0
        %v10900 = vadd.f32 %v10675, %v10899
        %v10901 = vpop.f32.mrb[0].mxu0
        %v10902 = vpop.f32.mrb[0].mxu0
        %v10903 = vadd.f32 %v10678, %v10902
        %v10904 = vpop.f32.mrb[0].mxu0
        %10905 = vmatprep.mubr.bf16.mxu0 %v9411
        %10906 = vmatmul.mubr.bf16.gmra.mrb[0].mxu0 %v9410
        %v10907 = vpop.f32.mrb[0].mxu0
        %v10908 = vadd.f32 %v10683, %v10907
        %v10909 = vpop.f32.mrb[0].mxu0
        %v10910 = vpop.f32.mrb[0].mxu0
        %v10911 = vadd.f32 %v10686, %v10910
        %v10912 = vpop.f32.mrb[0].mxu0
        %10913 = vmatprep.mubr.bf16.mxu0 %v9420
        %10914 = vmatmul.mubr.bf16.gmra.mrb[0].mxu0 %v9419
        %v10915 = vpop.f32.mrb[0].mxu0
        %v10916 = vadd.f32 %v10691, %v10915
        %v10917 = vpop.f32.mrb[0].mxu0
        %v10918 = vpop.f32.mrb[0].mxu0
        %v10919 = vadd.f32 %v10694, %v10918
        %v10920 = vpop.f32.mrb[0].mxu0
        %10921 = vmatprep.mubr.bf16.mxu0 %v9429
        %10922 = vmatmul.mubr.bf16.gmra.mrb[0].mxu0 %v9428
        %v10923 = vpop.f32.mrb[0].mxu0
        %v10924 = vadd.f32 %v10699, %v10923
        %v10925 = vpop.f32.mrb[0].mxu0
        %v10926 = vpop.f32.mrb[0].mxu0
        %v10927 = vadd.f32 %v10702, %v10926
        %v10928 = vpop.f32.mrb[0].mxu0
        %10929 = vmatprep.mubr.bf16.mxu0 %v9438
        %10930 = vmatmul.mubr.bf16.gmra.mrb[0].mxu0 %v9437
        %v10931 = vpop.f32.mrb[0].mxu0
        %v10932 = vadd.f32 %v10707, %v10931
        %v10933 = vpop.f32.mrb[0].mxu0
        %v10934 = vpop.f32.mrb[0].mxu0
        %v10935 = vadd.f32 %v10710, %v10934
        %v10936 = vpop.f32.mrb[0].mxu0
        %10937 = vmatprep.mubr.bf16.mxu0 %v9447
        %10938 = vmatmul.mubr.bf16.gmra.mrb[0].mxu0 %v9446
        %v10939 = vpop.f32.mrb[0].mxu0
        %v10940 = vadd.f32 %v10715, %v10939
        %v10941 = vpop.f32.mrb[0].mxu0
        %v10942 = vpop.f32.mrb[0].mxu0
        %v10943 = vadd.f32 %v10718, %v10942
        %v10944 = vpop.f32.mrb[0].mxu0
        %10945 = vmatprep.mubr.bf16.mxu0 %v9456
        %10946 = vmatmul.mubr.bf16.gmra.mrb[0].mxu0 %v9455
        %v10947 = vpop.f32.mrb[0].mxu0
        %v10948 = vadd.f32 %v10723, %v10947
        %v10949 = vpop.f32.mrb[0].mxu0
        %v10950 = vpop.f32.mrb[0].mxu0
        %v10951 = vadd.f32 %v10726, %v10950
        %v10952 = vpop.f32.mrb[0].mxu0
        %10953 = vmatprep.mubr.bf16.mxu0 %v9465
        %10954 = vmatmul.mubr.bf16.gmra.mrb[0].mxu0 %v9464
        %v10955 = vpop.f32.mrb[0].mxu0
        %v10956 = vadd.f32 %v10731, %v10955
        %v10957 = vpop.f32.mrb[0].mxu0
        %v10958 = vpop.f32.mrb[0].mxu0
        %v10959 = vadd.f32 %v10734, %v10958
        %v10960 = vpop.f32.mrb[0].mxu0
        %10961 = vmatprep.mubr.bf16.mxu0 %v9474
        %10962 = vmatmul.mubr.bf16.gmra.mrb[0].mxu0 %v9473
        %v10963 = vpop.f32.mrb[0].mxu0
        %v10964 = vadd.f32 %v10739, %v10963
        %v10965 = vpop.f32.mrb[0].mxu0
        %v10966 = vpop.f32.mrb[0].mxu0
        %v10967 = vadd.f32 %v10742, %v10966
        %v10968 = vpop.f32.mrb[0].mxu0
        %10969 = vmatprep.mubr.bf16.mxu0 %v9483
        %10970 = vmatmul.mubr.bf16.gmra.mrb[0].mxu0 %v9482
        %v10971 = vpop.f32.mrb[0].mxu0
        %v10972 = vadd.f32 %v10747, %v10971
        %v10973 = vpop.f32.mrb[0].mxu0
        %v10974 = vpop.f32.mrb[0].mxu0
        %v10975 = vadd.f32 %v10750, %v10974
        %v10976 = vpop.f32.mrb[0].mxu0
        %10977 = vmatprep.mubr.bf16.mxu0 %v9492
        %10978 = vmatmul.mubr.bf16.gmra.mrb[0].mxu0 %v9491
        %v10979 = vpop.f32.mrb[0].mxu0
        %v10980 = vadd.f32 %v10755, %v10979
        %v10981 = vpop.f32.mrb[0].mxu0
        %v10982 = vpop.f32.mrb[0].mxu0
        %v10983 = vadd.f32 %v10758, %v10982
        %v10984 = vpop.f32.mrb[0].mxu0
        %10985 = vmatprep.mubr.bf16.mxu0 %v9501
        %10986 = vmatmul.mubr.bf16.gmra.mrb[0].mxu0 %v9500
        %v10987 = vpop.f32.mrb[0].mxu0
        %v10988 = vadd.f32 %v10763, %v10987
        %v10989 = vpop.f32.mrb[0].mxu0
        %v10990 = vpop.f32.mrb[0].mxu0
        %v10991 = vadd.f32 %v10766, %v10990
        %v10992 = vpop.f32.mrb[0].mxu0
        %10993 = vmatprep.mubr.bf16.mxu0 %v9510
        %10994 = vmatmul.mubr.bf16.gmra.mrb[0].mxu0 %v9509
        %v10995 = vpop.f32.mrb[0].mxu0
        %v10996 = vadd.f32 %v10771, %v10995
        %v10997 = vpop.f32.mrb[0].mxu0
        %v10998 = vpop.f32.mrb[0].mxu0
        %v10999 = vadd.f32 %v10774, %v10998
        %v11000 = vpop.f32.mrb[0].mxu0
        %11001 = vmatprep.mubr.bf16.mxu0 %v9519
        %11002 = vmatmul.mubr.bf16.gmra.mrb[0].mxu0 %v9518
        %v11003 = vpop.f32.mrb[0].mxu0
        %v11004 = vadd.f32 %v10779, %v11003
        %v11005 = vpop.f32.mrb[0].mxu0
        %v11006 = vpop.f32.mrb[0].mxu0
        %v11007 = vadd.f32 %v10782, %v11006
        %v11008 = vpop.f32.mrb[0].mxu0
        %11009 = vmatprep.mubr.bf16.mxu0 %v9528
        %11010 = vmatmul.mubr.bf16.gmra.mrb[0].mxu0 %v9527
        %v11011 = vpop.f32.mrb[0].mxu0
        %v11012 = vadd.f32 %v10787, %v11011
        %v11013 = vpop.f32.mrb[0].mxu0
        %v11014 = vpop.f32.mrb[0].mxu0
        %v11015 = vadd.f32 %v10790, %v11014
        %v11016 = vpop.f32.mrb[0].mxu0
        %11017 = vmatprep.mubr.bf16.mxu0 %v9537
        %11018 = vmatmul.mubr.bf16.gmra.mrb[0].mxu0 %v9536
        %v11019 = vpop.f32.mrb[0].mxu0
        %v11020 = vadd.f32 %v10795, %v11019
        %v11021 = vpop.f32.mrb[0].mxu0
        %v11022 = vpop.f32.mrb[0].mxu0
        %v11023 = vadd.f32 %v10798, %v11022
        %v11024 = vpop.f32.mrb[0].mxu0
        %11025 = vmatprep.mubr.bf16.mxu0 %v9546
        %11026 = vmatmul.mubr.bf16.gmra.mrb[0].mxu0 %v9545
        %v11027 = vpop.f32.mrb[0].mxu0
        %v11028 = vadd.f32 %v10803, %v11027
        %v11029 = vpop.f32.mrb[0].mxu0
        %v11030 = vpop.f32.mrb[0].mxu0
        %v11031 = vadd.f32 %v10806, %v11030
        %v11032 = vpop.f32.mrb[0].mxu0
        %11033 = vmatprep.mubr.bf16.mxu0 %v9555
        %11034 = vmatmul.mubr.bf16.gmra.mrb[0].mxu0 %v9554
        %v11035 = vpop.f32.mrb[0].mxu0
        %v11036 = vadd.f32 %v10811, %v11035
        %v11037 = vpop.f32.mrb[0].mxu0
        %v11038 = vpop.f32.mrb[0].mxu0
        %v11039 = vadd.f32 %v10814, %v11038
        %v11040 = vpop.f32.mrb[0].mxu0
        %11041 = vmatprep.mubr.bf16.mxu0 %v9564
        %11042 = vmatmul.mubr.bf16.gmra.mrb[0].mxu0 %v9563
        %v11043 = vpop.f32.mrb[0].mxu0
        %v11044 = vadd.f32 %v10819, %v11043
        %v11045 = vpop.f32.mrb[0].mxu0
        %v11046 = vpop.f32.mrb[0].mxu0
        %v11047 = vadd.f32 %v10822, %v11046
        %v11048 = vpop.f32.mrb[0].mxu0
        %11049 = vmatprep.mubr.bf16.mxu0 %v9573
        %11050 = vmatmul.mubr.bf16.gmra.mrb[0].mxu0 %v9572
        %v11051 = vpop.f32.mrb[0].mxu0
        %v11052 = vadd.f32 %v10827, %v11051
        %v11053 = vpop.f32.mrb[0].mxu0
        %v11054 = vpop.f32.mrb[0].mxu0
        %v11055 = vadd.f32 %v10830, %v11054
        %v11056 = vpop.f32.mrb[0].mxu0
        %11057 = vdwg.mxu0
        %11058 = vmatprep.subr.bf16.mxu0 0
        %11059 = vmatpush1.bf16.msra.mxu0 %v10078
        %11060 = vmatprep.subr.bf16.mxu0 0
        %11061 = vmatpush1.bf16.msra.mxu0 %v10079
        %11062 = vmatprep.subr.bf16.mxu0 0
        %11063 = vmatpush1.bf16.msra.mxu0 %v10080
        %11064 = vmatprep.subr.bf16.mxu0 0
        %11065 = vmatpush1.bf16.msra.mxu0 %v10081
        %11066 = vmatprep.subr.bf16.mxu0 0
        %11067 = vmatpush1.bf16.msra.mxu0 %v10082
        %11068 = vmatprep.subr.bf16.mxu0 0
        %11069 = vmatpush1.bf16.msra.mxu0 %v10083
        %11070 = vmatprep.subr.bf16.mxu0 0
        %11071 = vmatpush1.bf16.msra.mxu0 %v10084
        %11072 = vmatprep.subr.bf16.mxu0 0
        %11073 = vmatpush1.bf16.msra.mxu0 %v10085
        %11074 = vmatprep.subr.bf16.mxu0 0
        %11075 = vmatpush1.bf16.msra.mxu0 0
        %11076 = vmatprep.subr.bf16.mxu0 0
        %11077 = vmatpush1.bf16.msra.mxu0 0
        %11078 = vmatprep.subr.bf16.mxu0 0
        %11079 = vmatpush1.bf16.msra.mxu0 0
        %11080 = vmatprep.subr.bf16.mxu0 0
        %11081 = vmatpush1.bf16.msra.mxu0 0
        %11082 = vmatprep.subr.bf16.mxu0 0
        %11083 = vmatpush1.bf16.msra.mxu0 0
        %11084 = vmatprep.subr.bf16.mxu0 0
        %11085 = vmatpush1.bf16.msra.mxu0 0
        %11086 = vmatprep.subr.bf16.mxu0 0
        %11087 = vmatpush1.bf16.msra.mxu0 0
        %11088 = vmatprep.subr.bf16.mxu0 0
        %11089 = vmatpush1.bf16.msra.mxu0 0
        %11090 = vmatprep.mubr.bf16.mxu0 0
        %11091 = vmatmul.mubr.bf16.gmra.mrb[0].mxu0 %v9367
        %v11092 = vpop.f32.mrb[0].mxu0
        %v11093 = vadd.f32 %v10868, %v11092
        %v11094 = vpop.f32.mrb[0].mxu0
        %v11095 = vpop.f32.mrb[0].mxu0
        %v11096 = vadd.f32 %v10871, %v11095
        %v11097 = vpop.f32.mrb[0].mxu0
        %11098 = vmatprep.mubr.bf16.mxu0 0
        %11099 = vmatmul.mubr.bf16.gmra.mrb[0].mxu0 %v9376
        %v11100 = vpop.f32.mrb[0].mxu0
        %v11101 = vadd.f32 %v10876, %v11100
        %v11102 = vpop.f32.mrb[0].mxu0
        %v11103 = vpop.f32.mrb[0].mxu0
        %v11104 = vadd.f32 %v10879, %v11103
        %v11105 = vpop.f32.mrb[0].mxu0
        %11106 = vmatprep.mubr.bf16.mxu0 0
        %11107 = vmatmul.mubr.bf16.gmra.mrb[0].mxu0 %v9385
        %v11108 = vpop.f32.mrb[0].mxu0
        %v11109 = vadd.f32 %v10884, %v11108
        %v11110 = vpop.f32.mrb[0].mxu0
        %v11111 = vpop.f32.mrb[0].mxu0
        %v11112 = vadd.f32 %v10887, %v11111
        %v11113 = vpop.f32.mrb[0].mxu0
        %11114 = vmatprep.mubr.bf16.mxu0 0
        %11115 = vmatmul.mubr.bf16.gmra.mrb[0].mxu0 %v9394
        %v11116 = vpop.f32.mrb[0].mxu0
        %v11117 = vadd.f32 %v10892, %v11116
        %v11118 = vpop.f32.mrb[0].mxu0
        %v11119 = vpop.f32.mrb[0].mxu0
        %v11120 = vadd.f32 %v10895, %v11119
        %v11121 = vpop.f32.mrb[0].mxu0
        %11122 = vmatprep.mubr.bf16.mxu0 0
        %11123 = vmatmul.mubr.bf16.gmra.mrb[0].mxu0 %v9403
        %v11124 = vpop.f32.mrb[0].mxu0
        %v11125 = vadd.f32 %v10900, %v11124
        %v11126 = vpop.f32.mrb[0].mxu0
        %v11127 = vpop.f32.mrb[0].mxu0
        %v11128 = vadd.f32 %v10903, %v11127
        %v11129 = vpop.f32.mrb[0].mxu0
        %11130 = vmatprep.mubr.bf16.mxu0 0
        %11131 = vmatmul.mubr.bf16.gmra.mrb[0].mxu0 %v9412
        %v11132 = vpop.f32.mrb[0].mxu0
        %v11133 = vadd.f32 %v10908, %v11132
        %v11134 = vpop.f32.mrb[0].mxu0
        %v11135 = vpop.f32.mrb[0].mxu0
        %v11136 = vadd.f32 %v10911, %v11135
        %v11137 = vpop.f32.mrb[0].mxu0
        %11138 = vmatprep.mubr.bf16.mxu0 0
        %11139 = vmatmul.mubr.bf16.gmra.mrb[0].mxu0 %v9421
        %v11140 = vpop.f32.mrb[0].mxu0
        %v11141 = vadd.f32 %v10916, %v11140
        %v11142 = vpop.f32.mrb[0].mxu0
        %v11143 = vpop.f32.mrb[0].mxu0
        %v11144 = vadd.f32 %v10919, %v11143
        %v11145 = vpop.f32.mrb[0].mxu0
        %11146 = vmatprep.mubr.bf16.mxu0 0
        %11147 = vmatmul.mubr.bf16.gmra.mrb[0].mxu0 %v9430
        %v11148 = vpop.f32.mrb[0].mxu0
        %v11149 = vadd.f32 %v10924, %v11148
        %v11150 = vpop.f32.mrb[0].mxu0
        %v11151 = vpop.f32.mrb[0].mxu0
        %v11152 = vadd.f32 %v10927, %v11151
        %v11153 = vpop.f32.mrb[0].mxu0
        %11154 = vmatprep.mubr.bf16.mxu0 0
        %11155 = vmatmul.mubr.bf16.gmra.mrb[0].mxu0 %v9439
        %v11156 = vpop.f32.mrb[0].mxu0
        %v11157 = vadd.f32 %v10932, %v11156
        %v11158 = vpop.f32.mrb[0].mxu0
        %v11159 = vpop.f32.mrb[0].mxu0
        %v11160 = vadd.f32 %v10935, %v11159
        %v11161 = vpop.f32.mrb[0].mxu0
        %11162 = vmatprep.mubr.bf16.mxu0 0
        %11163 = vmatmul.mubr.bf16.gmra.mrb[0].mxu0 %v9448
        %v11164 = vpop.f32.mrb[0].mxu0
        %v11165 = vadd.f32 %v10940, %v11164
        %v11166 = vpop.f32.mrb[0].mxu0
        %v11167 = vpop.f32.mrb[0].mxu0
        %v11168 = vadd.f32 %v10943, %v11167
        %v11169 = vpop.f32.mrb[0].mxu0
        %11170 = vmatprep.mubr.bf16.mxu0 0
        %11171 = vmatmul.mubr.bf16.gmra.mrb[0].mxu0 %v9457
        %v11172 = vpop.f32.mrb[0].mxu0
        %v11173 = vadd.f32 %v10948, %v11172
        %v11174 = vpop.f32.mrb[0].mxu0
        %v11175 = vpop.f32.mrb[0].mxu0
        %v11176 = vadd.f32 %v10951, %v11175
        %v11177 = vpop.f32.mrb[0].mxu0
        %11178 = vmatprep.mubr.bf16.mxu0 0
        %11179 = vmatmul.mubr.bf16.gmra.mrb[0].mxu0 %v9466
        %v11180 = vpop.f32.mrb[0].mxu0
        %v11181 = vadd.f32 %v10956, %v11180
        %v11182 = vpop.f32.mrb[0].mxu0
        %v11183 = vpop.f32.mrb[0].mxu0
        %v11184 = vadd.f32 %v10959, %v11183
        %v11185 = vpop.f32.mrb[0].mxu0
        %11186 = vmatprep.mubr.bf16.mxu0 0
        %11187 = vmatmul.mubr.bf16.gmra.mrb[0].mxu0 %v9475
        %v11188 = vpop.f32.mrb[0].mxu0
        %v11189 = vadd.f32 %v10964, %v11188
        %v11190 = vpop.f32.mrb[0].mxu0
        %v11191 = vpop.f32.mrb[0].mxu0
        %v11192 = vadd.f32 %v10967, %v11191
        %v11193 = vpop.f32.mrb[0].mxu0
        %11194 = vmatprep.mubr.bf16.mxu0 0
        %11195 = vmatmul.mubr.bf16.gmra.mrb[0].mxu0 %v9484
        %v11196 = vpop.f32.mrb[0].mxu0
        %v11197 = vadd.f32 %v10972, %v11196
        %v11198 = vpop.f32.mrb[0].mxu0
        %v11199 = vpop.f32.mrb[0].mxu0
        %v11200 = vadd.f32 %v10975, %v11199
        %v11201 = vpop.f32.mrb[0].mxu0
        %11202 = vmatprep.mubr.bf16.mxu0 0
        %11203 = vmatmul.mubr.bf16.gmra.mrb[0].mxu0 %v9493
        %v11204 = vpop.f32.mrb[0].mxu0
        %v11205 = vadd.f32 %v10980, %v11204
        %v11206 = vpop.f32.mrb[0].mxu0
        %v11207 = vpop.f32.mrb[0].mxu0
        %v11208 = vadd.f32 %v10983, %v11207
        %v11209 = vpop.f32.mrb[0].mxu0
        %11210 = vmatprep.mubr.bf16.mxu0 0
        %11211 = vmatmul.mubr.bf16.gmra.mrb[0].mxu0 %v9502
        %v11212 = vpop.f32.mrb[0].mxu0
        %v11213 = vadd.f32 %v10988, %v11212
        %v11214 = vpop.f32.mrb[0].mxu0
        %v11215 = vpop.f32.mrb[0].mxu0
        %v11216 = vadd.f32 %v10991, %v11215
        %v11217 = vpop.f32.mrb[0].mxu0
        %11218 = vmatprep.mubr.bf16.mxu0 0
        %11219 = vmatmul.mubr.bf16.gmra.mrb[0].mxu0 %v9511
        %v11220 = vpop.f32.mrb[0].mxu0
        %v11221 = vadd.f32 %v10996, %v11220
        %v11222 = vpop.f32.mrb[0].mxu0
        %v11223 = vpop.f32.mrb[0].mxu0
        %v11224 = vadd.f32 %v10999, %v11223
        %v11225 = vpop.f32.mrb[0].mxu0
        %11226 = vmatprep.mubr.bf16.mxu0 0
        %11227 = vmatmul.mubr.bf16.gmra.mrb[0].mxu0 %v9520
        %v11228 = vpop.f32.mrb[0].mxu0
        %v11229 = vadd.f32 %v11004, %v11228
        %v11230 = vpop.f32.mrb[0].mxu0
        %v11231 = vpop.f32.mrb[0].mxu0
        %v11232 = vadd.f32 %v11007, %v11231
        %v11233 = vpop.f32.mrb[0].mxu0
        %11234 = vmatprep.mubr.bf16.mxu0 0
        %11235 = vmatmul.mubr.bf16.gmra.mrb[0].mxu0 %v9529
        %v11236 = vpop.f32.mrb[0].mxu0
        %v11237 = vadd.f32 %v11012, %v11236
        %v11238 = vpop.f32.mrb[0].mxu0
        %v11239 = vpop.f32.mrb[0].mxu0
        %v11240 = vadd.f32 %v11015, %v11239
        %v11241 = vpop.f32.mrb[0].mxu0
        %11242 = vmatprep.mubr.bf16.mxu0 0
        %11243 = vmatmul.mubr.bf16.gmra.mrb[0].mxu0 %v9538
        %v11244 = vpop.f32.mrb[0].mxu0
        %v11245 = vadd.f32 %v11020, %v11244
        %v11246 = vpop.f32.mrb[0].mxu0
        %v11247 = vpop.f32.mrb[0].mxu0
        %v11248 = vadd.f32 %v11023, %v11247
        %v11249 = vpop.f32.mrb[0].mxu0
        %11250 = vmatprep.mubr.bf16.mxu0 0
        %11251 = vmatmul.mubr.bf16.gmra.mrb[0].mxu0 %v9547
        %v11252 = vpop.f32.mrb[0].mxu0
        %v11253 = vadd.f32 %v11028, %v11252
        %v11254 = vpop.f32.mrb[0].mxu0
        %v11255 = vpop.f32.mrb[0].mxu0
        %v11256 = vadd.f32 %v11031, %v11255
        %v11257 = vpop.f32.mrb[0].mxu0
        %11258 = vmatprep.mubr.bf16.mxu0 0
        %11259 = vmatmul.mubr.bf16.gmra.mrb[0].mxu0 %v9556
        %v11260 = vpop.f32.mrb[0].mxu0
        %v11261 = vadd.f32 %v11036, %v11260
        %v11262 = vpop.f32.mrb[0].mxu0
        %v11263 = vpop.f32.mrb[0].mxu0
        %v11264 = vadd.f32 %v11039, %v11263
        %v11265 = vpop.f32.mrb[0].mxu0
        %11266 = vmatprep.mubr.bf16.mxu0 0
        %11267 = vmatmul.mubr.bf16.gmra.mrb[0].mxu0 %v9565
        %v11268 = vpop.f32.mrb[0].mxu0
        %v11269 = vadd.f32 %v11044, %v11268
        %v11270 = vpop.f32.mrb[0].mxu0
        %v11271 = vpop.f32.mrb[0].mxu0
        %v11272 = vadd.f32 %v11047, %v11271
        %v11273 = vpop.f32.mrb[0].mxu0
        %11274 = vmatprep.mubr.bf16.mxu0 0
        %11275 = vmatmul.mubr.bf16.gmra.mrb[0].mxu0 %v9574
        %v11276 = vpop.f32.mrb[0].mxu0
        %v11277 = vadd.f32 %v11052, %v11276
        %v11278 = vpop.f32.mrb[0].mxu0
        %v11279 = vpop.f32.mrb[0].mxu0
        %v11280 = vadd.f32 %v11055, %v11279
        %v11281 = vpop.f32.mrb[0].mxu0
        %11282 = vdwg.mxu0
        %v11283 = vld [vmem:[%s237 + $0xc] sm:$0xf]
        %v11284 = vld [vmem:[%s237 + $0x10] sm:$0xf]
        %v11285 = vld [vmem:[%s237 + $0x14] sm:$0xf]
        %v11286 = vld [vmem:[%s237 + $0x18] sm:$0xf]
        %v11287 = vld [vmem:[%s237 + $0x1c] sm:$0xf]
        %v11288 = vld [vmem:[%s237 + $0x20] sm:$0xf]
        %v11289 = vld [vmem:[%s237 + $0x24] sm:$0xf]
        %v11290 = vld [vmem:[%s237 + $0x28] sm:$0xf]
        %v11291 = vld [vmem:[%s237 + $0x2c] sm:$0xf]
        %v11292 = vld [vmem:[%s237 + $0x30] sm:$0xf]
        %v11293 = vld [vmem:[%s237 + $0x34] sm:$0xf]
        %v11294 = vld [vmem:[%s237 + $0x38] sm:$0xf]
        %v11295 = vld [vmem:[%s237 + $0x3c] sm:$0xf]
        %v11296 = vld [vmem:[%s237 + $0x40] sm:$0xf]
        %v11297 = vld [vmem:[%s237 + $0x44] sm:$0xf]
        %v11298 = vld [vmem:[%s237 + $0x48] sm:$0xf]
        %v11299 = vld [vmem:[%s237 + $0x4c] sm:$0xf]
        %v11300 = vld [vmem:[%s237 + $0x50] sm:$0xf]
        %v11301 = vld [vmem:[%s237 + $0x54] sm:$0xf]
        %v11302 = vld [vmem:[%s237 + $0x58] sm:$0xf]
        %v11303 = vld [vmem:[%s237 + $0x5c] sm:$0xf]
        %v11304 = vld [vmem:[%s237 + $0x60] sm:$0xf]
        %v11305 = vld [vmem:[%s237 + $0x64] sm:$0xf]
        %v11306 = vld [vmem:[%s237 + $0x68] sm:$0xf]
        %v11307 = vld [vmem:[%s237 + $0x6c] sm:$0xf]
        %v11308 = vld [vmem:[%s237 + $0x70] sm:$0xf]
        %v11309 = vld [vmem:[%s237 + $0x74] sm:$0xf]
        %v11310 = vld [vmem:[%s237 + $0x78] sm:$0xf]
        %v11311 = vld [vmem:[%s237 + $0x7c] sm:$0xf]
        %v11312 = vld [vmem:[%s237 + $0x80] sm:$0xf]
        %v11313 = vld [vmem:[%s237 + $0x84] sm:$0xf]
        %v11314 = vld [vmem:[%s237 + $0x88] sm:$0xf]
        %v11315 = vld [vmem:[%s237 + $0x8c] sm:$0xf]
        %v11316 = vld [vmem:[%s237 + $0x90] sm:$0xf]
        %v11317 = vld [vmem:[%s237 + $0x94] sm:$0xf]
        %v11318 = vld [vmem:[%s237 + $0x98] sm:$0xf]
        %v11319 = vld [vmem:[%s237 + $0x9c] sm:$0xf]
        %v11320 = vld [vmem:[%s237 + $0xa0] sm:$0xf]
        %v11321 = vld [vmem:[%s237 + $0xa4] sm:$0xf]
        %v11322 = vld [vmem:[%s237 + $0xa8] sm:$0xf]
        %v11323 = vld [vmem:[%s237 + $0xac] sm:$0xf]
        %v11324 = vld [vmem:[%s237 + $0xb0] sm:$0xf]
        %v11325 = vld [vmem:[%s237 + $0xb4] sm:$0xf]
        %v11326 = vld [vmem:[%s237 + $0xb8] sm:$0xf]
        %v11327 = vld [vmem:[%s237 + $0xbc] sm:$0xf]
        %v11328 = vld [vmem:[%s237 + $0xc0] sm:$0xf]
        %v11329 = vld [vmem:[%s237 + $0xc4] sm:$0xf]
        %v11330 = vld [vmem:[%s237 + $0xc8] sm:$0xf]
        %v11331 = vld [vmem:[%s237 + $0xcc] sm:$0x1]
        %v11332 = vunpack.c.l.bf16 %v11283
        %v11333 = vunpack.c.l.bf16 %v11284
        %v11334 = vunpack.c.l.bf16 %v11285
        %v11335 = vunpack.c.l.bf16 %v11286
        %v11336 = vunpack.c.l.bf16 %v11287
        %v11337 = vunpack.c.l.bf16 %v11288
        %v11338 = vunpack.c.l.bf16 %v11289
        %v11339 = vunpack.c.l.bf16 %v11290
        %v11340 = vunpack.c.l.bf16 %v11291
        %v11341 = vunpack.c.l.bf16 %v11292
        %v11342 = vunpack.c.l.bf16 %v11293
        %v11343 = vunpack.c.l.bf16 %v11294
        %v11344 = vunpack.c.l.bf16 %v11295
        %v11345 = vunpack.c.l.bf16 %v11296
        %v11346 = vunpack.c.l.bf16 %v11297
        %v11347 = vunpack.c.l.bf16 %v11298
        %v11348 = vunpack.c.l.bf16 %v11299
        %v11349 = vunpack.c.l.bf16 %v11300
        %v11350 = vunpack.c.l.bf16 %v11301
        %v11351 = vunpack.c.l.bf16 %v11302
        %v11352 = vunpack.c.l.bf16 %v11303
        %v11353 = vunpack.c.l.bf16 %v11304
        %v11354 = vunpack.c.l.bf16 %v11305
        %v11355 = vunpack.c.l.bf16 %v11306
        %v11356 = vunpack.c.l.bf16 %v11307
        %v11357 = vunpack.c.l.bf16 %v11308
        %v11358 = vunpack.c.l.bf16 %v11309
        %v11359 = vunpack.c.l.bf16 %v11310
        %v11360 = vunpack.c.l.bf16 %v11311
        %v11361 = vunpack.c.l.bf16 %v11312
        %v11362 = vunpack.c.l.bf16 %v11313
        %v11363 = vunpack.c.l.bf16 %v11314
        %v11364 = vunpack.c.l.bf16 %v11315
        %v11365 = vunpack.c.l.bf16 %v11316
        %v11366 = vunpack.c.l.bf16 %v11317
        %v11367 = vunpack.c.l.bf16 %v11318
        %v11368 = vunpack.c.l.bf16 %v11319
        %v11369 = vunpack.c.l.bf16 %v11320
        %v11370 = vunpack.c.l.bf16 %v11321
        %v11371 = vunpack.c.l.bf16 %v11322
        %v11372 = vunpack.c.l.bf16 %v11323
        %v11373 = vunpack.c.l.bf16 %v11324
        %v11374 = vunpack.c.l.bf16 %v11325
        %v11375 = vunpack.c.l.bf16 %v11326
        %v11376 = vunpack.c.l.bf16 %v11327
        %v11377 = vunpack.c.l.bf16 %v11328
        %v11378 = vunpack.c.l.bf16 %v11329
        %v11379 = vunpack.c.l.bf16 %v11330
        %v11380 = vunpack.c.l.bf16 %v11331
        %vm11430 = vcmask 1046528
        %v11431 = vrot.slane %v11332, 1
        %v11432 = vrot.slane %v11333, 1
        %v11433 = vsel %vm11430, %v11431, %v11432
        %v11434 = vrot.slane %v11334, 1
        %v11435 = vsel %vm11430, %v11432, %v11434
        %v11436 = vrot.slane %v11335, 1
        %v11437 = vsel %vm11430, %v11434, %v11436
        %v11438 = vrot.slane %v11336, 1
        %v11439 = vsel %vm11430, %v11436, %v11438
        %v11440 = vrot.slane %v11337, 1
        %v11441 = vsel %vm11430, %v11438, %v11440
        %v11442 = vrot.slane %v11338, 1
        %v11443 = vsel %vm11430, %v11440, %v11442
        %v11444 = vrot.slane %v11339, 1
        %v11445 = vsel %vm11430, %v11442, %v11444
        %v11446 = vrot.slane %v11340, 1
        %v11447 = vsel %vm11430, %v11444, %v11446
        %v11448 = vrot.slane %v11341, 1
        %v11449 = vsel %vm11430, %v11446, %v11448
        %v11450 = vrot.slane %v11342, 1
        %v11451 = vsel %vm11430, %v11448, %v11450
        %v11452 = vrot.slane %v11343, 1
        %v11453 = vsel %vm11430, %v11450, %v11452
        %v11454 = vrot.slane %v11344, 1
        %v11455 = vsel %vm11430, %v11452, %v11454
        %v11456 = vrot.slane %v11345, 1
        %v11457 = vsel %vm11430, %v11454, %v11456
        %v11458 = vrot.slane %v11346, 1
        %v11459 = vsel %vm11430, %v11456, %v11458
        %v11460 = vrot.slane %v11347, 1
        %v11461 = vsel %vm11430, %v11458, %v11460
        %v11462 = vrot.slane %v11348, 1
        %v11463 = vsel %vm11430, %v11460, %v11462
        %v11464 = vrot.slane %v11349, 1
        %v11465 = vsel %vm11430, %v11462, %v11464
        %v11466 = vrot.slane %v11350, 1
        %v11467 = vsel %vm11430, %v11464, %v11466
        %v11468 = vrot.slane %v11351, 1
        %v11469 = vsel %vm11430, %v11466, %v11468
        %v11470 = vrot.slane %v11352, 1
        %v11471 = vsel %vm11430, %v11468, %v11470
        %v11472 = vrot.slane %v11353, 1
        %v11473 = vsel %vm11430, %v11470, %v11472
        %v11474 = vrot.slane %v11354, 1
        %v11475 = vsel %vm11430, %v11472, %v11474
        %v11476 = vrot.slane %v11355, 1
        %v11477 = vsel %vm11430, %v11474, %v11476
        %v11478 = vrot.slane %v11356, 1
        %v11479 = vsel %vm11430, %v11476, %v11478
        %v11480 = vrot.slane %v11357, 1
        %v11481 = vsel %vm11430, %v11478, %v11480
        %v11482 = vrot.slane %v11358, 1
        %v11483 = vsel %vm11430, %v11480, %v11482
        %v11484 = vrot.slane %v11359, 1
        %v11485 = vsel %vm11430, %v11482, %v11484
        %v11486 = vrot.slane %v11360, 1
        %v11487 = vsel %vm11430, %v11484, %v11486
        %v11488 = vrot.slane %v11361, 1
        %v11489 = vsel %vm11430, %v11486, %v11488
        %v11490 = vrot.slane %v11362, 1
        %v11491 = vsel %vm11430, %v11488, %v11490
        %v11492 = vrot.slane %v11363, 1
        %v11493 = vsel %vm11430, %v11490, %v11492
        %v11494 = vrot.slane %v11364, 1
        %v11495 = vsel %vm11430, %v11492, %v11494
        %v11496 = vrot.slane %v11365, 1
        %v11497 = vsel %vm11430, %v11494, %v11496
        %v11498 = vrot.slane %v11366, 1
        %v11499 = vsel %vm11430, %v11496, %v11498
        %v11500 = vrot.slane %v11367, 1
        %v11501 = vsel %vm11430, %v11498, %v11500
        %v11502 = vrot.slane %v11368, 1
        %v11503 = vsel %vm11430, %v11500, %v11502
        %v11504 = vrot.slane %v11369, 1
        %v11505 = vsel %vm11430, %v11502, %v11504
        %v11506 = vrot.slane %v11370, 1
        %v11507 = vsel %vm11430, %v11504, %v11506
        %v11508 = vrot.slane %v11371, 1
        %v11509 = vsel %vm11430, %v11506, %v11508
        %v11510 = vrot.slane %v11372, 1
        %v11511 = vsel %vm11430, %v11508, %v11510
        %v11512 = vrot.slane %v11373, 1
        %v11513 = vsel %vm11430, %v11510, %v11512
        %v11514 = vrot.slane %v11374, 1
        %v11515 = vsel %vm11430, %v11512, %v11514
        %v11516 = vrot.slane %v11375, 1
        %v11517 = vsel %vm11430, %v11514, %v11516
        %v11518 = vrot.slane %v11376, 1
        %v11519 = vsel %vm11430, %v11516, %v11518
        %v11520 = vrot.slane %v11377, 1
        %v11521 = vsel %vm11430, %v11518, %v11520
        %v11522 = vrot.slane %v11378, 1
        %v11523 = vsel %vm11430, %v11520, %v11522
        %v11524 = vrot.slane %v11379, 1
        %v11525 = vsel %vm11430, %v11522, %v11524
        %v11526 = vrot.slane %v11380, 1
        %v11527 = vsel %vm11430, %v11524, %v11526
        %v11576 = vadd.f32 %v11093, %v11433
        %v11577 = vadd.f32 %v11096, %v11435
        %v11578 = vadd.f32 %v11101, %v11437
        %v11579 = vadd.f32 %v11104, %v11439
        %v11580 = vadd.f32 %v11109, %v11441
        %v11581 = vadd.f32 %v11112, %v11443
        %v11582 = vadd.f32 %v11117, %v11445
        %v11583 = vadd.f32 %v11120, %v11447
        %v11584 = vadd.f32 %v11125, %v11449
        %v11585 = vadd.f32 %v11128, %v11451
        %v11586 = vadd.f32 %v11133, %v11453
        %v11587 = vadd.f32 %v11136, %v11455
        %v11588 = vadd.f32 %v11141, %v11457
        %v11589 = vadd.f32 %v11144, %v11459
        %v11590 = vadd.f32 %v11149, %v11461
        %v11591 = vadd.f32 %v11152, %v11463
        %v11592 = vadd.f32 %v11157, %v11465
        %v11593 = vadd.f32 %v11160, %v11467
        %v11594 = vadd.f32 %v11165, %v11469
        %v11595 = vadd.f32 %v11168, %v11471
        %v11596 = vadd.f32 %v11173, %v11473
        %v11597 = vadd.f32 %v11176, %v11475
        %v11598 = vadd.f32 %v11181, %v11477
        %v11599 = vadd.f32 %v11184, %v11479
        %v11600 = vadd.f32 %v11189, %v11481
        %v11601 = vadd.f32 %v11192, %v11483
        %v11602 = vadd.f32 %v11197, %v11485
        %v11603 = vadd.f32 %v11200, %v11487
        %v11604 = vadd.f32 %v11205, %v11489
        %v11605 = vadd.f32 %v11208, %v11491
        %v11606 = vadd.f32 %v11213, %v11493
        %v11607 = vadd.f32 %v11216, %v11495
        %v11608 = vadd.f32 %v11221, %v11497
        %v11609 = vadd.f32 %v11224, %v11499
        %v11610 = vadd.f32 %v11229, %v11501
        %v11611 = vadd.f32 %v11232, %v11503
        %v11612 = vadd.f32 %v11237, %v11505
        %v11613 = vadd.f32 %v11240, %v11507
        %v11614 = vadd.f32 %v11245, %v11509
        %v11615 = vadd.f32 %v11248, %v11511
        %v11616 = vadd.f32 %v11253, %v11513
        %v11617 = vadd.f32 %v11256, %v11515
        %v11618 = vadd.f32 %v11261, %v11517
        %v11619 = vadd.f32 %v11264, %v11519
        %v11620 = vadd.f32 %v11269, %v11521
        %v11621 = vadd.f32 %v11272, %v11523
        %v11622 = vadd.f32 %v11277, %v11525
        %v11623 = vadd.f32 %v11280, %v11527
        %v11624 = vmax.f32 %v11576, 0.0
        %v11625 = vmax.f32 %v11577, 0.0
        %v11626 = vmax.f32 %v11578, 0.0
        %v11627 = vmax.f32 %v11579, 0.0
        %v11628 = vmax.f32 %v11580, 0.0
        %v11629 = vmax.f32 %v11581, 0.0
        %v11630 = vmax.f32 %v11582, 0.0
        %v11631 = vmax.f32 %v11583, 0.0
        %v11632 = vmax.f32 %v11584, 0.0
        %v11633 = vmax.f32 %v11585, 0.0
        %v11634 = vmax.f32 %v11586, 0.0
        %v11635 = vmax.f32 %v11587, 0.0
        %v11636 = vmax.f32 %v11588, 0.0
        %v11637 = vmax.f32 %v11589, 0.0
        %v11638 = vmax.f32 %v11590, 0.0
        %v11639 = vmax.f32 %v11591, 0.0
        %v11640 = vmax.f32 %v11592, 0.0
        %v11641 = vmax.f32 %v11593, 0.0
        %v11642 = vmax.f32 %v11594, 0.0
        %v11643 = vmax.f32 %v11595, 0.0
        %v11644 = vmax.f32 %v11596, 0.0
        %v11645 = vmax.f32 %v11597, 0.0
        %v11646 = vmax.f32 %v11598, 0.0
        %v11647 = vmax.f32 %v11599, 0.0
        %v11648 = vmax.f32 %v11600, 0.0
        %v11649 = vmax.f32 %v11601, 0.0
        %v11650 = vmax.f32 %v11602, 0.0
        %v11651 = vmax.f32 %v11603, 0.0
        %v11652 = vmax.f32 %v11604, 0.0
        %v11653 = vmax.f32 %v11605, 0.0
        %v11654 = vmax.f32 %v11606, 0.0
        %v11655 = vmax.f32 %v11607, 0.0
        %v11656 = vmax.f32 %v11608, 0.0
        %v11657 = vmax.f32 %v11609, 0.0
        %v11658 = vmax.f32 %v11610, 0.0
        %v11659 = vmax.f32 %v11611, 0.0
        %v11660 = vmax.f32 %v11612, 0.0
        %v11661 = vmax.f32 %v11613, 0.0
        %v11662 = vmax.f32 %v11614, 0.0
        %v11663 = vmax.f32 %v11615, 0.0
        %v11664 = vmax.f32 %v11616, 0.0
        %v11665 = vmax.f32 %v11617, 0.0
        %v11666 = vmax.f32 %v11618, 0.0
        %v11667 = vmax.f32 %v11619, 0.0
        %v11668 = vmax.f32 %v11620, 0.0
        %v11669 = vmax.f32 %v11621, 0.0
        %v11670 = vmax.f32 %v11622, 0.0
        %v11671 = vmax.f32 %v11623, 0.0
        %v11672 = vsel %vm5863, %v11624, 0.0
        %v11673 = vsel %vm5864, %v11625, 0.0
        %v11674 = vsel %vm5865, %v11626, 0.0
        %v11675 = vsel %vm5866, %v11627, 0.0
        %v11676 = vsel %vm5867, %v11628, 0.0
        %v11677 = vsel %vm5868, %v11629, 0.0
        %v11678 = vsel %vm5869, %v11630, 0.0
        %v11679 = vsel %vm5870, %v11631, 0.0
        %v11680 = vsel %vm5871, %v11632, 0.0
        %v11681 = vsel %vm5872, %v11633, 0.0
        %v11682 = vsel %vm5873, %v11634, 0.0
        %v11683 = vsel %vm5874, %v11635, 0.0
        %v11684 = vsel %vm5875, %v11636, 0.0
        %v11685 = vsel %vm5876, %v11637, 0.0
        %v11686 = vsel %vm5877, %v11638, 0.0
        %v11687 = vsel %vm5878, %v11639, 0.0
        %v11688 = vsel %vm5879, %v11640, 0.0
        %v11689 = vsel %vm5880, %v11641, 0.0
        %v11690 = vsel %vm5881, %v11642, 0.0
        %v11691 = vsel %vm5882, %v11643, 0.0
        %v11692 = vsel %vm5883, %v11644, 0.0
        %v11693 = vsel %vm5884, %v11645, 0.0
        %v11694 = vsel %vm5885, %v11646, 0.0
        %v11695 = vsel %vm5886, %v11647, 0.0
        %v11696 = vsel %vm5887, %v11648, 0.0
        %v11697 = vsel %vm5888, %v11649, 0.0
        %v11698 = vsel %vm5889, %v11650, 0.0
        %v11699 = vsel %vm5890, %v11651, 0.0
        %v11700 = vsel %vm5891, %v11652, 0.0
        %v11701 = vsel %vm5892, %v11653, 0.0
        %v11702 = vsel %vm5893, %v11654, 0.0
        %v11703 = vsel %vm5894, %v11655, 0.0
        %v11704 = vsel %vm5895, %v11656, 0.0
        %v11705 = vsel %vm5896, %v11657, 0.0
        %v11706 = vsel %vm5897, %v11658, 0.0
        %v11707 = vsel %vm5898, %v11659, 0.0
        %v11708 = vsel %vm5899, %v11660, 0.0
        %v11709 = vsel %vm5900, %v11661, 0.0
        %v11710 = vsel %vm5901, %v11662, 0.0
        %v11711 = vsel %vm5902, %v11663, 0.0
        %v11712 = vsel %vm5903, %v11664, 0.0
        %v11713 = vsel %vm5904, %v11665, 0.0
        %v11714 = vsel %vm5905, %v11666, 0.0
        %v11715 = vsel %vm5906, %v11667, 0.0
        %v11716 = vsel %vm5907, %v11668, 0.0
        %v11717 = vsel %vm5908, %v11669, 0.0
        %v11718 = vsel %vm5909, %v11670, 0.0
        %v11719 = vsel %vm5910, %v11671, 0.0
        %11720 = vst [vmem:[%s271] sm:$0xf] 0
        %11721 = vst [vmem:[%s271 + $0x4] sm:$0xf] 0
        %11722 = vst [vmem:[%s271 + $0x8] sm:$0xf] 0
        %11723 = vst [vmem:[%s271 + $0xc] sm:$0xf] 0
        %11724 = vst [vmem:[%s271 + $0x10] sm:$0xf] 0
        %11725 = vst [vmem:[%s271 + $0x14] sm:$0xf] 0
        %11726 = vst [vmem:[%s271 + $0xcc] sm:$0xf] 0
        %11727 = vst [vmem:[%s271 + $0xd0] sm:$0xf] 0
        %11728 = vst [vmem:[%s271 + $0xd4] sm:$0xf] 0
        %11729 = vst [vmem:[%s271 + $0xd8] sm:$0xf] 0
        %11730 = vst [vmem:[%s271 + $0xdc] sm:$0xf] 0
        %11731 = vst [vmem:[%s271 + $0xe0] sm:$0xf] 0
        %v11732 = vpack.c.bf16 %v11673, %v11672
        %v11733 = vpack.c.bf16 %v11675, %v11674
        %v11734 = vpack.c.bf16 %v11677, %v11676
        %v11735 = vpack.c.bf16 %v11679, %v11678
        %v11736 = vpack.c.bf16 %v11681, %v11680
        %v11737 = vpack.c.bf16 %v11683, %v11682
        %v11738 = vpack.c.bf16 %v11685, %v11684
        %v11739 = vpack.c.bf16 %v11687, %v11686
        %v11740 = vpack.c.bf16 %v11689, %v11688
        %v11741 = vpack.c.bf16 %v11691, %v11690
        %v11742 = vpack.c.bf16 %v11693, %v11692
        %v11743 = vpack.c.bf16 %v11695, %v11694
        %v11744 = vpack.c.bf16 %v11697, %v11696
        %v11745 = vpack.c.bf16 %v11699, %v11698
        %v11746 = vpack.c.bf16 %v11701, %v11700
        %v11747 = vpack.c.bf16 %v11703, %v11702
        %v11748 = vpack.c.bf16 %v11705, %v11704
        %v11749 = vpack.c.bf16 %v11707, %v11706
        %v11750 = vpack.c.bf16 %v11709, %v11708
        %v11751 = vpack.c.bf16 %v11711, %v11710
        %v11752 = vpack.c.bf16 %v11713, %v11712
        %v11753 = vpack.c.bf16 %v11715, %v11714
        %v11754 = vpack.c.bf16 %v11717, %v11716
        %v11755 = vpack.c.bf16 %v11719, %v11718
        %v11780 = vunpack.c.l.b16 %v11732
        %v11781 = vunpack.c.h.b16 %v11732
        %v11782 = vunpack.c.l.b16 %v11733
        %v11783 = vunpack.c.h.b16 %v11733
        %v11784 = vunpack.c.l.b16 %v11734
        %v11785 = vunpack.c.h.b16 %v11734
        %v11786 = vunpack.c.l.b16 %v11735
        %v11787 = vunpack.c.h.b16 %v11735
        %v11788 = vunpack.c.l.b16 %v11736
        %v11789 = vunpack.c.h.b16 %v11736
        %v11790 = vunpack.c.l.b16 %v11737
        %v11791 = vunpack.c.h.b16 %v11737
        %v11792 = vunpack.c.l.b16 %v11738
        %v11793 = vunpack.c.h.b16 %v11738
        %v11794 = vunpack.c.l.b16 %v11739
        %v11795 = vunpack.c.h.b16 %v11739
        %v11796 = vunpack.c.l.b16 %v11740
        %v11797 = vunpack.c.h.b16 %v11740
        %v11798 = vunpack.c.l.b16 %v11741
        %v11799 = vunpack.c.h.b16 %v11741
        %v11800 = vunpack.c.l.b16 %v11742
        %v11801 = vunpack.c.h.b16 %v11742
        %v11802 = vunpack.c.l.b16 %v11743
        %v11803 = vunpack.c.h.b16 %v11743
        %v11804 = vunpack.c.l.b16 %v11744
        %v11805 = vunpack.c.h.b16 %v11744
        %v11806 = vunpack.c.l.b16 %v11745
        %v11807 = vunpack.c.h.b16 %v11745
        %v11808 = vunpack.c.l.b16 %v11746
        %v11809 = vunpack.c.h.b16 %v11746
        %v11810 = vunpack.c.l.b16 %v11747
        %v11811 = vunpack.c.h.b16 %v11747
        %v11812 = vunpack.c.l.b16 %v11748
        %v11813 = vunpack.c.h.b16 %v11748
        %v11814 = vunpack.c.l.b16 %v11749
        %v11815 = vunpack.c.h.b16 %v11749
        %v11816 = vunpack.c.l.b16 %v11750
        %v11817 = vunpack.c.h.b16 %v11750
        %v11818 = vunpack.c.l.b16 %v11751
        %v11819 = vunpack.c.h.b16 %v11751
        %v11820 = vunpack.c.l.b16 %v11752
        %v11821 = vunpack.c.h.b16 %v11752
        %v11822 = vunpack.c.l.b16 %v11753
        %v11823 = vunpack.c.h.b16 %v11753
        %v11824 = vunpack.c.l.b16 %v11754
        %v11825 = vunpack.c.h.b16 %v11754
        %v11826 = vunpack.c.l.b16 %v11755
        %v11827 = vunpack.c.h.b16 %v11755
        %v11828 = vpack.c.b16 %v11780, %v11780
        %v11829 = vpack.c.b16 %v11781, %v11781
        %v11830 = vpack.c.b16 %v11782, %v11782
        %v11831 = vpack.c.b16 %v11783, %v11783
        %v11832 = vpack.c.b16 %v11784, %v11784
        %v11833 = vpack.c.b16 %v11785, %v11785
        %v11834 = vpack.c.b16 %v11786, %v11786
        %v11835 = vpack.c.b16 %v11787, %v11787
        %v11836 = vpack.c.b16 %v11788, %v11788
        %v11837 = vpack.c.b16 %v11789, %v11789
        %v11838 = vpack.c.b16 %v11790, %v11790
        %v11839 = vpack.c.b16 %v11791, %v11791
        %v11840 = vpack.c.b16 %v11792, %v11792
        %v11841 = vpack.c.b16 %v11793, %v11793
        %v11842 = vpack.c.b16 %v11794, %v11794
        %v11843 = vpack.c.b16 %v11795, %v11795
        %v11844 = vpack.c.b16 %v11796, %v11796
        %v11845 = vpack.c.b16 %v11797, %v11797
        %v11846 = vpack.c.b16 %v11798, %v11798
        %v11847 = vpack.c.b16 %v11799, %v11799
        %v11848 = vpack.c.b16 %v11800, %v11800
        %v11849 = vpack.c.b16 %v11801, %v11801
        %v11850 = vpack.c.b16 %v11802, %v11802
        %v11851 = vpack.c.b16 %v11803, %v11803
        %v11852 = vpack.c.b16 %v11804, %v11804
        %v11853 = vpack.c.b16 %v11805, %v11805
        %v11854 = vpack.c.b16 %v11806, %v11806
        %v11855 = vpack.c.b16 %v11807, %v11807
        %v11856 = vpack.c.b16 %v11808, %v11808
        %v11857 = vpack.c.b16 %v11809, %v11809
        %v11858 = vpack.c.b16 %v11810, %v11810
        %v11859 = vpack.c.b16 %v11811, %v11811
        %v11860 = vpack.c.b16 %v11812, %v11812
        %v11861 = vpack.c.b16 %v11813, %v11813
        %v11862 = vpack.c.b16 %v11814, %v11814
        %v11863 = vpack.c.b16 %v11815, %v11815
        %v11864 = vpack.c.b16 %v11816, %v11816
        %v11865 = vpack.c.b16 %v11817, %v11817
        %v11866 = vpack.c.b16 %v11818, %v11818
        %v11867 = vpack.c.b16 %v11819, %v11819
        %v11868 = vpack.c.b16 %v11820, %v11820
        %v11869 = vpack.c.b16 %v11821, %v11821
        %v11870 = vpack.c.b16 %v11822, %v11822
        %v11871 = vpack.c.b16 %v11823, %v11823
        %v11872 = vpack.c.b16 %v11824, %v11824
        %v11873 = vpack.c.b16 %v11825, %v11825
        %v11874 = vpack.c.b16 %v11826, %v11826
        %v11875 = vpack.c.b16 %v11827, %v11827
        %v11877 = vshrl.u32 %v11828, 16
        %v11879 = vrot.slane %v11877, 7
        %v11880 = vshll.u32 %v11828, 16
        %v11882 = vor.u32 %v11879, %v11880
        %v11883 = vrot.slane %v11879, 4
        %v11885 = vshrl.u32 %v11829, 16
        %v11887 = vrot.slane %v11885, 7
        %v11888 = vshll.u32 %v11829, 16
        %v11890 = vor.u32 %v11887, %v11888
        %v11891 = vsel %vm6117, %v11883, %v11890
        %v11892 = vrot.slane %v11887, 4
        %v11894 = vshrl.u32 %v11830, 16
        %v11896 = vrot.slane %v11894, 7
        %v11897 = vshll.u32 %v11830, 16
        %v11899 = vor.u32 %v11896, %v11897
        %v11900 = vsel %vm6117, %v11892, %v11899
        %v11901 = vrot.slane %v11896, 4
        %v11903 = vshrl.u32 %v11831, 16
        %v11905 = vrot.slane %v11903, 7
        %v11906 = vshll.u32 %v11831, 16
        %v11908 = vor.u32 %v11905, %v11906
        %v11909 = vsel %vm6117, %v11901, %v11908
        %v11910 = vrot.slane %v11905, 4
        %v11912 = vshrl.u32 %v11832, 16
        %v11914 = vrot.slane %v11912, 7
        %v11915 = vshll.u32 %v11832, 16
        %v11917 = vor.u32 %v11914, %v11915
        %v11918 = vsel %vm6117, %v11910, %v11917
        %v11919 = vrot.slane %v11914, 4
        %v11921 = vshrl.u32 %v11833, 16
        %v11923 = vrot.slane %v11921, 7
        %v11924 = vshll.u32 %v11833, 16
        %v11926 = vor.u32 %v11923, %v11924
        %v11927 = vsel %vm6117, %v11919, %v11926
        %v11928 = vrot.slane %v11923, 4
        %v11930 = vshrl.u32 %v11834, 16
        %v11932 = vrot.slane %v11930, 7
        %v11933 = vshll.u32 %v11834, 16
        %v11935 = vor.u32 %v11932, %v11933
        %v11936 = vsel %vm6117, %v11928, %v11935
        %v11937 = vrot.slane %v11932, 4
        %v11939 = vshrl.u32 %v11835, 16
        %v11941 = vrot.slane %v11939, 7
        %v11942 = vshll.u32 %v11835, 16
        %v11944 = vor.u32 %v11941, %v11942
        %v11945 = vsel %vm6117, %v11937, %v11944
        %v11946 = vrot.slane %v11941, 4
        %v11948 = vshrl.u32 %v11836, 16
        %v11950 = vrot.slane %v11948, 7
        %v11951 = vshll.u32 %v11836, 16
        %v11953 = vor.u32 %v11950, %v11951
        %v11954 = vsel %vm6117, %v11946, %v11953
        %v11955 = vrot.slane %v11950, 4
        %v11957 = vshrl.u32 %v11837, 16
        %v11959 = vrot.slane %v11957, 7
        %v11960 = vshll.u32 %v11837, 16
        %v11962 = vor.u32 %v11959, %v11960
        %v11963 = vsel %vm6117, %v11955, %v11962
        %v11964 = vrot.slane %v11959, 4
        %v11966 = vshrl.u32 %v11838, 16
        %v11968 = vrot.slane %v11966, 7
        %v11969 = vshll.u32 %v11838, 16
        %v11971 = vor.u32 %v11968, %v11969
        %v11972 = vsel %vm6117, %v11964, %v11971
        %v11973 = vrot.slane %v11968, 4
        %v11975 = vshrl.u32 %v11839, 16
        %v11977 = vrot.slane %v11975, 7
        %v11978 = vshll.u32 %v11839, 16
        %v11980 = vor.u32 %v11977, %v11978
        %v11981 = vsel %vm6117, %v11973, %v11980
        %v11982 = vrot.slane %v11977, 4
        %v11984 = vshrl.u32 %v11840, 16
        %v11986 = vrot.slane %v11984, 7
        %v11987 = vshll.u32 %v11840, 16
        %v11989 = vor.u32 %v11986, %v11987
        %v11990 = vsel %vm6117, %v11982, %v11989
        %v11991 = vrot.slane %v11986, 4
        %v11993 = vshrl.u32 %v11841, 16
        %v11995 = vrot.slane %v11993, 7
        %v11996 = vshll.u32 %v11841, 16
        %v11998 = vor.u32 %v11995, %v11996
        %v11999 = vsel %vm6117, %v11991, %v11998
        %v12000 = vrot.slane %v11995, 4
        %v12002 = vshrl.u32 %v11842, 16
        %v12004 = vrot.slane %v12002, 7
        %v12005 = vshll.u32 %v11842, 16
        %v12007 = vor.u32 %v12004, %v12005
        %v12008 = vsel %vm6117, %v12000, %v12007
        %v12009 = vrot.slane %v12004, 4
        %v12011 = vshrl.u32 %v11843, 16
        %v12013 = vrot.slane %v12011, 7
        %v12014 = vshll.u32 %v11843, 16
        %v12016 = vor.u32 %v12013, %v12014
        %v12017 = vsel %vm6117, %v12009, %v12016
        %v12018 = vrot.slane %v12013, 4
        %v12020 = vshrl.u32 %v11844, 16
        %v12022 = vrot.slane %v12020, 7
        %v12023 = vshll.u32 %v11844, 16
        %v12025 = vor.u32 %v12022, %v12023
        %v12026 = vsel %vm6117, %v12018, %v12025
        %v12027 = vrot.slane %v12022, 4
        %v12029 = vshrl.u32 %v11845, 16
        %v12031 = vrot.slane %v12029, 7
        %v12032 = vshll.u32 %v11845, 16
        %v12034 = vor.u32 %v12031, %v12032
        %v12035 = vsel %vm6117, %v12027, %v12034
        %v12036 = vrot.slane %v12031, 4
        %v12038 = vshrl.u32 %v11846, 16
        %v12040 = vrot.slane %v12038, 7
        %v12041 = vshll.u32 %v11846, 16
        %v12043 = vor.u32 %v12040, %v12041
        %v12044 = vsel %vm6117, %v12036, %v12043
        %v12045 = vrot.slane %v12040, 4
        %v12047 = vshrl.u32 %v11847, 16
        %v12049 = vrot.slane %v12047, 7
        %v12050 = vshll.u32 %v11847, 16
        %v12052 = vor.u32 %v12049, %v12050
        %v12053 = vsel %vm6117, %v12045, %v12052
        %v12054 = vrot.slane %v12049, 4
        %v12056 = vshrl.u32 %v11848, 16
        %v12058 = vrot.slane %v12056, 7
        %v12059 = vshll.u32 %v11848, 16
        %v12061 = vor.u32 %v12058, %v12059
        %v12062 = vsel %vm6117, %v12054, %v12061
        %v12063 = vrot.slane %v12058, 4
        %v12065 = vshrl.u32 %v11849, 16
        %v12067 = vrot.slane %v12065, 7
        %v12068 = vshll.u32 %v11849, 16
        %v12070 = vor.u32 %v12067, %v12068
        %v12071 = vsel %vm6117, %v12063, %v12070
        %v12072 = vrot.slane %v12067, 4
        %v12074 = vshrl.u32 %v11850, 16
        %v12076 = vrot.slane %v12074, 7
        %v12077 = vshll.u32 %v11850, 16
        %v12079 = vor.u32 %v12076, %v12077
        %v12080 = vsel %vm6117, %v12072, %v12079
        %v12081 = vrot.slane %v12076, 4
        %v12083 = vshrl.u32 %v11851, 16
        %v12085 = vrot.slane %v12083, 7
        %v12086 = vshll.u32 %v11851, 16
        %v12088 = vor.u32 %v12085, %v12086
        %v12089 = vsel %vm6117, %v12081, %v12088
        %v12090 = vrot.slane %v12085, 4
        %v12092 = vshrl.u32 %v11852, 16
        %v12094 = vrot.slane %v12092, 7
        %v12095 = vshll.u32 %v11852, 16
        %v12097 = vor.u32 %v12094, %v12095
        %v12098 = vsel %vm6117, %v12090, %v12097
        %v12099 = vrot.slane %v12094, 4
        %v12101 = vshrl.u32 %v11853, 16
        %v12103 = vrot.slane %v12101, 7
        %v12104 = vshll.u32 %v11853, 16
        %v12106 = vor.u32 %v12103, %v12104
        %v12107 = vsel %vm6117, %v12099, %v12106
        %v12108 = vrot.slane %v12103, 4
        %v12110 = vshrl.u32 %v11854, 16
        %v12112 = vrot.slane %v12110, 7
        %v12113 = vshll.u32 %v11854, 16
        %v12115 = vor.u32 %v12112, %v12113
        %v12116 = vsel %vm6117, %v12108, %v12115
        %v12117 = vrot.slane %v12112, 4
        %v12119 = vshrl.u32 %v11855, 16
        %v12121 = vrot.slane %v12119, 7
        %v12122 = vshll.u32 %v11855, 16
        %v12124 = vor.u32 %v12121, %v12122
        %v12125 = vsel %vm6117, %v12117, %v12124
        %v12126 = vrot.slane %v12121, 4
        %v12128 = vshrl.u32 %v11856, 16
        %v12130 = vrot.slane %v12128, 7
        %v12131 = vshll.u32 %v11856, 16
        %v12133 = vor.u32 %v12130, %v12131
        %v12134 = vsel %vm6117, %v12126, %v12133
        %v12135 = vrot.slane %v12130, 4
        %v12137 = vshrl.u32 %v11857, 16
        %v12139 = vrot.slane %v12137, 7
        %v12140 = vshll.u32 %v11857, 16
        %v12142 = vor.u32 %v12139, %v12140
        %v12143 = vsel %vm6117, %v12135, %v12142
        %v12144 = vrot.slane %v12139, 4
        %v12146 = vshrl.u32 %v11858, 16
        %v12148 = vrot.slane %v12146, 7
        %v12149 = vshll.u32 %v11858, 16
        %v12151 = vor.u32 %v12148, %v12149
        %v12152 = vsel %vm6117, %v12144, %v12151
        %v12153 = vrot.slane %v12148, 4
        %v12155 = vshrl.u32 %v11859, 16
        %v12157 = vrot.slane %v12155, 7
        %v12158 = vshll.u32 %v11859, 16
        %v12160 = vor.u32 %v12157, %v12158
        %v12161 = vsel %vm6117, %v12153, %v12160
        %v12162 = vrot.slane %v12157, 4
        %v12164 = vshrl.u32 %v11860, 16
        %v12166 = vrot.slane %v12164, 7
        %v12167 = vshll.u32 %v11860, 16
        %v12169 = vor.u32 %v12166, %v12167
        %v12170 = vsel %vm6117, %v12162, %v12169
        %v12171 = vrot.slane %v12166, 4
        %v12173 = vshrl.u32 %v11861, 16
        %v12175 = vrot.slane %v12173, 7
        %v12176 = vshll.u32 %v11861, 16
        %v12178 = vor.u32 %v12175, %v12176
        %v12179 = vsel %vm6117, %v12171, %v12178
        %v12180 = vrot.slane %v12175, 4
        %v12182 = vshrl.u32 %v11862, 16
        %v12184 = vrot.slane %v12182, 7
        %v12185 = vshll.u32 %v11862, 16
        %v12187 = vor.u32 %v12184, %v12185
        %v12188 = vsel %vm6117, %v12180, %v12187
        %v12189 = vrot.slane %v12184, 4
        %v12191 = vshrl.u32 %v11863, 16
        %v12193 = vrot.slane %v12191, 7
        %v12194 = vshll.u32 %v11863, 16
        %v12196 = vor.u32 %v12193, %v12194
        %v12197 = vsel %vm6117, %v12189, %v12196
        %v12198 = vrot.slane %v12193, 4
        %v12200 = vshrl.u32 %v11864, 16
        %v12202 = vrot.slane %v12200, 7
        %v12203 = vshll.u32 %v11864, 16
        %v12205 = vor.u32 %v12202, %v12203
        %v12206 = vsel %vm6117, %v12198, %v12205
        %v12207 = vrot.slane %v12202, 4
        %v12209 = vshrl.u32 %v11865, 16
        %v12211 = vrot.slane %v12209, 7
        %v12212 = vshll.u32 %v11865, 16
        %v12214 = vor.u32 %v12211, %v12212
        %v12215 = vsel %vm6117, %v12207, %v12214
        %v12216 = vrot.slane %v12211, 4
        %v12218 = vshrl.u32 %v11866, 16
        %v12220 = vrot.slane %v12218, 7
        %v12221 = vshll.u32 %v11866, 16
        %v12223 = vor.u32 %v12220, %v12221
        %v12224 = vsel %vm6117, %v12216, %v12223
        %v12225 = vrot.slane %v12220, 4
        %v12227 = vshrl.u32 %v11867, 16
        %v12229 = vrot.slane %v12227, 7
        %v12230 = vshll.u32 %v11867, 16
        %v12232 = vor.u32 %v12229, %v12230
        %v12233 = vsel %vm6117, %v12225, %v12232
        %v12234 = vrot.slane %v12229, 4
        %v12236 = vshrl.u32 %v11868, 16
        %v12238 = vrot.slane %v12236, 7
        %v12239 = vshll.u32 %v11868, 16
        %v12241 = vor.u32 %v12238, %v12239
        %v12242 = vsel %vm6117, %v12234, %v12241
        %v12243 = vrot.slane %v12238, 4
        %v12245 = vshrl.u32 %v11869, 16
        %v12247 = vrot.slane %v12245, 7
        %v12248 = vshll.u32 %v11869, 16
        %v12250 = vor.u32 %v12247, %v12248
        %v12251 = vsel %vm6117, %v12243, %v12250
        %v12252 = vrot.slane %v12247, 4
        %v12254 = vshrl.u32 %v11870, 16
        %v12256 = vrot.slane %v12254, 7
        %v12257 = vshll.u32 %v11870, 16
        %v12259 = vor.u32 %v12256, %v12257
        %v12260 = vsel %vm6117, %v12252, %v12259
        %v12261 = vrot.slane %v12256, 4
        %v12263 = vshrl.u32 %v11871, 16
        %v12265 = vrot.slane %v12263, 7
        %v12266 = vshll.u32 %v11871, 16
        %v12268 = vor.u32 %v12265, %v12266
        %v12269 = vsel %vm6117, %v12261, %v12268
        %v12270 = vrot.slane %v12265, 4
        %v12272 = vshrl.u32 %v11872, 16
        %v12274 = vrot.slane %v12272, 7
        %v12275 = vshll.u32 %v11872, 16
        %v12277 = vor.u32 %v12274, %v12275
        %v12278 = vsel %vm6117, %v12270, %v12277
        %v12279 = vrot.slane %v12274, 4
        %v12281 = vshrl.u32 %v11873, 16
        %v12283 = vrot.slane %v12281, 7
        %v12284 = vshll.u32 %v11873, 16
        %v12286 = vor.u32 %v12283, %v12284
        %v12287 = vsel %vm6117, %v12279, %v12286
        %v12288 = vrot.slane %v12283, 4
        %v12290 = vshrl.u32 %v11874, 16
        %v12292 = vrot.slane %v12290, 7
        %v12293 = vshll.u32 %v11874, 16
        %v12295 = vor.u32 %v12292, %v12293
        %v12296 = vsel %vm6117, %v12288, %v12295
        %v12297 = vrot.slane %v12292, 4
        %v12299 = vshrl.u32 %v11875, 16
        %v12301 = vrot.slane %v12299, 7
        %v12302 = vshll.u32 %v11875, 16
        %v12304 = vor.u32 %v12301, %v12302
        %v12305 = vsel %vm6117, %v12297, %v12304
        %v12306 = vrot.slane %v12301, 4
        %v12356 = vld [vmem:[%s271 + $0xc] sm:$0xf]
        %v12357 = vsel %vm6600, %v11882, %v12356
        %12358 = vst [vmem:[%s271 + $0xc] sm:$0xf] %v12357
        %12359 = vst [vmem:[%s271 + $0x10] sm:$0xf] %v11891
        %12360 = vst [vmem:[%s271 + $0x14] sm:$0xf] %v11900
        %12361 = vst [vmem:[%s271 + $0x18] sm:$0xf] %v11909
        %12362 = vst [vmem:[%s271 + $0x1c] sm:$0xf] %v11918
        %12363 = vst [vmem:[%s271 + $0x20] sm:$0xf] %v11927
        %12364 = vst [vmem:[%s271 + $0x24] sm:$0xf] %v11936
        %12365 = vst [vmem:[%s271 + $0x28] sm:$0xf] %v11945
        %12366 = vst [vmem:[%s271 + $0x2c] sm:$0xf] %v11954
        %12367 = vst [vmem:[%s271 + $0x30] sm:$0xf] %v11963
        %12368 = vst [vmem:[%s271 + $0x34] sm:$0xf] %v11972
        %12369 = vst [vmem:[%s271 + $0x38] sm:$0xf] %v11981
        %12370 = vst [vmem:[%s271 + $0x3c] sm:$0xf] %v11990
        %12371 = vst [vmem:[%s271 + $0x40] sm:$0xf] %v11999
        %12372 = vst [vmem:[%s271 + $0x44] sm:$0xf] %v12008
        %12373 = vst [vmem:[%s271 + $0x48] sm:$0xf] %v12017
        %12374 = vst [vmem:[%s271 + $0x4c] sm:$0xf] %v12026
        %12375 = vst [vmem:[%s271 + $0x50] sm:$0xf] %v12035
        %12376 = vst [vmem:[%s271 + $0x54] sm:$0xf] %v12044
        %12377 = vst [vmem:[%s271 + $0x58] sm:$0xf] %v12053
        %12378 = vst [vmem:[%s271 + $0x5c] sm:$0xf] %v12062
        %12379 = vst [vmem:[%s271 + $0x60] sm:$0xf] %v12071
        %12380 = vst [vmem:[%s271 + $0x64] sm:$0xf] %v12080
        %12381 = vst [vmem:[%s271 + $0x68] sm:$0xf] %v12089
        %12382 = vst [vmem:[%s271 + $0x6c] sm:$0xf] %v12098
        %12383 = vst [vmem:[%s271 + $0x70] sm:$0xf] %v12107
        %12384 = vst [vmem:[%s271 + $0x74] sm:$0xf] %v12116
        %12385 = vst [vmem:[%s271 + $0x78] sm:$0xf] %v12125
        %12386 = vst [vmem:[%s271 + $0x7c] sm:$0xf] %v12134
        %12387 = vst [vmem:[%s271 + $0x80] sm:$0xf] %v12143
        %12388 = vst [vmem:[%s271 + $0x84] sm:$0xf] %v12152
        %12389 = vst [vmem:[%s271 + $0x88] sm:$0xf] %v12161
        %12390 = vst [vmem:[%s271 + $0x8c] sm:$0xf] %v12170
        %12391 = vst [vmem:[%s271 + $0x90] sm:$0xf] %v12179
        %12392 = vst [vmem:[%s271 + $0x94] sm:$0xf] %v12188
        %12393 = vst [vmem:[%s271 + $0x98] sm:$0xf] %v12197
        %12394 = vst [vmem:[%s271 + $0x9c] sm:$0xf] %v12206
        %12395 = vst [vmem:[%s271 + $0xa0] sm:$0xf] %v12215
        %12396 = vst [vmem:[%s271 + $0xa4] sm:$0xf] %v12224
        %12397 = vst [vmem:[%s271 + $0xa8] sm:$0xf] %v12233
        %12398 = vst [vmem:[%s271 + $0xac] sm:$0xf] %v12242
        %12399 = vst [vmem:[%s271 + $0xb0] sm:$0xf] %v12251
        %12400 = vst [vmem:[%s271 + $0xb4] sm:$0xf] %v12260
        %12401 = vst [vmem:[%s271 + $0xb8] sm:$0xf] %v12269
        %12402 = vst [vmem:[%s271 + $0xbc] sm:$0xf] %v12278
        %12403 = vst [vmem:[%s271 + $0xc0] sm:$0xf] %v12287
        %12404 = vst [vmem:[%s271 + $0xc4] sm:$0xf] %v12296
        %12405 = vst [vmem:[%s271 + $0xc8] sm:$0xf] %v12305
        %v12406 = vld [vmem:[%s271 + $0xcc] sm:$0x1]
        %v12407 = vsel %vm6652, %v12306, %v12406
        %12408 = vst [vmem:[%s271 + $0xcc] sm:$0x1] %v12407
        %s12409 = sand.u32 %s141, 1
        %s12410 = scalar_lea.sflag [#allocation6], %s12409
        %s12411 = sand.u32 %s141, 1
        %s12412 = smul.addr %s12411, 228
        %s12413 = scalar_lea.vmem [#allocation10], %s12412
        // Predicated region
        $region53: #{tpu_custom_call.1} parent=39 // pred_check
          %p12414 = pneg %p151
        $region54: #{tpu_custom_call.1} parent=39 // pred_check_branch
          %12416 = sbr.rel (%p12414) target = $region56
        $region55: #{tpu_custom_call.1} parent=39 // pred_region
          %s12418 = ssub.s32 3648, 3648
          %12419 = vsyncadd %s12410, %s12418
          %s12420 = smul.addr %s23, 57
          %s12421 = smul.addr %s12420, 64
          %s12422 = scalar_lea.hbm %s5, %s12421
          %s12423 = sshll.u32 %s12413, 4
          %s12424 = int_to_ptr.vmem [resolvable:$true] %s12423
          %12429 = dma.vmem_to_hbm [thread:$0]  %s12424, 3648, %s12422, %s12410, 64, 64, 4
        $region56: #{tpu_custom_call.1} parent=39 // pred_fallthru
          _
      $region40: #{tpu_custom_call.1} parent=5 // pred_fallthru
        _
      %p12430 = scmp.le.s32.totalorder 2, %s18
      // Predicated region
      $region57: #{tpu_custom_call.1} parent=5 // pred_check
        %p12431 = pneg %p12430
      $region58: #{tpu_custom_call.1} parent=5 // pred_check_branch
        %12433 = sbr.rel (%p12431) target = $region60
      $region59: #{tpu_custom_call.1} parent=5 // pred_region
        %s12434 = ssub.s32 %s18, 2
        // Predicated region
        $region61: #{tpu_custom_call.1} parent=59 // pred_check
          %p12435 = pneg %p157
        $region62: #{tpu_custom_call.1} parent=59 // pred_check_branch
          %12437 = sbr.rel (%p12435) target = $region64
        $region63: #{tpu_custom_call.1} parent=59 // pred_region
          %s12438 = sand.u32 %s142, 1
          %s12439 = scalar_lea.sflag [#allocation6], %s12438
          %s12440 = sand.u32 %s142, 1
          %s12441 = smul.addr %s12440, 228
          %s12442 = scalar_lea.vmem [#allocation10], %s12441
          %12443 = dma.done %s12439, 3648
        $region64: #{tpu_custom_call.1} parent=59 // pred_fallthru
          _
      $region60: #{tpu_custom_call.1} parent=5 // pred_fallthru
        _
    $region6: #{tpu_custom_call.1} parent=1 // loop_footer
      %s22 = sadd.s32 1, %s18
    $region7: #{tpu_custom_call.1} parent=1 // loop_footer_branch
      %17 = sbr.rel target = $region3
    $region8: #{tpu_custom_call.1} parent=1 // loop_exit
      _
    %12444 = vsyncpa [#allocation5], 1
    %s12445 = scalar_lea.sflag [#allocation5], 1
    %12446 = vsyncpa %s12445, 1
    %12447 = vsyncpa [#allocation8], 1
    %12448 = vsyncpa [#allocation6], 1
    %s12449 = scalar_lea.sflag [#allocation6], 1
    %12450 = vsyncpa %s12449, 1

</llo_original>
